<compile_context>
chip_gen: v5e
topology: v5e:2x2
jax: 0.10.0
libtpu: 0.0.40
codegen_flags: <defaults>
</compile_context>

<pallas_src>
import functools

import jax
import jax.numpy as jnp
from jax import lax
from jax.experimental import pallas as pl
from jax.experimental.pallas import tpu as pltpu

# ---- scaled-down config (structure identical to the PyTorch module) ---------
LAYER_NUM = 4        # layer_num
SKIP_DS_LAYER = 4    # skip_ds_layer
NUM_CLASSES = 8      # config['dataset']['num_classes']
PRIORS = 16          # priors            (128 in the original)
T_IN = 256           # input length      (2048 in the original)
C_FEAT = 128         # feature channels  (512 in the original)
C_HALF = 64          # TSSE branch width (256 in the original)
BATCH = 2

TM_CONV = 512        # skip-conv output-tile rows (B is folded into this dim)
HEAD_WIDTH = 128     # fused loc+conf head padded to a lane-dense 128 columns

LENS = [PRIORS >> i for i in range(LAYER_NUM)]          # [16, 8, 4, 2]
OFFS = []
_pos = 1
for _l in LENS:
    OFFS.append(_pos)
    _pos += _l + 1
LP_HEAD = _pos                                          # 35 = levels + zero separators
LP_PAD = ((LP_HEAD + 7) // 8) * 8                       # 40: sublane-aligned head rows


# =============================================================================
# Pallas kernels
# =============================================================================
def _tsse_conv_kernel(q_ref, halo_ref, wc_ref, wp_ref, b_ref, o_ref,
                      *, c_in, tm, rows_per_batch):
    """Conv1d(k=3, stride=2, pad=1) + bias + ReLU on a row-pair-packed input.

    q_ref   : (tm, 2*c_in)  row-pair tile, Q[r] = [x[2r], x[2r+1]] (B folded into rows)
    halo_ref: (1, 1, c_in)  hi half of the row just before this tile (zeros for tile 0)
    wc_ref  : (2*c_in, Cout) taps 1 and 2 stacked
    wp_ref  : (c_in, Cout)   tap 0
    o_ref   : (tm, Cout)     out[r] = x[2r-1]W0 + x[2r]W1 + x[2r+1]W2
    """
    t = pl.program_id(0)
    q = q_ref[...]                                        # (tm, 2C) bf16
    hi = q[:, c_in:].astype(jnp.float32)                  # x[2r+1] rows
    prev = pltpu.roll(hi, 1, axis=0)                      # prev[r] = hi[r-1]; row 0 wraps
    row = lax.broadcasted_iota(jnp.int32, (tm, 1), 0)
    prev = jnp.where(row == 0, halo_ref[0].astype(jnp.float32), prev)   # cross-tile halo
    first = ((row + t * tm) & (rows_per_batch - 1)) == 0  # zero pad at each batch start
    prev = jnp.where(first, 0.0, prev)
    y = (jnp.dot(q, wc_ref[...], preferred_element_type=jnp.float32)
         + jnp.dot(prev.astype(jnp.bfloat16), wp_ref[...],
                   preferred_element_type=jnp.float32)
         + b_ref[...])
    o_ref[...] = jnp.maximum(y, 0.0).astype(o_ref.dtype)


def _pyramid_tail_kernel(deep_ref, gp_ref, wt_ref, bt_ref, wl_ref, bl_ref,
                         wsh_ref, bsh_ref, wh_ref, bh_ref, mask_ref, scale_ref,
                         o_ref, feat_ref):
    """Fused pyramid tail for one batch row:
       4x (TSSE conv k=3 s=2) -> 4x LSREF (x2 upsample + global feat + 1x1 conv)
       -> head-layout assembly (zero separators) -> shared k=3 conv
       -> fused loc|conf k=3 conv -> ScaleExp on loc lanes.
    All levels are kept at a PRIORS-row cap so every matmul has healthy shapes;
    0/1 gather / upsample matrices are built in-kernel with iota (MXU work only)."""
    bf16 = jnp.bfloat16
    n = PRIORS
    r_i = lax.broadcasted_iota(jnp.int32, (n, n), 0)
    c_i = lax.broadcasted_iota(jnp.int32, (n, n), 1)

    feat_ref[...] = jnp.zeros_like(feat_ref)              # zero separators + padding

    d = deep_ref[0]                                        # (n, C) bf16, all rows valid
    for l in range(LAYER_NUM):
        len_in = PRIORS >> l
        n_out = len_in // 2
        # ---- TSSE conv k=3 stride=2 (taps gathered with 0/1 matrices) ----
        y = bt_ref[l]                                      # (1, C) f32
        for k in range(3):                                 # tap offset = k - 1
            sel = (c_i == 2 * r_i + (k - 1)) & (r_i < n_out) & (c_i < len_in)
            g = jnp.where(sel, 1.0, 0.0).astype(bf16)
            xk = jnp.dot(g, d, preferred_element_type=jnp.float32).astype(bf16)
            y = y + jnp.dot(xk, wt_ref[l, k], preferred_element_type=jnp.float32)
        d = jnp.maximum(y, 0.0).astype(bf16)               # (n, C), valid rows = n_out
        # ---- LSREF: x2 nearest upsample + pooled global feature + 1x1 conv ----
        usel = (c_i == (r_i >> 1)) & (r_i < LENS[l])
        u = jnp.where(usel, 1.0, 0.0).astype(bf16)
        up = jnp.dot(u, d, preferred_element_type=jnp.float32)           # (n, C)
        fused = (up + gp_ref[l, 0].astype(jnp.float32)).astype(bf16)
        o = jnp.dot(fused, wl_ref[l], preferred_element_type=jnp.float32) + bl_ref[l]
        o = jnp.maximum(o, 0.0).astype(bf16)
        feat_ref[OFFS[l]:OFFS[l] + LENS[l], :] = o[:LENS[l], :].astype(jnp.float32)

    # ---- prediction head; wrap rows of the rolls are zero separator/pad rows ----
    x32 = feat_ref[...]                                    # (LP_PAD, C) f32 (bf16-valued)
    xb = x32.astype(bf16)
    x_prev = pltpu.roll(x32, 1, axis=0).astype(bf16)
    x_next = pltpu.roll(x32, LP_PAD - 1, axis=0).astype(bf16)
    h = (jnp.dot(x_prev, wsh_ref[0], preferred_element_type=jnp.float32)
         + jnp.dot(xb, wsh_ref[1], preferred_element_type=jnp.float32)
         + jnp.dot(x_next, wsh_ref[2], preferred_element_type=jnp.float32)
         + bsh_ref[...])
    h = jnp.maximum(h, 0.0) * mask_ref[...]                # zero the separator/pad rows
    hb = h.astype(bf16)
    h_prev = pltpu.roll(h, 1, axis=0).astype(bf16)
    h_next = pltpu.roll(h, LP_PAD - 1, axis=0).astype(bf16)
    out = (jnp.dot(h_prev, wh_ref[0], preferred_element_type=jnp.float32)
           + jnp.dot(hb, wh_ref[1], preferred_element_type=jnp.float32)
           + jnp.dot(h_next, wh_ref[2], preferred_element_type=jnp.float32)
           + bh_ref[...])                                  # (LP_PAD, 128): [loc|conf|pad]
    col = lax.broadcasted_iota(jnp.int32, out.shape, 1)
    loc_val = jnp.exp(out * scale_ref[...])                # ScaleExp, per-row (per-level)
    o_ref[0] = jnp.where(col < 2, loc_val, out).astype(o_ref.dtype)


# =============================================================================
# pallas_call wrappers
# =============================================================================
def tsse_conv(x, p):
    # TODO(synk): TSSE source not provided; modeled as two Conv1d(k=3, s=2) branches
    # concatenated along channels followed by ReLU (weights pre-concatenated).
    B, T, C = x.shape
    t_out = T // 2
    assert t_out & (t_out - 1) == 0, "lengths must be powers of two"
    c_out = p["wc"].shape[1]
    m_total = B * t_out
    q = x.reshape(m_total, 2 * C)                 # free reshape: Q[r] = [x[2r], x[2r+1]]

    tm = min(TM_CONV, m_total)
    if m_total % tm != 0:
        tm = t_out                                # per-batch tiles always divide
    nt = m_total // tm

    # cross-tile halo rows (hi half of the row just before each tile); tiny host gather
    if nt > 1:
        halo = jnp.concatenate(
            [jnp.zeros((1, C), q.dtype), q[tm - 1:m_total - 1:tm, C:]], axis=0)
    else:
        halo = jnp.zeros((1, C), q.dtype)
    halo = halo.reshape(nt, 1, C)

    kernel = functools.partial(_tsse_conv_kernel, c_in=C, tm=tm, rows_per_batch=t_out)
    out = pl.pallas_call(
        kernel,
        out_shape=jax.ShapeDtypeStruct((m_total, c_out), jnp.bfloat16),
        grid=(nt,),
        in_specs=[
            pl.BlockSpec((tm, 2 * C), lambda t: (t, 0)),
            pl.BlockSpec((1, 1, C), lambda t: (t, 0, 0)),
            pl.BlockSpec((2 * C, c_out), lambda t: (0, 0)),
            pl.BlockSpec((C, c_out), lambda t: (0, 0)),
            pl.BlockSpec((1, c_out), lambda t: (0, 0)),
        ],
        out_specs=pl.BlockSpec((tm, c_out), lambda t: (t, 0)),
        compiler_params=pltpu.CompilerParams(
            dimension_semantics=("parallel",),
            vmem_limit_bytes=32 * 1024 * 1024),
    )(q, halo, p["wc"], p["wp"], p["b"])
    return out.reshape(B, t_out, c_out)


def pyramid_tail(deep, gpools, tp):
    # TODO(synk): LSREF / PredictionHead sources not provided; LSREF is modeled as
    # nearest x2 upsample + avg-pooled global feature + per-level 1x1 conv + ReLU,
    # the head as a shared Conv1d(k=3)+ReLU tower followed by loc(2)/conf(K) k=3 convs.
    B, _, C = deep.shape
    gp = jnp.stack([jnp.pad(g, ((0, 0), (0, PRIORS - g.shape[1]), (0, 0)))
                    for g in gpools])                       # (L, B, PRIORS, C) bf16
    return pl.pallas_call(
        _pyramid_tail_kernel,
        out_shape=jax.ShapeDtypeStruct((B, LP_PAD, HEAD_WIDTH), jnp.float32),
        grid=(B,),
        in_specs=[
            pl.BlockSpec((1, PRIORS, C), lambda b: (b, 0, 0)),
            pl.BlockSpec((LAYER_NUM, 1, PRIORS, C), lambda b: (0, b, 0, 0)),
            pl.BlockSpec((LAYER_NUM, 3, C, C), lambda b: (0, 0, 0, 0)),
            pl.BlockSpec((LAYER_NUM, 1, C), lambda b: (0, 0, 0)),
            pl.BlockSpec((LAYER_NUM, C, C), lambda b: (0, 0, 0)),
            pl.BlockSpec((LAYER_NUM, 1, C), lambda b: (0, 0, 0)),
            pl.BlockSpec((3, C, C), lambda b: (0, 0, 0)),
            pl.BlockSpec((1, C), lambda b: (0, 0)),
            pl.BlockSpec((3, C, HEAD_WIDTH), lambda b: (0, 0, 0)),
            pl.BlockSpec((1, HEAD_WIDTH), lambda b: (0, 0)),
            pl.BlockSpec((LP_PAD, 1), lambda b: (0, 0)),
            pl.BlockSpec((LP_PAD, 1), lambda b: (0, 0)),
        ],
        out_specs=pl.BlockSpec((1, LP_PAD, HEAD_WIDTH), lambda b: (b, 0, 0)),
        scratch_shapes=[pltpu.VMEM((LP_PAD, C), jnp.float32)],
        compiler_params=pltpu.CompilerParams(
            dimension_semantics=("parallel",),
            vmem_limit_bytes=32 * 1024 * 1024),
    )(deep, gp, tp["wt"], tp["bt"], tp["wl"], tp["bl"],
      tp["wsh"], tp["bsh"], tp["wh"], tp["bh"], tp["mask"], tp["scale"])


# =============================================================================
# plain-JAX glue
# =============================================================================
def pool_global(global_feat):
    # avg-pool global_feat with r = T//PRIORS * 2**i, derived iteratively
    B, T, C = global_feat.shape
    g = global_feat.astype(jnp.float32)
    gp = g.reshape(B, PRIORS, T // PRIORS, C).mean(axis=2)
    gpools = [gp.astype(jnp.bfloat16)]
    for _ in range(1, LAYER_NUM):
        gp = gp.reshape(B, gp.shape[1] // 2, 2, C).mean(axis=2)
        gpools.append(gp.astype(jnp.bfloat16))
    return gpools


# =============================================================================
# Pyramid_Detection.forward
# =============================================================================
def pyramid_detection_forward(embedd, pk):
    x = embedd.astype(jnp.bfloat16)
    deep_feat = x
    global_feat = lax.stop_gradient(x)                  # embedd.detach()

    for p in pk["skip_tsse"]:
        deep_feat = tsse_conv(deep_feat, p)

    gpools = pool_global(global_feat)
    head_out = pyramid_tail(deep_feat, gpools, pk["tail"])   # (B, LP_PAD, 128) f32

    locs, confs = [], []
    for off, ln in zip(OFFS, LENS):
        locs.append(head_out[:, off:off + ln, 0:2])
        confs.append(head_out[:, off:off + ln, 2:2 + NUM_CLASSES])
    loc = jnp.concatenate(locs, axis=1)
    conf = jnp.concatenate(confs, axis=1)
    return loc, conf, pk["priors"]


# =============================================================================
# parameter init (PyTorch-like shapes) and packing for the kernels
# =============================================================================
def init_params(key):
    ks = iter(jax.random.split(key, 64))

    def tsse_params():
        w1 = jax.random.normal(next(ks), (C_HALF, C_FEAT, 3), jnp.float32) * 0.05
        w2 = jax.random.normal(next(ks), (C_HALF, C_FEAT, 3), jnp.float32) * 0.05
        return {"w": jnp.concatenate([w1, w2], axis=0),          # (Cout, Cin, 3)
                "b": jnp.zeros((C_FEAT,), jnp.float32)}

    params = {
        "skip_tsse": [tsse_params() for _ in range(SKIP_DS_LAYER)],
        "py_tsse": [tsse_params() for _ in range(LAYER_NUM)],
        "py_lsre": [{"w": jax.random.normal(next(ks), (C_FEAT, C_FEAT), jnp.float32) * 0.05,
                     "b": jnp.zeros((C_FEAT,), jnp.float32)} for _ in range(LAYER_NUM)],
    }
    params["pred_head"] = {
        "w_shared": jax.random.normal(next(ks), (C_FEAT, C_FEAT, 3), jnp.float32) * 0.05,
        "b_shared": jnp.zeros((C_FEAT,), jnp.float32),
        "w_loc": jax.random.normal(next(ks), (2, C_FEAT, 3), jnp.float32) * 0.05,
        "b_loc": jnp.zeros((2,), jnp.float32),
        "w_conf": jax.random.normal(next(ks), (NUM_CLASSES, C_FEAT, 3), jnp.float32) * 0.05,
        "b_conf": jnp.zeros((NUM_CLASSES,), jnp.float32),
    }
    params["loc_scales"] = [jnp.float32(1.0) for _ in range(LAYER_NUM)]   # ScaleExp init

    params["priors"] = []
    t = PRIORS
    for _ in range(LAYER_NUM):
        params["priors"].append(((jnp.arange(t) + 0.5) / t).astype(jnp.float32).reshape(-1, 1))
        t //= 2
    return params


def pack_params(raw):
    bf16, f32 = jnp.bfloat16, jnp.float32

    def pack_skip(p):
        w = p["w"]                                                 # (Cout, Cin, 3)
        taps = [w[:, :, k].T.astype(bf16) for k in range(3)]       # (Cin, Cout)
        return {"wc": jnp.concatenate([taps[1], taps[2]], axis=0),
                "wp": taps[0],
                "b": p["b"].astype(f32).reshape(1, -1)}

    pk = {"skip_tsse": [pack_skip(p) for p in raw["skip_tsse"]]}

    # pyramid-tail fused kernel params (all levels stacked & resident)
    wt = jnp.stack([jnp.stack([raw["py_tsse"][l]["w"][:, :, k].T for k in range(3)])
                    for l in range(LAYER_NUM)]).astype(bf16)                   # (L,3,C,C)
    bt = jnp.stack([raw["py_tsse"][l]["b"].reshape(1, -1)
                    for l in range(LAYER_NUM)]).astype(f32)                    # (L,1,C)
    wl = jnp.stack([raw["py_lsre"][l]["w"] for l in range(LAYER_NUM)]).astype(bf16)
    bl = jnp.stack([raw["py_lsre"][l]["b"].reshape(1, -1)
                    for l in range(LAYER_NUM)]).astype(f32)

    ph = raw["pred_head"]
    wsh = jnp.stack([ph["w_shared"][:, :, k].T for k in range(3)]).astype(bf16)   # (3,C,C)
    bsh = ph["b_shared"].astype(f32).reshape(1, -1)

    def head_tap(k):
        w = jnp.concatenate([ph["w_loc"][:, :, k].T, ph["w_conf"][:, :, k].T], axis=1)
        return jnp.pad(w, ((0, 0), (0, HEAD_WIDTH - w.shape[1])))
    wh = jnp.stack([head_tap(k) for k in range(3)]).astype(bf16)                  # (3,C,128)
    bh = jnp.pad(jnp.concatenate([ph["b_loc"], ph["b_conf"]]),
                 (0, HEAD_WIDTH - 2 - NUM_CLASSES)).astype(f32).reshape(1, -1)

    row = jnp.arange(LP_PAD)[:, None]
    mask = jnp.zeros((LP_PAD, 1), f32)
    scale = jnp.ones((LP_PAD, 1), f32)
    for i in range(LAYER_NUM):
        sel = (row >= OFFS[i]) & (row < OFFS[i] + LENS[i])
        mask = jnp.where(sel, 1.0, mask)
        scale = jnp.where(sel, raw["loc_scales"][i], scale)

    pk["tail"] = {"wt": wt, "bt": bt, "wl": wl, "bl": bl,
                  "wsh": wsh, "bsh": bsh, "wh": wh, "bh": bh,
                  "mask": mask, "scale": scale}
    pk["priors"] = jnp.concatenate(raw["priors"], axis=0)[None]                   # (1,total,1)
    return pk


# =============================================================================
# pure-JAX reference (same bf16 storage / f32 accumulation policy)
# =============================================================================
def _ref_conv3(x, w, b, stride):
    xf = x.astype(jnp.float32)
    taps = [w[:, :, k].T.astype(jnp.bfloat16).astype(jnp.float32) for k in range(3)]
    xp = jnp.pad(xf, ((0, 0), (1, 1), (0, 0)))
    t_out = (x.shape[1] + 2 - 3) // stride + 1
    idx = jnp.arange(t_out) * stride
    y = sum(jnp.einsum("btc,cd->btd", xp[:, idx + k, :], taps[k],
                       precision=lax.Precision.HIGHEST) for k in range(3))
    return y + b.astype(jnp.float32)


def reference_forward(embedd, raw):
    bf16 = jnp.bfloat16
    x = embedd.astype(bf16)
    deep = x
    global_feat = x
    for p in raw["skip_tsse"]:
        deep = jnp.maximum(_ref_conv3(deep, p["w"], p["b"], 2), 0.0).astype(bf16)
    deep_feats = []
    for i in range(LAYER_NUM):
        p = raw["py_tsse"][i]
        deep = jnp.maximum(_ref_conv3(deep, p["w"], p["b"], 2), 0.0).astype(bf16)
        deep_feats.append(deep)
    gpools = pool_global(global_feat)
    out_feats = []
    for i in range(LAYER_NUM):
        lp = raw["py_lsre"][i]
        up = jnp.repeat(deep_feats[i], 2, axis=1).astype(jnp.float32)
        fused = (up + gpools[i].astype(jnp.float32)).astype(bf16)
        w = lp["w"].astype(bf16).astype(jnp.float32)
        y = jnp.einsum("blc,cd->bld", fused.astype(jnp.float32), w,
                       precision=lax.Precision.HIGHEST) + lp["b"]
        out_feats.append(jnp.maximum(y, 0.0).astype(bf16))
    ph = raw["pred_head"]
    locs, confs = [], []
    for i, feat in enumerate(out_feats):
        h = jnp.maximum(_ref_conv3(feat, ph["w_shared"], ph["b_shared"], 1), 0.0).astype(bf16)
        loc_logit = _ref_conv3(h, ph["w_loc"], ph["b_loc"], 1)
        conf_logit = _ref_conv3(h, ph["w_conf"], ph["b_conf"], 1)
        locs.append(jnp.exp(raw["loc_scales"][i] * loc_logit))
        confs.append(conf_logit)
    loc = jnp.concatenate(locs, axis=1)
    conf = jnp.concatenate(confs, axis=1)
    priors = jnp.concatenate(raw["priors"], axis=0)[None]
    return loc, conf, priors


if __name__ == "__main__":
    key = jax.random.PRNGKey(0)
    pkey, xkey = jax.random.split(key)
    raw = init_params(pkey)
    packed = pack_params(raw)

    # PyTorch embedd is NCW (B, 512, 2048); here channel-last (B, T, C) = (2, 256, 128)
    embedd = jax.random.normal(xkey, (BATCH, T_IN, C_FEAT), jnp.float32)

    loc, conf, priors = jax.jit(pyramid_detection_forward)(embedd, packed)
    jax.block_until_ready((loc, conf, priors))

    total = sum(LENS)
    assert loc.shape == (BATCH, total, 2)
    assert conf.shape == (BATCH, total, NUM_CLASSES)
    assert priors.shape == (1, total, 1)

    # sanity check vs. a pure-JAX reference using the same dtype policy
    loc_r, conf_r, priors_r = jax.jit(reference_forward)(embedd, raw)
    assert jnp.allclose(loc, loc_r, atol=3e-2, rtol=3e-2), float(jnp.max(jnp.abs(loc - loc_r)))
    assert jnp.allclose(conf, conf_r, atol=3e-2, rtol=3e-2), float(jnp.max(jnp.abs(conf - conf_r)))
    assert jnp.allclose(priors, priors_r)

    print("KERNEL_OK")
</pallas_src>

<mosaic_0001>
module attributes {stable_mosaic.version = 11 : i64} {
  func.func @_tsse_conv_kernel(%arg0: i32, %arg1: memref<256x256xbf16, #tpu.memory_space<vmem>>, %arg2: memref<1x1x128xbf16, #tpu.memory_space<vmem>>, %arg3: memref<256x128xbf16, #tpu.memory_space<vmem>>, %arg4: memref<128x128xbf16, #tpu.memory_space<vmem>>, %arg5: memref<1x128xf32, #tpu.memory_space<vmem>>, %arg6: memref<256x128xbf16, #tpu.memory_space<vmem>>) attributes {dimension_semantics = [#tpu.dimension_semantics<parallel>], iteration_bounds = array<i64: 1>, scalar_prefetch = 0 : i64, scratch_operands = 0 : i64, tpu.core_type = #tpu.core_type<tc>, window_params = [{transform_indices = @transform_0, window_bounds = array<i64: 256, 256>}, {transform_indices = @transform_1, window_bounds = array<i64: 1, 1, 128>}, {pipeline_mode = #tpu.pipeline_mode<synchronous>, transform_indices = @transform_2, window_bounds = array<i64: 256, 128>}, {pipeline_mode = #tpu.pipeline_mode<synchronous>, transform_indices = @transform_3, window_bounds = array<i64: 128, 128>}, {pipeline_mode = #tpu.pipeline_mode<synchronous>, transform_indices = @transform_4, window_bounds = array<i64: 1, 128>}, {transform_indices = @transform_5, window_bounds = array<i64: 256, 128>}]} {
    %c0 = arith.constant 0 : index
    %c0_0 = arith.constant 0 : index
    %0 = vector.load %arg1[%c0, %c0_0] : memref<256x256xbf16, #tpu.memory_space<vmem>>, vector<256x256xbf16>
    %1 = vector.extract_strided_slice %0 {offsets = [0, 128], sizes = [256, 128], strides = [1, 1]} : vector<256x256xbf16> to vector<256x128xbf16>
    %2 = arith.extf %1 : vector<256x128xbf16> to vector<256x128xf32>
    %c1_i32 = arith.constant 1 : i32
    %3 = tpu.dynamic_rotate %2 by %c1_i32 dim 0 : vector<256x128xf32>, i32 -> vector<256x128xf32>
    %4 = tpu.iota {dimensions = array<i32: 0>} : vector<256x1xi32>
    %c0_i32 = arith.constant 0 : i32
    %5 = vector.broadcast %c0_i32 : i32 to vector<256x1xi32>
    %6 = arith.cmpi eq, %4, %5 : vector<256x1xi32>
    %c0_1 = arith.constant 0 : index
    %c0_2 = arith.constant 0 : index
    %c0_3 = arith.constant 0 : index
    %7 = vector.load %arg2[%c0_1, %c0_2, %c0_3] : memref<1x1x128xbf16, #tpu.memory_space<vmem>>, vector<1x1x128xbf16>
    %8 = vector.shape_cast %7 : vector<1x1x128xbf16> to vector<1x128xbf16>
    %9 = arith.extf %8 : vector<1x128xbf16> to vector<1x128xf32>
    %10 = vector.shape_cast %6 : vector<256x1xi1> to vector<256x1xi1>
    %11 = vector.broadcast %10 : vector<256x1xi1> to vector<256x128xi1>
    %12 = vector.shape_cast %9 : vector<1x128xf32> to vector<1x128xf32>
    %13 = vector.broadcast %12 : vector<1x128xf32> to vector<256x128xf32>
    %14 = arith.select %11, %13, %3 : vector<256x128xi1>, vector<256x128xf32>
    %c256_i32 = arith.constant 256 : i32
    %15 = arith.muli %arg0, %c256_i32 : i32
    %16 = vector.broadcast %15 : i32 to vector<256x1xi32>
    %17 = arith.addi %4, %16 : vector<256x1xi32>
    %c127_i32 = arith.constant 127 : i32
    %18 = vector.broadcast %c127_i32 : i32 to vector<256x1xi32>
    %19 = arith.andi %17, %18 : vector<256x1xi32>
    %c0_i32_4 = arith.constant 0 : i32
    %20 = vector.broadcast %c0_i32_4 : i32 to vector<256x1xi32>
    %21 = arith.cmpi eq, %19, %20 : vector<256x1xi32>
    %cst = arith.constant 0.000000e+00 : f32
    %22 = vector.shape_cast %21 : vector<256x1xi1> to vector<256x1xi1>
    %23 = vector.broadcast %22 : vector<256x1xi1> to vector<256x128xi1>
    %24 = vector.broadcast %cst : f32 to vector<256x128xf32>
    %25 = arith.select %23, %24, %14 : vector<256x128xi1>, vector<256x128xf32>
    %c0_5 = arith.constant 0 : index
    %c0_6 = arith.constant 0 : index
    %26 = vector.load %arg3[%c0_5, %c0_6] : memref<256x128xbf16, #tpu.memory_space<vmem>>, vector<256x128xbf16>
    %cst_7 = arith.constant dense<0.000000e+00> : vector<256x128xf32>
    %27 = tpu.matmul %0, %26, %cst_7 {dimension_numbers = #tpu.dot_dimension_numbers<[1], [0], [0], [1], [0, 0, 1, 1], [], []>} : vector<256x256xbf16>, vector<256x128xbf16>, vector<256x128xf32> -> vector<256x128xf32>
    %28 = arith.truncf %25 : vector<256x128xf32> to vector<256x128xbf16>
    %c0_8 = arith.constant 0 : index
    %c0_9 = arith.constant 0 : index
    %29 = vector.load %arg4[%c0_8, %c0_9] : memref<128x128xbf16, #tpu.memory_space<vmem>>, vector<128x128xbf16>
    %cst_10 = arith.constant dense<0.000000e+00> : vector<256x128xf32>
    %30 = tpu.matmul %28, %29, %cst_10 {dimension_numbers = #tpu.dot_dimension_numbers<[1], [0], [0], [1], [0, 0, 1, 1], [], []>} : vector<256x128xbf16>, vector<128x128xbf16>, vector<256x128xf32> -> vector<256x128xf32>
    %31 = arith.addf %27, %30 : vector<256x128xf32>
    %c0_11 = arith.constant 0 : index
    %c0_12 = arith.constant 0 : index
    %32 = vector.load %arg5[%c0_11, %c0_12] : memref<1x128xf32, #tpu.memory_space<vmem>>, vector<1x128xf32>
    %33 = vector.broadcast %32 : vector<1x128xf32> to vector<256x128xf32>
    %34 = arith.addf %31, %33 : vector<256x128xf32>
    %cst_13 = arith.constant 0.000000e+00 : f32
    %35 = vector.broadcast %cst_13 : f32 to vector<256x128xf32>
    %36 = arith.maximumf %34, %35 : vector<256x128xf32>
    %37 = arith.truncf %36 : vector<256x128xf32> to vector<256x128xbf16>
    %c0_14 = arith.constant 0 : index
    %c0_15 = arith.constant 0 : index
    %38 = vector.load %arg6[%c0_14, %c0_15] : memref<256x128xbf16, #tpu.memory_space<vmem>>, vector<256x128xbf16>
    tpu.vector_store %arg6[%c0_14, %c0_15], %37 {strides = array<i32>} : memref<256x128xbf16, #tpu.memory_space<vmem>>, vector<256x128xbf16>,
    return
  }
  func.func @transform_0(%arg0: i32) -> (i32, i32) {
    %c0_i32 = arith.constant 0 : i32
    %c0_i32_0 = arith.constant 0 : i32
    return %arg0, %c0_i32 : i32, i32
  }
  func.func @transform_1(%arg0: i32) -> (i32, i32, i32) {
    %c0_i32 = arith.constant 0 : i32
    %c0_i32_0 = arith.constant 0 : i32
    %c0_i32_1 = arith.constant 0 : i32
    return %arg0, %c0_i32, %c0_i32_0 : i32, i32, i32
  }
  func.func @transform_2(%arg0: i32) -> (i32, i32) {
    %c0_i32 = arith.constant 0 : i32
    %c0_i32_0 = arith.constant 0 : i32
    %c0_i32_1 = arith.constant 0 : i32
    return %c0_i32, %c0_i32_0 : i32, i32
  }
  func.func @transform_3(%arg0: i32) -> (i32, i32) {
    %c0_i32 = arith.constant 0 : i32
    %c0_i32_0 = arith.constant 0 : i32
    %c0_i32_1 = arith.constant 0 : i32
    return %c0_i32, %c0_i32_0 : i32, i32
  }
  func.func @transform_4(%arg0: i32) -> (i32, i32) {
    %c0_i32 = arith.constant 0 : i32
    %c0_i32_0 = arith.constant 0 : i32
    %c0_i32_1 = arith.constant 0 : i32
    return %c0_i32, %c0_i32_0 : i32, i32
  }
  func.func @transform_5(%arg0: i32) -> (i32, i32) {
    %c0_i32 = arith.constant 0 : i32
    %c0_i32_0 = arith.constant 0 : i32
    return %arg0, %c0_i32 : i32, i32
  }
}

module attributes {stable_mosaic.version = 11 : i64} {
  func.func @_tsse_conv_kernel(%arg0: i32, %arg1: memref<128x256xbf16, #tpu.memory_space<vmem>>, %arg2: memref<1x1x128xbf16, #tpu.memory_space<vmem>>, %arg3: memref<256x128xbf16, #tpu.memory_space<vmem>>, %arg4: memref<128x128xbf16, #tpu.memory_space<vmem>>, %arg5: memref<1x128xf32, #tpu.memory_space<vmem>>, %arg6: memref<128x128xbf16, #tpu.memory_space<vmem>>) attributes {dimension_semantics = [#tpu.dimension_semantics<parallel>], iteration_bounds = array<i64: 1>, scalar_prefetch = 0 : i64, scratch_operands = 0 : i64, tpu.core_type = #tpu.core_type<tc>, window_params = [{transform_indices = @transform_0, window_bounds = array<i64: 128, 256>}, {transform_indices = @transform_1, window_bounds = array<i64: 1, 1, 128>}, {pipeline_mode = #tpu.pipeline_mode<synchronous>, transform_indices = @transform_2, window_bounds = array<i64: 256, 128>}, {pipeline_mode = #tpu.pipeline_mode<synchronous>, transform_indices = @transform_3, window_bounds = array<i64: 128, 128>}, {pipeline_mode = #tpu.pipeline_mode<synchronous>, transform_indices = @transform_4, window_bounds = array<i64: 1, 128>}, {transform_indices = @transform_5, window_bounds = array<i64: 128, 128>}]} {
    %c0 = arith.constant 0 : index
    %c0_0 = arith.constant 0 : index
    %0 = vector.load %arg1[%c0, %c0_0] : memref<128x256xbf16, #tpu.memory_space<vmem>>, vector<128x256xbf16>
    %1 = vector.extract_strided_slice %0 {offsets = [0, 128], sizes = [128, 128], strides = [1, 1]} : vector<128x256xbf16> to vector<128x128xbf16>
    %2 = arith.extf %1 : vector<128x128xbf16> to vector<128x128xf32>
    %c1_i32 = arith.constant 1 : i32
    %3 = tpu.dynamic_rotate %2 by %c1_i32 dim 0 : vector<128x128xf32>, i32 -> vector<128x128xf32>
    %4 = tpu.iota {dimensions = array<i32: 0>} : vector<128x1xi32>
    %c0_i32 = arith.constant 0 : i32
    %5 = vector.broadcast %c0_i32 : i32 to vector<128x1xi32>
    %6 = arith.cmpi eq, %4, %5 : vector<128x1xi32>
    %c0_1 = arith.constant 0 : index
    %c0_2 = arith.constant 0 : index
    %c0_3 = arith.constant 0 : index
    %7 = vector.load %arg2[%c0_1, %c0_2, %c0_3] : memref<1x1x128xbf16, #tpu.memory_space<vmem>>, vector<1x1x128xbf16>
    %8 = vector.shape_cast %7 : vector<1x1x128xbf16> to vector<1x128xbf16>
    %9 = arith.extf %8 : vector<1x128xbf16> to vector<1x128xf32>
    %10 = vector.shape_cast %6 : vector<128x1xi1> to vector<128x1xi1>
    %11 = vector.broadcast %10 : vector<128x1xi1> to vector<128x128xi1>
    %12 = vector.shape_cast %9 : vector<1x128xf32> to vector<1x128xf32>
    %13 = vector.broadcast %12 : vector<1x128xf32> to vector<128x128xf32>
    %14 = arith.select %11, %13, %3 : vector<128x128xi1>, vector<128x128xf32>
    %c128_i32 = arith.constant 128 : i32
    %15 = arith.muli %arg0, %c128_i32 : i32
    %16 = vector.broadcast %15 : i32 to vector<128x1xi32>
    %17 = arith.addi %4, %16 : vector<128x1xi32>
    %c63_i32 = arith.constant 63 : i32
    %18 = vector.broadcast %c63_i32 : i32 to vector<128x1xi32>
    %19 = arith.andi %17, %18 : vector<128x1xi32>
    %c0_i32_4 = arith.constant 0 : i32
    %20 = vector.broadcast %c0_i32_4 : i32 to vector<128x1xi32>
    %21 = arith.cmpi eq, %19, %20 : vector<128x1xi32>
    %cst = arith.constant 0.000000e+00 : f32
    %22 = vector.shape_cast %21 : vector<128x1xi1> to vector<128x1xi1>
    %23 = vector.broadcast %22 : vector<128x1xi1> to vector<128x128xi1>
    %24 = vector.broadcast %cst : f32 to vector<128x128xf32>
    %25 = arith.select %23, %24, %14 : vector<128x128xi1>, vector<128x128xf32>
    %c0_5 = arith.constant 0 : index
    %c0_6 = arith.constant 0 : index
    %26 = vector.load %arg3[%c0_5, %c0_6] : memref<256x128xbf16, #tpu.memory_space<vmem>>, vector<256x128xbf16>
    %cst_7 = arith.constant dense<0.000000e+00> : vector<128x128xf32>
    %27 = tpu.matmul %0, %26, %cst_7 {dimension_numbers = #tpu.dot_dimension_numbers<[1], [0], [0], [1], [0, 0, 1, 1], [], []>} : vector<128x256xbf16>, vector<256x128xbf16>, vector<128x128xf32> -> vector<128x128xf32>
    %28 = arith.truncf %25 : vector<128x128xf32> to vector<128x128xbf16>
    %c0_8 = arith.constant 0 : index
    %c0_9 = arith.constant 0 : index
    %29 = vector.load %arg4[%c0_8, %c0_9] : memref<128x128xbf16, #tpu.memory_space<vmem>>, vector<128x128xbf16>
    %cst_10 = arith.constant dense<0.000000e+00> : vector<128x128xf32>
    %30 = tpu.matmul %28, %29, %cst_10 {dimension_numbers = #tpu.dot_dimension_numbers<[1], [0], [0], [1], [0, 0, 1, 1], [], []>} : vector<128x128xbf16>, vector<128x128xbf16>, vector<128x128xf32> -> vector<128x128xf32>
    %31 = arith.addf %27, %30 : vector<128x128xf32>
    %c0_11 = arith.constant 0 : index
    %c0_12 = arith.constant 0 : index
    %32 = vector.load %arg5[%c0_11, %c0_12] : memref<1x128xf32, #tpu.memory_space<vmem>>, vector<1x128xf32>
    %33 = vector.broadcast %32 : vector<1x128xf32> to vector<128x128xf32>
    %34 = arith.addf %31, %33 : vector<128x128xf32>
    %cst_13 = arith.constant 0.000000e+00 : f32
    %35 = vector.broadcast %cst_13 : f32 to vector<128x128xf32>
    %36 = arith.maximumf %34, %35 : vector<128x128xf32>
    %37 = arith.truncf %36 : vector<128x128xf32> to vector<128x128xbf16>
    %c0_14 = arith.constant 0 : index
    %c0_15 = arith.constant 0 : index
    %38 = vector.load %arg6[%c0_14, %c0_15] : memref<128x128xbf16, #tpu.memory_space<vmem>>, vector<128x128xbf16>
    tpu.vector_store %arg6[%c0_14, %c0_15], %37 {strides = array<i32>} : memref<128x128xbf16, #tpu.memory_space<vmem>>, vector<128x128xbf16>,
    return
  }
  func.func @transform_0(%arg0: i32) -> (i32, i32) {
    %c0_i32 = arith.constant 0 : i32
    %c0_i32_0 = arith.constant 0 : i32
    return %arg0, %c0_i32 : i32, i32
  }
  func.func @transform_1(%arg0: i32) -> (i32, i32, i32) {
    %c0_i32 = arith.constant 0 : i32
    %c0_i32_0 = arith.constant 0 : i32
    %c0_i32_1 = arith.constant 0 : i32
    return %arg0, %c0_i32, %c0_i32_0 : i32, i32, i32
  }
  func.func @transform_2(%arg0: i32) -> (i32, i32) {
    %c0_i32 = arith.constant 0 : i32
    %c0_i32_0 = arith.constant 0 : i32
    %c0_i32_1 = arith.constant 0 : i32
    return %c0_i32, %c0_i32_0 : i32, i32
  }
  func.func @transform_3(%arg0: i32) -> (i32, i32) {
    %c0_i32 = arith.constant 0 : i32
    %c0_i32_0 = arith.constant 0 : i32
    %c0_i32_1 = arith.constant 0 : i32
    return %c0_i32, %c0_i32_0 : i32, i32
  }
  func.func @transform_4(%arg0: i32) -> (i32, i32) {
    %c0_i32 = arith.constant 0 : i32
    %c0_i32_0 = arith.constant 0 : i32
    %c0_i32_1 = arith.constant 0 : i32
    return %c0_i32, %c0_i32_0 : i32, i32
  }
  func.func @transform_5(%arg0: i32) -> (i32, i32) {
    %c0_i32 = arith.constant 0 : i32
    %c0_i32_0 = arith.constant 0 : i32
    return %arg0, %c0_i32 : i32, i32
  }
}

module attributes {stable_mosaic.version = 11 : i64} {
  func.func @_tsse_conv_kernel(%arg0: i32, %arg1: memref<64x256xbf16, #tpu.memory_space<vmem>>, %arg2: memref<1x1x128xbf16, #tpu.memory_space<vmem>>, %arg3: memref<256x128xbf16, #tpu.memory_space<vmem>>, %arg4: memref<128x128xbf16, #tpu.memory_space<vmem>>, %arg5: memref<1x128xf32, #tpu.memory_space<vmem>>, %arg6: memref<64x128xbf16, #tpu.memory_space<vmem>>) attributes {dimension_semantics = [#tpu.dimension_semantics<parallel>], iteration_bounds = array<i64: 1>, scalar_prefetch = 0 : i64, scratch_operands = 0 : i64, tpu.core_type = #tpu.core_type<tc>, window_params = [{transform_indices = @transform_0, window_bounds = array<i64: 64, 256>}, {transform_indices = @transform_1, window_bounds = array<i64: 1, 1, 128>}, {pipeline_mode = #tpu.pipeline_mode<synchronous>, transform_indices = @transform_2, window_bounds = array<i64: 256, 128>}, {pipeline_mode = #tpu.pipeline_mode<synchronous>, transform_indices = @transform_3, window_bounds = array<i64: 128, 128>}, {pipeline_mode = #tpu.pipeline_mode<synchronous>, transform_indices = @transform_4, window_bounds = array<i64: 1, 128>}, {transform_indices = @transform_5, window_bounds = array<i64: 64, 128>}]} {
    %c0 = arith.constant 0 : index
    %c0_0 = arith.constant 0 : index
    %0 = vector.load %arg1[%c0, %c0_0] : memref<64x256xbf16, #tpu.memory_space<vmem>>, vector<64x256xbf16>
    %1 = vector.extract_strided_slice %0 {offsets = [0, 128], sizes = [64, 128], strides = [1, 1]} : vector<64x256xbf16> to vector<64x128xbf16>
    %2 = arith.extf %1 : vector<64x128xbf16> to vector<64x128xf32>
    %c1_i32 = arith.constant 1 : i32
    %3 = tpu.dynamic_rotate %2 by %c1_i32 dim 0 : vector<64x128xf32>, i32 -> vector<64x128xf32>
    %4 = tpu.iota {dimensions = array<i32: 0>} : vector<64x1xi32>
    %c0_i32 = arith.constant 0 : i32
    %5 = vector.broadcast %c0_i32 : i32 to vector<64x1xi32>
    %6 = arith.cmpi eq, %4, %5 : vector<64x1xi32>
    %c0_1 = arith.constant 0 : index
    %c0_2 = arith.constant 0 : index
    %c0_3 = arith.constant 0 : index
    %7 = vector.load %arg2[%c0_1, %c0_2, %c0_3] : memref<1x1x128xbf16, #tpu.memory_space<vmem>>, vector<1x1x128xbf16>
    %8 = vector.shape_cast %7 : vector<1x1x128xbf16> to vector<1x128xbf16>
    %9 = arith.extf %8 : vector<1x128xbf16> to vector<1x128xf32>
    %10 = vector.shape_cast %6 : vector<64x1xi1> to vector<64x1xi1>
    %11 = vector.broadcast %10 : vector<64x1xi1> to vector<64x128xi1>
    %12 = vector.shape_cast %9 : vector<1x128xf32> to vector<1x128xf32>
    %13 = vector.broadcast %12 : vector<1x128xf32> to vector<64x128xf32>
    %14 = arith.select %11, %13, %3 : vector<64x128xi1>, vector<64x128xf32>
    %c64_i32 = arith.constant 64 : i32
    %15 = arith.muli %arg0, %c64_i32 : i32
    %16 = vector.broadcast %15 : i32 to vector<64x1xi32>
    %17 = arith.addi %4, %16 : vector<64x1xi32>
    %c31_i32 = arith.constant 31 : i32
    %18 = vector.broadcast %c31_i32 : i32 to vector<64x1xi32>
    %19 = arith.andi %17, %18 : vector<64x1xi32>
    %c0_i32_4 = arith.constant 0 : i32
    %20 = vector.broadcast %c0_i32_4 : i32 to vector<64x1xi32>
    %21 = arith.cmpi eq, %19, %20 : vector<64x1xi32>
    %cst = arith.constant 0.000000e+00 : f32
    %22 = vector.shape_cast %21 : vector<64x1xi1> to vector<64x1xi1>
    %23 = vector.broadcast %22 : vector<64x1xi1> to vector<64x128xi1>
    %24 = vector.broadcast %cst : f32 to vector<64x128xf32>
    %25 = arith.select %23, %24, %14 : vector<64x128xi1>, vector<64x128xf32>
    %c0_5 = arith.constant 0 : index
    %c0_6 = arith.constant 0 : index
    %26 = vector.load %arg3[%c0_5, %c0_6] : memref<256x128xbf16, #tpu.memory_space<vmem>>, vector<256x128xbf16>
    %cst_7 = arith.constant dense<0.000000e+00> : vector<64x128xf32>
    %27 = tpu.matmul %0, %26, %cst_7 {dimension_numbers = #tpu.dot_dimension_numbers<[1], [0], [0], [1], [0, 0, 1, 1], [], []>} : vector<64x256xbf16>, vector<256x128xbf16>, vector<64x128xf32> -> vector<64x128xf32>
    %28 = arith.truncf %25 : vector<64x128xf32> to vector<64x128xbf16>
    %c0_8 = arith.constant 0 : index
    %c0_9 = arith.constant 0 : index
    %29 = vector.load %arg4[%c0_8, %c0_9] : memref<128x128xbf16, #tpu.memory_space<vmem>>, vector<128x128xbf16>
    %cst_10 = arith.constant dense<0.000000e+00> : vector<64x128xf32>
    %30 = tpu.matmul %28, %29, %cst_10 {dimension_numbers = #tpu.dot_dimension_numbers<[1], [0], [0], [1], [0, 0, 1, 1], [], []>} : vector<64x128xbf16>, vector<128x128xbf16>, vector<64x128xf32> -> vector<64x128xf32>
    %31 = arith.addf %27, %30 : vector<64x128xf32>
    %c0_11 = arith.constant 0 : index
    %c0_12 = arith.constant 0 : index
    %32 = vector.load %arg5[%c0_11, %c0_12] : memref<1x128xf32, #tpu.memory_space<vmem>>, vector<1x128xf32>
    %33 = vector.broadcast %32 : vector<1x128xf32> to vector<64x128xf32>
    %34 = arith.addf %31, %33 : vector<64x128xf32>
    %cst_13 = arith.constant 0.000000e+00 : f32
    %35 = vector.broadcast %cst_13 : f32 to vector<64x128xf32>
    %36 = arith.maximumf %34, %35 : vector<64x128xf32>
    %37 = arith.truncf %36 : vector<64x128xf32> to vector<64x128xbf16>
    %c0_14 = arith.constant 0 : index
    %c0_15 = arith.constant 0 : index
    %38 = vector.load %arg6[%c0_14, %c0_15] : memref<64x128xbf16, #tpu.memory_space<vmem>>, vector<64x128xbf16>
    tpu.vector_store %arg6[%c0_14, %c0_15], %37 {strides = array<i32>} : memref<64x128xbf16, #tpu.memory_space<vmem>>, vector<64x128xbf16>,
    return
  }
  func.func @transform_0(%arg0: i32) -> (i32, i32) {
    %c0_i32 = arith.constant 0 : i32
    %c0_i32_0 = arith.constant 0 : i32
    return %arg0, %c0_i32 : i32, i32
  }
  func.func @transform_1(%arg0: i32) -> (i32, i32, i32) {
    %c0_i32 = arith.constant 0 : i32
    %c0_i32_0 = arith.constant 0 : i32
    %c0_i32_1 = arith.constant 0 : i32
    return %arg0, %c0_i32, %c0_i32_0 : i32, i32, i32
  }
  func.func @transform_2(%arg0: i32) -> (i32, i32) {
    %c0_i32 = arith.constant 0 : i32
    %c0_i32_0 = arith.constant 0 : i32
    %c0_i32_1 = arith.constant 0 : i32
    return %c0_i32, %c0_i32_0 : i32, i32
  }
  func.func @transform_3(%arg0: i32) -> (i32, i32) {
    %c0_i32 = arith.constant 0 : i32
    %c0_i32_0 = arith.constant 0 : i32
    %c0_i32_1 = arith.constant 0 : i32
    return %c0_i32, %c0_i32_0 : i32, i32
  }
  func.func @transform_4(%arg0: i32) -> (i32, i32) {
    %c0_i32 = arith.constant 0 : i32
    %c0_i32_0 = arith.constant 0 : i32
    %c0_i32_1 = arith.constant 0 : i32
    return %c0_i32, %c0_i32_0 : i32, i32
  }
  func.func @transform_5(%arg0: i32) -> (i32, i32) {
    %c0_i32 = arith.constant 0 : i32
    %c0_i32_0 = arith.constant 0 : i32
    return %arg0, %c0_i32 : i32, i32
  }
}

module attributes {stable_mosaic.version = 11 : i64} {
  func.func @_tsse_conv_kernel(%arg0: i32, %arg1: memref<32x256xbf16, #tpu.memory_space<vmem>>, %arg2: memref<1x1x128xbf16, #tpu.memory_space<vmem>>, %arg3: memref<256x128xbf16, #tpu.memory_space<vmem>>, %arg4: memref<128x128xbf16, #tpu.memory_space<vmem>>, %arg5: memref<1x128xf32, #tpu.memory_space<vmem>>, %arg6: memref<32x128xbf16, #tpu.memory_space<vmem>>) attributes {dimension_semantics = [#tpu.dimension_semantics<parallel>], iteration_bounds = array<i64: 1>, scalar_prefetch = 0 : i64, scratch_operands = 0 : i64, tpu.core_type = #tpu.core_type<tc>, window_params = [{transform_indices = @transform_0, window_bounds = array<i64: 32, 256>}, {transform_indices = @transform_1, window_bounds = array<i64: 1, 1, 128>}, {pipeline_mode = #tpu.pipeline_mode<synchronous>, transform_indices = @transform_2, window_bounds = array<i64: 256, 128>}, {pipeline_mode = #tpu.pipeline_mode<synchronous>, transform_indices = @transform_3, window_bounds = array<i64: 128, 128>}, {pipeline_mode = #tpu.pipeline_mode<synchronous>, transform_indices = @transform_4, window_bounds = array<i64: 1, 128>}, {transform_indices = @transform_5, window_bounds = array<i64: 32, 128>}]} {
    %c0 = arith.constant 0 : index
    %c0_0 = arith.constant 0 : index
    %0 = vector.load %arg1[%c0, %c0_0] : memref<32x256xbf16, #tpu.memory_space<vmem>>, vector<32x256xbf16>
    %1 = vector.extract_strided_slice %0 {offsets = [0, 128], sizes = [32, 128], strides = [1, 1]} : vector<32x256xbf16> to vector<32x128xbf16>
    %2 = arith.extf %1 : vector<32x128xbf16> to vector<32x128xf32>
    %c1_i32 = arith.constant 1 : i32
    %3 = tpu.dynamic_rotate %2 by %c1_i32 dim 0 : vector<32x128xf32>, i32 -> vector<32x128xf32>
    %4 = tpu.iota {dimensions = array<i32: 0>} : vector<32x1xi32>
    %c0_i32 = arith.constant 0 : i32
    %5 = vector.broadcast %c0_i32 : i32 to vector<32x1xi32>
    %6 = arith.cmpi eq, %4, %5 : vector<32x1xi32>
    %c0_1 = arith.constant 0 : index
    %c0_2 = arith.constant 0 : index
    %c0_3 = arith.constant 0 : index
    %7 = vector.load %arg2[%c0_1, %c0_2, %c0_3] : memref<1x1x128xbf16, #tpu.memory_space<vmem>>, vector<1x1x128xbf16>
    %8 = vector.shape_cast %7 : vector<1x1x128xbf16> to vector<1x128xbf16>
    %9 = arith.extf %8 : vector<1x128xbf16> to vector<1x128xf32>
    %10 = vector.shape_cast %6 : vector<32x1xi1> to vector<32x1xi1>
    %11 = vector.broadcast %10 : vector<32x1xi1> to vector<32x128xi1>
    %12 = vector.shape_cast %9 : vector<1x128xf32> to vector<1x128xf32>
    %13 = vector.broadcast %12 : vector<1x128xf32> to vector<32x128xf32>
    %14 = arith.select %11, %13, %3 : vector<32x128xi1>, vector<32x128xf32>
    %c32_i32 = arith.constant 32 : i32
    %15 = arith.muli %arg0, %c32_i32 : i32
    %16 = vector.broadcast %15 : i32 to vector<32x1xi32>
    %17 = arith.addi %4, %16 : vector<32x1xi32>
    %c15_i32 = arith.constant 15 : i32
    %18 = vector.broadcast %c15_i32 : i32 to vector<32x1xi32>
    %19 = arith.andi %17, %18 : vector<32x1xi32>
    %c0_i32_4 = arith.constant 0 : i32
    %20 = vector.broadcast %c0_i32_4 : i32 to vector<32x1xi32>
    %21 = arith.cmpi eq, %19, %20 : vector<32x1xi32>
    %cst = arith.constant 0.000000e+00 : f32
    %22 = vector.shape_cast %21 : vector<32x1xi1> to vector<32x1xi1>
    %23 = vector.broadcast %22 : vector<32x1xi1> to vector<32x128xi1>
    %24 = vector.broadcast %cst : f32 to vector<32x128xf32>
    %25 = arith.select %23, %24, %14 : vector<32x128xi1>, vector<32x128xf32>
    %c0_5 = arith.constant 0 : index
    %c0_6 = arith.constant 0 : index
    %26 = vector.load %arg3[%c0_5, %c0_6] : memref<256x128xbf16, #tpu.memory_space<vmem>>, vector<256x128xbf16>
    %cst_7 = arith.constant dense<0.000000e+00> : vector<32x128xf32>
    %27 = tpu.matmul %0, %26, %cst_7 {dimension_numbers = #tpu.dot_dimension_numbers<[1], [0], [0], [1], [0, 0, 1, 1], [], []>} : vector<32x256xbf16>, vector<256x128xbf16>, vector<32x128xf32> -> vector<32x128xf32>
    %28 = arith.truncf %25 : vector<32x128xf32> to vector<32x128xbf16>
    %c0_8 = arith.constant 0 : index
    %c0_9 = arith.constant 0 : index
    %29 = vector.load %arg4[%c0_8, %c0_9] : memref<128x128xbf16, #tpu.memory_space<vmem>>, vector<128x128xbf16>
    %cst_10 = arith.constant dense<0.000000e+00> : vector<32x128xf32>
    %30 = tpu.matmul %28, %29, %cst_10 {dimension_numbers = #tpu.dot_dimension_numbers<[1], [0], [0], [1], [0, 0, 1, 1], [], []>} : vector<32x128xbf16>, vector<128x128xbf16>, vector<32x128xf32> -> vector<32x128xf32>
    %31 = arith.addf %27, %30 : vector<32x128xf32>
    %c0_11 = arith.constant 0 : index
    %c0_12 = arith.constant 0 : index
    %32 = vector.load %arg5[%c0_11, %c0_12] : memref<1x128xf32, #tpu.memory_space<vmem>>, vector<1x128xf32>
    %33 = vector.broadcast %32 : vector<1x128xf32> to vector<32x128xf32>
    %34 = arith.addf %31, %33 : vector<32x128xf32>
    %cst_13 = arith.constant 0.000000e+00 : f32
    %35 = vector.broadcast %cst_13 : f32 to vector<32x128xf32>
    %36 = arith.maximumf %34, %35 : vector<32x128xf32>
    %37 = arith.truncf %36 : vector<32x128xf32> to vector<32x128xbf16>
    %c0_14 = arith.constant 0 : index
    %c0_15 = arith.constant 0 : index
    %38 = vector.load %arg6[%c0_14, %c0_15] : memref<32x128xbf16, #tpu.memory_space<vmem>>, vector<32x128xbf16>
    tpu.vector_store %arg6[%c0_14, %c0_15], %37 {strides = array<i32>} : memref<32x128xbf16, #tpu.memory_space<vmem>>, vector<32x128xbf16>,
    return
  }
  func.func @transform_0(%arg0: i32) -> (i32, i32) {
    %c0_i32 = arith.constant 0 : i32
    %c0_i32_0 = arith.constant 0 : i32
    return %arg0, %c0_i32 : i32, i32
  }
  func.func @transform_1(%arg0: i32) -> (i32, i32, i32) {
    %c0_i32 = arith.constant 0 : i32
    %c0_i32_0 = arith.constant 0 : i32
    %c0_i32_1 = arith.constant 0 : i32
    return %arg0, %c0_i32, %c0_i32_0 : i32, i32, i32
  }
  func.func @transform_2(%arg0: i32) -> (i32, i32) {
    %c0_i32 = arith.constant 0 : i32
    %c0_i32_0 = arith.constant 0 : i32
    %c0_i32_1 = arith.constant 0 : i32
    return %c0_i32, %c0_i32_0 : i32, i32
  }
  func.func @transform_3(%arg0: i32) -> (i32, i32) {
    %c0_i32 = arith.constant 0 : i32
    %c0_i32_0 = arith.constant 0 : i32
    %c0_i32_1 = arith.constant 0 : i32
    return %c0_i32, %c0_i32_0 : i32, i32
  }
  func.func @transform_4(%arg0: i32) -> (i32, i32) {
    %c0_i32 = arith.constant 0 : i32
    %c0_i32_0 = arith.constant 0 : i32
    %c0_i32_1 = arith.constant 0 : i32
    return %c0_i32, %c0_i32_0 : i32, i32
  }
  func.func @transform_5(%arg0: i32) -> (i32, i32) {
    %c0_i32 = arith.constant 0 : i32
    %c0_i32_0 = arith.constant 0 : i32
    return %arg0, %c0_i32 : i32, i32
  }
}

module attributes {stable_mosaic.version = 11 : i64} {
  func.func @_pyramid_tail_kernel(%arg0: i32, %arg1: memref<1x16x128xbf16, #tpu.memory_space<vmem>>, %arg2: memref<4x1x16x128xbf16, #tpu.memory_space<vmem>>, %arg3: memref<4x3x128x128xbf16, #tpu.memory_space<vmem>>, %arg4: memref<4x1x128xf32, #tpu.memory_space<vmem>>, %arg5: memref<4x128x128xbf16, #tpu.memory_space<vmem>>, %arg6: memref<4x1x128xf32, #tpu.memory_space<vmem>>, %arg7: memref<3x128x128xbf16, #tpu.memory_space<vmem>>, %arg8: memref<1x128xf32, #tpu.memory_space<vmem>>, %arg9: memref<3x128x128xbf16, #tpu.memory_space<vmem>>, %arg10: memref<1x128xf32, #tpu.memory_space<vmem>>, %arg11: memref<40x1xf32, #tpu.memory_space<vmem>>, %arg12: memref<40x1xf32, #tpu.memory_space<vmem>>, %arg13: memref<1x40x128xf32, #tpu.memory_space<vmem>>, %arg14: memref<40x128xf32, #tpu.memory_space<vmem>>) attributes {dimension_semantics = [#tpu.dimension_semantics<parallel>], iteration_bounds = array<i64: 2>, scalar_prefetch = 0 : i64, scratch_operands = 1 : i64, tpu.core_type = #tpu.core_type<tc>, window_params = [{transform_indices = @transform_0, window_bounds = array<i64: 1, 16, 128>}, {transform_indices = @transform_1, window_bounds = array<i64: 4, 1, 16, 128>}, {pipeline_mode = #tpu.pipeline_mode<synchronous>, transform_indices = @transform_2, window_bounds = array<i64: 4, 3, 128, 128>}, {pipeline_mode = #tpu.pipeline_mode<synchronous>, transform_indices = @transform_3, window_bounds = array<i64: 4, 1, 128>}, {pipeline_mode = #tpu.pipeline_mode<synchronous>, transform_indices = @transform_4, window_bounds = array<i64: 4, 128, 128>}, {pipeline_mode = #tpu.pipeline_mode<synchronous>, transform_indices = @transform_5, window_bounds = array<i64: 4, 1, 128>}, {pipeline_mode = #tpu.pipeline_mode<synchronous>, transform_indices = @transform_6, window_bounds = array<i64: 3, 128, 128>}, {pipeline_mode = #tpu.pipeline_mode<synchronous>, transform_indices = @transform_7, window_bounds = array<i64: 1, 128>}, {pipeline_mode = #tpu.pipeline_mode<synchronous>, transform_indices = @transform_8, window_bounds = array<i64: 3, 128, 128>}, {pipeline_mode = #tpu.pipeline_mode<synchronous>, transform_indices = @transform_9, window_bounds = array<i64: 1, 128>}, {pipeline_mode = #tpu.pipeline_mode<synchronous>, transform_indices = @transform_10, window_bounds = array<i64: 40, 1>}, {pipeline_mode = #tpu.pipeline_mode<synchronous>, transform_indices = @transform_11, window_bounds = array<i64: 40, 1>}, {transform_indices = @transform_12, window_bounds = array<i64: 1, 40, 128>}]} {
    %0 = tpu.iota {dimensions = array<i32: 0>} : vector<16x16xi32>
    %1 = tpu.iota {dimensions = array<i32: 1>} : vector<16x16xi32>
    %cst = arith.constant 0.000000e+00 : f32
    %2 = vector.broadcast %cst : f32 to vector<40x128xf32>
    %c0 = arith.constant 0 : index
    %c0_0 = arith.constant 0 : index
    %3 = vector.load %arg14[%c0, %c0_0] : memref<40x128xf32, #tpu.memory_space<vmem>>, vector<40x128xf32>
    tpu.vector_store %arg14[%c0, %c0_0], %2 {strides = array<i32>} : memref<40x128xf32, #tpu.memory_space<vmem>>, vector<40x128xf32>,
    %c0_1 = arith.constant 0 : index
    %c0_2 = arith.constant 0 : index
    %c0_3 = arith.constant 0 : index
    %4 = vector.load %arg1[%c0_1, %c0_2, %c0_3] : memref<1x16x128xbf16, #tpu.memory_space<vmem>>, vector<1x16x128xbf16>
    %5 = vector.shape_cast %4 : vector<1x16x128xbf16> to vector<16x128xbf16>
    %c0_4 = arith.constant 0 : index
    %c0_5 = arith.constant 0 : index
    %c0_6 = arith.constant 0 : index
    %6 = vector.load %arg4[%c0_4, %c0_5, %c0_6] : memref<4x1x128xf32, #tpu.memory_space<vmem>>, vector<1x1x128xf32>
    %7 = vector.shape_cast %6 : vector<1x1x128xf32> to vector<1x128xf32>
    %c2_i32 = arith.constant 2 : i32
    %8 = vector.broadcast %c2_i32 : i32 to vector<16x16xi32>
    %9 = arith.muli %8, %0 : vector<16x16xi32>
    %c-1_i32 = arith.constant -1 : i32
    %10 = vector.broadcast %c-1_i32 : i32 to vector<16x16xi32>
    %11 = arith.addi %9, %10 : vector<16x16xi32>
    %12 = arith.cmpi eq, %1, %11 : vector<16x16xi32>
    %c8_i32 = arith.constant 8 : i32
    %13 = vector.broadcast %c8_i32 : i32 to vector<16x16xi32>
    %14 = arith.cmpi slt, %0, %13 : vector<16x16xi32>
    %15 = arith.andi %12, %14 : vector<16x16xi1>
    %c16_i32 = arith.constant 16 : i32
    %16 = vector.broadcast %c16_i32 : i32 to vector<16x16xi32>
    %17 = arith.cmpi slt, %1, %16 : vector<16x16xi32>
    %18 = arith.andi %15, %17 : vector<16x16xi1>
    %cst_7 = arith.constant 1.000000e+00 : f32
    %cst_8 = arith.constant 0.000000e+00 : f32
    %19 = vector.broadcast %cst_7 : f32 to vector<16x16xf32>
    %20 = vector.broadcast %cst_8 : f32 to vector<16x16xf32>
    %21 = arith.select %18, %19, %20 : vector<16x16xi1>, vector<16x16xf32>
    %22 = arith.truncf %21 : vector<16x16xf32> to vector<16x16xbf16>
    %cst_9 = arith.constant dense<0.000000e+00> : vector<16x128xf32>
    %23 = tpu.matmul %22, %5, %cst_9 {dimension_numbers = #tpu.dot_dimension_numbers<[1], [0], [0], [1], [0, 0, 1, 1], [], []>} : vector<16x16xbf16>, vector<16x128xbf16>, vector<16x128xf32> -> vector<16x128xf32>
    %24 = arith.truncf %23 : vector<16x128xf32> to vector<16x128xbf16>
    %c0_10 = arith.constant 0 : index
    %c0_11 = arith.constant 0 : index
    %c0_12 = arith.constant 0 : index
    %c0_13 = arith.constant 0 : index
    %25 = vector.load %arg3[%c0_10, %c0_11, %c0_12, %c0_13] : memref<4x3x128x128xbf16, #tpu.memory_space<vmem>>, vector<1x1x128x128xbf16>
    %26 = vector.shape_cast %25 : vector<1x1x128x128xbf16> to vector<128x128xbf16>
    %cst_14 = arith.constant dense<0.000000e+00> : vector<16x128xf32>
    %27 = tpu.matmul %24, %26, %cst_14 {dimension_numbers = #tpu.dot_dimension_numbers<[1], [0], [0], [1], [0, 0, 1, 1], [], []>} : vector<16x128xbf16>, vector<128x128xbf16>, vector<16x128xf32> -> vector<16x128xf32>
    %28 = vector.broadcast %7 : vector<1x128xf32> to vector<16x128xf32>
    %29 = arith.addf %28, %27 : vector<16x128xf32>
    %c2_i32_15 = arith.constant 2 : i32
    %30 = vector.broadcast %c2_i32_15 : i32 to vector<16x16xi32>
    %31 = arith.muli %30, %0 : vector<16x16xi32>
    %c0_i32 = arith.constant 0 : i32
    %32 = vector.broadcast %c0_i32 : i32 to vector<16x16xi32>
    %33 = arith.addi %31, %32 : vector<16x16xi32>
    %34 = arith.cmpi eq, %1, %33 : vector<16x16xi32>
    %c8_i32_16 = arith.constant 8 : i32
    %35 = vector.broadcast %c8_i32_16 : i32 to vector<16x16xi32>
    %36 = arith.cmpi slt, %0, %35 : vector<16x16xi32>
    %37 = arith.andi %34, %36 : vector<16x16xi1>
    %c16_i32_17 = arith.constant 16 : i32
    %38 = vector.broadcast %c16_i32_17 : i32 to vector<16x16xi32>
    %39 = arith.cmpi slt, %1, %38 : vector<16x16xi32>
    %40 = arith.andi %37, %39 : vector<16x16xi1>
    %cst_18 = arith.constant 1.000000e+00 : f32
    %cst_19 = arith.constant 0.000000e+00 : f32
    %41 = vector.broadcast %cst_18 : f32 to vector<16x16xf32>
    %42 = vector.broadcast %cst_19 : f32 to vector<16x16xf32>
    %43 = arith.select %40, %41, %42 : vector<16x16xi1>, vector<16x16xf32>
    %44 = arith.truncf %43 : vector<16x16xf32> to vector<16x16xbf16>
    %cst_20 = arith.constant dense<0.000000e+00> : vector<16x128xf32>
    %45 = tpu.matmul %44, %5, %cst_20 {dimension_numbers = #tpu.dot_dimension_numbers<[1], [0], [0], [1], [0, 0, 1, 1], [], []>} : vector<16x16xbf16>, vector<16x128xbf16>, vector<16x128xf32> -> vector<16x128xf32>
    %46 = arith.truncf %45 : vector<16x128xf32> to vector<16x128xbf16>
    %c0_21 = arith.constant 0 : index
    %c1 = arith.constant 1 : index
    %c0_22 = arith.constant 0 : index
    %c0_23 = arith.constant 0 : index
    %47 = vector.load %arg3[%c0_21, %c1, %c0_22, %c0_23] : memref<4x3x128x128xbf16, #tpu.memory_space<vmem>>, vector<1x1x128x128xbf16>
    %48 = vector.shape_cast %47 : vector<1x1x128x128xbf16> to vector<128x128xbf16>
    %cst_24 = arith.constant dense<0.000000e+00> : vector<16x128xf32>
    %49 = tpu.matmul %46, %48, %cst_24 {dimension_numbers = #tpu.dot_dimension_numbers<[1], [0], [0], [1], [0, 0, 1, 1], [], []>} : vector<16x128xbf16>, vector<128x128xbf16>, vector<16x128xf32> -> vector<16x128xf32>
    %50 = arith.addf %29, %49 : vector<16x128xf32>
    %c2_i32_25 = arith.constant 2 : i32
    %51 = vector.broadcast %c2_i32_25 : i32 to vector<16x16xi32>
    %52 = arith.muli %51, %0 : vector<16x16xi32>
    %c1_i32 = arith.constant 1 : i32
    %53 = vector.broadcast %c1_i32 : i32 to vector<16x16xi32>
    %54 = arith.addi %52, %53 : vector<16x16xi32>
    %55 = arith.cmpi eq, %1, %54 : vector<16x16xi32>
    %c8_i32_26 = arith.constant 8 : i32
    %56 = vector.broadcast %c8_i32_26 : i32 to vector<16x16xi32>
    %57 = arith.cmpi slt, %0, %56 : vector<16x16xi32>
    %58 = arith.andi %55, %57 : vector<16x16xi1>
    %c16_i32_27 = arith.constant 16 : i32
    %59 = vector.broadcast %c16_i32_27 : i32 to vector<16x16xi32>
    %60 = arith.cmpi slt, %1, %59 : vector<16x16xi32>
    %61 = arith.andi %58, %60 : vector<16x16xi1>
    %cst_28 = arith.constant 1.000000e+00 : f32
    %cst_29 = arith.constant 0.000000e+00 : f32
    %62 = vector.broadcast %cst_28 : f32 to vector<16x16xf32>
    %63 = vector.broadcast %cst_29 : f32 to vector<16x16xf32>
    %64 = arith.select %61, %62, %63 : vector<16x16xi1>, vector<16x16xf32>
    %65 = arith.truncf %64 : vector<16x16xf32> to vector<16x16xbf16>
    %cst_30 = arith.constant dense<0.000000e+00> : vector<16x128xf32>
    %66 = tpu.matmul %65, %5, %cst_30 {dimension_numbers = #tpu.dot_dimension_numbers<[1], [0], [0], [1], [0, 0, 1, 1], [], []>} : vector<16x16xbf16>, vector<16x128xbf16>, vector<16x128xf32> -> vector<16x128xf32>
    %67 = arith.truncf %66 : vector<16x128xf32> to vector<16x128xbf16>
    %c0_31 = arith.constant 0 : index
    %c2 = arith.constant 2 : index
    %c0_32 = arith.constant 0 : index
    %c0_33 = arith.constant 0 : index
    %68 = vector.load %arg3[%c0_31, %c2, %c0_32, %c0_33] : memref<4x3x128x128xbf16, #tpu.memory_space<vmem>>, vector<1x1x128x128xbf16>
    %69 = vector.shape_cast %68 : vector<1x1x128x128xbf16> to vector<128x128xbf16>
    %cst_34 = arith.constant dense<0.000000e+00> : vector<16x128xf32>
    %70 = tpu.matmul %67, %69, %cst_34 {dimension_numbers = #tpu.dot_dimension_numbers<[1], [0], [0], [1], [0, 0, 1, 1], [], []>} : vector<16x128xbf16>, vector<128x128xbf16>, vector<16x128xf32> -> vector<16x128xf32>
    %71 = arith.addf %50, %70 : vector<16x128xf32>
    %cst_35 = arith.constant 0.000000e+00 : f32
    %72 = vector.broadcast %cst_35 : f32 to vector<16x128xf32>
    %73 = arith.maximumf %71, %72 : vector<16x128xf32>
    %74 = arith.truncf %73 : vector<16x128xf32> to vector<16x128xbf16>
    %c1_i32_36 = arith.constant 1 : i32
    %75 = vector.broadcast %c1_i32_36 : i32 to vector<16x16xi32>
    %76 = arith.shrsi %0, %75 : vector<16x16xi32>
    %77 = arith.cmpi eq, %1, %76 : vector<16x16xi32>
    %c16_i32_37 = arith.constant 16 : i32
    %78 = vector.broadcast %c16_i32_37 : i32 to vector<16x16xi32>
    %79 = arith.cmpi slt, %0, %78 : vector<16x16xi32>
    %80 = arith.andi %77, %79 : vector<16x16xi1>
    %cst_38 = arith.constant 1.000000e+00 : f32
    %cst_39 = arith.constant 0.000000e+00 : f32
    %81 = vector.broadcast %cst_38 : f32 to vector<16x16xf32>
    %82 = vector.broadcast %cst_39 : f32 to vector<16x16xf32>
    %83 = arith.select %80, %81, %82 : vector<16x16xi1>, vector<16x16xf32>
    %84 = arith.truncf %83 : vector<16x16xf32> to vector<16x16xbf16>
    %cst_40 = arith.constant dense<0.000000e+00> : vector<16x128xf32>
    %85 = tpu.matmul %84, %74, %cst_40 {dimension_numbers = #tpu.dot_dimension_numbers<[1], [0], [0], [1], [0, 0, 1, 1], [], []>} : vector<16x16xbf16>, vector<16x128xbf16>, vector<16x128xf32> -> vector<16x128xf32>
    %c0_41 = arith.constant 0 : index
    %c0_42 = arith.constant 0 : index
    %c0_43 = arith.constant 0 : index
    %c0_44 = arith.constant 0 : index
    %86 = vector.load %arg2[%c0_41, %c0_42, %c0_43, %c0_44] : memref<4x1x16x128xbf16, #tpu.memory_space<vmem>>, vector<1x1x16x128xbf16>
    %87 = vector.shape_cast %86 : vector<1x1x16x128xbf16> to vector<16x128xbf16>
    %88 = arith.extf %87 : vector<16x128xbf16> to vector<16x128xf32>
    %89 = arith.addf %85, %88 : vector<16x128xf32>
    %90 = arith.truncf %89 : vector<16x128xf32> to vector<16x128xbf16>
    %c0_45 = arith.constant 0 : index
    %c0_46 = arith.constant 0 : index
    %c0_47 = arith.constant 0 : index
    %91 = vector.load %arg5[%c0_45, %c0_46, %c0_47] : memref<4x128x128xbf16, #tpu.memory_space<vmem>>, vector<1x128x128xbf16>
    %92 = vector.shape_cast %91 : vector<1x128x128xbf16> to vector<128x128xbf16>
    %cst_48 = arith.constant dense<0.000000e+00> : vector<16x128xf32>
    %93 = tpu.matmul %90, %92, %cst_48 {dimension_numbers = #tpu.dot_dimension_numbers<[1], [0], [0], [1], [0, 0, 1, 1], [], []>} : vector<16x128xbf16>, vector<128x128xbf16>, vector<16x128xf32> -> vector<16x128xf32>
    %c0_49 = arith.constant 0 : index
    %c0_50 = arith.constant 0 : index
    %c0_51 = arith.constant 0 : index
    %94 = vector.load %arg6[%c0_49, %c0_50, %c0_51] : memref<4x1x128xf32, #tpu.memory_space<vmem>>, vector<1x1x128xf32>
    %95 = vector.shape_cast %94 : vector<1x1x128xf32> to vector<1x128xf32>
    %96 = vector.broadcast %95 : vector<1x128xf32> to vector<16x128xf32>
    %97 = arith.addf %93, %96 : vector<16x128xf32>
    %cst_52 = arith.constant 0.000000e+00 : f32
    %98 = vector.broadcast %cst_52 : f32 to vector<16x128xf32>
    %99 = arith.maximumf %97, %98 : vector<16x128xf32>
    %100 = arith.truncf %99 : vector<16x128xf32> to vector<16x128xbf16>
    %101 = arith.extf %100 : vector<16x128xbf16> to vector<16x128xf32>
    %c1_53 = arith.constant 1 : index
    %c0_54 = arith.constant 0 : index
    %102 = vector.load %arg14[%c1_53, %c0_54] : memref<40x128xf32, #tpu.memory_space<vmem>>, vector<16x128xf32>
    tpu.vector_store %arg14[%c1_53, %c0_54], %101 {strides = array<i32>} : memref<40x128xf32, #tpu.memory_space<vmem>>, vector<16x128xf32>,
    %c1_55 = arith.constant 1 : index
    %c0_56 = arith.constant 0 : index
    %c0_57 = arith.constant 0 : index
    %103 = vector.load %arg4[%c1_55, %c0_56, %c0_57] : memref<4x1x128xf32, #tpu.memory_space<vmem>>, vector<1x1x128xf32>
    %104 = vector.shape_cast %103 : vector<1x1x128xf32> to vector<1x128xf32>
    %c2_i32_58 = arith.constant 2 : i32
    %105 = vector.broadcast %c2_i32_58 : i32 to vector<16x16xi32>
    %106 = arith.muli %105, %0 : vector<16x16xi32>
    %c-1_i32_59 = arith.constant -1 : i32
    %107 = vector.broadcast %c-1_i32_59 : i32 to vector<16x16xi32>
    %108 = arith.addi %106, %107 : vector<16x16xi32>
    %109 = arith.cmpi eq, %1, %108 : vector<16x16xi32>
    %c4_i32 = arith.constant 4 : i32
    %110 = vector.broadcast %c4_i32 : i32 to vector<16x16xi32>
    %111 = arith.cmpi slt, %0, %110 : vector<16x16xi32>
    %112 = arith.andi %109, %111 : vector<16x16xi1>
    %c8_i32_60 = arith.constant 8 : i32
    %113 = vector.broadcast %c8_i32_60 : i32 to vector<16x16xi32>
    %114 = arith.cmpi slt, %1, %113 : vector<16x16xi32>
    %115 = arith.andi %112, %114 : vector<16x16xi1>
    %cst_61 = arith.constant 1.000000e+00 : f32
    %cst_62 = arith.constant 0.000000e+00 : f32
    %116 = vector.broadcast %cst_61 : f32 to vector<16x16xf32>
    %117 = vector.broadcast %cst_62 : f32 to vector<16x16xf32>
    %118 = arith.select %115, %116, %117 : vector<16x16xi1>, vector<16x16xf32>
    %119 = arith.truncf %118 : vector<16x16xf32> to vector<16x16xbf16>
    %cst_63 = arith.constant dense<0.000000e+00> : vector<16x128xf32>
    %120 = tpu.matmul %119, %74, %cst_63 {dimension_numbers = #tpu.dot_dimension_numbers<[1], [0], [0], [1], [0, 0, 1, 1], [], []>} : vector<16x16xbf16>, vector<16x128xbf16>, vector<16x128xf32> -> vector<16x128xf32>
    %121 = arith.truncf %120 : vector<16x128xf32> to vector<16x128xbf16>
    %c1_64 = arith.constant 1 : index
    %c0_65 = arith.constant 0 : index
    %c0_66 = arith.constant 0 : index
    %c0_67 = arith.constant 0 : index
    %122 = vector.load %arg3[%c1_64, %c0_65, %c0_66, %c0_67] : memref<4x3x128x128xbf16, #tpu.memory_space<vmem>>, vector<1x1x128x128xbf16>
    %123 = vector.shape_cast %122 : vector<1x1x128x128xbf16> to vector<128x128xbf16>
    %cst_68 = arith.constant dense<0.000000e+00> : vector<16x128xf32>
    %124 = tpu.matmul %121, %123, %cst_68 {dimension_numbers = #tpu.dot_dimension_numbers<[1], [0], [0], [1], [0, 0, 1, 1], [], []>} : vector<16x128xbf16>, vector<128x128xbf16>, vector<16x128xf32> -> vector<16x128xf32>
    %125 = vector.broadcast %104 : vector<1x128xf32> to vector<16x128xf32>
    %126 = arith.addf %125, %124 : vector<16x128xf32>
    %c2_i32_69 = arith.constant 2 : i32
    %127 = vector.broadcast %c2_i32_69 : i32 to vector<16x16xi32>
    %128 = arith.muli %127, %0 : vector<16x16xi32>
    %c0_i32_70 = arith.constant 0 : i32
    %129 = vector.broadcast %c0_i32_70 : i32 to vector<16x16xi32>
    %130 = arith.addi %128, %129 : vector<16x16xi32>
    %131 = arith.cmpi eq, %1, %130 : vector<16x16xi32>
    %c4_i32_71 = arith.constant 4 : i32
    %132 = vector.broadcast %c4_i32_71 : i32 to vector<16x16xi32>
    %133 = arith.cmpi slt, %0, %132 : vector<16x16xi32>
    %134 = arith.andi %131, %133 : vector<16x16xi1>
    %c8_i32_72 = arith.constant 8 : i32
    %135 = vector.broadcast %c8_i32_72 : i32 to vector<16x16xi32>
    %136 = arith.cmpi slt, %1, %135 : vector<16x16xi32>
    %137 = arith.andi %134, %136 : vector<16x16xi1>
    %cst_73 = arith.constant 1.000000e+00 : f32
    %cst_74 = arith.constant 0.000000e+00 : f32
    %138 = vector.broadcast %cst_73 : f32 to vector<16x16xf32>
    %139 = vector.broadcast %cst_74 : f32 to vector<16x16xf32>
    %140 = arith.select %137, %138, %139 : vector<16x16xi1>, vector<16x16xf32>
    %141 = arith.truncf %140 : vector<16x16xf32> to vector<16x16xbf16>
    %cst_75 = arith.constant dense<0.000000e+00> : vector<16x128xf32>
    %142 = tpu.matmul %141, %74, %cst_75 {dimension_numbers = #tpu.dot_dimension_numbers<[1], [0], [0], [1], [0, 0, 1, 1], [], []>} : vector<16x16xbf16>, vector<16x128xbf16>, vector<16x128xf32> -> vector<16x128xf32>
    %143 = arith.truncf %142 : vector<16x128xf32> to vector<16x128xbf16>
    %c1_76 = arith.constant 1 : index
    %c1_77 = arith.constant 1 : index
    %c0_78 = arith.constant 0 : index
    %c0_79 = arith.constant 0 : index
    %144 = vector.load %arg3[%c1_76, %c1_77, %c0_78, %c0_79] : memref<4x3x128x128xbf16, #tpu.memory_space<vmem>>, vector<1x1x128x128xbf16>
    %145 = vector.shape_cast %144 : vector<1x1x128x128xbf16> to vector<128x128xbf16>
    %cst_80 = arith.constant dense<0.000000e+00> : vector<16x128xf32>
    %146 = tpu.matmul %143, %145, %cst_80 {dimension_numbers = #tpu.dot_dimension_numbers<[1], [0], [0], [1], [0, 0, 1, 1], [], []>} : vector<16x128xbf16>, vector<128x128xbf16>, vector<16x128xf32> -> vector<16x128xf32>
    %147 = arith.addf %126, %146 : vector<16x128xf32>
    %c2_i32_81 = arith.constant 2 : i32
    %148 = vector.broadcast %c2_i32_81 : i32 to vector<16x16xi32>
    %149 = arith.muli %148, %0 : vector<16x16xi32>
    %c1_i32_82 = arith.constant 1 : i32
    %150 = vector.broadcast %c1_i32_82 : i32 to vector<16x16xi32>
    %151 = arith.addi %149, %150 : vector<16x16xi32>
    %152 = arith.cmpi eq, %1, %151 : vector<16x16xi32>
    %c4_i32_83 = arith.constant 4 : i32
    %153 = vector.broadcast %c4_i32_83 : i32 to vector<16x16xi32>
    %154 = arith.cmpi slt, %0, %153 : vector<16x16xi32>
    %155 = arith.andi %152, %154 : vector<16x16xi1>
    %c8_i32_84 = arith.constant 8 : i32
    %156 = vector.broadcast %c8_i32_84 : i32 to vector<16x16xi32>
    %157 = arith.cmpi slt, %1, %156 : vector<16x16xi32>
    %158 = arith.andi %155, %157 : vector<16x16xi1>
    %cst_85 = arith.constant 1.000000e+00 : f32
    %cst_86 = arith.constant 0.000000e+00 : f32
    %159 = vector.broadcast %cst_85 : f32 to vector<16x16xf32>
    %160 = vector.broadcast %cst_86 : f32 to vector<16x16xf32>
    %161 = arith.select %158, %159, %160 : vector<16x16xi1>, vector<16x16xf32>
    %162 = arith.truncf %161 : vector<16x16xf32> to vector<16x16xbf16>
    %cst_87 = arith.constant dense<0.000000e+00> : vector<16x128xf32>
    %163 = tpu.matmul %162, %74, %cst_87 {dimension_numbers = #tpu.dot_dimension_numbers<[1], [0], [0], [1], [0, 0, 1, 1], [], []>} : vector<16x16xbf16>, vector<16x128xbf16>, vector<16x128xf32> -> vector<16x128xf32>
    %164 = arith.truncf %163 : vector<16x128xf32> to vector<16x128xbf16>
    %c1_88 = arith.constant 1 : index
    %c2_89 = arith.constant 2 : index
    %c0_90 = arith.constant 0 : index
    %c0_91 = arith.constant 0 : index
    %165 = vector.load %arg3[%c1_88, %c2_89, %c0_90, %c0_91] : memref<4x3x128x128xbf16, #tpu.memory_space<vmem>>, vector<1x1x128x128xbf16>
    %166 = vector.shape_cast %165 : vector<1x1x128x128xbf16> to vector<128x128xbf16>
    %cst_92 = arith.constant dense<0.000000e+00> : vector<16x128xf32>
    %167 = tpu.matmul %164, %166, %cst_92 {dimension_numbers = #tpu.dot_dimension_numbers<[1], [0], [0], [1], [0, 0, 1, 1], [], []>} : vector<16x128xbf16>, vector<128x128xbf16>, vector<16x128xf32> -> vector<16x128xf32>
    %168 = arith.addf %147, %167 : vector<16x128xf32>
    %cst_93 = arith.constant 0.000000e+00 : f32
    %169 = vector.broadcast %cst_93 : f32 to vector<16x128xf32>
    %170 = arith.maximumf %168, %169 : vector<16x128xf32>
    %171 = arith.truncf %170 : vector<16x128xf32> to vector<16x128xbf16>
    %c1_i32_94 = arith.constant 1 : i32
    %172 = vector.broadcast %c1_i32_94 : i32 to vector<16x16xi32>
    %173 = arith.shrsi %0, %172 : vector<16x16xi32>
    %174 = arith.cmpi eq, %1, %173 : vector<16x16xi32>
    %c8_i32_95 = arith.constant 8 : i32
    %175 = vector.broadcast %c8_i32_95 : i32 to vector<16x16xi32>
    %176 = arith.cmpi slt, %0, %175 : vector<16x16xi32>
    %177 = arith.andi %174, %176 : vector<16x16xi1>
    %cst_96 = arith.constant 1.000000e+00 : f32
    %cst_97 = arith.constant 0.000000e+00 : f32
    %178 = vector.broadcast %cst_96 : f32 to vector<16x16xf32>
    %179 = vector.broadcast %cst_97 : f32 to vector<16x16xf32>
    %180 = arith.select %177, %178, %179 : vector<16x16xi1>, vector<16x16xf32>
    %181 = arith.truncf %180 : vector<16x16xf32> to vector<16x16xbf16>
    %cst_98 = arith.constant dense<0.000000e+00> : vector<16x128xf32>
    %182 = tpu.matmul %181, %171, %cst_98 {dimension_numbers = #tpu.dot_dimension_numbers<[1], [0], [0], [1], [0, 0, 1, 1], [], []>} : vector<16x16xbf16>, vector<16x128xbf16>, vector<16x128xf32> -> vector<16x128xf32>
    %c1_99 = arith.constant 1 : index
    %c0_100 = arith.constant 0 : index
    %c0_101 = arith.constant 0 : index
    %c0_102 = arith.constant 0 : index
    %183 = vector.load %arg2[%c1_99, %c0_100, %c0_101, %c0_102] : memref<4x1x16x128xbf16, #tpu.memory_space<vmem>>, vector<1x1x16x128xbf16>
    %184 = vector.shape_cast %183 : vector<1x1x16x128xbf16> to vector<16x128xbf16>
    %185 = arith.extf %184 : vector<16x128xbf16> to vector<16x128xf32>
    %186 = arith.addf %182, %185 : vector<16x128xf32>
    %187 = arith.truncf %186 : vector<16x128xf32> to vector<16x128xbf16>
    %c1_103 = arith.constant 1 : index
    %c0_104 = arith.constant 0 : index
    %c0_105 = arith.constant 0 : index
    %188 = vector.load %arg5[%c1_103, %c0_104, %c0_105] : memref<4x128x128xbf16, #tpu.memory_space<vmem>>, vector<1x128x128xbf16>
    %189 = vector.shape_cast %188 : vector<1x128x128xbf16> to vector<128x128xbf16>
    %cst_106 = arith.constant dense<0.000000e+00> : vector<16x128xf32>
    %190 = tpu.matmul %187, %189, %cst_106 {dimension_numbers = #tpu.dot_dimension_numbers<[1], [0], [0], [1], [0, 0, 1, 1], [], []>} : vector<16x128xbf16>, vector<128x128xbf16>, vector<16x128xf32> -> vector<16x128xf32>
    %c1_107 = arith.constant 1 : index
    %c0_108 = arith.constant 0 : index
    %c0_109 = arith.constant 0 : index
    %191 = vector.load %arg6[%c1_107, %c0_108, %c0_109] : memref<4x1x128xf32, #tpu.memory_space<vmem>>, vector<1x1x128xf32>
    %192 = vector.shape_cast %191 : vector<1x1x128xf32> to vector<1x128xf32>
    %193 = vector.broadcast %192 : vector<1x128xf32> to vector<16x128xf32>
    %194 = arith.addf %190, %193 : vector<16x128xf32>
    %cst_110 = arith.constant 0.000000e+00 : f32
    %195 = vector.broadcast %cst_110 : f32 to vector<16x128xf32>
    %196 = arith.maximumf %194, %195 : vector<16x128xf32>
    %197 = arith.truncf %196 : vector<16x128xf32> to vector<16x128xbf16>
    %198 = vector.extract_strided_slice %197 {offsets = [0, 0], sizes = [8, 128], strides = [1, 1]} : vector<16x128xbf16> to vector<8x128xbf16>
    %199 = arith.extf %198 : vector<8x128xbf16> to vector<8x128xf32>
    %c18 = arith.constant 18 : index
    %c0_111 = arith.constant 0 : index
    %200 = vector.load %arg14[%c18, %c0_111] : memref<40x128xf32, #tpu.memory_space<vmem>>, vector<8x128xf32>
    tpu.vector_store %arg14[%c18, %c0_111], %199 {strides = array<i32>} : memref<40x128xf32, #tpu.memory_space<vmem>>, vector<8x128xf32>,
    %c2_112 = arith.constant 2 : index
    %c0_113 = arith.constant 0 : index
    %c0_114 = arith.constant 0 : index
    %201 = vector.load %arg4[%c2_112, %c0_113, %c0_114] : memref<4x1x128xf32, #tpu.memory_space<vmem>>, vector<1x1x128xf32>
    %202 = vector.shape_cast %201 : vector<1x1x128xf32> to vector<1x128xf32>
    %c2_i32_115 = arith.constant 2 : i32
    %203 = vector.broadcast %c2_i32_115 : i32 to vector<16x16xi32>
    %204 = arith.muli %203, %0 : vector<16x16xi32>
    %c-1_i32_116 = arith.constant -1 : i32
    %205 = vector.broadcast %c-1_i32_116 : i32 to vector<16x16xi32>
    %206 = arith.addi %204, %205 : vector<16x16xi32>
    %207 = arith.cmpi eq, %1, %206 : vector<16x16xi32>
    %c2_i32_117 = arith.constant 2 : i32
    %208 = vector.broadcast %c2_i32_117 : i32 to vector<16x16xi32>
    %209 = arith.cmpi slt, %0, %208 : vector<16x16xi32>
    %210 = arith.andi %207, %209 : vector<16x16xi1>
    %c4_i32_118 = arith.constant 4 : i32
    %211 = vector.broadcast %c4_i32_118 : i32 to vector<16x16xi32>
    %212 = arith.cmpi slt, %1, %211 : vector<16x16xi32>
    %213 = arith.andi %210, %212 : vector<16x16xi1>
    %cst_119 = arith.constant 1.000000e+00 : f32
    %cst_120 = arith.constant 0.000000e+00 : f32
    %214 = vector.broadcast %cst_119 : f32 to vector<16x16xf32>
    %215 = vector.broadcast %cst_120 : f32 to vector<16x16xf32>
    %216 = arith.select %213, %214, %215 : vector<16x16xi1>, vector<16x16xf32>
    %217 = arith.truncf %216 : vector<16x16xf32> to vector<16x16xbf16>
    %cst_121 = arith.constant dense<0.000000e+00> : vector<16x128xf32>
    %218 = tpu.matmul %217, %171, %cst_121 {dimension_numbers = #tpu.dot_dimension_numbers<[1], [0], [0], [1], [0, 0, 1, 1], [], []>} : vector<16x16xbf16>, vector<16x128xbf16>, vector<16x128xf32> -> vector<16x128xf32>
    %219 = arith.truncf %218 : vector<16x128xf32> to vector<16x128xbf16>
    %c2_122 = arith.constant 2 : index
    %c0_123 = arith.constant 0 : index
    %c0_124 = arith.constant 0 : index
    %c0_125 = arith.constant 0 : index
    %220 = vector.load %arg3[%c2_122, %c0_123, %c0_124, %c0_125] : memref<4x3x128x128xbf16, #tpu.memory_space<vmem>>, vector<1x1x128x128xbf16>
    %221 = vector.shape_cast %220 : vector<1x1x128x128xbf16> to vector<128x128xbf16>
    %cst_126 = arith.constant dense<0.000000e+00> : vector<16x128xf32>
    %222 = tpu.matmul %219, %221, %cst_126 {dimension_numbers = #tpu.dot_dimension_numbers<[1], [0], [0], [1], [0, 0, 1, 1], [], []>} : vector<16x128xbf16>, vector<128x128xbf16>, vector<16x128xf32> -> vector<16x128xf32>
    %223 = vector.broadcast %202 : vector<1x128xf32> to vector<16x128xf32>
    %224 = arith.addf %223, %222 : vector<16x128xf32>
    %c2_i32_127 = arith.constant 2 : i32
    %225 = vector.broadcast %c2_i32_127 : i32 to vector<16x16xi32>
    %226 = arith.muli %225, %0 : vector<16x16xi32>
    %c0_i32_128 = arith.constant 0 : i32
    %227 = vector.broadcast %c0_i32_128 : i32 to vector<16x16xi32>
    %228 = arith.addi %226, %227 : vector<16x16xi32>
    %229 = arith.cmpi eq, %1, %228 : vector<16x16xi32>
    %c2_i32_129 = arith.constant 2 : i32
    %230 = vector.broadcast %c2_i32_129 : i32 to vector<16x16xi32>
    %231 = arith.cmpi slt, %0, %230 : vector<16x16xi32>
    %232 = arith.andi %229, %231 : vector<16x16xi1>
    %c4_i32_130 = arith.constant 4 : i32
    %233 = vector.broadcast %c4_i32_130 : i32 to vector<16x16xi32>
    %234 = arith.cmpi slt, %1, %233 : vector<16x16xi32>
    %235 = arith.andi %232, %234 : vector<16x16xi1>
    %cst_131 = arith.constant 1.000000e+00 : f32
    %cst_132 = arith.constant 0.000000e+00 : f32
    %236 = vector.broadcast %cst_131 : f32 to vector<16x16xf32>
    %237 = vector.broadcast %cst_132 : f32 to vector<16x16xf32>
    %238 = arith.select %235, %236, %237 : vector<16x16xi1>, vector<16x16xf32>
    %239 = arith.truncf %238 : vector<16x16xf32> to vector<16x16xbf16>
    %cst_133 = arith.constant dense<0.000000e+00> : vector<16x128xf32>
    %240 = tpu.matmul %239, %171, %cst_133 {dimension_numbers = #tpu.dot_dimension_numbers<[1], [0], [0], [1], [0, 0, 1, 1], [], []>} : vector<16x16xbf16>, vector<16x128xbf16>, vector<16x128xf32> -> vector<16x128xf32>
    %241 = arith.truncf %240 : vector<16x128xf32> to vector<16x128xbf16>
    %c2_134 = arith.constant 2 : index
    %c1_135 = arith.constant 1 : index
    %c0_136 = arith.constant 0 : index
    %c0_137 = arith.constant 0 : index
    %242 = vector.load %arg3[%c2_134, %c1_135, %c0_136, %c0_137] : memref<4x3x128x128xbf16, #tpu.memory_space<vmem>>, vector<1x1x128x128xbf16>
    %243 = vector.shape_cast %242 : vector<1x1x128x128xbf16> to vector<128x128xbf16>
    %cst_138 = arith.constant dense<0.000000e+00> : vector<16x128xf32>
    %244 = tpu.matmul %241, %243, %cst_138 {dimension_numbers = #tpu.dot_dimension_numbers<[1], [0], [0], [1], [0, 0, 1, 1], [], []>} : vector<16x128xbf16>, vector<128x128xbf16>, vector<16x128xf32> -> vector<16x128xf32>
    %245 = arith.addf %224, %244 : vector<16x128xf32>
    %c2_i32_139 = arith.constant 2 : i32
    %246 = vector.broadcast %c2_i32_139 : i32 to vector<16x16xi32>
    %247 = arith.muli %246, %0 : vector<16x16xi32>
    %c1_i32_140 = arith.constant 1 : i32
    %248 = vector.broadcast %c1_i32_140 : i32 to vector<16x16xi32>
    %249 = arith.addi %247, %248 : vector<16x16xi32>
    %250 = arith.cmpi eq, %1, %249 : vector<16x16xi32>
    %c2_i32_141 = arith.constant 2 : i32
    %251 = vector.broadcast %c2_i32_141 : i32 to vector<16x16xi32>
    %252 = arith.cmpi slt, %0, %251 : vector<16x16xi32>
    %253 = arith.andi %250, %252 : vector<16x16xi1>
    %c4_i32_142 = arith.constant 4 : i32
    %254 = vector.broadcast %c4_i32_142 : i32 to vector<16x16xi32>
    %255 = arith.cmpi slt, %1, %254 : vector<16x16xi32>
    %256 = arith.andi %253, %255 : vector<16x16xi1>
    %cst_143 = arith.constant 1.000000e+00 : f32
    %cst_144 = arith.constant 0.000000e+00 : f32
    %257 = vector.broadcast %cst_143 : f32 to vector<16x16xf32>
    %258 = vector.broadcast %cst_144 : f32 to vector<16x16xf32>
    %259 = arith.select %256, %257, %258 : vector<16x16xi1>, vector<16x16xf32>
    %260 = arith.truncf %259 : vector<16x16xf32> to vector<16x16xbf16>
    %cst_145 = arith.constant dense<0.000000e+00> : vector<16x128xf32>
    %261 = tpu.matmul %260, %171, %cst_145 {dimension_numbers = #tpu.dot_dimension_numbers<[1], [0], [0], [1], [0, 0, 1, 1], [], []>} : vector<16x16xbf16>, vector<16x128xbf16>, vector<16x128xf32> -> vector<16x128xf32>
    %262 = arith.truncf %261 : vector<16x128xf32> to vector<16x128xbf16>
    %c2_146 = arith.constant 2 : index
    %c2_147 = arith.constant 2 : index
    %c0_148 = arith.constant 0 : index
    %c0_149 = arith.constant 0 : index
    %263 = vector.load %arg3[%c2_146, %c2_147, %c0_148, %c0_149] : memref<4x3x128x128xbf16, #tpu.memory_space<vmem>>, vector<1x1x128x128xbf16>
    %264 = vector.shape_cast %263 : vector<1x1x128x128xbf16> to vector<128x128xbf16>
    %cst_150 = arith.constant dense<0.000000e+00> : vector<16x128xf32>
    %265 = tpu.matmul %262, %264, %cst_150 {dimension_numbers = #tpu.dot_dimension_numbers<[1], [0], [0], [1], [0, 0, 1, 1], [], []>} : vector<16x128xbf16>, vector<128x128xbf16>, vector<16x128xf32> -> vector<16x128xf32>
    %266 = arith.addf %245, %265 : vector<16x128xf32>
    %cst_151 = arith.constant 0.000000e+00 : f32
    %267 = vector.broadcast %cst_151 : f32 to vector<16x128xf32>
    %268 = arith.maximumf %266, %267 : vector<16x128xf32>
    %269 = arith.truncf %268 : vector<16x128xf32> to vector<16x128xbf16>
    %c1_i32_152 = arith.constant 1 : i32
    %270 = vector.broadcast %c1_i32_152 : i32 to vector<16x16xi32>
    %271 = arith.shrsi %0, %270 : vector<16x16xi32>
    %272 = arith.cmpi eq, %1, %271 : vector<16x16xi32>
    %c4_i32_153 = arith.constant 4 : i32
    %273 = vector.broadcast %c4_i32_153 : i32 to vector<16x16xi32>
    %274 = arith.cmpi slt, %0, %273 : vector<16x16xi32>
    %275 = arith.andi %272, %274 : vector<16x16xi1>
    %cst_154 = arith.constant 1.000000e+00 : f32
    %cst_155 = arith.constant 0.000000e+00 : f32
    %276 = vector.broadcast %cst_154 : f32 to vector<16x16xf32>
    %277 = vector.broadcast %cst_155 : f32 to vector<16x16xf32>
    %278 = arith.select %275, %276, %277 : vector<16x16xi1>, vector<16x16xf32>
    %279 = arith.truncf %278 : vector<16x16xf32> to vector<16x16xbf16>
    %cst_156 = arith.constant dense<0.000000e+00> : vector<16x128xf32>
    %280 = tpu.matmul %279, %269, %cst_156 {dimension_numbers = #tpu.dot_dimension_numbers<[1], [0], [0], [1], [0, 0, 1, 1], [], []>} : vector<16x16xbf16>, vector<16x128xbf16>, vector<16x128xf32> -> vector<16x128xf32>
    %c2_157 = arith.constant 2 : index
    %c0_158 = arith.constant 0 : index
    %c0_159 = arith.constant 0 : index
    %c0_160 = arith.constant 0 : index
    %281 = vector.load %arg2[%c2_157, %c0_158, %c0_159, %c0_160] : memref<4x1x16x128xbf16, #tpu.memory_space<vmem>>, vector<1x1x16x128xbf16>
    %282 = vector.shape_cast %281 : vector<1x1x16x128xbf16> to vector<16x128xbf16>
    %283 = arith.extf %282 : vector<16x128xbf16> to vector<16x128xf32>
    %284 = arith.addf %280, %283 : vector<16x128xf32>
    %285 = arith.truncf %284 : vector<16x128xf32> to vector<16x128xbf16>
    %c2_161 = arith.constant 2 : index
    %c0_162 = arith.constant 0 : index
    %c0_163 = arith.constant 0 : index
    %286 = vector.load %arg5[%c2_161, %c0_162, %c0_163] : memref<4x128x128xbf16, #tpu.memory_space<vmem>>, vector<1x128x128xbf16>
    %287 = vector.shape_cast %286 : vector<1x128x128xbf16> to vector<128x128xbf16>
    %cst_164 = arith.constant dense<0.000000e+00> : vector<16x128xf32>
    %288 = tpu.matmul %285, %287, %cst_164 {dimension_numbers = #tpu.dot_dimension_numbers<[1], [0], [0], [1], [0, 0, 1, 1], [], []>} : vector<16x128xbf16>, vector<128x128xbf16>, vector<16x128xf32> -> vector<16x128xf32>
    %c2_165 = arith.constant 2 : index
    %c0_166 = arith.constant 0 : index
    %c0_167 = arith.constant 0 : index
    %289 = vector.load %arg6[%c2_165, %c0_166, %c0_167] : memref<4x1x128xf32, #tpu.memory_space<vmem>>, vector<1x1x128xf32>
    %290 = vector.shape_cast %289 : vector<1x1x128xf32> to vector<1x128xf32>
    %291 = vector.broadcast %290 : vector<1x128xf32> to vector<16x128xf32>
    %292 = arith.addf %288, %291 : vector<16x128xf32>
    %cst_168 = arith.constant 0.000000e+00 : f32
    %293 = vector.broadcast %cst_168 : f32 to vector<16x128xf32>
    %294 = arith.maximumf %292, %293 : vector<16x128xf32>
    %295 = arith.truncf %294 : vector<16x128xf32> to vector<16x128xbf16>
    %296 = vector.extract_strided_slice %295 {offsets = [0, 0], sizes = [4, 128], strides = [1, 1]} : vector<16x128xbf16> to vector<4x128xbf16>
    %297 = arith.extf %296 : vector<4x128xbf16> to vector<4x128xf32>
    %c27 = arith.constant 27 : index
    %c0_169 = arith.constant 0 : index
    %298 = vector.load %arg14[%c27, %c0_169] : memref<40x128xf32, #tpu.memory_space<vmem>>, vector<4x128xf32>
    tpu.vector_store %arg14[%c27, %c0_169], %297 {strides = array<i32>} : memref<40x128xf32, #tpu.memory_space<vmem>>, vector<4x128xf32>,
    %c3 = arith.constant 3 : index
    %c0_170 = arith.constant 0 : index
    %c0_171 = arith.constant 0 : index
    %299 = vector.load %arg4[%c3, %c0_170, %c0_171] : memref<4x1x128xf32, #tpu.memory_space<vmem>>, vector<1x1x128xf32>
    %300 = vector.shape_cast %299 : vector<1x1x128xf32> to vector<1x128xf32>
    %c2_i32_172 = arith.constant 2 : i32
    %301 = vector.broadcast %c2_i32_172 : i32 to vector<16x16xi32>
    %302 = arith.muli %301, %0 : vector<16x16xi32>
    %c-1_i32_173 = arith.constant -1 : i32
    %303 = vector.broadcast %c-1_i32_173 : i32 to vector<16x16xi32>
    %304 = arith.addi %302, %303 : vector<16x16xi32>
    %305 = arith.cmpi eq, %1, %304 : vector<16x16xi32>
    %c1_i32_174 = arith.constant 1 : i32
    %306 = vector.broadcast %c1_i32_174 : i32 to vector<16x16xi32>
    %307 = arith.cmpi slt, %0, %306 : vector<16x16xi32>
    %308 = arith.andi %305, %307 : vector<16x16xi1>
    %c2_i32_175 = arith.constant 2 : i32
    %309 = vector.broadcast %c2_i32_175 : i32 to vector<16x16xi32>
    %310 = arith.cmpi slt, %1, %309 : vector<16x16xi32>
    %311 = arith.andi %308, %310 : vector<16x16xi1>
    %cst_176 = arith.constant 1.000000e+00 : f32
    %cst_177 = arith.constant 0.000000e+00 : f32
    %312 = vector.broadcast %cst_176 : f32 to vector<16x16xf32>
    %313 = vector.broadcast %cst_177 : f32 to vector<16x16xf32>
    %314 = arith.select %311, %312, %313 : vector<16x16xi1>, vector<16x16xf32>
    %315 = arith.truncf %314 : vector<16x16xf32> to vector<16x16xbf16>
    %cst_178 = arith.constant dense<0.000000e+00> : vector<16x128xf32>
    %316 = tpu.matmul %315, %269, %cst_178 {dimension_numbers = #tpu.dot_dimension_numbers<[1], [0], [0], [1], [0, 0, 1, 1], [], []>} : vector<16x16xbf16>, vector<16x128xbf16>, vector<16x128xf32> -> vector<16x128xf32>
    %317 = arith.truncf %316 : vector<16x128xf32> to vector<16x128xbf16>
    %c3_179 = arith.constant 3 : index
    %c0_180 = arith.constant 0 : index
    %c0_181 = arith.constant 0 : index
    %c0_182 = arith.constant 0 : index
    %318 = vector.load %arg3[%c3_179, %c0_180, %c0_181, %c0_182] : memref<4x3x128x128xbf16, #tpu.memory_space<vmem>>, vector<1x1x128x128xbf16>
    %319 = vector.shape_cast %318 : vector<1x1x128x128xbf16> to vector<128x128xbf16>
    %cst_183 = arith.constant dense<0.000000e+00> : vector<16x128xf32>
    %320 = tpu.matmul %317, %319, %cst_183 {dimension_numbers = #tpu.dot_dimension_numbers<[1], [0], [0], [1], [0, 0, 1, 1], [], []>} : vector<16x128xbf16>, vector<128x128xbf16>, vector<16x128xf32> -> vector<16x128xf32>
    %321 = vector.broadcast %300 : vector<1x128xf32> to vector<16x128xf32>
    %322 = arith.addf %321, %320 : vector<16x128xf32>
    %c2_i32_184 = arith.constant 2 : i32
    %323 = vector.broadcast %c2_i32_184 : i32 to vector<16x16xi32>
    %324 = arith.muli %323, %0 : vector<16x16xi32>
    %c0_i32_185 = arith.constant 0 : i32
    %325 = vector.broadcast %c0_i32_185 : i32 to vector<16x16xi32>
    %326 = arith.addi %324, %325 : vector<16x16xi32>
    %327 = arith.cmpi eq, %1, %326 : vector<16x16xi32>
    %c1_i32_186 = arith.constant 1 : i32
    %328 = vector.broadcast %c1_i32_186 : i32 to vector<16x16xi32>
    %329 = arith.cmpi slt, %0, %328 : vector<16x16xi32>
    %330 = arith.andi %327, %329 : vector<16x16xi1>
    %c2_i32_187 = arith.constant 2 : i32
    %331 = vector.broadcast %c2_i32_187 : i32 to vector<16x16xi32>
    %332 = arith.cmpi slt, %1, %331 : vector<16x16xi32>
    %333 = arith.andi %330, %332 : vector<16x16xi1>
    %cst_188 = arith.constant 1.000000e+00 : f32
    %cst_189 = arith.constant 0.000000e+00 : f32
    %334 = vector.broadcast %cst_188 : f32 to vector<16x16xf32>
    %335 = vector.broadcast %cst_189 : f32 to vector<16x16xf32>
    %336 = arith.select %333, %334, %335 : vector<16x16xi1>, vector<16x16xf32>
    %337 = arith.truncf %336 : vector<16x16xf32> to vector<16x16xbf16>
    %cst_190 = arith.constant dense<0.000000e+00> : vector<16x128xf32>
    %338 = tpu.matmul %337, %269, %cst_190 {dimension_numbers = #tpu.dot_dimension_numbers<[1], [0], [0], [1], [0, 0, 1, 1], [], []>} : vector<16x16xbf16>, vector<16x128xbf16>, vector<16x128xf32> -> vector<16x128xf32>
    %339 = arith.truncf %338 : vector<16x128xf32> to vector<16x128xbf16>
    %c3_191 = arith.constant 3 : index
    %c1_192 = arith.constant 1 : index
    %c0_193 = arith.constant 0 : index
    %c0_194 = arith.constant 0 : index
    %340 = vector.load %arg3[%c3_191, %c1_192, %c0_193, %c0_194] : memref<4x3x128x128xbf16, #tpu.memory_space<vmem>>, vector<1x1x128x128xbf16>
    %341 = vector.shape_cast %340 : vector<1x1x128x128xbf16> to vector<128x128xbf16>
    %cst_195 = arith.constant dense<0.000000e+00> : vector<16x128xf32>
    %342 = tpu.matmul %339, %341, %cst_195 {dimension_numbers = #tpu.dot_dimension_numbers<[1], [0], [0], [1], [0, 0, 1, 1], [], []>} : vector<16x128xbf16>, vector<128x128xbf16>, vector<16x128xf32> -> vector<16x128xf32>
    %343 = arith.addf %322, %342 : vector<16x128xf32>
    %c2_i32_196 = arith.constant 2 : i32
    %344 = vector.broadcast %c2_i32_196 : i32 to vector<16x16xi32>
    %345 = arith.muli %344, %0 : vector<16x16xi32>
    %c1_i32_197 = arith.constant 1 : i32
    %346 = vector.broadcast %c1_i32_197 : i32 to vector<16x16xi32>
    %347 = arith.addi %345, %346 : vector<16x16xi32>
    %348 = arith.cmpi eq, %1, %347 : vector<16x16xi32>
    %c1_i32_198 = arith.constant 1 : i32
    %349 = vector.broadcast %c1_i32_198 : i32 to vector<16x16xi32>
    %350 = arith.cmpi slt, %0, %349 : vector<16x16xi32>
    %351 = arith.andi %348, %350 : vector<16x16xi1>
    %c2_i32_199 = arith.constant 2 : i32
    %352 = vector.broadcast %c2_i32_199 : i32 to vector<16x16xi32>
    %353 = arith.cmpi slt, %1, %352 : vector<16x16xi32>
    %354 = arith.andi %351, %353 : vector<16x16xi1>
    %cst_200 = arith.constant 1.000000e+00 : f32
    %cst_201 = arith.constant 0.000000e+00 : f32
    %355 = vector.broadcast %cst_200 : f32 to vector<16x16xf32>
    %356 = vector.broadcast %cst_201 : f32 to vector<16x16xf32>
    %357 = arith.select %354, %355, %356 : vector<16x16xi1>, vector<16x16xf32>
    %358 = arith.truncf %357 : vector<16x16xf32> to vector<16x16xbf16>
    %cst_202 = arith.constant dense<0.000000e+00> : vector<16x128xf32>
    %359 = tpu.matmul %358, %269, %cst_202 {dimension_numbers = #tpu.dot_dimension_numbers<[1], [0], [0], [1], [0, 0, 1, 1], [], []>} : vector<16x16xbf16>, vector<16x128xbf16>, vector<16x128xf32> -> vector<16x128xf32>
    %360 = arith.truncf %359 : vector<16x128xf32> to vector<16x128xbf16>
    %c3_203 = arith.constant 3 : index
    %c2_204 = arith.constant 2 : index
    %c0_205 = arith.constant 0 : index
    %c0_206 = arith.constant 0 : index
    %361 = vector.load %arg3[%c3_203, %c2_204, %c0_205, %c0_206] : memref<4x3x128x128xbf16, #tpu.memory_space<vmem>>, vector<1x1x128x128xbf16>
    %362 = vector.shape_cast %361 : vector<1x1x128x128xbf16> to vector<128x128xbf16>
    %cst_207 = arith.constant dense<0.000000e+00> : vector<16x128xf32>
    %363 = tpu.matmul %360, %362, %cst_207 {dimension_numbers = #tpu.dot_dimension_numbers<[1], [0], [0], [1], [0, 0, 1, 1], [], []>} : vector<16x128xbf16>, vector<128x128xbf16>, vector<16x128xf32> -> vector<16x128xf32>
    %364 = arith.addf %343, %363 : vector<16x128xf32>
    %cst_208 = arith.constant 0.000000e+00 : f32
    %365 = vector.broadcast %cst_208 : f32 to vector<16x128xf32>
    %366 = arith.maximumf %364, %365 : vector<16x128xf32>
    %367 = arith.truncf %366 : vector<16x128xf32> to vector<16x128xbf16>
    %c1_i32_209 = arith.constant 1 : i32
    %368 = vector.broadcast %c1_i32_209 : i32 to vector<16x16xi32>
    %369 = arith.shrsi %0, %368 : vector<16x16xi32>
    %370 = arith.cmpi eq, %1, %369 : vector<16x16xi32>
    %c2_i32_210 = arith.constant 2 : i32
    %371 = vector.broadcast %c2_i32_210 : i32 to vector<16x16xi32>
    %372 = arith.cmpi slt, %0, %371 : vector<16x16xi32>
    %373 = arith.andi %370, %372 : vector<16x16xi1>
    %cst_211 = arith.constant 1.000000e+00 : f32
    %cst_212 = arith.constant 0.000000e+00 : f32
    %374 = vector.broadcast %cst_211 : f32 to vector<16x16xf32>
    %375 = vector.broadcast %cst_212 : f32 to vector<16x16xf32>
    %376 = arith.select %373, %374, %375 : vector<16x16xi1>, vector<16x16xf32>
    %377 = arith.truncf %376 : vector<16x16xf32> to vector<16x16xbf16>
    %cst_213 = arith.constant dense<0.000000e+00> : vector<16x128xf32>
    %378 = tpu.matmul %377, %367, %cst_213 {dimension_numbers = #tpu.dot_dimension_numbers<[1], [0], [0], [1], [0, 0, 1, 1], [], []>} : vector<16x16xbf16>, vector<16x128xbf16>, vector<16x128xf32> -> vector<16x128xf32>
    %c3_214 = arith.constant 3 : index
    %c0_215 = arith.constant 0 : index
    %c0_216 = arith.constant 0 : index
    %c0_217 = arith.constant 0 : index
    %379 = vector.load %arg2[%c3_214, %c0_215, %c0_216, %c0_217] : memref<4x1x16x128xbf16, #tpu.memory_space<vmem>>, vector<1x1x16x128xbf16>
    %380 = vector.shape_cast %379 : vector<1x1x16x128xbf16> to vector<16x128xbf16>
    %381 = arith.extf %380 : vector<16x128xbf16> to vector<16x128xf32>
    %382 = arith.addf %378, %381 : vector<16x128xf32>
    %383 = arith.truncf %382 : vector<16x128xf32> to vector<16x128xbf16>
    %c3_218 = arith.constant 3 : index
    %c0_219 = arith.constant 0 : index
    %c0_220 = arith.constant 0 : index
    %384 = vector.load %arg5[%c3_218, %c0_219, %c0_220] : memref<4x128x128xbf16, #tpu.memory_space<vmem>>, vector<1x128x128xbf16>
    %385 = vector.shape_cast %384 : vector<1x128x128xbf16> to vector<128x128xbf16>
    %cst_221 = arith.constant dense<0.000000e+00> : vector<16x128xf32>
    %386 = tpu.matmul %383, %385, %cst_221 {dimension_numbers = #tpu.dot_dimension_numbers<[1], [0], [0], [1], [0, 0, 1, 1], [], []>} : vector<16x128xbf16>, vector<128x128xbf16>, vector<16x128xf32> -> vector<16x128xf32>
    %c3_222 = arith.constant 3 : index
    %c0_223 = arith.constant 0 : index
    %c0_224 = arith.constant 0 : index
    %387 = vector.load %arg6[%c3_222, %c0_223, %c0_224] : memref<4x1x128xf32, #tpu.memory_space<vmem>>, vector<1x1x128xf32>
    %388 = vector.shape_cast %387 : vector<1x1x128xf32> to vector<1x128xf32>
    %389 = vector.broadcast %388 : vector<1x128xf32> to vector<16x128xf32>
    %390 = arith.addf %386, %389 : vector<16x128xf32>
    %cst_225 = arith.constant 0.000000e+00 : f32
    %391 = vector.broadcast %cst_225 : f32 to vector<16x128xf32>
    %392 = arith.maximumf %390, %391 : vector<16x128xf32>
    %393 = arith.truncf %392 : vector<16x128xf32> to vector<16x128xbf16>
    %394 = vector.extract_strided_slice %393 {offsets = [0, 0], sizes = [2, 128], strides = [1, 1]} : vector<16x128xbf16> to vector<2x128xbf16>
    %395 = arith.extf %394 : vector<2x128xbf16> to vector<2x128xf32>
    %c32 = arith.constant 32 : index
    %c0_226 = arith.constant 0 : index
    %396 = vector.load %arg14[%c32, %c0_226] : memref<40x128xf32, #tpu.memory_space<vmem>>, vector<2x128xf32>
    tpu.vector_store %arg14[%c32, %c0_226], %395 {strides = array<i32>} : memref<40x128xf32, #tpu.memory_space<vmem>>, vector<2x128xf32>,
    %c0_227 = arith.constant 0 : index
    %c0_228 = arith.constant 0 : index
    %397 = vector.load %arg14[%c0_227, %c0_228] : memref<40x128xf32, #tpu.memory_space<vmem>>, vector<40x128xf32>
    %398 = arith.truncf %397 : vector<40x128xf32> to vector<40x128xbf16>
    %c1_i32_229 = arith.constant 1 : i32
    %399 = tpu.dynamic_rotate %397 by %c1_i32_229 dim 0 : vector<40x128xf32>, i32 -> vector<40x128xf32>
    %400 = arith.truncf %399 : vector<40x128xf32> to vector<40x128xbf16>
    %c39_i32 = arith.constant 39 : i32
    %401 = tpu.dynamic_rotate %397 by %c39_i32 dim 0 : vector<40x128xf32>, i32 -> vector<40x128xf32>
    %402 = arith.truncf %401 : vector<40x128xf32> to vector<40x128xbf16>
    %c0_230 = arith.constant 0 : index
    %c0_231 = arith.constant 0 : index
    %c0_232 = arith.constant 0 : index
    %403 = vector.load %arg7[%c0_230, %c0_231, %c0_232] : memref<3x128x128xbf16, #tpu.memory_space<vmem>>, vector<1x128x128xbf16>
    %404 = vector.shape_cast %403 : vector<1x128x128xbf16> to vector<128x128xbf16>
    %cst_233 = arith.constant dense<0.000000e+00> : vector<40x128xf32>
    %405 = tpu.matmul %400, %404, %cst_233 {dimension_numbers = #tpu.dot_dimension_numbers<[1], [0], [0], [1], [0, 0, 1, 1], [], []>} : vector<40x128xbf16>, vector<128x128xbf16>, vector<40x128xf32> -> vector<40x128xf32>
    %c1_234 = arith.constant 1 : index
    %c0_235 = arith.constant 0 : index
    %c0_236 = arith.constant 0 : index
    %406 = vector.load %arg7[%c1_234, %c0_235, %c0_236] : memref<3x128x128xbf16, #tpu.memory_space<vmem>>, vector<1x128x128xbf16>
    %407 = vector.shape_cast %406 : vector<1x128x128xbf16> to vector<128x128xbf16>
    %cst_237 = arith.constant dense<0.000000e+00> : vector<40x128xf32>
    %408 = tpu.matmul %398, %407, %cst_237 {dimension_numbers = #tpu.dot_dimension_numbers<[1], [0], [0], [1], [0, 0, 1, 1], [], []>} : vector<40x128xbf16>, vector<128x128xbf16>, vector<40x128xf32> -> vector<40x128xf32>
    %409 = arith.addf %405, %408 : vector<40x128xf32>
    %c2_238 = arith.constant 2 : index
    %c0_239 = arith.constant 0 : index
    %c0_240 = arith.constant 0 : index
    %410 = vector.load %arg7[%c2_238, %c0_239, %c0_240] : memref<3x128x128xbf16, #tpu.memory_space<vmem>>, vector<1x128x128xbf16>
    %411 = vector.shape_cast %410 : vector<1x128x128xbf16> to vector<128x128xbf16>
    %cst_241 = arith.constant dense<0.000000e+00> : vector<40x128xf32>
    %412 = tpu.matmul %402, %411, %cst_241 {dimension_numbers = #tpu.dot_dimension_numbers<[1], [0], [0], [1], [0, 0, 1, 1], [], []>} : vector<40x128xbf16>, vector<128x128xbf16>, vector<40x128xf32> -> vector<40x128xf32>
    %413 = arith.addf %409, %412 : vector<40x128xf32>
    %c0_242 = arith.constant 0 : index
    %c0_243 = arith.constant 0 : index
    %414 = vector.load %arg8[%c0_242, %c0_243] : memref<1x128xf32, #tpu.memory_space<vmem>>, vector<1x128xf32>
    %415 = vector.broadcast %414 : vector<1x128xf32> to vector<40x128xf32>
    %416 = arith.addf %413, %415 : vector<40x128xf32>
    %cst_244 = arith.constant 0.000000e+00 : f32
    %417 = vector.broadcast %cst_244 : f32 to vector<40x128xf32>
    %418 = arith.maximumf %416, %417 : vector<40x128xf32>
    %c0_245 = arith.constant 0 : index
    %c0_246 = arith.constant 0 : index
    %419 = vector.load %arg11[%c0_245, %c0_246] : memref<40x1xf32, #tpu.memory_space<vmem>>, vector<40x1xf32>
    %420 = vector.broadcast %419 : vector<40x1xf32> to vector<40x128xf32>
    %421 = arith.mulf %418, %420 : vector<40x128xf32>
    %422 = arith.truncf %421 : vector<40x128xf32> to vector<40x128xbf16>
    %c1_i32_247 = arith.constant 1 : i32
    %423 = tpu.dynamic_rotate %421 by %c1_i32_247 dim 0 : vector<40x128xf32>, i32 -> vector<40x128xf32>
    %424 = arith.truncf %423 : vector<40x128xf32> to vector<40x128xbf16>
    %c39_i32_248 = arith.constant 39 : i32
    %425 = tpu.dynamic_rotate %421 by %c39_i32_248 dim 0 : vector<40x128xf32>, i32 -> vector<40x128xf32>
    %426 = arith.truncf %425 : vector<40x128xf32> to vector<40x128xbf16>
    %c0_249 = arith.constant 0 : index
    %c0_250 = arith.constant 0 : index
    %c0_251 = arith.constant 0 : index
    %427 = vector.load %arg9[%c0_249, %c0_250, %c0_251] : memref<3x128x128xbf16, #tpu.memory_space<vmem>>, vector<1x128x128xbf16>
    %428 = vector.shape_cast %427 : vector<1x128x128xbf16> to vector<128x128xbf16>
    %cst_252 = arith.constant dense<0.000000e+00> : vector<40x128xf32>
    %429 = tpu.matmul %424, %428, %cst_252 {dimension_numbers = #tpu.dot_dimension_numbers<[1], [0], [0], [1], [0, 0, 1, 1], [], []>} : vector<40x128xbf16>, vector<128x128xbf16>, vector<40x128xf32> -> vector<40x128xf32>
    %c1_253 = arith.constant 1 : index
    %c0_254 = arith.constant 0 : index
    %c0_255 = arith.constant 0 : index
    %430 = vector.load %arg9[%c1_253, %c0_254, %c0_255] : memref<3x128x128xbf16, #tpu.memory_space<vmem>>, vector<1x128x128xbf16>
    %431 = vector.shape_cast %430 : vector<1x128x128xbf16> to vector<128x128xbf16>
    %cst_256 = arith.constant dense<0.000000e+00> : vector<40x128xf32>
    %432 = tpu.matmul %422, %431, %cst_256 {dimension_numbers = #tpu.dot_dimension_numbers<[1], [0], [0], [1], [0, 0, 1, 1], [], []>} : vector<40x128xbf16>, vector<128x128xbf16>, vector<40x128xf32> -> vector<40x128xf32>
    %433 = arith.addf %429, %432 : vector<40x128xf32>
    %c2_257 = arith.constant 2 : index
    %c0_258 = arith.constant 0 : index
    %c0_259 = arith.constant 0 : index
    %434 = vector.load %arg9[%c2_257, %c0_258, %c0_259] : memref<3x128x128xbf16, #tpu.memory_space<vmem>>, vector<1x128x128xbf16>
    %435 = vector.shape_cast %434 : vector<1x128x128xbf16> to vector<128x128xbf16>
    %cst_260 = arith.constant dense<0.000000e+00> : vector<40x128xf32>
    %436 = tpu.matmul %426, %435, %cst_260 {dimension_numbers = #tpu.dot_dimension_numbers<[1], [0], [0], [1], [0, 0, 1, 1], [], []>} : vector<40x128xbf16>, vector<128x128xbf16>, vector<40x128xf32> -> vector<40x128xf32>
    %437 = arith.addf %433, %436 : vector<40x128xf32>
    %c0_261 = arith.constant 0 : index
    %c0_262 = arith.constant 0 : index
    %438 = vector.load %arg10[%c0_261, %c0_262] : memref<1x128xf32, #tpu.memory_space<vmem>>, vector<1x128xf32>
    %439 = vector.broadcast %438 : vector<1x128xf32> to vector<40x128xf32>
    %440 = arith.addf %437, %439 : vector<40x128xf32>
    %441 = tpu.iota {dimensions = array<i32: 1>} : vector<40x128xi32>
    %c0_263 = arith.constant 0 : index
    %c0_264 = arith.constant 0 : index
    %442 = vector.load %arg12[%c0_263, %c0_264] : memref<40x1xf32, #tpu.memory_space<vmem>>, vector<40x1xf32>
    %443 = vector.broadcast %442 : vector<40x1xf32> to vector<40x128xf32>
    %444 = arith.mulf %440, %443 : vector<40x128xf32>
    %445 = math.exp %444 : vector<40x128xf32>
    %c2_i32_265 = arith.constant 2 : i32
    %446 = vector.broadcast %c2_i32_265 : i32 to vector<40x128xi32>
    %447 = arith.cmpi slt, %441, %446 : vector<40x128xi32>
    %448 = arith.select %447, %445, %440 : vector<40x128xi1>, vector<40x128xf32>
    %c0_266 = arith.constant 0 : index
    %c0_267 = arith.constant 0 : index
    %c0_268 = arith.constant 0 : index
    %449 = vector.load %arg13[%c0_266, %c0_267, %c0_268] : memref<1x40x128xf32, #tpu.memory_space<vmem>>, vector<1x40x128xf32>
    %450 = vector.shape_cast %449 : vector<1x40x128xf32> to vector<40x128xf32>
    %451 = vector.shape_cast %448 : vector<40x128xf32> to vector<1x40x128xf32>
    tpu.vector_store %arg13[%c0_266, %c0_267, %c0_268], %451 {strides = array<i32>} : memref<1x40x128xf32, #tpu.memory_space<vmem>>, vector<1x40x128xf32>,
    return
  }
  func.func @transform_0(%arg0: i32) -> (i32, i32, i32) {
    %c0_i32 = arith.constant 0 : i32
    %c0_i32_0 = arith.constant 0 : i32
    %c0_i32_1 = arith.constant 0 : i32
    return %arg0, %c0_i32, %c0_i32_0 : i32, i32, i32
  }
  func.func @transform_1(%arg0: i32) -> (i32, i32, i32, i32) {
    %c0_i32 = arith.constant 0 : i32
    %c0_i32_0 = arith.constant 0 : i32
    %c0_i32_1 = arith.constant 0 : i32
    %c0_i32_2 = arith.constant 0 : i32
    return %c0_i32, %arg0, %c0_i32_0, %c0_i32_1 : i32, i32, i32, i32
  }
  func.func @transform_2(%arg0: i32) -> (i32, i32, i32, i32) {
    %c0_i32 = arith.constant 0 : i32
    %c0_i32_0 = arith.constant 0 : i32
    %c0_i32_1 = arith.constant 0 : i32
    %c0_i32_2 = arith.constant 0 : i32
    %c0_i32_3 = arith.constant 0 : i32
    return %c0_i32, %c0_i32_0, %c0_i32_1, %c0_i32_2 : i32, i32, i32, i32
  }
  func.func @transform_3(%arg0: i32) -> (i32, i32, i32) {
    %c0_i32 = arith.constant 0 : i32
    %c0_i32_0 = arith.constant 0 : i32
    %c0_i32_1 = arith.constant 0 : i32
    %c0_i32_2 = arith.constant 0 : i32
    return %c0_i32, %c0_i32_0, %c0_i32_1 : i32, i32, i32
  }
  func.func @transform_4(%arg0: i32) -> (i32, i32, i32) {
    %c0_i32 = arith.constant 0 : i32
    %c0_i32_0 = arith.constant 0 : i32
    %c0_i32_1 = arith.constant 0 : i32
    %c0_i32_2 = arith.constant 0 : i32
    return %c0_i32, %c0_i32_0, %c0_i32_1 : i32, i32, i32
  }
  func.func @transform_5(%arg0: i32) -> (i32, i32, i32) {
    %c0_i32 = arith.constant 0 : i32
    %c0_i32_0 = arith.constant 0 : i32
    %c0_i32_1 = arith.constant 0 : i32
    %c0_i32_2 = arith.constant 0 : i32
    return %c0_i32, %c0_i32_0, %c0_i32_1 : i32, i32, i32
  }
  func.func @transform_6(%arg0: i32) -> (i32, i32, i32) {
    %c0_i32 = arith.constant 0 : i32
    %c0_i32_0 = arith.constant 0 : i32
    %c0_i32_1 = arith.constant 0 : i32
    %c0_i32_2 = arith.constant 0 : i32
    return %c0_i32, %c0_i32_0, %c0_i32_1 : i32, i32, i32
  }
  func.func @transform_7(%arg0: i32) -> (i32, i32) {
    %c0_i32 = arith.constant 0 : i32
    %c0_i32_0 = arith.constant 0 : i32
    %c0_i32_1 = arith.constant 0 : i32
    return %c0_i32, %c0_i32_0 : i32, i32
  }
  func.func @transform_8(%arg0: i32) -> (i32, i32, i32) {
    %c0_i32 = arith.constant 0 : i32
    %c0_i32_0 = arith.constant 0 : i32
    %c0_i32_1 = arith.constant 0 : i32
    %c0_i32_2 = arith.constant 0 : i32
    return %c0_i32, %c0_i32_0, %c0_i32_1 : i32, i32, i32
  }
  func.func @transform_9(%arg0: i32) -> (i32, i32) {
    %c0_i32 = arith.constant 0 : i32
    %c0_i32_0 = arith.constant 0 : i32
    %c0_i32_1 = arith.constant 0 : i32
    return %c0_i32, %c0_i32_0 : i32, i32
  }
  func.func @transform_10(%arg0: i32) -> (i32, i32) {
    %c0_i32 = arith.constant 0 : i32
    %c0_i32_0 = arith.constant 0 : i32
    %c0_i32_1 = arith.constant 0 : i32
    return %c0_i32, %c0_i32_0 : i32, i32
  }
  func.func @transform_11(%arg0: i32) -> (i32, i32) {
    %c0_i32 = arith.constant 0 : i32
    %c0_i32_0 = arith.constant 0 : i32
    %c0_i32_1 = arith.constant 0 : i32
    return %c0_i32, %c0_i32_0 : i32, i32
  }
  func.func @transform_12(%arg0: i32) -> (i32, i32, i32) {
    %c0_i32 = arith.constant 0 : i32
    %c0_i32_0 = arith.constant 0 : i32
    %c0_i32_1 = arith.constant 0 : i32
    return %arg0, %c0_i32, %c0_i32_0 : i32, i32, i32
  }
}

</mosaic_0001>

<llo_original>
// kernel: pyramid_detection_forward.7
$region0: #{pyramid_detection_forward.7}
  #allocation0 [shape = 'u32[]', space=smem, size = 0x4, offset = 0x4, fixed_abs, tag = 'smem constant byte address 0x4 - core index']
  #allocation1 [shape = 'u32[72,128]{1,0:T(1,128)}', space=vmem, size = 0x9000, scoped, tag = 'internal scratch']
  %s0 = inlined_call_operand.vmem [shape: bf16[64,256], index: 0, kind: input, shape index: {}]
  %s1 = inlined_call_operand.vmem [shape: bf16[1,1,128], index: 1, kind: input, shape index: {}]
  %s2 = inlined_call_operand.vmem [shape: bf16[256,128], index: 2, kind: input, shape index: {}]
  %s3 = inlined_call_operand.vmem [shape: bf16[128,128], index: 3, kind: input, shape index: {}]
  %s4 = inlined_call_operand.vmem [shape: f32[1,128], index: 4, kind: input, shape index: {}]
  %s5 = inlined_call_operand.vmem [shape: bf16[64,128], index: 5, kind: output, shape index: {}]
  %s6 = sld [smem:[#allocation0]]
  $region30: #{pyramid_detection_forward.7} parent=0
    _
  %s8 = ssub.s32 1, %s6
  %s9 = scalar_select 0, %s8, %s6
  // Predicated region
  $region2: #{pyramid_detection_forward.7} parent=0 // pred_check
    _
  $region3: #{pyramid_detection_forward.7} parent=0 // pred_check_branch
    %11 = sbr.rel (0) target = $region5
  $region4: #{pyramid_detection_forward.7} parent=0 // pred_region
    _
  $region5: #{pyramid_detection_forward.7} parent=0 // pred_fallthru
    _
  // Predicated region
  $region6: #{pyramid_detection_forward.7} parent=0 // pred_check
    _
  $region7: #{pyramid_detection_forward.7} parent=0 // pred_check_branch
    %13 = sbr.rel (0) target = $region9
  $region8: #{pyramid_detection_forward.7} parent=0 // pred_region
    _
  $region9: #{pyramid_detection_forward.7} parent=0 // pred_fallthru
    _
  // Predicated region
  $region10: #{pyramid_detection_forward.7} parent=0 // pred_check
    _
  $region11: #{pyramid_detection_forward.7} parent=0 // pred_check_branch
    %15 = sbr.rel (0) target = $region13
  $region12: #{pyramid_detection_forward.7} parent=0 // pred_region
    _
  $region13: #{pyramid_detection_forward.7} parent=0 // pred_fallthru
    _
  // Predicated region
  $region14: #{pyramid_detection_forward.7} parent=0 // pred_check
    _
  $region15: #{pyramid_detection_forward.7} parent=0 // pred_check_branch
    %17 = sbr.rel (0) target = $region17
  $region16: #{pyramid_detection_forward.7} parent=0 // pred_region
    _
  $region17: #{pyramid_detection_forward.7} parent=0 // pred_fallthru
    _
  // Predicated region
  $region18: #{pyramid_detection_forward.7} parent=0 // pred_check
    _
  $region19: #{pyramid_detection_forward.7} parent=0 // pred_check_branch
    %19 = sbr.rel (0) target = $region21
  $region20: #{pyramid_detection_forward.7} parent=0 // pred_region
    _
  $region21: #{pyramid_detection_forward.7} parent=0 // pred_fallthru
    _
  %v20 = vld [vmem:[%s0] sm:$0xff]
  %v21 = vld [vmem:[%s0 + $0x8] sm:$0xff]
  %v22 = vld [vmem:[%s0 + $0x10] sm:$0xff]
  %v23 = vld [vmem:[%s0 + $0x18] sm:$0xff]
  %v24 = vld [vmem:[%s0 + $0x20] sm:$0xff]
  %v25 = vld [vmem:[%s0 + $0x28] sm:$0xff]
  %v26 = vld [vmem:[%s0 + $0x30] sm:$0xff]
  %v27 = vld [vmem:[%s0 + $0x38] sm:$0xff]
  %v36 = vrot.slane %v20, 4
  %v37 = vrot.slane %v21, 4
  %v38 = vrot.slane %v22, 4
  %v39 = vrot.slane %v23, 4
  %v40 = vrot.slane %v24, 4
  %v41 = vrot.slane %v25, 4
  %v42 = vrot.slane %v26, 4
  %v43 = vrot.slane %v27, 4
  %v52 = vunpack.c.l.bf16 %v36
  %v53 = vunpack.c.l.bf16 %v37
  %v54 = vunpack.c.l.bf16 %v38
  %v55 = vunpack.c.l.bf16 %v39
  %v56 = vunpack.c.l.bf16 %v40
  %v57 = vunpack.c.l.bf16 %v41
  %v58 = vunpack.c.l.bf16 %v42
  %v59 = vunpack.c.l.bf16 %v43
  %v60 = vrot.slane %v52, 7
  %v61 = vrot.slane %v53, 7
  %v62 = vrot.slane %v54, 7
  %v63 = vrot.slane %v55, 7
  %v64 = vrot.slane %v56, 7
  %v65 = vrot.slane %v57, 7
  %v66 = vrot.slane %v58, 7
  %v67 = vrot.slane %v59, 7
  %v68 = vlaneseq
  %v69 = vshrl.u32 %v68, 7
  %vm70 = vcmp.lt.s32.totalorder %v69, 1
  %v71 = vsel %vm70, %v66, %v67
  %v72 = vsel %vm70, %v65, %v66
  %v73 = vsel %vm70, %v64, %v65
  %v74 = vsel %vm70, %v63, %v64
  %v75 = vsel %vm70, %v62, %v63
  %v76 = vsel %vm70, %v61, %v62
  %v77 = vsel %vm70, %v60, %v61
  %v78 = vsel %vm70, %v67, %v60
  %v79 = vadd.s32 %v69, 8
  %v80 = vadd.s32 %v69, 16
  %v81 = vadd.s32 %v69, 24
  %v82 = vadd.s32 %v69, 32
  %v83 = vadd.s32 %v69, 40
  %v84 = vadd.s32 %v69, 48
  %v85 = vadd.s32 %v69, 56
  %vm86 = vcmp.eq.s32.totalorder %v69, 0
  %vm87 = vcmp.eq.s32.totalorder %v79, 0
  %vm88 = vcmp.eq.s32.totalorder %v80, 0
  %vm89 = vcmp.eq.s32.totalorder %v81, 0
  %vm90 = vcmp.eq.s32.totalorder %v82, 0
  %vm91 = vcmp.eq.s32.totalorder %v83, 0
  %vm92 = vcmp.eq.s32.totalorder %v84, 0
  %vm93 = vcmp.eq.s32.totalorder %v85, 0
  %v94 = vld [vmem:[%s1] sm:$0x1]
  %v95 = vunpack.c.l.bf16 %v94
  %v96 = vsel %vm86, 1, 0
  %v97 = vsel %vm87, 1, 0
  %v98 = vsel %vm88, 1, 0
  %v99 = vsel %vm89, 1, 0
  %v100 = vsel %vm90, 1, 0
  %v101 = vsel %vm91, 1, 0
  %v102 = vsel %vm92, 1, 0
  %v103 = vsel %vm93, 1, 0
  %vm104 = vcmp.eq.s32.totalorder %v96, 1
  %vm105 = vcmp.eq.s32.totalorder %v97, 1
  %vm106 = vcmp.eq.s32.totalorder %v98, 1
  %vm107 = vcmp.eq.s32.totalorder %v99, 1
  %vm108 = vcmp.eq.s32.totalorder %v100, 1
  %vm109 = vcmp.eq.s32.totalorder %v101, 1
  %vm110 = vcmp.eq.s32.totalorder %v102, 1
  %vm111 = vcmp.eq.s32.totalorder %v103, 1
  %v112 = vperm.slane %v95, 0
  %v113 = vsel %vm104, %v112, %v78
  %v114 = vsel %vm105, %v112, %v77
  %v115 = vsel %vm106, %v112, %v76
  %v116 = vsel %vm107, %v112, %v75
  %v117 = vsel %vm108, %v112, %v74
  %v118 = vsel %vm109, %v112, %v73
  %v119 = vsel %vm110, %v112, %v72
  %v120 = vsel %vm111, %v112, %v71
  %s121 = smul.u32 0, 64
  %v122 = vstv %s121
  %v123 = vadd.s32 %v69, %v122
  %v124 = vadd.s32 %v79, %v122
  %v125 = vadd.s32 %v80, %v122
  %v126 = vadd.s32 %v81, %v122
  %v127 = vadd.s32 %v82, %v122
  %v128 = vadd.s32 %v83, %v122
  %v129 = vadd.s32 %v84, %v122
  %v130 = vadd.s32 %v85, %v122
  %v131 = vand.u32 %v123, 31
  %v132 = vand.u32 %v124, 31
  %v133 = vand.u32 %v125, 31
  %v134 = vand.u32 %v126, 31
  %v135 = vand.u32 %v127, 31
  %v136 = vand.u32 %v128, 31
  %v137 = vand.u32 %v129, 31
  %v138 = vand.u32 %v130, 31
  %vm139 = vcmp.eq.s32.totalorder %v131, 0
  %vm140 = vcmp.eq.s32.totalorder %v132, 0
  %vm141 = vcmp.eq.s32.totalorder %v133, 0
  %vm142 = vcmp.eq.s32.totalorder %v134, 0
  %vm143 = vcmp.eq.s32.totalorder %v135, 0
  %vm144 = vcmp.eq.s32.totalorder %v136, 0
  %vm145 = vcmp.eq.s32.totalorder %v137, 0
  %vm146 = vcmp.eq.s32.totalorder %v138, 0
  %v147 = vsel %vm139, 1, 0
  %v148 = vsel %vm140, 1, 0
  %v149 = vsel %vm141, 1, 0
  %v150 = vsel %vm142, 1, 0
  %v151 = vsel %vm143, 1, 0
  %v152 = vsel %vm144, 1, 0
  %v153 = vsel %vm145, 1, 0
  %v154 = vsel %vm146, 1, 0
  %vm155 = vcmp.eq.s32.totalorder %v147, 1
  %vm156 = vcmp.eq.s32.totalorder %v148, 1
  %vm157 = vcmp.eq.s32.totalorder %v149, 1
  %vm158 = vcmp.eq.s32.totalorder %v150, 1
  %vm159 = vcmp.eq.s32.totalorder %v151, 1
  %vm160 = vcmp.eq.s32.totalorder %v152, 1
  %vm161 = vcmp.eq.s32.totalorder %v153, 1
  %vm162 = vcmp.eq.s32.totalorder %v154, 1
  %v163 = vsel %vm155, 0.0, %v113
  %v164 = vsel %vm156, 0.0, %v114
  %v165 = vsel %vm157, 0.0, %v115
  %v166 = vsel %vm158, 0.0, %v116
  %v167 = vsel %vm159, 0.0, %v117
  %v168 = vsel %vm160, 0.0, %v118
  %v169 = vsel %vm161, 0.0, %v119
  %v170 = vsel %vm162, 0.0, %v120
  %v171 = vld [vmem:[%s2] sm:$0xf]
  %v172 = vld [vmem:[%s2 + $0x4] sm:$0xf]
  %v173 = vld [vmem:[%s2 + $0x8] sm:$0xf]
  %v174 = vld [vmem:[%s2 + $0xc] sm:$0xf]
  %v175 = vld [vmem:[%s2 + $0x10] sm:$0xf]
  %v176 = vld [vmem:[%s2 + $0x14] sm:$0xf]
  %v177 = vld [vmem:[%s2 + $0x18] sm:$0xf]
  %v178 = vld [vmem:[%s2 + $0x1c] sm:$0xf]
  %v179 = vld [vmem:[%s2 + $0x20] sm:$0xf]
  %v180 = vld [vmem:[%s2 + $0x24] sm:$0xf]
  %v181 = vld [vmem:[%s2 + $0x28] sm:$0xf]
  %v182 = vld [vmem:[%s2 + $0x2c] sm:$0xf]
  %v183 = vld [vmem:[%s2 + $0x30] sm:$0xf]
  %v184 = vld [vmem:[%s2 + $0x34] sm:$0xf]
  %v185 = vld [vmem:[%s2 + $0x38] sm:$0xf]
  %v186 = vld [vmem:[%s2 + $0x3c] sm:$0xf]
  %v187 = vld [vmem:[%s2 + $0x40] sm:$0xf]
  %v188 = vld [vmem:[%s2 + $0x44] sm:$0xf]
  %v189 = vld [vmem:[%s2 + $0x48] sm:$0xf]
  %v190 = vld [vmem:[%s2 + $0x4c] sm:$0xf]
  %v191 = vld [vmem:[%s2 + $0x50] sm:$0xf]
  %v192 = vld [vmem:[%s2 + $0x54] sm:$0xf]
  %v193 = vld [vmem:[%s2 + $0x58] sm:$0xf]
  %v194 = vld [vmem:[%s2 + $0x5c] sm:$0xf]
  %v195 = vld [vmem:[%s2 + $0x60] sm:$0xf]
  %v196 = vld [vmem:[%s2 + $0x64] sm:$0xf]
  %v197 = vld [vmem:[%s2 + $0x68] sm:$0xf]
  %v198 = vld [vmem:[%s2 + $0x6c] sm:$0xf]
  %v199 = vld [vmem:[%s2 + $0x70] sm:$0xf]
  %v200 = vld [vmem:[%s2 + $0x74] sm:$0xf]
  %v201 = vld [vmem:[%s2 + $0x78] sm:$0xf]
  %v202 = vld [vmem:[%s2 + $0x7c] sm:$0xf]
  %v203 = vpack.c.bf16 %v164, %v163
  %v204 = vpack.c.bf16 %v166, %v165
  %v205 = vpack.c.bf16 %v168, %v167
  %v206 = vpack.c.bf16 %v170, %v169
  %v207 = vld [vmem:[%s3] sm:$0xf]
  %v208 = vld [vmem:[%s3 + $0x4] sm:$0xf]
  %v209 = vld [vmem:[%s3 + $0x8] sm:$0xf]
  %v210 = vld [vmem:[%s3 + $0xc] sm:$0xf]
  %v211 = vld [vmem:[%s3 + $0x10] sm:$0xf]
  %v212 = vld [vmem:[%s3 + $0x14] sm:$0xf]
  %v213 = vld [vmem:[%s3 + $0x18] sm:$0xf]
  %v214 = vld [vmem:[%s3 + $0x1c] sm:$0xf]
  %v215 = vld [vmem:[%s3 + $0x20] sm:$0xf]
  %v216 = vld [vmem:[%s3 + $0x24] sm:$0xf]
  %v217 = vld [vmem:[%s3 + $0x28] sm:$0xf]
  %v218 = vld [vmem:[%s3 + $0x2c] sm:$0xf]
  %v219 = vld [vmem:[%s3 + $0x30] sm:$0xf]
  %v220 = vld [vmem:[%s3 + $0x34] sm:$0xf]
  %v221 = vld [vmem:[%s3 + $0x38] sm:$0xf]
  %v222 = vld [vmem:[%s3 + $0x3c] sm:$0xf]
  %v239 = vunpack.c.l.b16 %v207
  %v240 = vunpack.c.l.b16 %v208
  %v241 = vunpack.c.l.b16 %v209
  %v242 = vunpack.c.l.b16 %v210
  %v243 = vunpack.c.l.b16 %v211
  %v244 = vunpack.c.l.b16 %v212
  %v245 = vunpack.c.l.b16 %v213
  %v246 = vunpack.c.l.b16 %v214
  %v247 = vunpack.c.l.b16 %v215
  %v248 = vunpack.c.l.b16 %v216
  %v249 = vunpack.c.l.b16 %v217
  %v250 = vunpack.c.l.b16 %v218
  %v251 = vunpack.c.l.b16 %v219
  %v252 = vunpack.c.l.b16 %v220
  %v253 = vunpack.c.l.b16 %v221
  %v254 = vunpack.c.l.b16 %v222
  %v255 = vpack.c.b16 %v240, %v239
  %v256 = vpack.c.b16 %v242, %v241
  %v257 = vpack.c.b16 %v244, %v243
  %v258 = vpack.c.b16 %v246, %v245
  %v259 = vpack.c.b16 %v248, %v247
  %v260 = vpack.c.b16 %v250, %v249
  %v261 = vpack.c.b16 %v252, %v251
  %v262 = vpack.c.b16 %v254, %v253
  %271 = vmatpush.bf16.msra.mxu0 %v262
  %272 = vmatpush.bf16.msra.mxu0 %v261
  %273 = vmatpush.bf16.msra.mxu0 %v260
  %274 = vmatpush.bf16.msra.mxu0 %v259
  %275 = vmatpush.bf16.msra.mxu0 %v258
  %276 = vmatpush.bf16.msra.mxu0 %v257
  %277 = vmatpush.bf16.msra.mxu0 %v256
  %278 = vmatpush.bf16.msra.mxu0 %v255
  %279 = vmatmul.bf16.gmra.mxu0 %v203
  %v280 = vpop.f32.mrf.mxu0
  %v281 = vadd.f32 0.0, %v280
  %v282 = vpop.f32.mrf.mxu0
  %v283 = vadd.f32 0.0, %v282
  %284 = vmatmul.bf16.gmra.mxu0 %v204
  %v285 = vpop.f32.mrf.mxu0
  %v286 = vadd.f32 0.0, %v285
  %v287 = vpop.f32.mrf.mxu0
  %v288 = vadd.f32 0.0, %v287
  %289 = vmatmul.bf16.gmra.mxu0 %v205
  %v290 = vpop.f32.mrf.mxu0
  %v291 = vadd.f32 0.0, %v290
  %v292 = vpop.f32.mrf.mxu0
  %v293 = vadd.f32 0.0, %v292
  %294 = vmatmul.bf16.gmra.mxu0 %v206
  %v295 = vpop.f32.mrf.mxu0
  %v296 = vadd.f32 0.0, %v295
  %v297 = vpop.f32.mrf.mxu0
  %v298 = vadd.f32 0.0, %v297
  %299 = vdwg.mxu0
  %v300 = vunpack.c.l.b16 %v20
  %v301 = vunpack.c.h.b16 %v20
  %v302 = vunpack.c.l.b16 %v21
  %v303 = vunpack.c.h.b16 %v21
  %v304 = vunpack.c.l.b16 %v22
  %v305 = vunpack.c.h.b16 %v22
  %v306 = vunpack.c.l.b16 %v23
  %v307 = vunpack.c.h.b16 %v23
  %v308 = vunpack.c.l.b16 %v24
  %v309 = vunpack.c.h.b16 %v24
  %v310 = vunpack.c.l.b16 %v25
  %v311 = vunpack.c.h.b16 %v25
  %v312 = vunpack.c.l.b16 %v26
  %v313 = vunpack.c.h.b16 %v26
  %v314 = vunpack.c.l.b16 %v27
  %v315 = vunpack.c.h.b16 %v27
  %v316 = vpack.c.b16 %v302, %v300
  %v317 = vpack.c.b16 %v303, %v301
  %v318 = vpack.c.b16 %v306, %v304
  %v319 = vpack.c.b16 %v307, %v305
  %v320 = vpack.c.b16 %v310, %v308
  %v321 = vpack.c.b16 %v311, %v309
  %v322 = vpack.c.b16 %v314, %v312
  %v323 = vpack.c.b16 %v315, %v313
  %v364 = vunpack.c.l.b16 %v171
  %v365 = vunpack.c.l.b16 %v172
  %v366 = vunpack.c.l.b16 %v173
  %v367 = vunpack.c.l.b16 %v174
  %v368 = vunpack.c.l.b16 %v175
  %v369 = vunpack.c.l.b16 %v176
  %v370 = vunpack.c.l.b16 %v177
  %v371 = vunpack.c.l.b16 %v178
  %v372 = vunpack.c.l.b16 %v179
  %v373 = vunpack.c.l.b16 %v180
  %v374 = vunpack.c.l.b16 %v181
  %v375 = vunpack.c.l.b16 %v182
  %v376 = vunpack.c.l.b16 %v183
  %v377 = vunpack.c.l.b16 %v184
  %v378 = vunpack.c.l.b16 %v185
  %v379 = vunpack.c.l.b16 %v186
  %v380 = vunpack.c.l.b16 %v187
  %v381 = vunpack.c.l.b16 %v188
  %v382 = vunpack.c.l.b16 %v189
  %v383 = vunpack.c.l.b16 %v190
  %v384 = vunpack.c.l.b16 %v191
  %v385 = vunpack.c.l.b16 %v192
  %v386 = vunpack.c.l.b16 %v193
  %v387 = vunpack.c.l.b16 %v194
  %v388 = vunpack.c.l.b16 %v195
  %v389 = vunpack.c.l.b16 %v196
  %v390 = vunpack.c.l.b16 %v197
  %v391 = vunpack.c.l.b16 %v198
  %v392 = vunpack.c.l.b16 %v199
  %v393 = vunpack.c.l.b16 %v200
  %v394 = vunpack.c.l.b16 %v201
  %v395 = vunpack.c.l.b16 %v202
  %v396 = vpack.c.b16 %v365, %v364
  %v397 = vpack.c.b16 %v367, %v366
  %v398 = vpack.c.b16 %v369, %v368
  %v399 = vpack.c.b16 %v371, %v370
  %v400 = vpack.c.b16 %v373, %v372
  %v401 = vpack.c.b16 %v375, %v374
  %v402 = vpack.c.b16 %v377, %v376
  %v403 = vpack.c.b16 %v379, %v378
  %v404 = vpack.c.b16 %v381, %v380
  %v405 = vpack.c.b16 %v383, %v382
  %v406 = vpack.c.b16 %v385, %v384
  %v407 = vpack.c.b16 %v387, %v386
  %v408 = vpack.c.b16 %v389, %v388
  %v409 = vpack.c.b16 %v391, %v390
  %v410 = vpack.c.b16 %v393, %v392
  %v411 = vpack.c.b16 %v395, %v394
  %428 = vmatpush.bf16.msra.mxu0 %v403
  %429 = vmatpush.bf16.msra.mxu0 %v402
  %430 = vmatpush.bf16.msra.mxu0 %v401
  %431 = vmatpush.bf16.msra.mxu0 %v400
  %432 = vmatpush.bf16.msra.mxu0 %v399
  %433 = vmatpush.bf16.msra.mxu0 %v398
  %434 = vmatpush.bf16.msra.mxu0 %v397
  %435 = vmatpush.bf16.msra.mxu0 %v396
  %436 = vmatmul.bf16.gmra.mxu0 %v316
  %v437 = vpop.f32.mrf.mxu0
  %v438 = vadd.f32 %v281, %v437
  %v439 = vpop.f32.mrf.mxu0
  %v440 = vadd.f32 %v283, %v439
  %441 = vmatmul.bf16.gmra.mxu0 %v318
  %v442 = vpop.f32.mrf.mxu0
  %v443 = vadd.f32 %v286, %v442
  %v444 = vpop.f32.mrf.mxu0
  %v445 = vadd.f32 %v288, %v444
  %446 = vmatmul.bf16.gmra.mxu0 %v320
  %v447 = vpop.f32.mrf.mxu0
  %v448 = vadd.f32 %v291, %v447
  %v449 = vpop.f32.mrf.mxu0
  %v450 = vadd.f32 %v293, %v449
  %451 = vmatmul.bf16.gmra.mxu0 %v322
  %v452 = vpop.f32.mrf.mxu0
  %v453 = vadd.f32 %v296, %v452
  %v454 = vpop.f32.mrf.mxu0
  %v455 = vadd.f32 %v298, %v454
  %456 = vdwg.mxu0
  %457 = vmatpush.bf16.msra.mxu0 %v411
  %458 = vmatpush.bf16.msra.mxu0 %v410
  %459 = vmatpush.bf16.msra.mxu0 %v409
  %460 = vmatpush.bf16.msra.mxu0 %v408
  %461 = vmatpush.bf16.msra.mxu0 %v407
  %462 = vmatpush.bf16.msra.mxu0 %v406
  %463 = vmatpush.bf16.msra.mxu0 %v405
  %464 = vmatpush.bf16.msra.mxu0 %v404
  %465 = vmatmul.bf16.gmra.mxu0 %v317
  %v466 = vpop.f32.mrf.mxu0
  %v467 = vadd.f32 %v438, %v466
  %v468 = vpop.f32.mrf.mxu0
  %v469 = vadd.f32 %v440, %v468
  %470 = vmatmul.bf16.gmra.mxu0 %v319
  %v471 = vpop.f32.mrf.mxu0
  %v472 = vadd.f32 %v443, %v471
  %v473 = vpop.f32.mrf.mxu0
  %v474 = vadd.f32 %v445, %v473
  %475 = vmatmul.bf16.gmra.mxu0 %v321
  %v476 = vpop.f32.mrf.mxu0
  %v477 = vadd.f32 %v448, %v476
  %v478 = vpop.f32.mrf.mxu0
  %v479 = vadd.f32 %v450, %v478
  %480 = vmatmul.bf16.gmra.mxu0 %v323
  %v481 = vpop.f32.mrf.mxu0
  %v482 = vadd.f32 %v453, %v481
  %v483 = vpop.f32.mrf.mxu0
  %v484 = vadd.f32 %v455, %v483
  %485 = vdwg.mxu0
  %v486 = vld [vmem:[%s4] sm:$0x1]
  %v488 = vperm.slane %v486, 0
  %v490 = vadd.f32 %v467, %v488
  %v491 = vadd.f32 %v469, %v488
  %v492 = vadd.f32 %v472, %v488
  %v493 = vadd.f32 %v474, %v488
  %v494 = vadd.f32 %v477, %v488
  %v495 = vadd.f32 %v479, %v488
  %v496 = vadd.f32 %v482, %v488
  %v497 = vadd.f32 %v484, %v488
  %v498 = vmax.f32 %v490, 0.0
  %v499 = vmax.f32 %v491, 0.0
  %v500 = vmax.f32 %v492, 0.0
  %v501 = vmax.f32 %v493, 0.0
  %v502 = vmax.f32 %v494, 0.0
  %v503 = vmax.f32 %v495, 0.0
  %v504 = vmax.f32 %v496, 0.0
  %v505 = vmax.f32 %v497, 0.0
  %v506 = vpack.c.bf16 %v498, %v498
  %v507 = vpack.c.bf16 %v499, %v499
  %v508 = vpack.c.bf16 %v500, %v500
  %v509 = vpack.c.bf16 %v501, %v501
  %v510 = vpack.c.bf16 %v502, %v502
  %v511 = vpack.c.bf16 %v503, %v503
  %v512 = vpack.c.bf16 %v504, %v504
  %v513 = vpack.c.bf16 %v505, %v505
  %514 = vst [vmem:[%s5] sm:$0xf] %v506
  %515 = vst [vmem:[%s5 + $0x4] sm:$0xf] %v507
  %516 = vst [vmem:[%s5 + $0x8] sm:$0xf] %v508
  %517 = vst [vmem:[%s5 + $0xc] sm:$0xf] %v509
  %518 = vst [vmem:[%s5 + $0x10] sm:$0xf] %v510
  %519 = vst [vmem:[%s5 + $0x14] sm:$0xf] %v511
  %520 = vst [vmem:[%s5 + $0x18] sm:$0xf] %v512
  %521 = vst [vmem:[%s5 + $0x1c] sm:$0xf] %v513
  // Predicated region
  $region22: #{pyramid_detection_forward.7} parent=0 // pred_check
    _
  $region23: #{pyramid_detection_forward.7} parent=0 // pred_check_branch
    %523 = sbr.rel (0) target = $region25
  $region24: #{pyramid_detection_forward.7} parent=0 // pred_region
    _
  $region25: #{pyramid_detection_forward.7} parent=0 // pred_fallthru
    _
  // Predicated region
  $region26: #{pyramid_detection_forward.7} parent=0 // pred_check
    _
  $region27: #{pyramid_detection_forward.7} parent=0 // pred_check_branch
    %525 = sbr.rel (0) target = $region29
  $region28: #{pyramid_detection_forward.7} parent=0 // pred_region
    _
  $region29: #{pyramid_detection_forward.7} parent=0 // pred_fallthru
    _

// kernel: pyramid_detection_forward.8
$region0: #{pyramid_detection_forward.8}
  #allocation0 [shape = 'u32[]', space=smem, size = 0x4, offset = 0x4, fixed_abs, tag = 'smem constant byte address 0x4 - core index']
  #allocation1 [shape = 'u32[72,128]{1,0:T(1,128)}', space=vmem, size = 0x9000, scoped, tag = 'internal scratch']
  %s0 = inlined_call_operand.vmem [shape: bf16[32,256], index: 0, kind: input, shape index: {}]
  %s1 = inlined_call_operand.vmem [shape: bf16[1,1,128], index: 1, kind: input, shape index: {}]
  %s2 = inlined_call_operand.vmem [shape: bf16[256,128], index: 2, kind: input, shape index: {}]
  %s3 = inlined_call_operand.vmem [shape: bf16[128,128], index: 3, kind: input, shape index: {}]
  %s4 = inlined_call_operand.vmem [shape: f32[1,128], index: 4, kind: input, shape index: {}]
  %s5 = inlined_call_operand.vmem [shape: bf16[32,128], index: 5, kind: output, shape index: {}]
  %s6 = sld [smem:[#allocation0]]
  $region30: #{pyramid_detection_forward.8} parent=0
    _
  %s8 = ssub.s32 1, %s6
  %s9 = scalar_select 0, %s8, %s6
  // Predicated region
  $region2: #{pyramid_detection_forward.8} parent=0 // pred_check
    _
  $region3: #{pyramid_detection_forward.8} parent=0 // pred_check_branch
    %11 = sbr.rel (0) target = $region5
  $region4: #{pyramid_detection_forward.8} parent=0 // pred_region
    _
  $region5: #{pyramid_detection_forward.8} parent=0 // pred_fallthru
    _
  // Predicated region
  $region6: #{pyramid_detection_forward.8} parent=0 // pred_check
    _
  $region7: #{pyramid_detection_forward.8} parent=0 // pred_check_branch
    %13 = sbr.rel (0) target = $region9
  $region8: #{pyramid_detection_forward.8} parent=0 // pred_region
    _
  $region9: #{pyramid_detection_forward.8} parent=0 // pred_fallthru
    _
  // Predicated region
  $region10: #{pyramid_detection_forward.8} parent=0 // pred_check
    _
  $region11: #{pyramid_detection_forward.8} parent=0 // pred_check_branch
    %15 = sbr.rel (0) target = $region13
  $region12: #{pyramid_detection_forward.8} parent=0 // pred_region
    _
  $region13: #{pyramid_detection_forward.8} parent=0 // pred_fallthru
    _
  // Predicated region
  $region14: #{pyramid_detection_forward.8} parent=0 // pred_check
    _
  $region15: #{pyramid_detection_forward.8} parent=0 // pred_check_branch
    %17 = sbr.rel (0) target = $region17
  $region16: #{pyramid_detection_forward.8} parent=0 // pred_region
    _
  $region17: #{pyramid_detection_forward.8} parent=0 // pred_fallthru
    _
  // Predicated region
  $region18: #{pyramid_detection_forward.8} parent=0 // pred_check
    _
  $region19: #{pyramid_detection_forward.8} parent=0 // pred_check_branch
    %19 = sbr.rel (0) target = $region21
  $region20: #{pyramid_detection_forward.8} parent=0 // pred_region
    _
  $region21: #{pyramid_detection_forward.8} parent=0 // pred_fallthru
    _
  %v20 = vld [vmem:[%s0] sm:$0xff]
  %v21 = vld [vmem:[%s0 + $0x8] sm:$0xff]
  %v22 = vld [vmem:[%s0 + $0x10] sm:$0xff]
  %v23 = vld [vmem:[%s0 + $0x18] sm:$0xff]
  %v28 = vrot.slane %v20, 4
  %v29 = vrot.slane %v21, 4
  %v30 = vrot.slane %v22, 4
  %v31 = vrot.slane %v23, 4
  %v36 = vunpack.c.l.bf16 %v28
  %v37 = vunpack.c.l.bf16 %v29
  %v38 = vunpack.c.l.bf16 %v30
  %v39 = vunpack.c.l.bf16 %v31
  %v40 = vrot.slane %v36, 7
  %v41 = vrot.slane %v37, 7
  %v42 = vrot.slane %v38, 7
  %v43 = vrot.slane %v39, 7
  %v44 = vlaneseq
  %v45 = vshrl.u32 %v44, 7
  %vm46 = vcmp.lt.s32.totalorder %v45, 1
  %v47 = vsel %vm46, %v42, %v43
  %v48 = vsel %vm46, %v41, %v42
  %v49 = vsel %vm46, %v40, %v41
  %v50 = vsel %vm46, %v43, %v40
  %v51 = vadd.s32 %v45, 8
  %v52 = vadd.s32 %v45, 16
  %v53 = vadd.s32 %v45, 24
  %vm54 = vcmp.eq.s32.totalorder %v45, 0
  %vm55 = vcmp.eq.s32.totalorder %v51, 0
  %vm56 = vcmp.eq.s32.totalorder %v52, 0
  %vm57 = vcmp.eq.s32.totalorder %v53, 0
  %v58 = vld [vmem:[%s1] sm:$0x1]
  %v59 = vunpack.c.l.bf16 %v58
  %v60 = vsel %vm54, 1, 0
  %v61 = vsel %vm55, 1, 0
  %v62 = vsel %vm56, 1, 0
  %v63 = vsel %vm57, 1, 0
  %vm64 = vcmp.eq.s32.totalorder %v60, 1
  %vm65 = vcmp.eq.s32.totalorder %v61, 1
  %vm66 = vcmp.eq.s32.totalorder %v62, 1
  %vm67 = vcmp.eq.s32.totalorder %v63, 1
  %v68 = vperm.slane %v59, 0
  %v69 = vsel %vm64, %v68, %v50
  %v70 = vsel %vm65, %v68, %v49
  %v71 = vsel %vm66, %v68, %v48
  %v72 = vsel %vm67, %v68, %v47
  %s73 = smul.u32 0, 32
  %v74 = vstv %s73
  %v75 = vadd.s32 %v45, %v74
  %v76 = vadd.s32 %v51, %v74
  %v77 = vadd.s32 %v52, %v74
  %v78 = vadd.s32 %v53, %v74
  %v79 = vand.u32 %v75, 15
  %v80 = vand.u32 %v76, 15
  %v81 = vand.u32 %v77, 15
  %v82 = vand.u32 %v78, 15
  %vm83 = vcmp.eq.s32.totalorder %v79, 0
  %vm84 = vcmp.eq.s32.totalorder %v80, 0
  %vm85 = vcmp.eq.s32.totalorder %v81, 0
  %vm86 = vcmp.eq.s32.totalorder %v82, 0
  %v87 = vsel %vm83, 1, 0
  %v88 = vsel %vm84, 1, 0
  %v89 = vsel %vm85, 1, 0
  %v90 = vsel %vm86, 1, 0
  %vm91 = vcmp.eq.s32.totalorder %v87, 1
  %vm92 = vcmp.eq.s32.totalorder %v88, 1
  %vm93 = vcmp.eq.s32.totalorder %v89, 1
  %vm94 = vcmp.eq.s32.totalorder %v90, 1
  %v95 = vsel %vm91, 0.0, %v69
  %v96 = vsel %vm92, 0.0, %v70
  %v97 = vsel %vm93, 0.0, %v71
  %v98 = vsel %vm94, 0.0, %v72
  %v99 = vld [vmem:[%s2] sm:$0xf]
  %v100 = vld [vmem:[%s2 + $0x4] sm:$0xf]
  %v101 = vld [vmem:[%s2 + $0x8] sm:$0xf]
  %v102 = vld [vmem:[%s2 + $0xc] sm:$0xf]
  %v103 = vld [vmem:[%s2 + $0x10] sm:$0xf]
  %v104 = vld [vmem:[%s2 + $0x14] sm:$0xf]
  %v105 = vld [vmem:[%s2 + $0x18] sm:$0xf]
  %v106 = vld [vmem:[%s2 + $0x1c] sm:$0xf]
  %v107 = vld [vmem:[%s2 + $0x20] sm:$0xf]
  %v108 = vld [vmem:[%s2 + $0x24] sm:$0xf]
  %v109 = vld [vmem:[%s2 + $0x28] sm:$0xf]
  %v110 = vld [vmem:[%s2 + $0x2c] sm:$0xf]
  %v111 = vld [vmem:[%s2 + $0x30] sm:$0xf]
  %v112 = vld [vmem:[%s2 + $0x34] sm:$0xf]
  %v113 = vld [vmem:[%s2 + $0x38] sm:$0xf]
  %v114 = vld [vmem:[%s2 + $0x3c] sm:$0xf]
  %v115 = vld [vmem:[%s2 + $0x40] sm:$0xf]
  %v116 = vld [vmem:[%s2 + $0x44] sm:$0xf]
  %v117 = vld [vmem:[%s2 + $0x48] sm:$0xf]
  %v118 = vld [vmem:[%s2 + $0x4c] sm:$0xf]
  %v119 = vld [vmem:[%s2 + $0x50] sm:$0xf]
  %v120 = vld [vmem:[%s2 + $0x54] sm:$0xf]
  %v121 = vld [vmem:[%s2 + $0x58] sm:$0xf]
  %v122 = vld [vmem:[%s2 + $0x5c] sm:$0xf]
  %v123 = vld [vmem:[%s2 + $0x60] sm:$0xf]
  %v124 = vld [vmem:[%s2 + $0x64] sm:$0xf]
  %v125 = vld [vmem:[%s2 + $0x68] sm:$0xf]
  %v126 = vld [vmem:[%s2 + $0x6c] sm:$0xf]
  %v127 = vld [vmem:[%s2 + $0x70] sm:$0xf]
  %v128 = vld [vmem:[%s2 + $0x74] sm:$0xf]
  %v129 = vld [vmem:[%s2 + $0x78] sm:$0xf]
  %v130 = vld [vmem:[%s2 + $0x7c] sm:$0xf]
  %v131 = vpack.c.bf16 %v96, %v95
  %v132 = vpack.c.bf16 %v98, %v97
  %v133 = vld [vmem:[%s3] sm:$0xf]
  %v134 = vld [vmem:[%s3 + $0x4] sm:$0xf]
  %v135 = vld [vmem:[%s3 + $0x8] sm:$0xf]
  %v136 = vld [vmem:[%s3 + $0xc] sm:$0xf]
  %v137 = vld [vmem:[%s3 + $0x10] sm:$0xf]
  %v138 = vld [vmem:[%s3 + $0x14] sm:$0xf]
  %v139 = vld [vmem:[%s3 + $0x18] sm:$0xf]
  %v140 = vld [vmem:[%s3 + $0x1c] sm:$0xf]
  %v141 = vld [vmem:[%s3 + $0x20] sm:$0xf]
  %v142 = vld [vmem:[%s3 + $0x24] sm:$0xf]
  %v143 = vld [vmem:[%s3 + $0x28] sm:$0xf]
  %v144 = vld [vmem:[%s3 + $0x2c] sm:$0xf]
  %v145 = vld [vmem:[%s3 + $0x30] sm:$0xf]
  %v146 = vld [vmem:[%s3 + $0x34] sm:$0xf]
  %v147 = vld [vmem:[%s3 + $0x38] sm:$0xf]
  %v148 = vld [vmem:[%s3 + $0x3c] sm:$0xf]
  %v165 = vunpack.c.l.b16 %v133
  %v166 = vunpack.c.l.b16 %v134
  %v167 = vunpack.c.l.b16 %v135
  %v168 = vunpack.c.l.b16 %v136
  %v169 = vunpack.c.l.b16 %v137
  %v170 = vunpack.c.l.b16 %v138
  %v171 = vunpack.c.l.b16 %v139
  %v172 = vunpack.c.l.b16 %v140
  %v173 = vunpack.c.l.b16 %v141
  %v174 = vunpack.c.l.b16 %v142
  %v175 = vunpack.c.l.b16 %v143
  %v176 = vunpack.c.l.b16 %v144
  %v177 = vunpack.c.l.b16 %v145
  %v178 = vunpack.c.l.b16 %v146
  %v179 = vunpack.c.l.b16 %v147
  %v180 = vunpack.c.l.b16 %v148
  %v181 = vpack.c.b16 %v166, %v165
  %v182 = vpack.c.b16 %v168, %v167
  %v183 = vpack.c.b16 %v170, %v169
  %v184 = vpack.c.b16 %v172, %v171
  %v185 = vpack.c.b16 %v174, %v173
  %v186 = vpack.c.b16 %v176, %v175
  %v187 = vpack.c.b16 %v178, %v177
  %v188 = vpack.c.b16 %v180, %v179
  %197 = vmatpush.bf16.msra.mxu0 %v188
  %198 = vmatpush.bf16.msra.mxu0 %v187
  %199 = vmatpush.bf16.msra.mxu0 %v186
  %200 = vmatpush.bf16.msra.mxu0 %v185
  %201 = vmatpush.bf16.msra.mxu0 %v184
  %202 = vmatpush.bf16.msra.mxu0 %v183
  %203 = vmatpush.bf16.msra.mxu0 %v182
  %204 = vmatpush.bf16.msra.mxu0 %v181
  %205 = vmatmul.bf16.gmra.mxu0 %v131
  %v206 = vpop.f32.mrf.mxu0
  %v207 = vadd.f32 0.0, %v206
  %v208 = vpop.f32.mrf.mxu0
  %v209 = vadd.f32 0.0, %v208
  %210 = vmatmul.bf16.gmra.mxu0 %v132
  %v211 = vpop.f32.mrf.mxu0
  %v212 = vadd.f32 0.0, %v211
  %v213 = vpop.f32.mrf.mxu0
  %v214 = vadd.f32 0.0, %v213
  %215 = vdwg.mxu0
  %v216 = vunpack.c.l.b16 %v20
  %v217 = vunpack.c.h.b16 %v20
  %v218 = vunpack.c.l.b16 %v21
  %v219 = vunpack.c.h.b16 %v21
  %v220 = vunpack.c.l.b16 %v22
  %v221 = vunpack.c.h.b16 %v22
  %v222 = vunpack.c.l.b16 %v23
  %v223 = vunpack.c.h.b16 %v23
  %v224 = vpack.c.b16 %v218, %v216
  %v225 = vpack.c.b16 %v219, %v217
  %v226 = vpack.c.b16 %v222, %v220
  %v227 = vpack.c.b16 %v223, %v221
  %v264 = vunpack.c.l.b16 %v99
  %v265 = vunpack.c.l.b16 %v100
  %v266 = vunpack.c.l.b16 %v101
  %v267 = vunpack.c.l.b16 %v102
  %v268 = vunpack.c.l.b16 %v103
  %v269 = vunpack.c.l.b16 %v104
  %v270 = vunpack.c.l.b16 %v105
  %v271 = vunpack.c.l.b16 %v106
  %v272 = vunpack.c.l.b16 %v107
  %v273 = vunpack.c.l.b16 %v108
  %v274 = vunpack.c.l.b16 %v109
  %v275 = vunpack.c.l.b16 %v110
  %v276 = vunpack.c.l.b16 %v111
  %v277 = vunpack.c.l.b16 %v112
  %v278 = vunpack.c.l.b16 %v113
  %v279 = vunpack.c.l.b16 %v114
  %v280 = vunpack.c.l.b16 %v115
  %v281 = vunpack.c.l.b16 %v116
  %v282 = vunpack.c.l.b16 %v117
  %v283 = vunpack.c.l.b16 %v118
  %v284 = vunpack.c.l.b16 %v119
  %v285 = vunpack.c.l.b16 %v120
  %v286 = vunpack.c.l.b16 %v121
  %v287 = vunpack.c.l.b16 %v122
  %v288 = vunpack.c.l.b16 %v123
  %v289 = vunpack.c.l.b16 %v124
  %v290 = vunpack.c.l.b16 %v125
  %v291 = vunpack.c.l.b16 %v126
  %v292 = vunpack.c.l.b16 %v127
  %v293 = vunpack.c.l.b16 %v128
  %v294 = vunpack.c.l.b16 %v129
  %v295 = vunpack.c.l.b16 %v130
  %v296 = vpack.c.b16 %v265, %v264
  %v297 = vpack.c.b16 %v267, %v266
  %v298 = vpack.c.b16 %v269, %v268
  %v299 = vpack.c.b16 %v271, %v270
  %v300 = vpack.c.b16 %v273, %v272
  %v301 = vpack.c.b16 %v275, %v274
  %v302 = vpack.c.b16 %v277, %v276
  %v303 = vpack.c.b16 %v279, %v278
  %v304 = vpack.c.b16 %v281, %v280
  %v305 = vpack.c.b16 %v283, %v282
  %v306 = vpack.c.b16 %v285, %v284
  %v307 = vpack.c.b16 %v287, %v286
  %v308 = vpack.c.b16 %v289, %v288
  %v309 = vpack.c.b16 %v291, %v290
  %v310 = vpack.c.b16 %v293, %v292
  %v311 = vpack.c.b16 %v295, %v294
  %328 = vmatpush.bf16.msra.mxu0 %v303
  %329 = vmatpush.bf16.msra.mxu0 %v302
  %330 = vmatpush.bf16.msra.mxu0 %v301
  %331 = vmatpush.bf16.msra.mxu0 %v300
  %332 = vmatpush.bf16.msra.mxu0 %v299
  %333 = vmatpush.bf16.msra.mxu0 %v298
  %334 = vmatpush.bf16.msra.mxu0 %v297
  %335 = vmatpush.bf16.msra.mxu0 %v296
  %336 = vmatmul.bf16.gmra.mxu0 %v224
  %v337 = vpop.f32.mrf.mxu0
  %v338 = vadd.f32 %v207, %v337
  %v339 = vpop.f32.mrf.mxu0
  %v340 = vadd.f32 %v209, %v339
  %341 = vmatmul.bf16.gmra.mxu0 %v226
  %v342 = vpop.f32.mrf.mxu0
  %v343 = vadd.f32 %v212, %v342
  %v344 = vpop.f32.mrf.mxu0
  %v345 = vadd.f32 %v214, %v344
  %346 = vdwg.mxu0
  %347 = vmatpush.bf16.msra.mxu0 %v311
  %348 = vmatpush.bf16.msra.mxu0 %v310
  %349 = vmatpush.bf16.msra.mxu0 %v309
  %350 = vmatpush.bf16.msra.mxu0 %v308
  %351 = vmatpush.bf16.msra.mxu0 %v307
  %352 = vmatpush.bf16.msra.mxu0 %v306
  %353 = vmatpush.bf16.msra.mxu0 %v305
  %354 = vmatpush.bf16.msra.mxu0 %v304
  %355 = vmatmul.bf16.gmra.mxu0 %v225
  %v356 = vpop.f32.mrf.mxu0
  %v357 = vadd.f32 %v338, %v356
  %v358 = vpop.f32.mrf.mxu0
  %v359 = vadd.f32 %v340, %v358
  %360 = vmatmul.bf16.gmra.mxu0 %v227
  %v361 = vpop.f32.mrf.mxu0
  %v362 = vadd.f32 %v343, %v361
  %v363 = vpop.f32.mrf.mxu0
  %v364 = vadd.f32 %v345, %v363
  %365 = vdwg.mxu0
  %v366 = vld [vmem:[%s4] sm:$0x1]
  %v368 = vperm.slane %v366, 0
  %v370 = vadd.f32 %v357, %v368
  %v371 = vadd.f32 %v359, %v368
  %v372 = vadd.f32 %v362, %v368
  %v373 = vadd.f32 %v364, %v368
  %v374 = vmax.f32 %v370, 0.0
  %v375 = vmax.f32 %v371, 0.0
  %v376 = vmax.f32 %v372, 0.0
  %v377 = vmax.f32 %v373, 0.0
  %v378 = vpack.c.bf16 %v374, %v374
  %v379 = vpack.c.bf16 %v375, %v375
  %v380 = vpack.c.bf16 %v376, %v376
  %v381 = vpack.c.bf16 %v377, %v377
  %382 = vst [vmem:[%s5] sm:$0xf] %v378
  %383 = vst [vmem:[%s5 + $0x4] sm:$0xf] %v379
  %384 = vst [vmem:[%s5 + $0x8] sm:$0xf] %v380
  %385 = vst [vmem:[%s5 + $0xc] sm:$0xf] %v381
  // Predicated region
  $region22: #{pyramid_detection_forward.8} parent=0 // pred_check
    _
  $region23: #{pyramid_detection_forward.8} parent=0 // pred_check_branch
    %387 = sbr.rel (0) target = $region25
  $region24: #{pyramid_detection_forward.8} parent=0 // pred_region
    _
  $region25: #{pyramid_detection_forward.8} parent=0 // pred_fallthru
    _
  // Predicated region
  $region26: #{pyramid_detection_forward.8} parent=0 // pred_check
    _
  $region27: #{pyramid_detection_forward.8} parent=0 // pred_check_branch
    %389 = sbr.rel (0) target = $region29
  $region28: #{pyramid_detection_forward.8} parent=0 // pred_region
    _
  $region29: #{pyramid_detection_forward.8} parent=0 // pred_fallthru
    _

// kernel: pyramid_detection_forward.6
$region0: #{pyramid_detection_forward.6}
  #allocation0 [shape = 'u32[]', space=smem, size = 0x4, offset = 0x4, fixed_abs, tag = 'smem constant byte address 0x4 - core index']
  #allocation1 [shape = 'u32[72,128]{1,0:T(1,128)}', space=vmem, size = 0x9000, scoped, tag = 'internal scratch']
  %s0 = inlined_call_operand.vmem [shape: bf16[128,256], index: 0, kind: input, shape index: {}]
  %s1 = inlined_call_operand.vmem [shape: bf16[1,1,128], index: 1, kind: input, shape index: {}]
  %s2 = inlined_call_operand.vmem [shape: bf16[256,128], index: 2, kind: input, shape index: {}]
  %s3 = inlined_call_operand.vmem [shape: bf16[128,128], index: 3, kind: input, shape index: {}]
  %s4 = inlined_call_operand.vmem [shape: f32[1,128], index: 4, kind: input, shape index: {}]
  %s5 = inlined_call_operand.vmem [shape: bf16[128,128], index: 5, kind: output, shape index: {}]
  %s6 = sld [smem:[#allocation0]]
  $region30: #{pyramid_detection_forward.6} parent=0
    _
  %s8 = ssub.s32 1, %s6
  %s9 = scalar_select 0, %s8, %s6
  // Predicated region
  $region2: #{pyramid_detection_forward.6} parent=0 // pred_check
    _
  $region3: #{pyramid_detection_forward.6} parent=0 // pred_check_branch
    %11 = sbr.rel (0) target = $region5
  $region4: #{pyramid_detection_forward.6} parent=0 // pred_region
    _
  $region5: #{pyramid_detection_forward.6} parent=0 // pred_fallthru
    _
  // Predicated region
  $region6: #{pyramid_detection_forward.6} parent=0 // pred_check
    _
  $region7: #{pyramid_detection_forward.6} parent=0 // pred_check_branch
    %13 = sbr.rel (0) target = $region9
  $region8: #{pyramid_detection_forward.6} parent=0 // pred_region
    _
  $region9: #{pyramid_detection_forward.6} parent=0 // pred_fallthru
    _
  // Predicated region
  $region10: #{pyramid_detection_forward.6} parent=0 // pred_check
    _
  $region11: #{pyramid_detection_forward.6} parent=0 // pred_check_branch
    %15 = sbr.rel (0) target = $region13
  $region12: #{pyramid_detection_forward.6} parent=0 // pred_region
    _
  $region13: #{pyramid_detection_forward.6} parent=0 // pred_fallthru
    _
  // Predicated region
  $region14: #{pyramid_detection_forward.6} parent=0 // pred_check
    _
  $region15: #{pyramid_detection_forward.6} parent=0 // pred_check_branch
    %17 = sbr.rel (0) target = $region17
  $region16: #{pyramid_detection_forward.6} parent=0 // pred_region
    _
  $region17: #{pyramid_detection_forward.6} parent=0 // pred_fallthru
    _
  // Predicated region
  $region18: #{pyramid_detection_forward.6} parent=0 // pred_check
    _
  $region19: #{pyramid_detection_forward.6} parent=0 // pred_check_branch
    %19 = sbr.rel (0) target = $region21
  $region20: #{pyramid_detection_forward.6} parent=0 // pred_region
    _
  $region21: #{pyramid_detection_forward.6} parent=0 // pred_fallthru
    _
  %v20 = vld [vmem:[%s0] sm:$0xff]
  %v21 = vld [vmem:[%s0 + $0x8] sm:$0xff]
  %v22 = vld [vmem:[%s0 + $0x10] sm:$0xff]
  %v23 = vld [vmem:[%s0 + $0x18] sm:$0xff]
  %v24 = vld [vmem:[%s0 + $0x20] sm:$0xff]
  %v25 = vld [vmem:[%s0 + $0x28] sm:$0xff]
  %v26 = vld [vmem:[%s0 + $0x30] sm:$0xff]
  %v27 = vld [vmem:[%s0 + $0x38] sm:$0xff]
  %v28 = vld [vmem:[%s0 + $0x40] sm:$0xff]
  %v29 = vld [vmem:[%s0 + $0x48] sm:$0xff]
  %v30 = vld [vmem:[%s0 + $0x50] sm:$0xff]
  %v31 = vld [vmem:[%s0 + $0x58] sm:$0xff]
  %v32 = vld [vmem:[%s0 + $0x60] sm:$0xff]
  %v33 = vld [vmem:[%s0 + $0x68] sm:$0xff]
  %v34 = vld [vmem:[%s0 + $0x70] sm:$0xff]
  %v35 = vld [vmem:[%s0 + $0x78] sm:$0xff]
  %v52 = vrot.slane %v20, 4
  %v53 = vrot.slane %v21, 4
  %v54 = vrot.slane %v22, 4
  %v55 = vrot.slane %v23, 4
  %v56 = vrot.slane %v24, 4
  %v57 = vrot.slane %v25, 4
  %v58 = vrot.slane %v26, 4
  %v59 = vrot.slane %v27, 4
  %v60 = vrot.slane %v28, 4
  %v61 = vrot.slane %v29, 4
  %v62 = vrot.slane %v30, 4
  %v63 = vrot.slane %v31, 4
  %v64 = vrot.slane %v32, 4
  %v65 = vrot.slane %v33, 4
  %v66 = vrot.slane %v34, 4
  %v67 = vrot.slane %v35, 4
  %v84 = vunpack.c.l.bf16 %v52
  %v85 = vunpack.c.l.bf16 %v53
  %v86 = vunpack.c.l.bf16 %v54
  %v87 = vunpack.c.l.bf16 %v55
  %v88 = vunpack.c.l.bf16 %v56
  %v89 = vunpack.c.l.bf16 %v57
  %v90 = vunpack.c.l.bf16 %v58
  %v91 = vunpack.c.l.bf16 %v59
  %v92 = vunpack.c.l.bf16 %v60
  %v93 = vunpack.c.l.bf16 %v61
  %v94 = vunpack.c.l.bf16 %v62
  %v95 = vunpack.c.l.bf16 %v63
  %v96 = vunpack.c.l.bf16 %v64
  %v97 = vunpack.c.l.bf16 %v65
  %v98 = vunpack.c.l.bf16 %v66
  %v99 = vunpack.c.l.bf16 %v67
  %v100 = vrot.slane %v84, 7
  %v101 = vrot.slane %v85, 7
  %v102 = vrot.slane %v86, 7
  %v103 = vrot.slane %v87, 7
  %v104 = vrot.slane %v88, 7
  %v105 = vrot.slane %v89, 7
  %v106 = vrot.slane %v90, 7
  %v107 = vrot.slane %v91, 7
  %v108 = vrot.slane %v92, 7
  %v109 = vrot.slane %v93, 7
  %v110 = vrot.slane %v94, 7
  %v111 = vrot.slane %v95, 7
  %v112 = vrot.slane %v96, 7
  %v113 = vrot.slane %v97, 7
  %v114 = vrot.slane %v98, 7
  %v115 = vrot.slane %v99, 7
  %v116 = vlaneseq
  %v117 = vshrl.u32 %v116, 7
  %vm118 = vcmp.lt.s32.totalorder %v117, 1
  %v119 = vsel %vm118, %v114, %v115
  %v120 = vsel %vm118, %v113, %v114
  %v121 = vsel %vm118, %v112, %v113
  %v122 = vsel %vm118, %v111, %v112
  %v123 = vsel %vm118, %v110, %v111
  %v124 = vsel %vm118, %v109, %v110
  %v125 = vsel %vm118, %v108, %v109
  %v126 = vsel %vm118, %v107, %v108
  %v127 = vsel %vm118, %v106, %v107
  %v128 = vsel %vm118, %v105, %v106
  %v129 = vsel %vm118, %v104, %v105
  %v130 = vsel %vm118, %v103, %v104
  %v131 = vsel %vm118, %v102, %v103
  %v132 = vsel %vm118, %v101, %v102
  %v133 = vsel %vm118, %v100, %v101
  %v134 = vsel %vm118, %v115, %v100
  %v135 = vadd.s32 %v117, 8
  %v136 = vadd.s32 %v117, 16
  %v137 = vadd.s32 %v117, 24
  %v138 = vadd.s32 %v117, 32
  %v139 = vadd.s32 %v117, 40
  %v140 = vadd.s32 %v117, 48
  %v141 = vadd.s32 %v117, 56
  %v142 = vadd.s32 %v117, 64
  %v143 = vadd.s32 %v117, 72
  %v144 = vadd.s32 %v117, 80
  %v145 = vadd.s32 %v117, 88
  %v146 = vadd.s32 %v117, 96
  %v147 = vadd.s32 %v117, 104
  %v148 = vadd.s32 %v117, 112
  %v149 = vadd.s32 %v117, 120
  %vm150 = vcmp.eq.s32.totalorder %v117, 0
  %vm151 = vcmp.eq.s32.totalorder %v135, 0
  %vm152 = vcmp.eq.s32.totalorder %v136, 0
  %vm153 = vcmp.eq.s32.totalorder %v137, 0
  %vm154 = vcmp.eq.s32.totalorder %v138, 0
  %vm155 = vcmp.eq.s32.totalorder %v139, 0
  %vm156 = vcmp.eq.s32.totalorder %v140, 0
  %vm157 = vcmp.eq.s32.totalorder %v141, 0
  %vm158 = vcmp.eq.s32.totalorder %v142, 0
  %vm159 = vcmp.eq.s32.totalorder %v143, 0
  %vm160 = vcmp.eq.s32.totalorder %v144, 0
  %vm161 = vcmp.eq.s32.totalorder %v145, 0
  %vm162 = vcmp.eq.s32.totalorder %v146, 0
  %vm163 = vcmp.eq.s32.totalorder %v147, 0
  %vm164 = vcmp.eq.s32.totalorder %v148, 0
  %vm165 = vcmp.eq.s32.totalorder %v149, 0
  %v166 = vld [vmem:[%s1] sm:$0x1]
  %v167 = vunpack.c.l.bf16 %v166
  %v168 = vsel %vm150, 1, 0
  %v169 = vsel %vm151, 1, 0
  %v170 = vsel %vm152, 1, 0
  %v171 = vsel %vm153, 1, 0
  %v172 = vsel %vm154, 1, 0
  %v173 = vsel %vm155, 1, 0
  %v174 = vsel %vm156, 1, 0
  %v175 = vsel %vm157, 1, 0
  %v176 = vsel %vm158, 1, 0
  %v177 = vsel %vm159, 1, 0
  %v178 = vsel %vm160, 1, 0
  %v179 = vsel %vm161, 1, 0
  %v180 = vsel %vm162, 1, 0
  %v181 = vsel %vm163, 1, 0
  %v182 = vsel %vm164, 1, 0
  %v183 = vsel %vm165, 1, 0
  %vm184 = vcmp.eq.s32.totalorder %v168, 1
  %vm185 = vcmp.eq.s32.totalorder %v169, 1
  %vm186 = vcmp.eq.s32.totalorder %v170, 1
  %vm187 = vcmp.eq.s32.totalorder %v171, 1
  %vm188 = vcmp.eq.s32.totalorder %v172, 1
  %vm189 = vcmp.eq.s32.totalorder %v173, 1
  %vm190 = vcmp.eq.s32.totalorder %v174, 1
  %vm191 = vcmp.eq.s32.totalorder %v175, 1
  %vm192 = vcmp.eq.s32.totalorder %v176, 1
  %vm193 = vcmp.eq.s32.totalorder %v177, 1
  %vm194 = vcmp.eq.s32.totalorder %v178, 1
  %vm195 = vcmp.eq.s32.totalorder %v179, 1
  %vm196 = vcmp.eq.s32.totalorder %v180, 1
  %vm197 = vcmp.eq.s32.totalorder %v181, 1
  %vm198 = vcmp.eq.s32.totalorder %v182, 1
  %vm199 = vcmp.eq.s32.totalorder %v183, 1
  %v200 = vperm.slane %v167, 0
  %v201 = vsel %vm184, %v200, %v134
  %v202 = vsel %vm185, %v200, %v133
  %v203 = vsel %vm186, %v200, %v132
  %v204 = vsel %vm187, %v200, %v131
  %v205 = vsel %vm188, %v200, %v130
  %v206 = vsel %vm189, %v200, %v129
  %v207 = vsel %vm190, %v200, %v128
  %v208 = vsel %vm191, %v200, %v127
  %v209 = vsel %vm192, %v200, %v126
  %v210 = vsel %vm193, %v200, %v125
  %v211 = vsel %vm194, %v200, %v124
  %v212 = vsel %vm195, %v200, %v123
  %v213 = vsel %vm196, %v200, %v122
  %v214 = vsel %vm197, %v200, %v121
  %v215 = vsel %vm198, %v200, %v120
  %v216 = vsel %vm199, %v200, %v119
  %s217 = smul.u32 0, 128
  %v218 = vstv %s217
  %v219 = vadd.s32 %v117, %v218
  %v220 = vadd.s32 %v135, %v218
  %v221 = vadd.s32 %v136, %v218
  %v222 = vadd.s32 %v137, %v218
  %v223 = vadd.s32 %v138, %v218
  %v224 = vadd.s32 %v139, %v218
  %v225 = vadd.s32 %v140, %v218
  %v226 = vadd.s32 %v141, %v218
  %v227 = vadd.s32 %v142, %v218
  %v228 = vadd.s32 %v143, %v218
  %v229 = vadd.s32 %v144, %v218
  %v230 = vadd.s32 %v145, %v218
  %v231 = vadd.s32 %v146, %v218
  %v232 = vadd.s32 %v147, %v218
  %v233 = vadd.s32 %v148, %v218
  %v234 = vadd.s32 %v149, %v218
  %v235 = vand.u32 %v219, 63
  %v236 = vand.u32 %v220, 63
  %v237 = vand.u32 %v221, 63
  %v238 = vand.u32 %v222, 63
  %v239 = vand.u32 %v223, 63
  %v240 = vand.u32 %v224, 63
  %v241 = vand.u32 %v225, 63
  %v242 = vand.u32 %v226, 63
  %v243 = vand.u32 %v227, 63
  %v244 = vand.u32 %v228, 63
  %v245 = vand.u32 %v229, 63
  %v246 = vand.u32 %v230, 63
  %v247 = vand.u32 %v231, 63
  %v248 = vand.u32 %v232, 63
  %v249 = vand.u32 %v233, 63
  %v250 = vand.u32 %v234, 63
  %vm251 = vcmp.eq.s32.totalorder %v235, 0
  %vm252 = vcmp.eq.s32.totalorder %v236, 0
  %vm253 = vcmp.eq.s32.totalorder %v237, 0
  %vm254 = vcmp.eq.s32.totalorder %v238, 0
  %vm255 = vcmp.eq.s32.totalorder %v239, 0
  %vm256 = vcmp.eq.s32.totalorder %v240, 0
  %vm257 = vcmp.eq.s32.totalorder %v241, 0
  %vm258 = vcmp.eq.s32.totalorder %v242, 0
  %vm259 = vcmp.eq.s32.totalorder %v243, 0
  %vm260 = vcmp.eq.s32.totalorder %v244, 0
  %vm261 = vcmp.eq.s32.totalorder %v245, 0
  %vm262 = vcmp.eq.s32.totalorder %v246, 0
  %vm263 = vcmp.eq.s32.totalorder %v247, 0
  %vm264 = vcmp.eq.s32.totalorder %v248, 0
  %vm265 = vcmp.eq.s32.totalorder %v249, 0
  %vm266 = vcmp.eq.s32.totalorder %v250, 0
  %v267 = vsel %vm251, 1, 0
  %v268 = vsel %vm252, 1, 0
  %v269 = vsel %vm253, 1, 0
  %v270 = vsel %vm254, 1, 0
  %v271 = vsel %vm255, 1, 0
  %v272 = vsel %vm256, 1, 0
  %v273 = vsel %vm257, 1, 0
  %v274 = vsel %vm258, 1, 0
  %v275 = vsel %vm259, 1, 0
  %v276 = vsel %vm260, 1, 0
  %v277 = vsel %vm261, 1, 0
  %v278 = vsel %vm262, 1, 0
  %v279 = vsel %vm263, 1, 0
  %v280 = vsel %vm264, 1, 0
  %v281 = vsel %vm265, 1, 0
  %v282 = vsel %vm266, 1, 0
  %vm283 = vcmp.eq.s32.totalorder %v267, 1
  %vm284 = vcmp.eq.s32.totalorder %v268, 1
  %vm285 = vcmp.eq.s32.totalorder %v269, 1
  %vm286 = vcmp.eq.s32.totalorder %v270, 1
  %vm287 = vcmp.eq.s32.totalorder %v271, 1
  %vm288 = vcmp.eq.s32.totalorder %v272, 1
  %vm289 = vcmp.eq.s32.totalorder %v273, 1
  %vm290 = vcmp.eq.s32.totalorder %v274, 1
  %vm291 = vcmp.eq.s32.totalorder %v275, 1
  %vm292 = vcmp.eq.s32.totalorder %v276, 1
  %vm293 = vcmp.eq.s32.totalorder %v277, 1
  %vm294 = vcmp.eq.s32.totalorder %v278, 1
  %vm295 = vcmp.eq.s32.totalorder %v279, 1
  %vm296 = vcmp.eq.s32.totalorder %v280, 1
  %vm297 = vcmp.eq.s32.totalorder %v281, 1
  %vm298 = vcmp.eq.s32.totalorder %v282, 1
  %v299 = vsel %vm283, 0.0, %v201
  %v300 = vsel %vm284, 0.0, %v202
  %v301 = vsel %vm285, 0.0, %v203
  %v302 = vsel %vm286, 0.0, %v204
  %v303 = vsel %vm287, 0.0, %v205
  %v304 = vsel %vm288, 0.0, %v206
  %v305 = vsel %vm289, 0.0, %v207
  %v306 = vsel %vm290, 0.0, %v208
  %v307 = vsel %vm291, 0.0, %v209
  %v308 = vsel %vm292, 0.0, %v210
  %v309 = vsel %vm293, 0.0, %v211
  %v310 = vsel %vm294, 0.0, %v212
  %v311 = vsel %vm295, 0.0, %v213
  %v312 = vsel %vm296, 0.0, %v214
  %v313 = vsel %vm297, 0.0, %v215
  %v314 = vsel %vm298, 0.0, %v216
  %v315 = vld [vmem:[%s2] sm:$0xf]
  %v316 = vld [vmem:[%s2 + $0x4] sm:$0xf]
  %v317 = vld [vmem:[%s2 + $0x8] sm:$0xf]
  %v318 = vld [vmem:[%s2 + $0xc] sm:$0xf]
  %v319 = vld [vmem:[%s2 + $0x10] sm:$0xf]
  %v320 = vld [vmem:[%s2 + $0x14] sm:$0xf]
  %v321 = vld [vmem:[%s2 + $0x18] sm:$0xf]
  %v322 = vld [vmem:[%s2 + $0x1c] sm:$0xf]
  %v323 = vld [vmem:[%s2 + $0x20] sm:$0xf]
  %v324 = vld [vmem:[%s2 + $0x24] sm:$0xf]
  %v325 = vld [vmem:[%s2 + $0x28] sm:$0xf]
  %v326 = vld [vmem:[%s2 + $0x2c] sm:$0xf]
  %v327 = vld [vmem:[%s2 + $0x30] sm:$0xf]
  %v328 = vld [vmem:[%s2 + $0x34] sm:$0xf]
  %v329 = vld [vmem:[%s2 + $0x38] sm:$0xf]
  %v330 = vld [vmem:[%s2 + $0x3c] sm:$0xf]
  %v331 = vld [vmem:[%s2 + $0x40] sm:$0xf]
  %v332 = vld [vmem:[%s2 + $0x44] sm:$0xf]
  %v333 = vld [vmem:[%s2 + $0x48] sm:$0xf]
  %v334 = vld [vmem:[%s2 + $0x4c] sm:$0xf]
  %v335 = vld [vmem:[%s2 + $0x50] sm:$0xf]
  %v336 = vld [vmem:[%s2 + $0x54] sm:$0xf]
  %v337 = vld [vmem:[%s2 + $0x58] sm:$0xf]
  %v338 = vld [vmem:[%s2 + $0x5c] sm:$0xf]
  %v339 = vld [vmem:[%s2 + $0x60] sm:$0xf]
  %v340 = vld [vmem:[%s2 + $0x64] sm:$0xf]
  %v341 = vld [vmem:[%s2 + $0x68] sm:$0xf]
  %v342 = vld [vmem:[%s2 + $0x6c] sm:$0xf]
  %v343 = vld [vmem:[%s2 + $0x70] sm:$0xf]
  %v344 = vld [vmem:[%s2 + $0x74] sm:$0xf]
  %v345 = vld [vmem:[%s2 + $0x78] sm:$0xf]
  %v346 = vld [vmem:[%s2 + $0x7c] sm:$0xf]
  %v347 = vpack.c.bf16 %v300, %v299
  %v348 = vpack.c.bf16 %v302, %v301
  %v349 = vpack.c.bf16 %v304, %v303
  %v350 = vpack.c.bf16 %v306, %v305
  %v351 = vpack.c.bf16 %v308, %v307
  %v352 = vpack.c.bf16 %v310, %v309
  %v353 = vpack.c.bf16 %v312, %v311
  %v354 = vpack.c.bf16 %v314, %v313
  %v355 = vld [vmem:[%s3] sm:$0xf]
  %v356 = vld [vmem:[%s3 + $0x4] sm:$0xf]
  %v357 = vld [vmem:[%s3 + $0x8] sm:$0xf]
  %v358 = vld [vmem:[%s3 + $0xc] sm:$0xf]
  %v359 = vld [vmem:[%s3 + $0x10] sm:$0xf]
  %v360 = vld [vmem:[%s3 + $0x14] sm:$0xf]
  %v361 = vld [vmem:[%s3 + $0x18] sm:$0xf]
  %v362 = vld [vmem:[%s3 + $0x1c] sm:$0xf]
  %v363 = vld [vmem:[%s3 + $0x20] sm:$0xf]
  %v364 = vld [vmem:[%s3 + $0x24] sm:$0xf]
  %v365 = vld [vmem:[%s3 + $0x28] sm:$0xf]
  %v366 = vld [vmem:[%s3 + $0x2c] sm:$0xf]
  %v367 = vld [vmem:[%s3 + $0x30] sm:$0xf]
  %v368 = vld [vmem:[%s3 + $0x34] sm:$0xf]
  %v369 = vld [vmem:[%s3 + $0x38] sm:$0xf]
  %v370 = vld [vmem:[%s3 + $0x3c] sm:$0xf]
  %v387 = vunpack.c.l.b16 %v355
  %v388 = vunpack.c.l.b16 %v356
  %v389 = vunpack.c.l.b16 %v357
  %v390 = vunpack.c.l.b16 %v358
  %v391 = vunpack.c.l.b16 %v359
  %v392 = vunpack.c.l.b16 %v360
  %v393 = vunpack.c.l.b16 %v361
  %v394 = vunpack.c.l.b16 %v362
  %v395 = vunpack.c.l.b16 %v363
  %v396 = vunpack.c.l.b16 %v364
  %v397 = vunpack.c.l.b16 %v365
  %v398 = vunpack.c.l.b16 %v366
  %v399 = vunpack.c.l.b16 %v367
  %v400 = vunpack.c.l.b16 %v368
  %v401 = vunpack.c.l.b16 %v369
  %v402 = vunpack.c.l.b16 %v370
  %v403 = vpack.c.b16 %v388, %v387
  %v404 = vpack.c.b16 %v390, %v389
  %v405 = vpack.c.b16 %v392, %v391
  %v406 = vpack.c.b16 %v394, %v393
  %v407 = vpack.c.b16 %v396, %v395
  %v408 = vpack.c.b16 %v398, %v397
  %v409 = vpack.c.b16 %v400, %v399
  %v410 = vpack.c.b16 %v402, %v401
  %419 = vmatpush.bf16.msra.mxu0 %v410
  %420 = vmatpush.bf16.msra.mxu0 %v409
  %421 = vmatpush.bf16.msra.mxu0 %v408
  %422 = vmatpush.bf16.msra.mxu0 %v407
  %423 = vmatpush.bf16.msra.mxu0 %v406
  %424 = vmatpush.bf16.msra.mxu0 %v405
  %425 = vmatpush.bf16.msra.mxu0 %v404
  %426 = vmatpush.bf16.msra.mxu0 %v403
  %427 = vmatmul.bf16.gmra.mxu0 %v347
  %v428 = vpop.f32.mrf.mxu0
  %v429 = vadd.f32 0.0, %v428
  %v430 = vpop.f32.mrf.mxu0
  %v431 = vadd.f32 0.0, %v430
  %432 = vmatmul.bf16.gmra.mxu0 %v348
  %v433 = vpop.f32.mrf.mxu0
  %v434 = vadd.f32 0.0, %v433
  %v435 = vpop.f32.mrf.mxu0
  %v436 = vadd.f32 0.0, %v435
  %437 = vmatmul.bf16.gmra.mxu0 %v349
  %v438 = vpop.f32.mrf.mxu0
  %v439 = vadd.f32 0.0, %v438
  %v440 = vpop.f32.mrf.mxu0
  %v441 = vadd.f32 0.0, %v440
  %442 = vmatmul.bf16.gmra.mxu0 %v350
  %v443 = vpop.f32.mrf.mxu0
  %v444 = vadd.f32 0.0, %v443
  %v445 = vpop.f32.mrf.mxu0
  %v446 = vadd.f32 0.0, %v445
  %447 = vmatmul.bf16.gmra.mxu0 %v351
  %v448 = vpop.f32.mrf.mxu0
  %v449 = vadd.f32 0.0, %v448
  %v450 = vpop.f32.mrf.mxu0
  %v451 = vadd.f32 0.0, %v450
  %452 = vmatmul.bf16.gmra.mxu0 %v352
  %v453 = vpop.f32.mrf.mxu0
  %v454 = vadd.f32 0.0, %v453
  %v455 = vpop.f32.mrf.mxu0
  %v456 = vadd.f32 0.0, %v455
  %457 = vmatmul.bf16.gmra.mxu0 %v353
  %v458 = vpop.f32.mrf.mxu0
  %v459 = vadd.f32 0.0, %v458
  %v460 = vpop.f32.mrf.mxu0
  %v461 = vadd.f32 0.0, %v460
  %462 = vmatmul.bf16.gmra.mxu0 %v354
  %v463 = vpop.f32.mrf.mxu0
  %v464 = vadd.f32 0.0, %v463
  %v465 = vpop.f32.mrf.mxu0
  %v466 = vadd.f32 0.0, %v465
  %467 = vdwg.mxu0
  %v468 = vunpack.c.l.b16 %v20
  %v469 = vunpack.c.h.b16 %v20
  %v470 = vunpack.c.l.b16 %v21
  %v471 = vunpack.c.h.b16 %v21
  %v472 = vunpack.c.l.b16 %v22
  %v473 = vunpack.c.h.b16 %v22
  %v474 = vunpack.c.l.b16 %v23
  %v475 = vunpack.c.h.b16 %v23
  %v476 = vunpack.c.l.b16 %v24
  %v477 = vunpack.c.h.b16 %v24
  %v478 = vunpack.c.l.b16 %v25
  %v479 = vunpack.c.h.b16 %v25
  %v480 = vunpack.c.l.b16 %v26
  %v481 = vunpack.c.h.b16 %v26
  %v482 = vunpack.c.l.b16 %v27
  %v483 = vunpack.c.h.b16 %v27
  %v484 = vunpack.c.l.b16 %v28
  %v485 = vunpack.c.h.b16 %v28
  %v486 = vunpack.c.l.b16 %v29
  %v487 = vunpack.c.h.b16 %v29
  %v488 = vunpack.c.l.b16 %v30
  %v489 = vunpack.c.h.b16 %v30
  %v490 = vunpack.c.l.b16 %v31
  %v491 = vunpack.c.h.b16 %v31
  %v492 = vunpack.c.l.b16 %v32
  %v493 = vunpack.c.h.b16 %v32
  %v494 = vunpack.c.l.b16 %v33
  %v495 = vunpack.c.h.b16 %v33
  %v496 = vunpack.c.l.b16 %v34
  %v497 = vunpack.c.h.b16 %v34
  %v498 = vunpack.c.l.b16 %v35
  %v499 = vunpack.c.h.b16 %v35
  %v500 = vpack.c.b16 %v470, %v468
  %v501 = vpack.c.b16 %v471, %v469
  %v502 = vpack.c.b16 %v474, %v472
  %v503 = vpack.c.b16 %v475, %v473
  %v504 = vpack.c.b16 %v478, %v476
  %v505 = vpack.c.b16 %v479, %v477
  %v506 = vpack.c.b16 %v482, %v480
  %v507 = vpack.c.b16 %v483, %v481
  %v508 = vpack.c.b16 %v486, %v484
  %v509 = vpack.c.b16 %v487, %v485
  %v510 = vpack.c.b16 %v490, %v488
  %v511 = vpack.c.b16 %v491, %v489
  %v512 = vpack.c.b16 %v494, %v492
  %v513 = vpack.c.b16 %v495, %v493
  %v514 = vpack.c.b16 %v498, %v496
  %v515 = vpack.c.b16 %v499, %v497
  %v564 = vunpack.c.l.b16 %v315
  %v565 = vunpack.c.l.b16 %v316
  %v566 = vunpack.c.l.b16 %v317
  %v567 = vunpack.c.l.b16 %v318
  %v568 = vunpack.c.l.b16 %v319
  %v569 = vunpack.c.l.b16 %v320
  %v570 = vunpack.c.l.b16 %v321
  %v571 = vunpack.c.l.b16 %v322
  %v572 = vunpack.c.l.b16 %v323
  %v573 = vunpack.c.l.b16 %v324
  %v574 = vunpack.c.l.b16 %v325
  %v575 = vunpack.c.l.b16 %v326
  %v576 = vunpack.c.l.b16 %v327
  %v577 = vunpack.c.l.b16 %v328
  %v578 = vunpack.c.l.b16 %v329
  %v579 = vunpack.c.l.b16 %v330
  %v580 = vunpack.c.l.b16 %v331
  %v581 = vunpack.c.l.b16 %v332
  %v582 = vunpack.c.l.b16 %v333
  %v583 = vunpack.c.l.b16 %v334
  %v584 = vunpack.c.l.b16 %v335
  %v585 = vunpack.c.l.b16 %v336
  %v586 = vunpack.c.l.b16 %v337
  %v587 = vunpack.c.l.b16 %v338
  %v588 = vunpack.c.l.b16 %v339
  %v589 = vunpack.c.l.b16 %v340
  %v590 = vunpack.c.l.b16 %v341
  %v591 = vunpack.c.l.b16 %v342
  %v592 = vunpack.c.l.b16 %v343
  %v593 = vunpack.c.l.b16 %v344
  %v594 = vunpack.c.l.b16 %v345
  %v595 = vunpack.c.l.b16 %v346
  %v596 = vpack.c.b16 %v565, %v564
  %v597 = vpack.c.b16 %v567, %v566
  %v598 = vpack.c.b16 %v569, %v568
  %v599 = vpack.c.b16 %v571, %v570
  %v600 = vpack.c.b16 %v573, %v572
  %v601 = vpack.c.b16 %v575, %v574
  %v602 = vpack.c.b16 %v577, %v576
  %v603 = vpack.c.b16 %v579, %v578
  %v604 = vpack.c.b16 %v581, %v580
  %v605 = vpack.c.b16 %v583, %v582
  %v606 = vpack.c.b16 %v585, %v584
  %v607 = vpack.c.b16 %v587, %v586
  %v608 = vpack.c.b16 %v589, %v588
  %v609 = vpack.c.b16 %v591, %v590
  %v610 = vpack.c.b16 %v593, %v592
  %v611 = vpack.c.b16 %v595, %v594
  %628 = vmatpush.bf16.msra.mxu0 %v603
  %629 = vmatpush.bf16.msra.mxu0 %v602
  %630 = vmatpush.bf16.msra.mxu0 %v601
  %631 = vmatpush.bf16.msra.mxu0 %v600
  %632 = vmatpush.bf16.msra.mxu0 %v599
  %633 = vmatpush.bf16.msra.mxu0 %v598
  %634 = vmatpush.bf16.msra.mxu0 %v597
  %635 = vmatpush.bf16.msra.mxu0 %v596
  %636 = vmatmul.bf16.gmra.mxu0 %v500
  %v637 = vpop.f32.mrf.mxu0
  %v638 = vadd.f32 %v429, %v637
  %v639 = vpop.f32.mrf.mxu0
  %v640 = vadd.f32 %v431, %v639
  %641 = vmatmul.bf16.gmra.mxu0 %v502
  %v642 = vpop.f32.mrf.mxu0
  %v643 = vadd.f32 %v434, %v642
  %v644 = vpop.f32.mrf.mxu0
  %v645 = vadd.f32 %v436, %v644
  %646 = vmatmul.bf16.gmra.mxu0 %v504
  %v647 = vpop.f32.mrf.mxu0
  %v648 = vadd.f32 %v439, %v647
  %v649 = vpop.f32.mrf.mxu0
  %v650 = vadd.f32 %v441, %v649
  %651 = vmatmul.bf16.gmra.mxu0 %v506
  %v652 = vpop.f32.mrf.mxu0
  %v653 = vadd.f32 %v444, %v652
  %v654 = vpop.f32.mrf.mxu0
  %v655 = vadd.f32 %v446, %v654
  %656 = vmatmul.bf16.gmra.mxu0 %v508
  %v657 = vpop.f32.mrf.mxu0
  %v658 = vadd.f32 %v449, %v657
  %v659 = vpop.f32.mrf.mxu0
  %v660 = vadd.f32 %v451, %v659
  %661 = vmatmul.bf16.gmra.mxu0 %v510
  %v662 = vpop.f32.mrf.mxu0
  %v663 = vadd.f32 %v454, %v662
  %v664 = vpop.f32.mrf.mxu0
  %v665 = vadd.f32 %v456, %v664
  %666 = vmatmul.bf16.gmra.mxu0 %v512
  %v667 = vpop.f32.mrf.mxu0
  %v668 = vadd.f32 %v459, %v667
  %v669 = vpop.f32.mrf.mxu0
  %v670 = vadd.f32 %v461, %v669
  %671 = vmatmul.bf16.gmra.mxu0 %v514
  %v672 = vpop.f32.mrf.mxu0
  %v673 = vadd.f32 %v464, %v672
  %v674 = vpop.f32.mrf.mxu0
  %v675 = vadd.f32 %v466, %v674
  %676 = vdwg.mxu0
  %677 = vmatpush.bf16.msra.mxu0 %v611
  %678 = vmatpush.bf16.msra.mxu0 %v610
  %679 = vmatpush.bf16.msra.mxu0 %v609
  %680 = vmatpush.bf16.msra.mxu0 %v608
  %681 = vmatpush.bf16.msra.mxu0 %v607
  %682 = vmatpush.bf16.msra.mxu0 %v606
  %683 = vmatpush.bf16.msra.mxu0 %v605
  %684 = vmatpush.bf16.msra.mxu0 %v604
  %685 = vmatmul.bf16.gmra.mxu0 %v501
  %v686 = vpop.f32.mrf.mxu0
  %v687 = vadd.f32 %v638, %v686
  %v688 = vpop.f32.mrf.mxu0
  %v689 = vadd.f32 %v640, %v688
  %690 = vmatmul.bf16.gmra.mxu0 %v503
  %v691 = vpop.f32.mrf.mxu0
  %v692 = vadd.f32 %v643, %v691
  %v693 = vpop.f32.mrf.mxu0
  %v694 = vadd.f32 %v645, %v693
  %695 = vmatmul.bf16.gmra.mxu0 %v505
  %v696 = vpop.f32.mrf.mxu0
  %v697 = vadd.f32 %v648, %v696
  %v698 = vpop.f32.mrf.mxu0
  %v699 = vadd.f32 %v650, %v698
  %700 = vmatmul.bf16.gmra.mxu0 %v507
  %v701 = vpop.f32.mrf.mxu0
  %v702 = vadd.f32 %v653, %v701
  %v703 = vpop.f32.mrf.mxu0
  %v704 = vadd.f32 %v655, %v703
  %705 = vmatmul.bf16.gmra.mxu0 %v509
  %v706 = vpop.f32.mrf.mxu0
  %v707 = vadd.f32 %v658, %v706
  %v708 = vpop.f32.mrf.mxu0
  %v709 = vadd.f32 %v660, %v708
  %710 = vmatmul.bf16.gmra.mxu0 %v511
  %v711 = vpop.f32.mrf.mxu0
  %v712 = vadd.f32 %v663, %v711
  %v713 = vpop.f32.mrf.mxu0
  %v714 = vadd.f32 %v665, %v713
  %715 = vmatmul.bf16.gmra.mxu0 %v513
  %v716 = vpop.f32.mrf.mxu0
  %v717 = vadd.f32 %v668, %v716
  %v718 = vpop.f32.mrf.mxu0
  %v719 = vadd.f32 %v670, %v718
  %720 = vmatmul.bf16.gmra.mxu0 %v515
  %v721 = vpop.f32.mrf.mxu0
  %v722 = vadd.f32 %v673, %v721
  %v723 = vpop.f32.mrf.mxu0
  %v724 = vadd.f32 %v675, %v723
  %725 = vdwg.mxu0
  %v726 = vld [vmem:[%s4] sm:$0x1]
  %v728 = vperm.slane %v726, 0
  %v730 = vadd.f32 %v687, %v728
  %v731 = vadd.f32 %v689, %v728
  %v732 = vadd.f32 %v692, %v728
  %v733 = vadd.f32 %v694, %v728
  %v734 = vadd.f32 %v697, %v728
  %v735 = vadd.f32 %v699, %v728
  %v736 = vadd.f32 %v702, %v728
  %v737 = vadd.f32 %v704, %v728
  %v738 = vadd.f32 %v707, %v728
  %v739 = vadd.f32 %v709, %v728
  %v740 = vadd.f32 %v712, %v728
  %v741 = vadd.f32 %v714, %v728
  %v742 = vadd.f32 %v717, %v728
  %v743 = vadd.f32 %v719, %v728
  %v744 = vadd.f32 %v722, %v728
  %v745 = vadd.f32 %v724, %v728
  %v746 = vmax.f32 %v730, 0.0
  %v747 = vmax.f32 %v731, 0.0
  %v748 = vmax.f32 %v732, 0.0
  %v749 = vmax.f32 %v733, 0.0
  %v750 = vmax.f32 %v734, 0.0
  %v751 = vmax.f32 %v735, 0.0
  %v752 = vmax.f32 %v736, 0.0
  %v753 = vmax.f32 %v737, 0.0
  %v754 = vmax.f32 %v738, 0.0
  %v755 = vmax.f32 %v739, 0.0
  %v756 = vmax.f32 %v740, 0.0
  %v757 = vmax.f32 %v741, 0.0
  %v758 = vmax.f32 %v742, 0.0
  %v759 = vmax.f32 %v743, 0.0
  %v760 = vmax.f32 %v744, 0.0
  %v761 = vmax.f32 %v745, 0.0
  %v762 = vpack.c.bf16 %v746, %v746
  %v763 = vpack.c.bf16 %v747, %v747
  %v764 = vpack.c.bf16 %v748, %v748
  %v765 = vpack.c.bf16 %v749, %v749
  %v766 = vpack.c.bf16 %v750, %v750
  %v767 = vpack.c.bf16 %v751, %v751
  %v768 = vpack.c.bf16 %v752, %v752
  %v769 = vpack.c.bf16 %v753, %v753
  %v770 = vpack.c.bf16 %v754, %v754
  %v771 = vpack.c.bf16 %v755, %v755
  %v772 = vpack.c.bf16 %v756, %v756
  %v773 = vpack.c.bf16 %v757, %v757
  %v774 = vpack.c.bf16 %v758, %v758
  %v775 = vpack.c.bf16 %v759, %v759
  %v776 = vpack.c.bf16 %v760, %v760
  %v777 = vpack.c.bf16 %v761, %v761
  %778 = vst [vmem:[%s5] sm:$0xf] %v762
  %779 = vst [vmem:[%s5 + $0x4] sm:$0xf] %v763
  %780 = vst [vmem:[%s5 + $0x8] sm:$0xf] %v764
  %781 = vst [vmem:[%s5 + $0xc] sm:$0xf] %v765
  %782 = vst [vmem:[%s5 + $0x10] sm:$0xf] %v766
  %783 = vst [vmem:[%s5 + $0x14] sm:$0xf] %v767
  %784 = vst [vmem:[%s5 + $0x18] sm:$0xf] %v768
  %785 = vst [vmem:[%s5 + $0x1c] sm:$0xf] %v769
  %786 = vst [vmem:[%s5 + $0x20] sm:$0xf] %v770
  %787 = vst [vmem:[%s5 + $0x24] sm:$0xf] %v771
  %788 = vst [vmem:[%s5 + $0x28] sm:$0xf] %v772
  %789 = vst [vmem:[%s5 + $0x2c] sm:$0xf] %v773
  %790 = vst [vmem:[%s5 + $0x30] sm:$0xf] %v774
  %791 = vst [vmem:[%s5 + $0x34] sm:$0xf] %v775
  %792 = vst [vmem:[%s5 + $0x38] sm:$0xf] %v776
  %793 = vst [vmem:[%s5 + $0x3c] sm:$0xf] %v777
  // Predicated region
  $region22: #{pyramid_detection_forward.6} parent=0 // pred_check
    _
  $region23: #{pyramid_detection_forward.6} parent=0 // pred_check_branch
    %795 = sbr.rel (0) target = $region25
  $region24: #{pyramid_detection_forward.6} parent=0 // pred_region
    _
  $region25: #{pyramid_detection_forward.6} parent=0 // pred_fallthru
    _
  // Predicated region
  $region26: #{pyramid_detection_forward.6} parent=0 // pred_check
    _
  $region27: #{pyramid_detection_forward.6} parent=0 // pred_check_branch
    %797 = sbr.rel (0) target = $region29
  $region28: #{pyramid_detection_forward.6} parent=0 // pred_region
    _
  $region29: #{pyramid_detection_forward.6} parent=0 // pred_fallthru
    _

// kernel: pyramid_detection_forward.5
$region0: #{pyramid_detection_forward.5}
  #allocation0 [shape = 'u32[]', space=smem, size = 0x4, offset = 0x4, fixed_abs, tag = 'smem constant byte address 0x4 - core index']
  #allocation1 [shape = 'u32[72,128]{1,0:T(1,128)}', space=vmem, size = 0x9000, scoped, tag = 'internal scratch']
  %s0 = inlined_call_operand.vmem [shape: bf16[256,256], index: 0, kind: input, shape index: {}]
  %s1 = inlined_call_operand.vmem [shape: bf16[1,1,128], index: 1, kind: input, shape index: {}]
  %s2 = inlined_call_operand.vmem [shape: bf16[256,128], index: 2, kind: input, shape index: {}]
  %s3 = inlined_call_operand.vmem [shape: bf16[128,128], index: 3, kind: input, shape index: {}]
  %s4 = inlined_call_operand.vmem [shape: f32[1,128], index: 4, kind: input, shape index: {}]
  %s5 = inlined_call_operand.vmem [shape: bf16[256,128], index: 5, kind: output, shape index: {}]
  %s6 = sld [smem:[#allocation0]]
  $region30: #{pyramid_detection_forward.5} parent=0
    _
  %s8 = ssub.s32 1, %s6
  %s9 = scalar_select 0, %s8, %s6
  // Predicated region
  $region2: #{pyramid_detection_forward.5} parent=0 // pred_check
    _
  $region3: #{pyramid_detection_forward.5} parent=0 // pred_check_branch
    %11 = sbr.rel (0) target = $region5
  $region4: #{pyramid_detection_forward.5} parent=0 // pred_region
    _
  $region5: #{pyramid_detection_forward.5} parent=0 // pred_fallthru
    _
  // Predicated region
  $region6: #{pyramid_detection_forward.5} parent=0 // pred_check
    _
  $region7: #{pyramid_detection_forward.5} parent=0 // pred_check_branch
    %13 = sbr.rel (0) target = $region9
  $region8: #{pyramid_detection_forward.5} parent=0 // pred_region
    _
  $region9: #{pyramid_detection_forward.5} parent=0 // pred_fallthru
    _
  // Predicated region
  $region10: #{pyramid_detection_forward.5} parent=0 // pred_check
    _
  $region11: #{pyramid_detection_forward.5} parent=0 // pred_check_branch
    %15 = sbr.rel (0) target = $region13
  $region12: #{pyramid_detection_forward.5} parent=0 // pred_region
    _
  $region13: #{pyramid_detection_forward.5} parent=0 // pred_fallthru
    _
  // Predicated region
  $region14: #{pyramid_detection_forward.5} parent=0 // pred_check
    _
  $region15: #{pyramid_detection_forward.5} parent=0 // pred_check_branch
    %17 = sbr.rel (0) target = $region17
  $region16: #{pyramid_detection_forward.5} parent=0 // pred_region
    _
  $region17: #{pyramid_detection_forward.5} parent=0 // pred_fallthru
    _
  // Predicated region
  $region18: #{pyramid_detection_forward.5} parent=0 // pred_check
    _
  $region19: #{pyramid_detection_forward.5} parent=0 // pred_check_branch
    %19 = sbr.rel (0) target = $region21
  $region20: #{pyramid_detection_forward.5} parent=0 // pred_region
    _
  $region21: #{pyramid_detection_forward.5} parent=0 // pred_fallthru
    _
  %v20 = vld [vmem:[%s0] sm:$0xff]
  %v21 = vld [vmem:[%s0 + $0x8] sm:$0xff]
  %v22 = vld [vmem:[%s0 + $0x10] sm:$0xff]
  %v23 = vld [vmem:[%s0 + $0x18] sm:$0xff]
  %v24 = vld [vmem:[%s0 + $0x20] sm:$0xff]
  %v25 = vld [vmem:[%s0 + $0x28] sm:$0xff]
  %v26 = vld [vmem:[%s0 + $0x30] sm:$0xff]
  %v27 = vld [vmem:[%s0 + $0x38] sm:$0xff]
  %v28 = vld [vmem:[%s0 + $0x40] sm:$0xff]
  %v29 = vld [vmem:[%s0 + $0x48] sm:$0xff]
  %v30 = vld [vmem:[%s0 + $0x50] sm:$0xff]
  %v31 = vld [vmem:[%s0 + $0x58] sm:$0xff]
  %v32 = vld [vmem:[%s0 + $0x60] sm:$0xff]
  %v33 = vld [vmem:[%s0 + $0x68] sm:$0xff]
  %v34 = vld [vmem:[%s0 + $0x70] sm:$0xff]
  %v35 = vld [vmem:[%s0 + $0x78] sm:$0xff]
  %v36 = vld [vmem:[%s0 + $0x80] sm:$0xff]
  %v37 = vld [vmem:[%s0 + $0x88] sm:$0xff]
  %v38 = vld [vmem:[%s0 + $0x90] sm:$0xff]
  %v39 = vld [vmem:[%s0 + $0x98] sm:$0xff]
  %v40 = vld [vmem:[%s0 + $0xa0] sm:$0xff]
  %v41 = vld [vmem:[%s0 + $0xa8] sm:$0xff]
  %v42 = vld [vmem:[%s0 + $0xb0] sm:$0xff]
  %v43 = vld [vmem:[%s0 + $0xb8] sm:$0xff]
  %v44 = vld [vmem:[%s0 + $0xc0] sm:$0xff]
  %v45 = vld [vmem:[%s0 + $0xc8] sm:$0xff]
  %v46 = vld [vmem:[%s0 + $0xd0] sm:$0xff]
  %v47 = vld [vmem:[%s0 + $0xd8] sm:$0xff]
  %v48 = vld [vmem:[%s0 + $0xe0] sm:$0xff]
  %v49 = vld [vmem:[%s0 + $0xe8] sm:$0xff]
  %v50 = vld [vmem:[%s0 + $0xf0] sm:$0xff]
  %v51 = vld [vmem:[%s0 + $0xf8] sm:$0xff]
  %v84 = vrot.slane %v20, 4
  %v85 = vrot.slane %v21, 4
  %v86 = vrot.slane %v22, 4
  %v87 = vrot.slane %v23, 4
  %v88 = vrot.slane %v24, 4
  %v89 = vrot.slane %v25, 4
  %v90 = vrot.slane %v26, 4
  %v91 = vrot.slane %v27, 4
  %v92 = vrot.slane %v28, 4
  %v93 = vrot.slane %v29, 4
  %v94 = vrot.slane %v30, 4
  %v95 = vrot.slane %v31, 4
  %v96 = vrot.slane %v32, 4
  %v97 = vrot.slane %v33, 4
  %v98 = vrot.slane %v34, 4
  %v99 = vrot.slane %v35, 4
  %v100 = vrot.slane %v36, 4
  %v101 = vrot.slane %v37, 4
  %v102 = vrot.slane %v38, 4
  %v103 = vrot.slane %v39, 4
  %v104 = vrot.slane %v40, 4
  %v105 = vrot.slane %v41, 4
  %v106 = vrot.slane %v42, 4
  %v107 = vrot.slane %v43, 4
  %v108 = vrot.slane %v44, 4
  %v109 = vrot.slane %v45, 4
  %v110 = vrot.slane %v46, 4
  %v111 = vrot.slane %v47, 4
  %v112 = vrot.slane %v48, 4
  %v113 = vrot.slane %v49, 4
  %v114 = vrot.slane %v50, 4
  %v115 = vrot.slane %v51, 4
  %v148 = vunpack.c.l.bf16 %v84
  %v149 = vunpack.c.l.bf16 %v85
  %v150 = vunpack.c.l.bf16 %v86
  %v151 = vunpack.c.l.bf16 %v87
  %v152 = vunpack.c.l.bf16 %v88
  %v153 = vunpack.c.l.bf16 %v89
  %v154 = vunpack.c.l.bf16 %v90
  %v155 = vunpack.c.l.bf16 %v91
  %v156 = vunpack.c.l.bf16 %v92
  %v157 = vunpack.c.l.bf16 %v93
  %v158 = vunpack.c.l.bf16 %v94
  %v159 = vunpack.c.l.bf16 %v95
  %v160 = vunpack.c.l.bf16 %v96
  %v161 = vunpack.c.l.bf16 %v97
  %v162 = vunpack.c.l.bf16 %v98
  %v163 = vunpack.c.l.bf16 %v99
  %v164 = vunpack.c.l.bf16 %v100
  %v165 = vunpack.c.l.bf16 %v101
  %v166 = vunpack.c.l.bf16 %v102
  %v167 = vunpack.c.l.bf16 %v103
  %v168 = vunpack.c.l.bf16 %v104
  %v169 = vunpack.c.l.bf16 %v105
  %v170 = vunpack.c.l.bf16 %v106
  %v171 = vunpack.c.l.bf16 %v107
  %v172 = vunpack.c.l.bf16 %v108
  %v173 = vunpack.c.l.bf16 %v109
  %v174 = vunpack.c.l.bf16 %v110
  %v175 = vunpack.c.l.bf16 %v111
  %v176 = vunpack.c.l.bf16 %v112
  %v177 = vunpack.c.l.bf16 %v113
  %v178 = vunpack.c.l.bf16 %v114
  %v179 = vunpack.c.l.bf16 %v115
  %v180 = vrot.slane %v148, 7
  %v181 = vrot.slane %v149, 7
  %v182 = vrot.slane %v150, 7
  %v183 = vrot.slane %v151, 7
  %v184 = vrot.slane %v152, 7
  %v185 = vrot.slane %v153, 7
  %v186 = vrot.slane %v154, 7
  %v187 = vrot.slane %v155, 7
  %v188 = vrot.slane %v156, 7
  %v189 = vrot.slane %v157, 7
  %v190 = vrot.slane %v158, 7
  %v191 = vrot.slane %v159, 7
  %v192 = vrot.slane %v160, 7
  %v193 = vrot.slane %v161, 7
  %v194 = vrot.slane %v162, 7
  %v195 = vrot.slane %v163, 7
  %v196 = vrot.slane %v164, 7
  %v197 = vrot.slane %v165, 7
  %v198 = vrot.slane %v166, 7
  %v199 = vrot.slane %v167, 7
  %v200 = vrot.slane %v168, 7
  %v201 = vrot.slane %v169, 7
  %v202 = vrot.slane %v170, 7
  %v203 = vrot.slane %v171, 7
  %v204 = vrot.slane %v172, 7
  %v205 = vrot.slane %v173, 7
  %v206 = vrot.slane %v174, 7
  %v207 = vrot.slane %v175, 7
  %v208 = vrot.slane %v176, 7
  %v209 = vrot.slane %v177, 7
  %v210 = vrot.slane %v178, 7
  %v211 = vrot.slane %v179, 7
  %v212 = vlaneseq
  %v213 = vshrl.u32 %v212, 7
  %vm214 = vcmp.lt.s32.totalorder %v213, 1
  %v215 = vsel %vm214, %v210, %v211
  %v216 = vsel %vm214, %v209, %v210
  %v217 = vsel %vm214, %v208, %v209
  %v218 = vsel %vm214, %v207, %v208
  %v219 = vsel %vm214, %v206, %v207
  %v220 = vsel %vm214, %v205, %v206
  %v221 = vsel %vm214, %v204, %v205
  %v222 = vsel %vm214, %v203, %v204
  %v223 = vsel %vm214, %v202, %v203
  %v224 = vsel %vm214, %v201, %v202
  %v225 = vsel %vm214, %v200, %v201
  %v226 = vsel %vm214, %v199, %v200
  %v227 = vsel %vm214, %v198, %v199
  %v228 = vsel %vm214, %v197, %v198
  %v229 = vsel %vm214, %v196, %v197
  %v230 = vsel %vm214, %v195, %v196
  %v231 = vsel %vm214, %v194, %v195
  %v232 = vsel %vm214, %v193, %v194
  %v233 = vsel %vm214, %v192, %v193
  %v234 = vsel %vm214, %v191, %v192
  %v235 = vsel %vm214, %v190, %v191
  %v236 = vsel %vm214, %v189, %v190
  %v237 = vsel %vm214, %v188, %v189
  %v238 = vsel %vm214, %v187, %v188
  %v239 = vsel %vm214, %v186, %v187
  %v240 = vsel %vm214, %v185, %v186
  %v241 = vsel %vm214, %v184, %v185
  %v242 = vsel %vm214, %v183, %v184
  %v243 = vsel %vm214, %v182, %v183
  %v244 = vsel %vm214, %v181, %v182
  %v245 = vsel %vm214, %v180, %v181
  %v246 = vsel %vm214, %v211, %v180
  %v247 = vadd.s32 %v213, 8
  %v248 = vadd.s32 %v213, 16
  %v249 = vadd.s32 %v213, 24
  %v250 = vadd.s32 %v213, 32
  %v251 = vadd.s32 %v213, 40
  %v252 = vadd.s32 %v213, 48
  %v253 = vadd.s32 %v213, 56
  %v254 = vadd.s32 %v213, 64
  %v255 = vadd.s32 %v213, 72
  %v256 = vadd.s32 %v213, 80
  %v257 = vadd.s32 %v213, 88
  %v258 = vadd.s32 %v213, 96
  %v259 = vadd.s32 %v213, 104
  %v260 = vadd.s32 %v213, 112
  %v261 = vadd.s32 %v213, 120
  %v262 = vadd.s32 %v213, 128
  %v263 = vadd.s32 %v213, 136
  %v264 = vadd.s32 %v213, 144
  %v265 = vadd.s32 %v213, 152
  %v266 = vadd.s32 %v213, 160
  %v267 = vadd.s32 %v213, 168
  %v268 = vadd.s32 %v213, 176
  %v269 = vadd.s32 %v213, 184
  %v270 = vadd.s32 %v213, 192
  %v271 = vadd.s32 %v213, 200
  %v272 = vadd.s32 %v213, 208
  %v273 = vadd.s32 %v213, 216
  %v274 = vadd.s32 %v213, 224
  %v275 = vadd.s32 %v213, 232
  %v276 = vadd.s32 %v213, 240
  %v277 = vadd.s32 %v213, 248
  %vm278 = vcmp.eq.s32.totalorder %v213, 0
  %vm279 = vcmp.eq.s32.totalorder %v247, 0
  %vm280 = vcmp.eq.s32.totalorder %v248, 0
  %vm281 = vcmp.eq.s32.totalorder %v249, 0
  %vm282 = vcmp.eq.s32.totalorder %v250, 0
  %vm283 = vcmp.eq.s32.totalorder %v251, 0
  %vm284 = vcmp.eq.s32.totalorder %v252, 0
  %vm285 = vcmp.eq.s32.totalorder %v253, 0
  %vm286 = vcmp.eq.s32.totalorder %v254, 0
  %vm287 = vcmp.eq.s32.totalorder %v255, 0
  %vm288 = vcmp.eq.s32.totalorder %v256, 0
  %vm289 = vcmp.eq.s32.totalorder %v257, 0
  %vm290 = vcmp.eq.s32.totalorder %v258, 0
  %vm291 = vcmp.eq.s32.totalorder %v259, 0
  %vm292 = vcmp.eq.s32.totalorder %v260, 0
  %vm293 = vcmp.eq.s32.totalorder %v261, 0
  %vm294 = vcmp.eq.s32.totalorder %v262, 0
  %vm295 = vcmp.eq.s32.totalorder %v263, 0
  %vm296 = vcmp.eq.s32.totalorder %v264, 0
  %vm297 = vcmp.eq.s32.totalorder %v265, 0
  %vm298 = vcmp.eq.s32.totalorder %v266, 0
  %vm299 = vcmp.eq.s32.totalorder %v267, 0
  %vm300 = vcmp.eq.s32.totalorder %v268, 0
  %vm301 = vcmp.eq.s32.totalorder %v269, 0
  %vm302 = vcmp.eq.s32.totalorder %v270, 0
  %vm303 = vcmp.eq.s32.totalorder %v271, 0
  %vm304 = vcmp.eq.s32.totalorder %v272, 0
  %vm305 = vcmp.eq.s32.totalorder %v273, 0
  %vm306 = vcmp.eq.s32.totalorder %v274, 0
  %vm307 = vcmp.eq.s32.totalorder %v275, 0
  %vm308 = vcmp.eq.s32.totalorder %v276, 0
  %vm309 = vcmp.eq.s32.totalorder %v277, 0
  %v310 = vld [vmem:[%s1] sm:$0x1]
  %v311 = vunpack.c.l.bf16 %v310
  %v312 = vsel %vm278, 1, 0
  %v313 = vsel %vm279, 1, 0
  %v314 = vsel %vm280, 1, 0
  %v315 = vsel %vm281, 1, 0
  %v316 = vsel %vm282, 1, 0
  %v317 = vsel %vm283, 1, 0
  %v318 = vsel %vm284, 1, 0
  %v319 = vsel %vm285, 1, 0
  %v320 = vsel %vm286, 1, 0
  %v321 = vsel %vm287, 1, 0
  %v322 = vsel %vm288, 1, 0
  %v323 = vsel %vm289, 1, 0
  %v324 = vsel %vm290, 1, 0
  %v325 = vsel %vm291, 1, 0
  %v326 = vsel %vm292, 1, 0
  %v327 = vsel %vm293, 1, 0
  %v328 = vsel %vm294, 1, 0
  %v329 = vsel %vm295, 1, 0
  %v330 = vsel %vm296, 1, 0
  %v331 = vsel %vm297, 1, 0
  %v332 = vsel %vm298, 1, 0
  %v333 = vsel %vm299, 1, 0
  %v334 = vsel %vm300, 1, 0
  %v335 = vsel %vm301, 1, 0
  %v336 = vsel %vm302, 1, 0
  %v337 = vsel %vm303, 1, 0
  %v338 = vsel %vm304, 1, 0
  %v339 = vsel %vm305, 1, 0
  %v340 = vsel %vm306, 1, 0
  %v341 = vsel %vm307, 1, 0
  %v342 = vsel %vm308, 1, 0
  %v343 = vsel %vm309, 1, 0
  %vm344 = vcmp.eq.s32.totalorder %v312, 1
  %vm345 = vcmp.eq.s32.totalorder %v313, 1
  %vm346 = vcmp.eq.s32.totalorder %v314, 1
  %vm347 = vcmp.eq.s32.totalorder %v315, 1
  %vm348 = vcmp.eq.s32.totalorder %v316, 1
  %vm349 = vcmp.eq.s32.totalorder %v317, 1
  %vm350 = vcmp.eq.s32.totalorder %v318, 1
  %vm351 = vcmp.eq.s32.totalorder %v319, 1
  %vm352 = vcmp.eq.s32.totalorder %v320, 1
  %vm353 = vcmp.eq.s32.totalorder %v321, 1
  %vm354 = vcmp.eq.s32.totalorder %v322, 1
  %vm355 = vcmp.eq.s32.totalorder %v323, 1
  %vm356 = vcmp.eq.s32.totalorder %v324, 1
  %vm357 = vcmp.eq.s32.totalorder %v325, 1
  %vm358 = vcmp.eq.s32.totalorder %v326, 1
  %vm359 = vcmp.eq.s32.totalorder %v327, 1
  %vm360 = vcmp.eq.s32.totalorder %v328, 1
  %vm361 = vcmp.eq.s32.totalorder %v329, 1
  %vm362 = vcmp.eq.s32.totalorder %v330, 1
  %vm363 = vcmp.eq.s32.totalorder %v331, 1
  %vm364 = vcmp.eq.s32.totalorder %v332, 1
  %vm365 = vcmp.eq.s32.totalorder %v333, 1
  %vm366 = vcmp.eq.s32.totalorder %v334, 1
  %vm367 = vcmp.eq.s32.totalorder %v335, 1
  %vm368 = vcmp.eq.s32.totalorder %v336, 1
  %vm369 = vcmp.eq.s32.totalorder %v337, 1
  %vm370 = vcmp.eq.s32.totalorder %v338, 1
  %vm371 = vcmp.eq.s32.totalorder %v339, 1
  %vm372 = vcmp.eq.s32.totalorder %v340, 1
  %vm373 = vcmp.eq.s32.totalorder %v341, 1
  %vm374 = vcmp.eq.s32.totalorder %v342, 1
  %vm375 = vcmp.eq.s32.totalorder %v343, 1
  %v376 = vperm.slane %v311, 0
  %v377 = vsel %vm344, %v376, %v246
  %v378 = vsel %vm345, %v376, %v245
  %v379 = vsel %vm346, %v376, %v244
  %v380 = vsel %vm347, %v376, %v243
  %v381 = vsel %vm348, %v376, %v242
  %v382 = vsel %vm349, %v376, %v241
  %v383 = vsel %vm350, %v376, %v240
  %v384 = vsel %vm351, %v376, %v239
  %v385 = vsel %vm352, %v376, %v238
  %v386 = vsel %vm353, %v376, %v237
  %v387 = vsel %vm354, %v376, %v236
  %v388 = vsel %vm355, %v376, %v235
  %v389 = vsel %vm356, %v376, %v234
  %v390 = vsel %vm357, %v376, %v233
  %v391 = vsel %vm358, %v376, %v232
  %v392 = vsel %vm359, %v376, %v231
  %v393 = vsel %vm360, %v376, %v230
  %v394 = vsel %vm361, %v376, %v229
  %v395 = vsel %vm362, %v376, %v228
  %v396 = vsel %vm363, %v376, %v227
  %v397 = vsel %vm364, %v376, %v226
  %v398 = vsel %vm365, %v376, %v225
  %v399 = vsel %vm366, %v376, %v224
  %v400 = vsel %vm367, %v376, %v223
  %v401 = vsel %vm368, %v376, %v222
  %v402 = vsel %vm369, %v376, %v221
  %v403 = vsel %vm370, %v376, %v220
  %v404 = vsel %vm371, %v376, %v219
  %v405 = vsel %vm372, %v376, %v218
  %v406 = vsel %vm373, %v376, %v217
  %v407 = vsel %vm374, %v376, %v216
  %v408 = vsel %vm375, %v376, %v215
  %s409 = smul.u32 0, 256
  %v410 = vstv %s409
  %v411 = vadd.s32 %v213, %v410
  %v412 = vadd.s32 %v247, %v410
  %v413 = vadd.s32 %v248, %v410
  %v414 = vadd.s32 %v249, %v410
  %v415 = vadd.s32 %v250, %v410
  %v416 = vadd.s32 %v251, %v410
  %v417 = vadd.s32 %v252, %v410
  %v418 = vadd.s32 %v253, %v410
  %v419 = vadd.s32 %v254, %v410
  %v420 = vadd.s32 %v255, %v410
  %v421 = vadd.s32 %v256, %v410
  %v422 = vadd.s32 %v257, %v410
  %v423 = vadd.s32 %v258, %v410
  %v424 = vadd.s32 %v259, %v410
  %v425 = vadd.s32 %v260, %v410
  %v426 = vadd.s32 %v261, %v410
  %v427 = vadd.s32 %v262, %v410
  %v428 = vadd.s32 %v263, %v410
  %v429 = vadd.s32 %v264, %v410
  %v430 = vadd.s32 %v265, %v410
  %v431 = vadd.s32 %v266, %v410
  %v432 = vadd.s32 %v267, %v410
  %v433 = vadd.s32 %v268, %v410
  %v434 = vadd.s32 %v269, %v410
  %v435 = vadd.s32 %v270, %v410
  %v436 = vadd.s32 %v271, %v410
  %v437 = vadd.s32 %v272, %v410
  %v438 = vadd.s32 %v273, %v410
  %v439 = vadd.s32 %v274, %v410
  %v440 = vadd.s32 %v275, %v410
  %v441 = vadd.s32 %v276, %v410
  %v442 = vadd.s32 %v277, %v410
  %v443 = vand.u32 %v411, 127
  %v444 = vand.u32 %v412, 127
  %v445 = vand.u32 %v413, 127
  %v446 = vand.u32 %v414, 127
  %v447 = vand.u32 %v415, 127
  %v448 = vand.u32 %v416, 127
  %v449 = vand.u32 %v417, 127
  %v450 = vand.u32 %v418, 127
  %v451 = vand.u32 %v419, 127
  %v452 = vand.u32 %v420, 127
  %v453 = vand.u32 %v421, 127
  %v454 = vand.u32 %v422, 127
  %v455 = vand.u32 %v423, 127
  %v456 = vand.u32 %v424, 127
  %v457 = vand.u32 %v425, 127
  %v458 = vand.u32 %v426, 127
  %v459 = vand.u32 %v427, 127
  %v460 = vand.u32 %v428, 127
  %v461 = vand.u32 %v429, 127
  %v462 = vand.u32 %v430, 127
  %v463 = vand.u32 %v431, 127
  %v464 = vand.u32 %v432, 127
  %v465 = vand.u32 %v433, 127
  %v466 = vand.u32 %v434, 127
  %v467 = vand.u32 %v435, 127
  %v468 = vand.u32 %v436, 127
  %v469 = vand.u32 %v437, 127
  %v470 = vand.u32 %v438, 127
  %v471 = vand.u32 %v439, 127
  %v472 = vand.u32 %v440, 127
  %v473 = vand.u32 %v441, 127
  %v474 = vand.u32 %v442, 127
  %vm475 = vcmp.eq.s32.totalorder %v443, 0
  %vm476 = vcmp.eq.s32.totalorder %v444, 0
  %vm477 = vcmp.eq.s32.totalorder %v445, 0
  %vm478 = vcmp.eq.s32.totalorder %v446, 0
  %vm479 = vcmp.eq.s32.totalorder %v447, 0
  %vm480 = vcmp.eq.s32.totalorder %v448, 0
  %vm481 = vcmp.eq.s32.totalorder %v449, 0
  %vm482 = vcmp.eq.s32.totalorder %v450, 0
  %vm483 = vcmp.eq.s32.totalorder %v451, 0
  %vm484 = vcmp.eq.s32.totalorder %v452, 0
  %vm485 = vcmp.eq.s32.totalorder %v453, 0
  %vm486 = vcmp.eq.s32.totalorder %v454, 0
  %vm487 = vcmp.eq.s32.totalorder %v455, 0
  %vm488 = vcmp.eq.s32.totalorder %v456, 0
  %vm489 = vcmp.eq.s32.totalorder %v457, 0
  %vm490 = vcmp.eq.s32.totalorder %v458, 0
  %vm491 = vcmp.eq.s32.totalorder %v459, 0
  %vm492 = vcmp.eq.s32.totalorder %v460, 0
  %vm493 = vcmp.eq.s32.totalorder %v461, 0
  %vm494 = vcmp.eq.s32.totalorder %v462, 0
  %vm495 = vcmp.eq.s32.totalorder %v463, 0
  %vm496 = vcmp.eq.s32.totalorder %v464, 0
  %vm497 = vcmp.eq.s32.totalorder %v465, 0
  %vm498 = vcmp.eq.s32.totalorder %v466, 0
  %vm499 = vcmp.eq.s32.totalorder %v467, 0
  %vm500 = vcmp.eq.s32.totalorder %v468, 0
  %vm501 = vcmp.eq.s32.totalorder %v469, 0
  %vm502 = vcmp.eq.s32.totalorder %v470, 0
  %vm503 = vcmp.eq.s32.totalorder %v471, 0
  %vm504 = vcmp.eq.s32.totalorder %v472, 0
  %vm505 = vcmp.eq.s32.totalorder %v473, 0
  %vm506 = vcmp.eq.s32.totalorder %v474, 0
  %v507 = vsel %vm475, 1, 0
  %v508 = vsel %vm476, 1, 0
  %v509 = vsel %vm477, 1, 0
  %v510 = vsel %vm478, 1, 0
  %v511 = vsel %vm479, 1, 0
  %v512 = vsel %vm480, 1, 0
  %v513 = vsel %vm481, 1, 0
  %v514 = vsel %vm482, 1, 0
  %v515 = vsel %vm483, 1, 0
  %v516 = vsel %vm484, 1, 0
  %v517 = vsel %vm485, 1, 0
  %v518 = vsel %vm486, 1, 0
  %v519 = vsel %vm487, 1, 0
  %v520 = vsel %vm488, 1, 0
  %v521 = vsel %vm489, 1, 0
  %v522 = vsel %vm490, 1, 0
  %v523 = vsel %vm491, 1, 0
  %v524 = vsel %vm492, 1, 0
  %v525 = vsel %vm493, 1, 0
  %v526 = vsel %vm494, 1, 0
  %v527 = vsel %vm495, 1, 0
  %v528 = vsel %vm496, 1, 0
  %v529 = vsel %vm497, 1, 0
  %v530 = vsel %vm498, 1, 0
  %v531 = vsel %vm499, 1, 0
  %v532 = vsel %vm500, 1, 0
  %v533 = vsel %vm501, 1, 0
  %v534 = vsel %vm502, 1, 0
  %v535 = vsel %vm503, 1, 0
  %v536 = vsel %vm504, 1, 0
  %v537 = vsel %vm505, 1, 0
  %v538 = vsel %vm506, 1, 0
  %vm539 = vcmp.eq.s32.totalorder %v507, 1
  %vm540 = vcmp.eq.s32.totalorder %v508, 1
  %vm541 = vcmp.eq.s32.totalorder %v509, 1
  %vm542 = vcmp.eq.s32.totalorder %v510, 1
  %vm543 = vcmp.eq.s32.totalorder %v511, 1
  %vm544 = vcmp.eq.s32.totalorder %v512, 1
  %vm545 = vcmp.eq.s32.totalorder %v513, 1
  %vm546 = vcmp.eq.s32.totalorder %v514, 1
  %vm547 = vcmp.eq.s32.totalorder %v515, 1
  %vm548 = vcmp.eq.s32.totalorder %v516, 1
  %vm549 = vcmp.eq.s32.totalorder %v517, 1
  %vm550 = vcmp.eq.s32.totalorder %v518, 1
  %vm551 = vcmp.eq.s32.totalorder %v519, 1
  %vm552 = vcmp.eq.s32.totalorder %v520, 1
  %vm553 = vcmp.eq.s32.totalorder %v521, 1
  %vm554 = vcmp.eq.s32.totalorder %v522, 1
  %vm555 = vcmp.eq.s32.totalorder %v523, 1
  %vm556 = vcmp.eq.s32.totalorder %v524, 1
  %vm557 = vcmp.eq.s32.totalorder %v525, 1
  %vm558 = vcmp.eq.s32.totalorder %v526, 1
  %vm559 = vcmp.eq.s32.totalorder %v527, 1
  %vm560 = vcmp.eq.s32.totalorder %v528, 1
  %vm561 = vcmp.eq.s32.totalorder %v529, 1
  %vm562 = vcmp.eq.s32.totalorder %v530, 1
  %vm563 = vcmp.eq.s32.totalorder %v531, 1
  %vm564 = vcmp.eq.s32.totalorder %v532, 1
  %vm565 = vcmp.eq.s32.totalorder %v533, 1
  %vm566 = vcmp.eq.s32.totalorder %v534, 1
  %vm567 = vcmp.eq.s32.totalorder %v535, 1
  %vm568 = vcmp.eq.s32.totalorder %v536, 1
  %vm569 = vcmp.eq.s32.totalorder %v537, 1
  %vm570 = vcmp.eq.s32.totalorder %v538, 1
  %v571 = vsel %vm539, 0.0, %v377
  %v572 = vsel %vm540, 0.0, %v378
  %v573 = vsel %vm541, 0.0, %v379
  %v574 = vsel %vm542, 0.0, %v380
  %v575 = vsel %vm543, 0.0, %v381
  %v576 = vsel %vm544, 0.0, %v382
  %v577 = vsel %vm545, 0.0, %v383
  %v578 = vsel %vm546, 0.0, %v384
  %v579 = vsel %vm547, 0.0, %v385
  %v580 = vsel %vm548, 0.0, %v386
  %v581 = vsel %vm549, 0.0, %v387
  %v582 = vsel %vm550, 0.0, %v388
  %v583 = vsel %vm551, 0.0, %v389
  %v584 = vsel %vm552, 0.0, %v390
  %v585 = vsel %vm553, 0.0, %v391
  %v586 = vsel %vm554, 0.0, %v392
  %v587 = vsel %vm555, 0.0, %v393
  %v588 = vsel %vm556, 0.0, %v394
  %v589 = vsel %vm557, 0.0, %v395
  %v590 = vsel %vm558, 0.0, %v396
  %v591 = vsel %vm559, 0.0, %v397
  %v592 = vsel %vm560, 0.0, %v398
  %v593 = vsel %vm561, 0.0, %v399
  %v594 = vsel %vm562, 0.0, %v400
  %v595 = vsel %vm563, 0.0, %v401
  %v596 = vsel %vm564, 0.0, %v402
  %v597 = vsel %vm565, 0.0, %v403
  %v598 = vsel %vm566, 0.0, %v404
  %v599 = vsel %vm567, 0.0, %v405
  %v600 = vsel %vm568, 0.0, %v406
  %v601 = vsel %vm569, 0.0, %v407
  %v602 = vsel %vm570, 0.0, %v408
  %v603 = vld [vmem:[%s2] sm:$0xf]
  %v604 = vld [vmem:[%s2 + $0x4] sm:$0xf]
  %v605 = vld [vmem:[%s2 + $0x8] sm:$0xf]
  %v606 = vld [vmem:[%s2 + $0xc] sm:$0xf]
  %v607 = vld [vmem:[%s2 + $0x10] sm:$0xf]
  %v608 = vld [vmem:[%s2 + $0x14] sm:$0xf]
  %v609 = vld [vmem:[%s2 + $0x18] sm:$0xf]
  %v610 = vld [vmem:[%s2 + $0x1c] sm:$0xf]
  %v611 = vld [vmem:[%s2 + $0x20] sm:$0xf]
  %v612 = vld [vmem:[%s2 + $0x24] sm:$0xf]
  %v613 = vld [vmem:[%s2 + $0x28] sm:$0xf]
  %v614 = vld [vmem:[%s2 + $0x2c] sm:$0xf]
  %v615 = vld [vmem:[%s2 + $0x30] sm:$0xf]
  %v616 = vld [vmem:[%s2 + $0x34] sm:$0xf]
  %v617 = vld [vmem:[%s2 + $0x38] sm:$0xf]
  %v618 = vld [vmem:[%s2 + $0x3c] sm:$0xf]
  %v619 = vld [vmem:[%s2 + $0x40] sm:$0xf]
  %v620 = vld [vmem:[%s2 + $0x44] sm:$0xf]
  %v621 = vld [vmem:[%s2 + $0x48] sm:$0xf]
  %v622 = vld [vmem:[%s2 + $0x4c] sm:$0xf]
  %v623 = vld [vmem:[%s2 + $0x50] sm:$0xf]
  %v624 = vld [vmem:[%s2 + $0x54] sm:$0xf]
  %v625 = vld [vmem:[%s2 + $0x58] sm:$0xf]
  %v626 = vld [vmem:[%s2 + $0x5c] sm:$0xf]
  %v627 = vld [vmem:[%s2 + $0x60] sm:$0xf]
  %v628 = vld [vmem:[%s2 + $0x64] sm:$0xf]
  %v629 = vld [vmem:[%s2 + $0x68] sm:$0xf]
  %v630 = vld [vmem:[%s2 + $0x6c] sm:$0xf]
  %v631 = vld [vmem:[%s2 + $0x70] sm:$0xf]
  %v632 = vld [vmem:[%s2 + $0x74] sm:$0xf]
  %v633 = vld [vmem:[%s2 + $0x78] sm:$0xf]
  %v634 = vld [vmem:[%s2 + $0x7c] sm:$0xf]
  %v635 = vpack.c.bf16 %v572, %v571
  %v636 = vpack.c.bf16 %v574, %v573
  %v637 = vpack.c.bf16 %v576, %v575
  %v638 = vpack.c.bf16 %v578, %v577
  %v639 = vpack.c.bf16 %v580, %v579
  %v640 = vpack.c.bf16 %v582, %v581
  %v641 = vpack.c.bf16 %v584, %v583
  %v642 = vpack.c.bf16 %v586, %v585
  %v643 = vpack.c.bf16 %v588, %v587
  %v644 = vpack.c.bf16 %v590, %v589
  %v645 = vpack.c.bf16 %v592, %v591
  %v646 = vpack.c.bf16 %v594, %v593
  %v647 = vpack.c.bf16 %v596, %v595
  %v648 = vpack.c.bf16 %v598, %v597
  %v649 = vpack.c.bf16 %v600, %v599
  %v650 = vpack.c.bf16 %v602, %v601
  %v651 = vld [vmem:[%s3] sm:$0xf]
  %v652 = vld [vmem:[%s3 + $0x4] sm:$0xf]
  %v653 = vld [vmem:[%s3 + $0x8] sm:$0xf]
  %v654 = vld [vmem:[%s3 + $0xc] sm:$0xf]
  %v655 = vld [vmem:[%s3 + $0x10] sm:$0xf]
  %v656 = vld [vmem:[%s3 + $0x14] sm:$0xf]
  %v657 = vld [vmem:[%s3 + $0x18] sm:$0xf]
  %v658 = vld [vmem:[%s3 + $0x1c] sm:$0xf]
  %v659 = vld [vmem:[%s3 + $0x20] sm:$0xf]
  %v660 = vld [vmem:[%s3 + $0x24] sm:$0xf]
  %v661 = vld [vmem:[%s3 + $0x28] sm:$0xf]
  %v662 = vld [vmem:[%s3 + $0x2c] sm:$0xf]
  %v663 = vld [vmem:[%s3 + $0x30] sm:$0xf]
  %v664 = vld [vmem:[%s3 + $0x34] sm:$0xf]
  %v665 = vld [vmem:[%s3 + $0x38] sm:$0xf]
  %v666 = vld [vmem:[%s3 + $0x3c] sm:$0xf]
  %v683 = vunpack.c.l.b16 %v651
  %v684 = vunpack.c.l.b16 %v652
  %v685 = vunpack.c.l.b16 %v653
  %v686 = vunpack.c.l.b16 %v654
  %v687 = vunpack.c.l.b16 %v655
  %v688 = vunpack.c.l.b16 %v656
  %v689 = vunpack.c.l.b16 %v657
  %v690 = vunpack.c.l.b16 %v658
  %v691 = vunpack.c.l.b16 %v659
  %v692 = vunpack.c.l.b16 %v660
  %v693 = vunpack.c.l.b16 %v661
  %v694 = vunpack.c.l.b16 %v662
  %v695 = vunpack.c.l.b16 %v663
  %v696 = vunpack.c.l.b16 %v664
  %v697 = vunpack.c.l.b16 %v665
  %v698 = vunpack.c.l.b16 %v666
  %v699 = vpack.c.b16 %v684, %v683
  %v700 = vpack.c.b16 %v686, %v685
  %v701 = vpack.c.b16 %v688, %v687
  %v702 = vpack.c.b16 %v690, %v689
  %v703 = vpack.c.b16 %v692, %v691
  %v704 = vpack.c.b16 %v694, %v693
  %v705 = vpack.c.b16 %v696, %v695
  %v706 = vpack.c.b16 %v698, %v697
  %715 = vmatpush.bf16.msra.mxu0 %v706
  %716 = vmatpush.bf16.msra.mxu0 %v705
  %717 = vmatpush.bf16.msra.mxu0 %v704
  %718 = vmatpush.bf16.msra.mxu0 %v703
  %719 = vmatpush.bf16.msra.mxu0 %v702
  %720 = vmatpush.bf16.msra.mxu0 %v701
  %721 = vmatpush.bf16.msra.mxu0 %v700
  %722 = vmatpush.bf16.msra.mxu0 %v699
  %723 = vmatmul.bf16.gmra.mxu0 %v635
  %v724 = vpop.f32.mrf.mxu0
  %v725 = vadd.f32 0.0, %v724
  %v726 = vpop.f32.mrf.mxu0
  %v727 = vadd.f32 0.0, %v726
  %728 = vmatmul.bf16.gmra.mxu0 %v636
  %v729 = vpop.f32.mrf.mxu0
  %v730 = vadd.f32 0.0, %v729
  %v731 = vpop.f32.mrf.mxu0
  %v732 = vadd.f32 0.0, %v731
  %733 = vmatmul.bf16.gmra.mxu0 %v637
  %v734 = vpop.f32.mrf.mxu0
  %v735 = vadd.f32 0.0, %v734
  %v736 = vpop.f32.mrf.mxu0
  %v737 = vadd.f32 0.0, %v736
  %738 = vmatmul.bf16.gmra.mxu0 %v638
  %v739 = vpop.f32.mrf.mxu0
  %v740 = vadd.f32 0.0, %v739
  %v741 = vpop.f32.mrf.mxu0
  %v742 = vadd.f32 0.0, %v741
  %743 = vmatmul.bf16.gmra.mxu0 %v639
  %v744 = vpop.f32.mrf.mxu0
  %v745 = vadd.f32 0.0, %v744
  %v746 = vpop.f32.mrf.mxu0
  %v747 = vadd.f32 0.0, %v746
  %748 = vmatmul.bf16.gmra.mxu0 %v640
  %v749 = vpop.f32.mrf.mxu0
  %v750 = vadd.f32 0.0, %v749
  %v751 = vpop.f32.mrf.mxu0
  %v752 = vadd.f32 0.0, %v751
  %753 = vmatmul.bf16.gmra.mxu0 %v641
  %v754 = vpop.f32.mrf.mxu0
  %v755 = vadd.f32 0.0, %v754
  %v756 = vpop.f32.mrf.mxu0
  %v757 = vadd.f32 0.0, %v756
  %758 = vmatmul.bf16.gmra.mxu0 %v642
  %v759 = vpop.f32.mrf.mxu0
  %v760 = vadd.f32 0.0, %v759
  %v761 = vpop.f32.mrf.mxu0
  %v762 = vadd.f32 0.0, %v761
  %763 = vmatmul.bf16.gmra.mxu0 %v643
  %v764 = vpop.f32.mrf.mxu0
  %v765 = vadd.f32 0.0, %v764
  %v766 = vpop.f32.mrf.mxu0
  %v767 = vadd.f32 0.0, %v766
  %768 = vmatmul.bf16.gmra.mxu0 %v644
  %v769 = vpop.f32.mrf.mxu0
  %v770 = vadd.f32 0.0, %v769
  %v771 = vpop.f32.mrf.mxu0
  %v772 = vadd.f32 0.0, %v771
  %773 = vmatmul.bf16.gmra.mxu0 %v645
  %v774 = vpop.f32.mrf.mxu0
  %v775 = vadd.f32 0.0, %v774
  %v776 = vpop.f32.mrf.mxu0
  %v777 = vadd.f32 0.0, %v776
  %778 = vmatmul.bf16.gmra.mxu0 %v646
  %v779 = vpop.f32.mrf.mxu0
  %v780 = vadd.f32 0.0, %v779
  %v781 = vpop.f32.mrf.mxu0
  %v782 = vadd.f32 0.0, %v781
  %783 = vmatmul.bf16.gmra.mxu0 %v647
  %v784 = vpop.f32.mrf.mxu0
  %v785 = vadd.f32 0.0, %v784
  %v786 = vpop.f32.mrf.mxu0
  %v787 = vadd.f32 0.0, %v786
  %788 = vmatmul.bf16.gmra.mxu0 %v648
  %v789 = vpop.f32.mrf.mxu0
  %v790 = vadd.f32 0.0, %v789
  %v791 = vpop.f32.mrf.mxu0
  %v792 = vadd.f32 0.0, %v791
  %793 = vmatmul.bf16.gmra.mxu0 %v649
  %v794 = vpop.f32.mrf.mxu0
  %v795 = vadd.f32 0.0, %v794
  %v796 = vpop.f32.mrf.mxu0
  %v797 = vadd.f32 0.0, %v796
  %798 = vmatmul.bf16.gmra.mxu0 %v650
  %v799 = vpop.f32.mrf.mxu0
  %v800 = vadd.f32 0.0, %v799
  %v801 = vpop.f32.mrf.mxu0
  %v802 = vadd.f32 0.0, %v801
  %803 = vdwg.mxu0
  %v804 = vunpack.c.l.b16 %v20
  %v805 = vunpack.c.h.b16 %v20
  %v806 = vunpack.c.l.b16 %v21
  %v807 = vunpack.c.h.b16 %v21
  %v808 = vunpack.c.l.b16 %v22
  %v809 = vunpack.c.h.b16 %v22
  %v810 = vunpack.c.l.b16 %v23
  %v811 = vunpack.c.h.b16 %v23
  %v812 = vunpack.c.l.b16 %v24
  %v813 = vunpack.c.h.b16 %v24
  %v814 = vunpack.c.l.b16 %v25
  %v815 = vunpack.c.h.b16 %v25
  %v816 = vunpack.c.l.b16 %v26
  %v817 = vunpack.c.h.b16 %v26
  %v818 = vunpack.c.l.b16 %v27
  %v819 = vunpack.c.h.b16 %v27
  %v820 = vunpack.c.l.b16 %v28
  %v821 = vunpack.c.h.b16 %v28
  %v822 = vunpack.c.l.b16 %v29
  %v823 = vunpack.c.h.b16 %v29
  %v824 = vunpack.c.l.b16 %v30
  %v825 = vunpack.c.h.b16 %v30
  %v826 = vunpack.c.l.b16 %v31
  %v827 = vunpack.c.h.b16 %v31
  %v828 = vunpack.c.l.b16 %v32
  %v829 = vunpack.c.h.b16 %v32
  %v830 = vunpack.c.l.b16 %v33
  %v831 = vunpack.c.h.b16 %v33
  %v832 = vunpack.c.l.b16 %v34
  %v833 = vunpack.c.h.b16 %v34
  %v834 = vunpack.c.l.b16 %v35
  %v835 = vunpack.c.h.b16 %v35
  %v836 = vunpack.c.l.b16 %v36
  %v837 = vunpack.c.h.b16 %v36
  %v838 = vunpack.c.l.b16 %v37
  %v839 = vunpack.c.h.b16 %v37
  %v840 = vunpack.c.l.b16 %v38
  %v841 = vunpack.c.h.b16 %v38
  %v842 = vunpack.c.l.b16 %v39
  %v843 = vunpack.c.h.b16 %v39
  %v844 = vunpack.c.l.b16 %v40
  %v845 = vunpack.c.h.b16 %v40
  %v846 = vunpack.c.l.b16 %v41
  %v847 = vunpack.c.h.b16 %v41
  %v848 = vunpack.c.l.b16 %v42
  %v849 = vunpack.c.h.b16 %v42
  %v850 = vunpack.c.l.b16 %v43
  %v851 = vunpack.c.h.b16 %v43
  %v852 = vunpack.c.l.b16 %v44
  %v853 = vunpack.c.h.b16 %v44
  %v854 = vunpack.c.l.b16 %v45
  %v855 = vunpack.c.h.b16 %v45
  %v856 = vunpack.c.l.b16 %v46
  %v857 = vunpack.c.h.b16 %v46
  %v858 = vunpack.c.l.b16 %v47
  %v859 = vunpack.c.h.b16 %v47
  %v860 = vunpack.c.l.b16 %v48
  %v861 = vunpack.c.h.b16 %v48
  %v862 = vunpack.c.l.b16 %v49
  %v863 = vunpack.c.h.b16 %v49
  %v864 = vunpack.c.l.b16 %v50
  %v865 = vunpack.c.h.b16 %v50
  %v866 = vunpack.c.l.b16 %v51
  %v867 = vunpack.c.h.b16 %v51
  %v868 = vpack.c.b16 %v806, %v804
  %v869 = vpack.c.b16 %v807, %v805
  %v870 = vpack.c.b16 %v810, %v808
  %v871 = vpack.c.b16 %v811, %v809
  %v872 = vpack.c.b16 %v814, %v812
  %v873 = vpack.c.b16 %v815, %v813
  %v874 = vpack.c.b16 %v818, %v816
  %v875 = vpack.c.b16 %v819, %v817
  %v876 = vpack.c.b16 %v822, %v820
  %v877 = vpack.c.b16 %v823, %v821
  %v878 = vpack.c.b16 %v826, %v824
  %v879 = vpack.c.b16 %v827, %v825
  %v880 = vpack.c.b16 %v830, %v828
  %v881 = vpack.c.b16 %v831, %v829
  %v882 = vpack.c.b16 %v834, %v832
  %v883 = vpack.c.b16 %v835, %v833
  %v884 = vpack.c.b16 %v838, %v836
  %v885 = vpack.c.b16 %v839, %v837
  %v886 = vpack.c.b16 %v842, %v840
  %v887 = vpack.c.b16 %v843, %v841
  %v888 = vpack.c.b16 %v846, %v844
  %v889 = vpack.c.b16 %v847, %v845
  %v890 = vpack.c.b16 %v850, %v848
  %v891 = vpack.c.b16 %v851, %v849
  %v892 = vpack.c.b16 %v854, %v852
  %v893 = vpack.c.b16 %v855, %v853
  %v894 = vpack.c.b16 %v858, %v856
  %v895 = vpack.c.b16 %v859, %v857
  %v896 = vpack.c.b16 %v862, %v860
  %v897 = vpack.c.b16 %v863, %v861
  %v898 = vpack.c.b16 %v866, %v864
  %v899 = vpack.c.b16 %v867, %v865
  %v964 = vunpack.c.l.b16 %v603
  %v965 = vunpack.c.l.b16 %v604
  %v966 = vunpack.c.l.b16 %v605
  %v967 = vunpack.c.l.b16 %v606
  %v968 = vunpack.c.l.b16 %v607
  %v969 = vunpack.c.l.b16 %v608
  %v970 = vunpack.c.l.b16 %v609
  %v971 = vunpack.c.l.b16 %v610
  %v972 = vunpack.c.l.b16 %v611
  %v973 = vunpack.c.l.b16 %v612
  %v974 = vunpack.c.l.b16 %v613
  %v975 = vunpack.c.l.b16 %v614
  %v976 = vunpack.c.l.b16 %v615
  %v977 = vunpack.c.l.b16 %v616
  %v978 = vunpack.c.l.b16 %v617
  %v979 = vunpack.c.l.b16 %v618
  %v980 = vunpack.c.l.b16 %v619
  %v981 = vunpack.c.l.b16 %v620
  %v982 = vunpack.c.l.b16 %v621
  %v983 = vunpack.c.l.b16 %v622
  %v984 = vunpack.c.l.b16 %v623
  %v985 = vunpack.c.l.b16 %v624
  %v986 = vunpack.c.l.b16 %v625
  %v987 = vunpack.c.l.b16 %v626
  %v988 = vunpack.c.l.b16 %v627
  %v989 = vunpack.c.l.b16 %v628
  %v990 = vunpack.c.l.b16 %v629
  %v991 = vunpack.c.l.b16 %v630
  %v992 = vunpack.c.l.b16 %v631
  %v993 = vunpack.c.l.b16 %v632
  %v994 = vunpack.c.l.b16 %v633
  %v995 = vunpack.c.l.b16 %v634
  %v996 = vpack.c.b16 %v965, %v964
  %v997 = vpack.c.b16 %v967, %v966
  %v998 = vpack.c.b16 %v969, %v968
  %v999 = vpack.c.b16 %v971, %v970
  %v1000 = vpack.c.b16 %v973, %v972
  %v1001 = vpack.c.b16 %v975, %v974
  %v1002 = vpack.c.b16 %v977, %v976
  %v1003 = vpack.c.b16 %v979, %v978
  %v1004 = vpack.c.b16 %v981, %v980
  %v1005 = vpack.c.b16 %v983, %v982
  %v1006 = vpack.c.b16 %v985, %v984
  %v1007 = vpack.c.b16 %v987, %v986
  %v1008 = vpack.c.b16 %v989, %v988
  %v1009 = vpack.c.b16 %v991, %v990
  %v1010 = vpack.c.b16 %v993, %v992
  %v1011 = vpack.c.b16 %v995, %v994
  %1028 = vmatpush.bf16.msra.mxu0 %v1003
  %1029 = vmatpush.bf16.msra.mxu0 %v1002
  %1030 = vmatpush.bf16.msra.mxu0 %v1001
  %1031 = vmatpush.bf16.msra.mxu0 %v1000
  %1032 = vmatpush.bf16.msra.mxu0 %v999
  %1033 = vmatpush.bf16.msra.mxu0 %v998
  %1034 = vmatpush.bf16.msra.mxu0 %v997
  %1035 = vmatpush.bf16.msra.mxu0 %v996
  %1036 = vmatmul.bf16.gmra.mxu0 %v868
  %v1037 = vpop.f32.mrf.mxu0
  %v1038 = vadd.f32 %v725, %v1037
  %v1039 = vpop.f32.mrf.mxu0
  %v1040 = vadd.f32 %v727, %v1039
  %1041 = vmatmul.bf16.gmra.mxu0 %v870
  %v1042 = vpop.f32.mrf.mxu0
  %v1043 = vadd.f32 %v730, %v1042
  %v1044 = vpop.f32.mrf.mxu0
  %v1045 = vadd.f32 %v732, %v1044
  %1046 = vmatmul.bf16.gmra.mxu0 %v872
  %v1047 = vpop.f32.mrf.mxu0
  %v1048 = vadd.f32 %v735, %v1047
  %v1049 = vpop.f32.mrf.mxu0
  %v1050 = vadd.f32 %v737, %v1049
  %1051 = vmatmul.bf16.gmra.mxu0 %v874
  %v1052 = vpop.f32.mrf.mxu0
  %v1053 = vadd.f32 %v740, %v1052
  %v1054 = vpop.f32.mrf.mxu0
  %v1055 = vadd.f32 %v742, %v1054
  %1056 = vmatmul.bf16.gmra.mxu0 %v876
  %v1057 = vpop.f32.mrf.mxu0
  %v1058 = vadd.f32 %v745, %v1057
  %v1059 = vpop.f32.mrf.mxu0
  %v1060 = vadd.f32 %v747, %v1059
  %1061 = vmatmul.bf16.gmra.mxu0 %v878
  %v1062 = vpop.f32.mrf.mxu0
  %v1063 = vadd.f32 %v750, %v1062
  %v1064 = vpop.f32.mrf.mxu0
  %v1065 = vadd.f32 %v752, %v1064
  %1066 = vmatmul.bf16.gmra.mxu0 %v880
  %v1067 = vpop.f32.mrf.mxu0
  %v1068 = vadd.f32 %v755, %v1067
  %v1069 = vpop.f32.mrf.mxu0
  %v1070 = vadd.f32 %v757, %v1069
  %1071 = vmatmul.bf16.gmra.mxu0 %v882
  %v1072 = vpop.f32.mrf.mxu0
  %v1073 = vadd.f32 %v760, %v1072
  %v1074 = vpop.f32.mrf.mxu0
  %v1075 = vadd.f32 %v762, %v1074
  %1076 = vmatmul.bf16.gmra.mxu0 %v884
  %v1077 = vpop.f32.mrf.mxu0
  %v1078 = vadd.f32 %v765, %v1077
  %v1079 = vpop.f32.mrf.mxu0
  %v1080 = vadd.f32 %v767, %v1079
  %1081 = vmatmul.bf16.gmra.mxu0 %v886
  %v1082 = vpop.f32.mrf.mxu0
  %v1083 = vadd.f32 %v770, %v1082
  %v1084 = vpop.f32.mrf.mxu0
  %v1085 = vadd.f32 %v772, %v1084
  %1086 = vmatmul.bf16.gmra.mxu0 %v888
  %v1087 = vpop.f32.mrf.mxu0
  %v1088 = vadd.f32 %v775, %v1087
  %v1089 = vpop.f32.mrf.mxu0
  %v1090 = vadd.f32 %v777, %v1089
  %1091 = vmatmul.bf16.gmra.mxu0 %v890
  %v1092 = vpop.f32.mrf.mxu0
  %v1093 = vadd.f32 %v780, %v1092
  %v1094 = vpop.f32.mrf.mxu0
  %v1095 = vadd.f32 %v782, %v1094
  %1096 = vmatmul.bf16.gmra.mxu0 %v892
  %v1097 = vpop.f32.mrf.mxu0
  %v1098 = vadd.f32 %v785, %v1097
  %v1099 = vpop.f32.mrf.mxu0
  %v1100 = vadd.f32 %v787, %v1099
  %1101 = vmatmul.bf16.gmra.mxu0 %v894
  %v1102 = vpop.f32.mrf.mxu0
  %v1103 = vadd.f32 %v790, %v1102
  %v1104 = vpop.f32.mrf.mxu0
  %v1105 = vadd.f32 %v792, %v1104
  %1106 = vmatmul.bf16.gmra.mxu0 %v896
  %v1107 = vpop.f32.mrf.mxu0
  %v1108 = vadd.f32 %v795, %v1107
  %v1109 = vpop.f32.mrf.mxu0
  %v1110 = vadd.f32 %v797, %v1109
  %1111 = vmatmul.bf16.gmra.mxu0 %v898
  %v1112 = vpop.f32.mrf.mxu0
  %v1113 = vadd.f32 %v800, %v1112
  %v1114 = vpop.f32.mrf.mxu0
  %v1115 = vadd.f32 %v802, %v1114
  %1116 = vdwg.mxu0
  %1117 = vmatpush.bf16.msra.mxu0 %v1011
  %1118 = vmatpush.bf16.msra.mxu0 %v1010
  %1119 = vmatpush.bf16.msra.mxu0 %v1009
  %1120 = vmatpush.bf16.msra.mxu0 %v1008
  %1121 = vmatpush.bf16.msra.mxu0 %v1007
  %1122 = vmatpush.bf16.msra.mxu0 %v1006
  %1123 = vmatpush.bf16.msra.mxu0 %v1005
  %1124 = vmatpush.bf16.msra.mxu0 %v1004
  %1125 = vmatmul.bf16.gmra.mxu0 %v869
  %v1126 = vpop.f32.mrf.mxu0
  %v1127 = vadd.f32 %v1038, %v1126
  %v1128 = vpop.f32.mrf.mxu0
  %v1129 = vadd.f32 %v1040, %v1128
  %1130 = vmatmul.bf16.gmra.mxu0 %v871
  %v1131 = vpop.f32.mrf.mxu0
  %v1132 = vadd.f32 %v1043, %v1131
  %v1133 = vpop.f32.mrf.mxu0
  %v1134 = vadd.f32 %v1045, %v1133
  %1135 = vmatmul.bf16.gmra.mxu0 %v873
  %v1136 = vpop.f32.mrf.mxu0
  %v1137 = vadd.f32 %v1048, %v1136
  %v1138 = vpop.f32.mrf.mxu0
  %v1139 = vadd.f32 %v1050, %v1138
  %1140 = vmatmul.bf16.gmra.mxu0 %v875
  %v1141 = vpop.f32.mrf.mxu0
  %v1142 = vadd.f32 %v1053, %v1141
  %v1143 = vpop.f32.mrf.mxu0
  %v1144 = vadd.f32 %v1055, %v1143
  %1145 = vmatmul.bf16.gmra.mxu0 %v877
  %v1146 = vpop.f32.mrf.mxu0
  %v1147 = vadd.f32 %v1058, %v1146
  %v1148 = vpop.f32.mrf.mxu0
  %v1149 = vadd.f32 %v1060, %v1148
  %1150 = vmatmul.bf16.gmra.mxu0 %v879
  %v1151 = vpop.f32.mrf.mxu0
  %v1152 = vadd.f32 %v1063, %v1151
  %v1153 = vpop.f32.mrf.mxu0
  %v1154 = vadd.f32 %v1065, %v1153
  %1155 = vmatmul.bf16.gmra.mxu0 %v881
  %v1156 = vpop.f32.mrf.mxu0
  %v1157 = vadd.f32 %v1068, %v1156
  %v1158 = vpop.f32.mrf.mxu0
  %v1159 = vadd.f32 %v1070, %v1158
  %1160 = vmatmul.bf16.gmra.mxu0 %v883
  %v1161 = vpop.f32.mrf.mxu0
  %v1162 = vadd.f32 %v1073, %v1161
  %v1163 = vpop.f32.mrf.mxu0
  %v1164 = vadd.f32 %v1075, %v1163
  %1165 = vmatmul.bf16.gmra.mxu0 %v885
  %v1166 = vpop.f32.mrf.mxu0
  %v1167 = vadd.f32 %v1078, %v1166
  %v1168 = vpop.f32.mrf.mxu0
  %v1169 = vadd.f32 %v1080, %v1168
  %1170 = vmatmul.bf16.gmra.mxu0 %v887
  %v1171 = vpop.f32.mrf.mxu0
  %v1172 = vadd.f32 %v1083, %v1171
  %v1173 = vpop.f32.mrf.mxu0
  %v1174 = vadd.f32 %v1085, %v1173
  %1175 = vmatmul.bf16.gmra.mxu0 %v889
  %v1176 = vpop.f32.mrf.mxu0
  %v1177 = vadd.f32 %v1088, %v1176
  %v1178 = vpop.f32.mrf.mxu0
  %v1179 = vadd.f32 %v1090, %v1178
  %1180 = vmatmul.bf16.gmra.mxu0 %v891
  %v1181 = vpop.f32.mrf.mxu0
  %v1182 = vadd.f32 %v1093, %v1181
  %v1183 = vpop.f32.mrf.mxu0
  %v1184 = vadd.f32 %v1095, %v1183
  %1185 = vmatmul.bf16.gmra.mxu0 %v893
  %v1186 = vpop.f32.mrf.mxu0
  %v1187 = vadd.f32 %v1098, %v1186
  %v1188 = vpop.f32.mrf.mxu0
  %v1189 = vadd.f32 %v1100, %v1188
  %1190 = vmatmul.bf16.gmra.mxu0 %v895
  %v1191 = vpop.f32.mrf.mxu0
  %v1192 = vadd.f32 %v1103, %v1191
  %v1193 = vpop.f32.mrf.mxu0
  %v1194 = vadd.f32 %v1105, %v1193
  %1195 = vmatmul.bf16.gmra.mxu0 %v897
  %v1196 = vpop.f32.mrf.mxu0
  %v1197 = vadd.f32 %v1108, %v1196
  %v1198 = vpop.f32.mrf.mxu0
  %v1199 = vadd.f32 %v1110, %v1198
  %1200 = vmatmul.bf16.gmra.mxu0 %v899
  %v1201 = vpop.f32.mrf.mxu0
  %v1202 = vadd.f32 %v1113, %v1201
  %v1203 = vpop.f32.mrf.mxu0
  %v1204 = vadd.f32 %v1115, %v1203
  %1205 = vdwg.mxu0
  %v1206 = vld [vmem:[%s4] sm:$0x1]
  %v1208 = vperm.slane %v1206, 0
  %v1210 = vadd.f32 %v1127, %v1208
  %v1211 = vadd.f32 %v1129, %v1208
  %v1212 = vadd.f32 %v1132, %v1208
  %v1213 = vadd.f32 %v1134, %v1208
  %v1214 = vadd.f32 %v1137, %v1208
  %v1215 = vadd.f32 %v1139, %v1208
  %v1216 = vadd.f32 %v1142, %v1208
  %v1217 = vadd.f32 %v1144, %v1208
  %v1218 = vadd.f32 %v1147, %v1208
  %v1219 = vadd.f32 %v1149, %v1208
  %v1220 = vadd.f32 %v1152, %v1208
  %v1221 = vadd.f32 %v1154, %v1208
  %v1222 = vadd.f32 %v1157, %v1208
  %v1223 = vadd.f32 %v1159, %v1208
  %v1224 = vadd.f32 %v1162, %v1208
  %v1225 = vadd.f32 %v1164, %v1208
  %v1226 = vadd.f32 %v1167, %v1208
  %v1227 = vadd.f32 %v1169, %v1208
  %v1228 = vadd.f32 %v1172, %v1208
  %v1229 = vadd.f32 %v1174, %v1208
  %v1230 = vadd.f32 %v1177, %v1208
  %v1231 = vadd.f32 %v1179, %v1208
  %v1232 = vadd.f32 %v1182, %v1208
  %v1233 = vadd.f32 %v1184, %v1208
  %v1234 = vadd.f32 %v1187, %v1208
  %v1235 = vadd.f32 %v1189, %v1208
  %v1236 = vadd.f32 %v1192, %v1208
  %v1237 = vadd.f32 %v1194, %v1208
  %v1238 = vadd.f32 %v1197, %v1208
  %v1239 = vadd.f32 %v1199, %v1208
  %v1240 = vadd.f32 %v1202, %v1208
  %v1241 = vadd.f32 %v1204, %v1208
  %v1242 = vmax.f32 %v1210, 0.0
  %v1243 = vmax.f32 %v1211, 0.0
  %v1244 = vmax.f32 %v1212, 0.0
  %v1245 = vmax.f32 %v1213, 0.0
  %v1246 = vmax.f32 %v1214, 0.0
  %v1247 = vmax.f32 %v1215, 0.0
  %v1248 = vmax.f32 %v1216, 0.0
  %v1249 = vmax.f32 %v1217, 0.0
  %v1250 = vmax.f32 %v1218, 0.0
  %v1251 = vmax.f32 %v1219, 0.0
  %v1252 = vmax.f32 %v1220, 0.0
  %v1253 = vmax.f32 %v1221, 0.0
  %v1254 = vmax.f32 %v1222, 0.0
  %v1255 = vmax.f32 %v1223, 0.0
  %v1256 = vmax.f32 %v1224, 0.0
  %v1257 = vmax.f32 %v1225, 0.0
  %v1258 = vmax.f32 %v1226, 0.0
  %v1259 = vmax.f32 %v1227, 0.0
  %v1260 = vmax.f32 %v1228, 0.0
  %v1261 = vmax.f32 %v1229, 0.0
  %v1262 = vmax.f32 %v1230, 0.0
  %v1263 = vmax.f32 %v1231, 0.0
  %v1264 = vmax.f32 %v1232, 0.0
  %v1265 = vmax.f32 %v1233, 0.0
  %v1266 = vmax.f32 %v1234, 0.0
  %v1267 = vmax.f32 %v1235, 0.0
  %v1268 = vmax.f32 %v1236, 0.0
  %v1269 = vmax.f32 %v1237, 0.0
  %v1270 = vmax.f32 %v1238, 0.0
  %v1271 = vmax.f32 %v1239, 0.0
  %v1272 = vmax.f32 %v1240, 0.0
  %v1273 = vmax.f32 %v1241, 0.0
  %v1274 = vpack.c.bf16 %v1242, %v1242
  %v1275 = vpack.c.bf16 %v1243, %v1243
  %v1276 = vpack.c.bf16 %v1244, %v1244
  %v1277 = vpack.c.bf16 %v1245, %v1245
  %v1278 = vpack.c.bf16 %v1246, %v1246
  %v1279 = vpack.c.bf16 %v1247, %v1247
  %v1280 = vpack.c.bf16 %v1248, %v1248
  %v1281 = vpack.c.bf16 %v1249, %v1249
  %v1282 = vpack.c.bf16 %v1250, %v1250
  %v1283 = vpack.c.bf16 %v1251, %v1251
  %v1284 = vpack.c.bf16 %v1252, %v1252
  %v1285 = vpack.c.bf16 %v1253, %v1253
  %v1286 = vpack.c.bf16 %v1254, %v1254
  %v1287 = vpack.c.bf16 %v1255, %v1255
  %v1288 = vpack.c.bf16 %v1256, %v1256
  %v1289 = vpack.c.bf16 %v1257, %v1257
  %v1290 = vpack.c.bf16 %v1258, %v1258
  %v1291 = vpack.c.bf16 %v1259, %v1259
  %v1292 = vpack.c.bf16 %v1260, %v1260
  %v1293 = vpack.c.bf16 %v1261, %v1261
  %v1294 = vpack.c.bf16 %v1262, %v1262
  %v1295 = vpack.c.bf16 %v1263, %v1263
  %v1296 = vpack.c.bf16 %v1264, %v1264
  %v1297 = vpack.c.bf16 %v1265, %v1265
  %v1298 = vpack.c.bf16 %v1266, %v1266
  %v1299 = vpack.c.bf16 %v1267, %v1267
  %v1300 = vpack.c.bf16 %v1268, %v1268
  %v1301 = vpack.c.bf16 %v1269, %v1269
  %v1302 = vpack.c.bf16 %v1270, %v1270
  %v1303 = vpack.c.bf16 %v1271, %v1271
  %v1304 = vpack.c.bf16 %v1272, %v1272
  %v1305 = vpack.c.bf16 %v1273, %v1273
  %1306 = vst [vmem:[%s5] sm:$0xf] %v1274
  %1307 = vst [vmem:[%s5 + $0x4] sm:$0xf] %v1275
  %1308 = vst [vmem:[%s5 + $0x8] sm:$0xf] %v1276
  %1309 = vst [vmem:[%s5 + $0xc] sm:$0xf] %v1277
  %1310 = vst [vmem:[%s5 + $0x10] sm:$0xf] %v1278
  %1311 = vst [vmem:[%s5 + $0x14] sm:$0xf] %v1279
  %1312 = vst [vmem:[%s5 + $0x18] sm:$0xf] %v1280
  %1313 = vst [vmem:[%s5 + $0x1c] sm:$0xf] %v1281
  %1314 = vst [vmem:[%s5 + $0x20] sm:$0xf] %v1282
  %1315 = vst [vmem:[%s5 + $0x24] sm:$0xf] %v1283
  %1316 = vst [vmem:[%s5 + $0x28] sm:$0xf] %v1284
  %1317 = vst [vmem:[%s5 + $0x2c] sm:$0xf] %v1285
  %1318 = vst [vmem:[%s5 + $0x30] sm:$0xf] %v1286
  %1319 = vst [vmem:[%s5 + $0x34] sm:$0xf] %v1287
  %1320 = vst [vmem:[%s5 + $0x38] sm:$0xf] %v1288
  %1321 = vst [vmem:[%s5 + $0x3c] sm:$0xf] %v1289
  %1322 = vst [vmem:[%s5 + $0x40] sm:$0xf] %v1290
  %1323 = vst [vmem:[%s5 + $0x44] sm:$0xf] %v1291
  %1324 = vst [vmem:[%s5 + $0x48] sm:$0xf] %v1292
  %1325 = vst [vmem:[%s5 + $0x4c] sm:$0xf] %v1293
  %1326 = vst [vmem:[%s5 + $0x50] sm:$0xf] %v1294
  %1327 = vst [vmem:[%s5 + $0x54] sm:$0xf] %v1295
  %1328 = vst [vmem:[%s5 + $0x58] sm:$0xf] %v1296
  %1329 = vst [vmem:[%s5 + $0x5c] sm:$0xf] %v1297
  %1330 = vst [vmem:[%s5 + $0x60] sm:$0xf] %v1298
  %1331 = vst [vmem:[%s5 + $0x64] sm:$0xf] %v1299
  %1332 = vst [vmem:[%s5 + $0x68] sm:$0xf] %v1300
  %1333 = vst [vmem:[%s5 + $0x6c] sm:$0xf] %v1301
  %1334 = vst [vmem:[%s5 + $0x70] sm:$0xf] %v1302
  %1335 = vst [vmem:[%s5 + $0x74] sm:$0xf] %v1303
  %1336 = vst [vmem:[%s5 + $0x78] sm:$0xf] %v1304
  %1337 = vst [vmem:[%s5 + $0x7c] sm:$0xf] %v1305
  // Predicated region
  $region22: #{pyramid_detection_forward.5} parent=0 // pred_check
    _
  $region23: #{pyramid_detection_forward.5} parent=0 // pred_check_branch
    %1339 = sbr.rel (0) target = $region25
  $region24: #{pyramid_detection_forward.5} parent=0 // pred_region
    _
  $region25: #{pyramid_detection_forward.5} parent=0 // pred_fallthru
    _
  // Predicated region
  $region26: #{pyramid_detection_forward.5} parent=0 // pred_check
    _
  $region27: #{pyramid_detection_forward.5} parent=0 // pred_check_branch
    %1341 = sbr.rel (0) target = $region29
  $region28: #{pyramid_detection_forward.5} parent=0 // pred_region
    _
  $region29: #{pyramid_detection_forward.5} parent=0 // pred_fallthru
    _

// kernel: pyramid_detection_forward.9
$region0: #{pyramid_detection_forward.9}
  #allocation0 [shape = 'u32[]', space=smem, size = 0x4, offset = 0x4, fixed_abs, tag = 'smem constant byte address 0x4 - core index']
  #allocation1 [shape = 'u32[72,128]{1,0:T(1,128)}', space=vmem, size = 0x9000, scoped, tag = 'internal scratch']
  #allocation2 [shape = 'f32[40,128]{1,0:T(8,128)}', space=vmem, size = 0x5000, scoped, tag = 'scratch operand']
  %s0 = inlined_call_operand.vmem [shape: bf16[2,16,128], index: 0, kind: input, shape index: {}]
  %s1 = inlined_call_operand.vmem [shape: bf16[4,2,16,128], index: 1, kind: input, shape index: {}]
  %s2 = inlined_call_operand.vmem [shape: bf16[4,3,128,128], index: 2, kind: input, shape index: {}]
  %s3 = inlined_call_operand.vmem [shape: f32[4,1,128], index: 3, kind: input, shape index: {}]
  %s4 = inlined_call_operand.vmem [shape: bf16[4,128,128], index: 4, kind: input, shape index: {}]
  %s5 = inlined_call_operand.vmem [shape: f32[4,1,128], index: 5, kind: input, shape index: {}]
  %s6 = inlined_call_operand.vmem [shape: bf16[3,128,128], index: 6, kind: input, shape index: {}]
  %s7 = inlined_call_operand.vmem [shape: f32[1,128], index: 7, kind: input, shape index: {}]
  %s8 = inlined_call_operand.vmem [shape: bf16[3,128,128], index: 8, kind: input, shape index: {}]
  %s9 = inlined_call_operand.vmem [shape: f32[1,128], index: 9, kind: input, shape index: {}]
  %s10 = inlined_call_operand.vmem [shape: f32[40,1], index: 10, kind: input, shape index: {}]
  %s11 = inlined_call_operand.vmem [shape: f32[40,1], index: 11, kind: input, shape index: {}]
  %s12 = inlined_call_operand.vmem [shape: f32[2,40,128], index: 12, kind: output, shape index: {}]
  %s13 = sld [smem:[#allocation0]]
  $region122: #{pyramid_detection_forward.9} parent=0
    _
  %s15 = ssub.s32 1, %s13
  %s16 = scalar_select 0, %s15, %s13
  $region1: #{pyramid_detection_forward.9} parent=0
    #allocation3 [shape = 'u8[32768]{0}', space=vmem, size = 0x8000, scoped, tag = 'input window, operand 1']
    loop: start=0, step=1, limit=4
    $region2: #{pyramid_detection_forward.9} parent=1 // loop_pre_header
      _
    $region3: #{pyramid_detection_forward.9} parent=1 // loop_header
      %s18 = sphi 0, %s22
      %p19 = scmp.ge.s32.totalorder %s18, 4
      %s28 = sphi 0, %s30
      %s31 = sphi 0, %s28
      %s32 = sphi 0, %s31
      %s48 = sphi 0, %s32
      %s54 = sphi 0, %s56
      %s57 = sphi 0, %s54
      %s58 = sphi 0, %s57
      %s74 = sphi 0, %s58
      %s78 = sphi 0, %s78
      %s80 = sphi 0, %s78
      %s81 = sphi 0, %s80
      %s95 = sphi 0, %s81
      %s99 = sphi 0, %s99
      %s101 = sphi 0, %s99
      %s102 = sphi 0, %s101
      %s116 = sphi 0, %s102
      %s120 = sphi 0, %s120
      %s122 = sphi 0, %s120
      %s123 = sphi 0, %s122
      %s137 = sphi 0, %s123
      %s141 = sphi 0, %s141
      %s143 = sphi 0, %s141
      %s144 = sphi 0, %s143
      %s158 = sphi 0, %s144
      %s162 = sphi 0, %s162
      %s164 = sphi 0, %s162
      %s165 = sphi 0, %s164
      %s179 = sphi 0, %s165
      %s183 = sphi 0, %s183
      %s185 = sphi 0, %s183
      %s186 = sphi 0, %s185
      %s200 = sphi 0, %s186
      %s204 = sphi 0, %s204
      %s206 = sphi 0, %s204
      %s207 = sphi 0, %s206
      %s221 = sphi 0, %s207
      %s225 = sphi 0, %s225
      %s227 = sphi 0, %s225
      %s228 = sphi 0, %s227
      %s242 = sphi 0, %s228
      %s246 = sphi 0, %s246
      %s248 = sphi 0, %s246
      %s249 = sphi 0, %s248
      %s263 = sphi 0, %s249
      %s267 = sphi 0, %s267
      %s269 = sphi 0, %s267
      %s270 = sphi 0, %s269
      %s284 = sphi 0, %s270
      %s290 = sphi 0, %s292
      %s293 = sphi 0, %s290
      %s294 = sphi 0, %s293
      %s310 = sphi 0, %s294
    $region4: #{pyramid_detection_forward.9} parent=1 // loop_header_branch
      %21 = sbr.rel (%p19) target = $region8
    $region5: #{pyramid_detection_forward.9} parent=1 // loop_body
      %s23 = ssub.s32 %s18, 1
      %s24 = ssub.s32 %s18, 2
      %s25 = sadd.s32 %s18, 1
      %s26 = ssub.s32 %s18, %s25
      %p27 = scmp.eq.s32.totalorder %s26, 0
      %s29 = sadd.s32 %s28, 1
      %s30 = scalar_select %p27, %s28, %s29
      %p33 = pneg %p27
      %p34 = scmp.eq.s32.totalorder %s18, 1
      %p35 = por %p33, %p34
      %p36 = scmp.ne.s32.totalorder %s28, %s31
      %p37 = scmp.eq.s32.totalorder %s18, 0
      %p38 = por %p36, %p37
      %p39 = scmp.ne.s32.totalorder %s28, %s31
      %p40 = scmp.eq.s32.totalorder %s23, 1
      %p41 = por %p39, %p40
      %p42 = scmp.ne.s32.totalorder %s31, %s32
      %p43 = scmp.eq.s32.totalorder %s23, 0
      %p44 = por %p42, %p43
      %p45 = scmp.ne.s32.totalorder %s31, %s32
      %p46 = scmp.eq.s32.totalorder %s24, 1
      %p47 = por %p45, %p46
      %p49 = scmp.ne.s32.totalorder %s32, %s48
      %p50 = scmp.eq.s32.totalorder %s24, 0
      %p51 = por %p49, %p50
      %s52 = ssub.s32 %s18, %s25
      %p53 = scmp.eq.s32.totalorder %s52, 0
      %s55 = sadd.s32 %s54, 1
      %s56 = scalar_select %p53, %s54, %s55
      %p59 = pneg %p53
      %p60 = scmp.eq.s32.totalorder %s18, 1
      %p61 = por %p59, %p60
      %p62 = scmp.ne.s32.totalorder %s54, %s57
      %p63 = scmp.eq.s32.totalorder %s18, 0
      %p64 = por %p62, %p63
      %p65 = scmp.ne.s32.totalorder %s54, %s57
      %p66 = scmp.eq.s32.totalorder %s23, 1
      %p67 = por %p65, %p66
      %p68 = scmp.ne.s32.totalorder %s57, %s58
      %p69 = scmp.eq.s32.totalorder %s23, 0
      %p70 = por %p68, %p69
      %p71 = scmp.ne.s32.totalorder %s57, %s58
      %p72 = scmp.eq.s32.totalorder %s24, 1
      %p73 = por %p71, %p72
      %p75 = scmp.ne.s32.totalorder %s58, %s74
      %p76 = scmp.eq.s32.totalorder %s24, 0
      %p77 = por %p75, %p76
      %s79 = sadd.s32 %s78, 1
      %p82 = scmp.eq.s32.totalorder %s18, 1
      %p83 = scmp.ne.s32.totalorder %s78, %s80
      %p84 = scmp.eq.s32.totalorder %s18, 0
      %p85 = por %p83, %p84
      %p86 = scmp.ne.s32.totalorder %s78, %s80
      %p87 = scmp.eq.s32.totalorder %s23, 1
      %p88 = por %p86, %p87
      %p89 = scmp.ne.s32.totalorder %s80, %s81
      %p90 = scmp.eq.s32.totalorder %s23, 0
      %p91 = por %p89, %p90
      %p92 = scmp.ne.s32.totalorder %s80, %s81
      %p93 = scmp.eq.s32.totalorder %s24, 1
      %p94 = por %p92, %p93
      %p96 = scmp.ne.s32.totalorder %s81, %s95
      %p97 = scmp.eq.s32.totalorder %s24, 0
      %p98 = por %p96, %p97
      %s100 = sadd.s32 %s99, 1
      %p103 = scmp.eq.s32.totalorder %s18, 1
      %p104 = scmp.ne.s32.totalorder %s99, %s101
      %p105 = scmp.eq.s32.totalorder %s18, 0
      %p106 = por %p104, %p105
      %p107 = scmp.ne.s32.totalorder %s99, %s101
      %p108 = scmp.eq.s32.totalorder %s23, 1
      %p109 = por %p107, %p108
      %p110 = scmp.ne.s32.totalorder %s101, %s102
      %p111 = scmp.eq.s32.totalorder %s23, 0
      %p112 = por %p110, %p111
      %p113 = scmp.ne.s32.totalorder %s101, %s102
      %p114 = scmp.eq.s32.totalorder %s24, 1
      %p115 = por %p113, %p114
      %p117 = scmp.ne.s32.totalorder %s102, %s116
      %p118 = scmp.eq.s32.totalorder %s24, 0
      %p119 = por %p117, %p118
      %s121 = sadd.s32 %s120, 1
      %p124 = scmp.eq.s32.totalorder %s18, 1
      %p125 = scmp.ne.s32.totalorder %s120, %s122
      %p126 = scmp.eq.s32.totalorder %s18, 0
      %p127 = por %p125, %p126
      %p128 = scmp.ne.s32.totalorder %s120, %s122
      %p129 = scmp.eq.s32.totalorder %s23, 1
      %p130 = por %p128, %p129
      %p131 = scmp.ne.s32.totalorder %s122, %s123
      %p132 = scmp.eq.s32.totalorder %s23, 0
      %p133 = por %p131, %p132
      %p134 = scmp.ne.s32.totalorder %s122, %s123
      %p135 = scmp.eq.s32.totalorder %s24, 1
      %p136 = por %p134, %p135
      %p138 = scmp.ne.s32.totalorder %s123, %s137
      %p139 = scmp.eq.s32.totalorder %s24, 0
      %p140 = por %p138, %p139
      %s142 = sadd.s32 %s141, 1
      %p145 = scmp.eq.s32.totalorder %s18, 1
      %p146 = scmp.ne.s32.totalorder %s141, %s143
      %p147 = scmp.eq.s32.totalorder %s18, 0
      %p148 = por %p146, %p147
      %p149 = scmp.ne.s32.totalorder %s141, %s143
      %p150 = scmp.eq.s32.totalorder %s23, 1
      %p151 = por %p149, %p150
      %p152 = scmp.ne.s32.totalorder %s143, %s144
      %p153 = scmp.eq.s32.totalorder %s23, 0
      %p154 = por %p152, %p153
      %p155 = scmp.ne.s32.totalorder %s143, %s144
      %p156 = scmp.eq.s32.totalorder %s24, 1
      %p157 = por %p155, %p156
      %p159 = scmp.ne.s32.totalorder %s144, %s158
      %p160 = scmp.eq.s32.totalorder %s24, 0
      %p161 = por %p159, %p160
      %s163 = sadd.s32 %s162, 1
      %p166 = scmp.eq.s32.totalorder %s18, 1
      %p167 = scmp.ne.s32.totalorder %s162, %s164
      %p168 = scmp.eq.s32.totalorder %s18, 0
      %p169 = por %p167, %p168
      %p170 = scmp.ne.s32.totalorder %s162, %s164
      %p171 = scmp.eq.s32.totalorder %s23, 1
      %p172 = por %p170, %p171
      %p173 = scmp.ne.s32.totalorder %s164, %s165
      %p174 = scmp.eq.s32.totalorder %s23, 0
      %p175 = por %p173, %p174
      %p176 = scmp.ne.s32.totalorder %s164, %s165
      %p177 = scmp.eq.s32.totalorder %s24, 1
      %p178 = por %p176, %p177
      %p180 = scmp.ne.s32.totalorder %s165, %s179
      %p181 = scmp.eq.s32.totalorder %s24, 0
      %p182 = por %p180, %p181
      %s184 = sadd.s32 %s183, 1
      %p187 = scmp.eq.s32.totalorder %s18, 1
      %p188 = scmp.ne.s32.totalorder %s183, %s185
      %p189 = scmp.eq.s32.totalorder %s18, 0
      %p190 = por %p188, %p189
      %p191 = scmp.ne.s32.totalorder %s183, %s185
      %p192 = scmp.eq.s32.totalorder %s23, 1
      %p193 = por %p191, %p192
      %p194 = scmp.ne.s32.totalorder %s185, %s186
      %p195 = scmp.eq.s32.totalorder %s23, 0
      %p196 = por %p194, %p195
      %p197 = scmp.ne.s32.totalorder %s185, %s186
      %p198 = scmp.eq.s32.totalorder %s24, 1
      %p199 = por %p197, %p198
      %p201 = scmp.ne.s32.totalorder %s186, %s200
      %p202 = scmp.eq.s32.totalorder %s24, 0
      %p203 = por %p201, %p202
      %s205 = sadd.s32 %s204, 1
      %p208 = scmp.eq.s32.totalorder %s18, 1
      %p209 = scmp.ne.s32.totalorder %s204, %s206
      %p210 = scmp.eq.s32.totalorder %s18, 0
      %p211 = por %p209, %p210
      %p212 = scmp.ne.s32.totalorder %s204, %s206
      %p213 = scmp.eq.s32.totalorder %s23, 1
      %p214 = por %p212, %p213
      %p215 = scmp.ne.s32.totalorder %s206, %s207
      %p216 = scmp.eq.s32.totalorder %s23, 0
      %p217 = por %p215, %p216
      %p218 = scmp.ne.s32.totalorder %s206, %s207
      %p219 = scmp.eq.s32.totalorder %s24, 1
      %p220 = por %p218, %p219
      %p222 = scmp.ne.s32.totalorder %s207, %s221
      %p223 = scmp.eq.s32.totalorder %s24, 0
      %p224 = por %p222, %p223
      %s226 = sadd.s32 %s225, 1
      %p229 = scmp.eq.s32.totalorder %s18, 1
      %p230 = scmp.ne.s32.totalorder %s225, %s227
      %p231 = scmp.eq.s32.totalorder %s18, 0
      %p232 = por %p230, %p231
      %p233 = scmp.ne.s32.totalorder %s225, %s227
      %p234 = scmp.eq.s32.totalorder %s23, 1
      %p235 = por %p233, %p234
      %p236 = scmp.ne.s32.totalorder %s227, %s228
      %p237 = scmp.eq.s32.totalorder %s23, 0
      %p238 = por %p236, %p237
      %p239 = scmp.ne.s32.totalorder %s227, %s228
      %p240 = scmp.eq.s32.totalorder %s24, 1
      %p241 = por %p239, %p240
      %p243 = scmp.ne.s32.totalorder %s228, %s242
      %p244 = scmp.eq.s32.totalorder %s24, 0
      %p245 = por %p243, %p244
      %s247 = sadd.s32 %s246, 1
      %p250 = scmp.eq.s32.totalorder %s18, 1
      %p251 = scmp.ne.s32.totalorder %s246, %s248
      %p252 = scmp.eq.s32.totalorder %s18, 0
      %p253 = por %p251, %p252
      %p254 = scmp.ne.s32.totalorder %s246, %s248
      %p255 = scmp.eq.s32.totalorder %s23, 1
      %p256 = por %p254, %p255
      %p257 = scmp.ne.s32.totalorder %s248, %s249
      %p258 = scmp.eq.s32.totalorder %s23, 0
      %p259 = por %p257, %p258
      %p260 = scmp.ne.s32.totalorder %s248, %s249
      %p261 = scmp.eq.s32.totalorder %s24, 1
      %p262 = por %p260, %p261
      %p264 = scmp.ne.s32.totalorder %s249, %s263
      %p265 = scmp.eq.s32.totalorder %s24, 0
      %p266 = por %p264, %p265
      %s268 = sadd.s32 %s267, 1
      %p271 = scmp.eq.s32.totalorder %s18, 1
      %p272 = scmp.ne.s32.totalorder %s267, %s269
      %p273 = scmp.eq.s32.totalorder %s18, 0
      %p274 = por %p272, %p273
      %p275 = scmp.ne.s32.totalorder %s267, %s269
      %p276 = scmp.eq.s32.totalorder %s23, 1
      %p277 = por %p275, %p276
      %p278 = scmp.ne.s32.totalorder %s269, %s270
      %p279 = scmp.eq.s32.totalorder %s23, 0
      %p280 = por %p278, %p279
      %p281 = scmp.ne.s32.totalorder %s269, %s270
      %p282 = scmp.eq.s32.totalorder %s24, 1
      %p283 = por %p281, %p282
      %p285 = scmp.ne.s32.totalorder %s270, %s284
      %p286 = scmp.eq.s32.totalorder %s24, 0
      %p287 = por %p285, %p286
      %s288 = ssub.s32 %s18, %s25
      %p289 = scmp.eq.s32.totalorder %s288, 0
      %s291 = sadd.s32 %s290, 1
      %s292 = scalar_select %p289, %s290, %s291
      %p295 = pneg %p289
      %p296 = scmp.eq.s32.totalorder %s18, 1
      %p297 = por %p295, %p296
      %p298 = scmp.ne.s32.totalorder %s290, %s293
      %p299 = scmp.eq.s32.totalorder %s18, 0
      %p300 = por %p298, %p299
      %p301 = scmp.ne.s32.totalorder %s290, %s293
      %p302 = scmp.eq.s32.totalorder %s23, 1
      %p303 = por %p301, %p302
      %p304 = scmp.ne.s32.totalorder %s293, %s294
      %p305 = scmp.eq.s32.totalorder %s23, 0
      %p306 = por %p304, %p305
      %p307 = scmp.ne.s32.totalorder %s293, %s294
      %p308 = scmp.eq.s32.totalorder %s24, 1
      %p309 = por %p307, %p308
      %p311 = scmp.ne.s32.totalorder %s294, %s310
      %p312 = scmp.eq.s32.totalorder %s24, 0
      %p313 = por %p311, %p312
      %p314 = scmp.le.s32.totalorder 1, %s18
      %p315 = scmp.lt.s32.totalorder %s18, 3
      %p316 = pnand %p314, %p315
      %p317 = pneg %p316
      // Predicated region
      $region9: #{pyramid_detection_forward.9} parent=5 // pred_check
        _
      $region10: #{pyramid_detection_forward.9} parent=5 // pred_check_branch
        %319 = sbr.rel (%p316) target = $region12
      $region11: #{pyramid_detection_forward.9} parent=5 // pred_region
        %s320 = ssub.s32 %s18, 1
        // Predicated region
        $region13: #{pyramid_detection_forward.9} parent=11 // pred_check
          %p321 = pneg %p91
        $region14: #{pyramid_detection_forward.9} parent=11 // pred_check_branch
          %323 = sbr.rel (%p321) target = $region16
        $region15: #{pyramid_detection_forward.9} parent=11 // pred_region
          _
        $region16: #{pyramid_detection_forward.9} parent=11 // pred_fallthru
          _
        // Predicated region
        $region17: #{pyramid_detection_forward.9} parent=11 // pred_check
          %p324 = pneg %p112
        $region18: #{pyramid_detection_forward.9} parent=11 // pred_check_branch
          %326 = sbr.rel (%p324) target = $region20
        $region19: #{pyramid_detection_forward.9} parent=11 // pred_region
          _
        $region20: #{pyramid_detection_forward.9} parent=11 // pred_fallthru
          _
        // Predicated region
        $region21: #{pyramid_detection_forward.9} parent=11 // pred_check
          %p327 = pneg %p133
        $region22: #{pyramid_detection_forward.9} parent=11 // pred_check_branch
          %329 = sbr.rel (%p327) target = $region24
        $region23: #{pyramid_detection_forward.9} parent=11 // pred_region
          _
        $region24: #{pyramid_detection_forward.9} parent=11 // pred_fallthru
          _
        // Predicated region
        $region25: #{pyramid_detection_forward.9} parent=11 // pred_check
          %p330 = pneg %p154
        $region26: #{pyramid_detection_forward.9} parent=11 // pred_check_branch
          %332 = sbr.rel (%p330) target = $region28
        $region27: #{pyramid_detection_forward.9} parent=11 // pred_region
          _
        $region28: #{pyramid_detection_forward.9} parent=11 // pred_fallthru
          _
        // Predicated region
        $region29: #{pyramid_detection_forward.9} parent=11 // pred_check
          %p333 = pneg %p175
        $region30: #{pyramid_detection_forward.9} parent=11 // pred_check_branch
          %335 = sbr.rel (%p333) target = $region32
        $region31: #{pyramid_detection_forward.9} parent=11 // pred_region
          _
        $region32: #{pyramid_detection_forward.9} parent=11 // pred_fallthru
          _
        // Predicated region
        $region33: #{pyramid_detection_forward.9} parent=11 // pred_check
          %p336 = pneg %p196
        $region34: #{pyramid_detection_forward.9} parent=11 // pred_check_branch
          %338 = sbr.rel (%p336) target = $region36
        $region35: #{pyramid_detection_forward.9} parent=11 // pred_region
          _
        $region36: #{pyramid_detection_forward.9} parent=11 // pred_fallthru
          _
        // Predicated region
        $region37: #{pyramid_detection_forward.9} parent=11 // pred_check
          %p339 = pneg %p217
        $region38: #{pyramid_detection_forward.9} parent=11 // pred_check_branch
          %341 = sbr.rel (%p339) target = $region40
        $region39: #{pyramid_detection_forward.9} parent=11 // pred_region
          _
        $region40: #{pyramid_detection_forward.9} parent=11 // pred_fallthru
          _
        // Predicated region
        $region41: #{pyramid_detection_forward.9} parent=11 // pred_check
          %p342 = pneg %p238
        $region42: #{pyramid_detection_forward.9} parent=11 // pred_check_branch
          %344 = sbr.rel (%p342) target = $region44
        $region43: #{pyramid_detection_forward.9} parent=11 // pred_region
          _
        $region44: #{pyramid_detection_forward.9} parent=11 // pred_fallthru
          _
        // Predicated region
        $region45: #{pyramid_detection_forward.9} parent=11 // pred_check
          %p345 = pneg %p259
        $region46: #{pyramid_detection_forward.9} parent=11 // pred_check_branch
          %347 = sbr.rel (%p345) target = $region48
        $region47: #{pyramid_detection_forward.9} parent=11 // pred_region
          _
        $region48: #{pyramid_detection_forward.9} parent=11 // pred_fallthru
          _
        // Predicated region
        $region49: #{pyramid_detection_forward.9} parent=11 // pred_check
          %p348 = pneg %p280
        $region50: #{pyramid_detection_forward.9} parent=11 // pred_check_branch
          %350 = sbr.rel (%p348) target = $region52
        $region51: #{pyramid_detection_forward.9} parent=11 // pred_region
          _
        $region52: #{pyramid_detection_forward.9} parent=11 // pred_fallthru
          _
      $region12: #{pyramid_detection_forward.9} parent=5 // pred_fallthru
        _
      %p351 = scmp.lt.s32.totalorder %s18, 2
      // Predicated region
      $region53: #{pyramid_detection_forward.9} parent=5 // pred_check
        %p352 = pneg %p351
      $region54: #{pyramid_detection_forward.9} parent=5 // pred_check_branch
        %354 = sbr.rel (%p352) target = $region56
      $region55: #{pyramid_detection_forward.9} parent=5 // pred_region
        // Predicated region
        $region57: #{pyramid_detection_forward.9} parent=55 // pred_check
          %p355 = pneg %p38
        $region58: #{pyramid_detection_forward.9} parent=55 // pred_check_branch
          %357 = sbr.rel (%p355) target = $region60
        $region59: #{pyramid_detection_forward.9} parent=55 // pred_region
          %p358 = scmp.lt.s32.totalorder %s18, 1
          %s359 = scalar_select %p358, %s18, 1
          %s360 = smul.addr %s359, 2
          %s361 = smul.addr %s360, 4
          %s362 = scalar_lea.vmem %s0, %s361
        $region60: #{pyramid_detection_forward.9} parent=55 // pred_fallthru
          _
        // Predicated region
        $region61: #{pyramid_detection_forward.9} parent=55 // pred_check
          %p363 = pneg %p64
        $region62: #{pyramid_detection_forward.9} parent=55 // pred_check_branch
          %365 = sbr.rel (%p363) target = $region64
        $region63: #{pyramid_detection_forward.9} parent=55 // pred_region
          %s366 = sand.u32 %s54, 1
          %s367 = sand.u32 %s54, 1
          %s368 = smul.addr %s367, 32
          %s369 = scalar_lea.vmem [#allocation3], %s368
          %s370 = smul.addr %s18, 2
          %s371 = smul.addr %s370, 4
          %s372 = scalar_lea.vmem %s1, %s371
          // Predicated region
          $region65: #{pyramid_detection_forward.9} parent=63 // pred_check
            _
          $region66: #{pyramid_detection_forward.9} parent=63 // pred_check_branch
            %374 = sbr.rel (0) target = $region68
          $region67: #{pyramid_detection_forward.9} parent=63 // pred_region
            // Predicated region
            $region69: #{pyramid_detection_forward.9} parent=67 // pred_check
              _
            $region70: #{pyramid_detection_forward.9} parent=67 // pred_check_branch
              %376 = sbr.rel target = $region72
            $region71: #{pyramid_detection_forward.9} parent=67 // pred_region
              // Predicated region
              $region84: #{pyramid_detection_forward.9} parent=71 // pred_check
                _
              $region85: #{pyramid_detection_forward.9} parent=71 // pred_check_branch
                %406 = sbr.rel (0) target = $region87
              $region86: #{pyramid_detection_forward.9} parent=71 // pred_region
                loop: start=0, step=1, limit=1
                $region88: #{pyramid_detection_forward.9} parent=86 // loop_pre_header
                  _
                $region89: #{pyramid_detection_forward.9} parent=86 // loop_header
                  %s408 = sphi 0, %s412
                  %p409 = scmp.ge.s32.totalorder %s408, 1
                  %s413 = sphi %s372, %s372
                  %s414 = sphi %s369, %s369
                $region90: #{pyramid_detection_forward.9} parent=86 // loop_header_branch
                  %411 = sbr.rel (%p409) target = $region94
                $region91: #{pyramid_detection_forward.9} parent=86 // loop_body
                  _
                $region92: #{pyramid_detection_forward.9} parent=86 // loop_footer
                  %s412 = sadd.s32 1, %s408
                $region93: #{pyramid_detection_forward.9} parent=86 // loop_footer_branch
                  %407 = sbr.rel target = $region89
                $region94: #{pyramid_detection_forward.9} parent=86 // loop_exit
                  _
                %s416 = ssub.s32 16, 1
                loop: start=0, step=1, limit=1
                $region95: #{pyramid_detection_forward.9} parent=86 // loop_pre_header
                  _
                $region96: #{pyramid_detection_forward.9} parent=86 // loop_header
                  %s418 = sphi 0, %s422
                  %p419 = scmp.ge.s32.totalorder %s418, 1
                  %s423 = sphi %s372, %s372
                  %s424 = sphi %s369, %s369
                $region97: #{pyramid_detection_forward.9} parent=86 // loop_header_branch
                  %421 = sbr.rel (%p419) target = $region101
                $region98: #{pyramid_detection_forward.9} parent=86 // loop_body
                  %v425 = vld [vmem:[%s423] sm:%s416]
                  %426 = vst [vmem:[%s424] sm:%s416] %v425
                  %v427 = vld [vmem:[%s423 + $0x4] sm:%s416]
                  %428 = vst [vmem:[%s424 + $0x4] sm:%s416] %v427
                  %v429 = vld [vmem:[%s423 + $0x10] sm:%s416]
                  %430 = vst [vmem:[%s424 + $0x8] sm:%s416] %v429
                  %v431 = vld [vmem:[%s423 + $0x14] sm:%s416]
                  %432 = vst [vmem:[%s424 + $0xc] sm:%s416] %v431
                  %v433 = vld [vmem:[%s423 + $0x20] sm:%s416]
                  %434 = vst [vmem:[%s424 + $0x10] sm:%s416] %v433
                  %v435 = vld [vmem:[%s423 + $0x24] sm:%s416]
                  %436 = vst [vmem:[%s424 + $0x14] sm:%s416] %v435
                  %v437 = vld [vmem:[%s423 + $0x30] sm:%s416]
                  %438 = vst [vmem:[%s424 + $0x18] sm:%s416] %v437
                  %v439 = vld [vmem:[%s423 + $0x34] sm:%s416]
                  %440 = vst [vmem:[%s424 + $0x1c] sm:%s416] %v439
                $region99: #{pyramid_detection_forward.9} parent=86 // loop_footer
                  %s422 = sadd.s32 1, %s418
                $region100: #{pyramid_detection_forward.9} parent=86 // loop_footer_branch
                  %417 = sbr.rel target = $region96
                $region101: #{pyramid_detection_forward.9} parent=86 // loop_exit
                  _
              $region87: #{pyramid_detection_forward.9} parent=71 // pred_fallthru
                _
            $region72: #{pyramid_detection_forward.9} parent=67 // pred_fallthru
              _
            // Predicated region
            $region73: #{pyramid_detection_forward.9} parent=67 // pred_check
              _
            $region74: #{pyramid_detection_forward.9} parent=67 // pred_check_branch
              %378 = sbr.rel (0) target = $region76
            $region75: #{pyramid_detection_forward.9} parent=67 // pred_region
              %s380 = ssub.s32 16, 1
              loop: start=0, step=1, limit=1
              $region77: #{pyramid_detection_forward.9} parent=75 // loop_pre_header
                _
              $region78: #{pyramid_detection_forward.9} parent=75 // loop_header
                %s382 = sphi 0, %s386
                %p383 = scmp.ge.s32.totalorder %s382, 1
                %s387 = sphi %s372, %s372
                %s388 = sphi %s369, %s369
              $region79: #{pyramid_detection_forward.9} parent=75 // loop_header_branch
                %385 = sbr.rel (%p383) target = $region83
              $region80: #{pyramid_detection_forward.9} parent=75 // loop_body
                %v389 = vld [vmem:[%s387] sm:%s380]
                %390 = vst [vmem:[%s388] sm:%s380] %v389
                %v391 = vld [vmem:[%s387 + $0x4] sm:%s380]
                %392 = vst [vmem:[%s388 + $0x4] sm:%s380] %v391
                %v393 = vld [vmem:[%s387 + $0x10] sm:%s380]
                %394 = vst [vmem:[%s388 + $0x8] sm:%s380] %v393
                %v395 = vld [vmem:[%s387 + $0x14] sm:%s380]
                %396 = vst [vmem:[%s388 + $0xc] sm:%s380] %v395
                %v397 = vld [vmem:[%s387 + $0x20] sm:%s380]
                %398 = vst [vmem:[%s388 + $0x10] sm:%s380] %v397
                %v399 = vld [vmem:[%s387 + $0x24] sm:%s380]
                %400 = vst [vmem:[%s388 + $0x14] sm:%s380] %v399
                %v401 = vld [vmem:[%s387 + $0x30] sm:%s380]
                %402 = vst [vmem:[%s388 + $0x18] sm:%s380] %v401
                %v403 = vld [vmem:[%s387 + $0x34] sm:%s380]
                %404 = vst [vmem:[%s388 + $0x1c] sm:%s380] %v403
              $region81: #{pyramid_detection_forward.9} parent=75 // loop_footer
                %s386 = sadd.s32 1, %s382
              $region82: #{pyramid_detection_forward.9} parent=75 // loop_footer_branch
                %381 = sbr.rel target = $region78
              $region83: #{pyramid_detection_forward.9} parent=75 // loop_exit
                _
            $region76: #{pyramid_detection_forward.9} parent=67 // pred_fallthru
              _
          $region68: #{pyramid_detection_forward.9} parent=63 // pred_fallthru
            _
          %441 = vnop
        $region64: #{pyramid_detection_forward.9} parent=55 // pred_fallthru
          _
      $region56: #{pyramid_detection_forward.9} parent=5 // pred_fallthru
        _
      %p442 = scmp.le.s32.totalorder 1, %s18
      %p443 = scmp.lt.s32.totalorder %s18, 3
      %p444 = pnand %p442, %p443
      %p445 = pneg %p444
      // Predicated region
      $region102: #{pyramid_detection_forward.9} parent=5 // pred_check
        _
      $region103: #{pyramid_detection_forward.9} parent=5 // pred_check_branch
        %447 = sbr.rel (%p444) target = $region105
      $region104: #{pyramid_detection_forward.9} parent=5 // pred_region
        %s448 = ssub.s32 %s18, 1
        %s449 = sand.u32 %s57, 1
        %s450 = sand.u32 %s57, 1
        %s451 = smul.addr %s450, 32
        %s452 = scalar_lea.vmem [#allocation3], %s451
        // Predicated region
        $region106: #{pyramid_detection_forward.9} parent=104 // pred_check
          %p453 = pneg %p70
        $region107: #{pyramid_detection_forward.9} parent=104 // pred_check_branch
          %455 = sbr.rel (%p453) target = $region109
        $region108: #{pyramid_detection_forward.9} parent=104 // pred_region
          _
        $region109: #{pyramid_detection_forward.9} parent=104 // pred_fallthru
          _
        %p456 = scmp.lt.s32.totalorder %s23, 1
        %s457 = scalar_select %p456, %s23, 1
        %s458 = smul.addr %s457, 2
        %s459 = smul.addr %s458, 4
        %s460 = scalar_lea.vmem %s0, %s459
        %p461 = pneg %p44
        %p462 = pneg %p41
        %s463 = sand.u32 %s57, 1
        %s464 = sand.u32 %s57, 1
        %s465 = smul.addr %s464, 32
        %s466 = scalar_lea.vmem [#allocation3], %s465
        %p467 = pneg %p70
        %p468 = pneg %p67
        %p469 = pneg %p91
        %p470 = pneg %p88
        %p471 = pneg %p112
        %p472 = pneg %p109
        %p473 = pneg %p133
        %p474 = pneg %p130
        %p475 = pneg %p154
        %p476 = pneg %p151
        %p477 = pneg %p175
        %p478 = pneg %p172
        %p479 = pneg %p196
        %p480 = pneg %p193
        %p481 = pneg %p217
        %p482 = pneg %p214
        %p483 = pneg %p238
        %p484 = pneg %p235
        %p485 = pneg %p259
        %p486 = pneg %p256
        %p487 = pneg %p280
        %p488 = pneg %p277
        %p489 = pneg %p306
        %p490 = pneg %p303
        %p491 = scmp.lt.s32.totalorder %s23, 1
        %s492 = scalar_select %p491, %s23, 1
        %s493 = smul.addr %s492, 5
        %s494 = smul.addr %s493, 8
        %s495 = scalar_lea.vmem %s12, %s494
        %p496 = scmp.lt.s32.totalorder %s23, 1
        %s497 = scalar_select %p496, %s23, 1
        %s498 = smul.addr %s497, 2
        %s499 = smul.addr %s498, 4
        %s500 = scalar_lea.vmem %s0, %s499
        %p501 = scmp.lt.s32.totalorder %s23, 1
        %s502 = scalar_select %p501, %s23, 1
        %s503 = smul.addr %s502, 5
        %s504 = smul.addr %s503, 8
        %s505 = scalar_lea.vmem %s12, %s504
        %v507 = vlaneseq
        %v508 = vshrl.u32 %v507, 7
        %v509 = vadd.s32 %v508, 8
        %v510 = vlaneseq
        %v511 = vand.u32 %v510, 127
        %512 = vst [vmem:[#allocation2] sm:$0xff] 0.0
        %513 = vst [vmem:[#allocation2 + $0x8] sm:$0xff] 0.0
        %514 = vst [vmem:[#allocation2 + $0x10] sm:$0xff] 0.0
        %515 = vst [vmem:[#allocation2 + $0x18] sm:$0xff] 0.0
        %516 = vst [vmem:[#allocation2 + $0x20] sm:$0xff] 0.0
        %v517 = vld [vmem:[%s500] sm:$0xf]
        %v518 = vld [vmem:[%s500 + $0x4] sm:$0xf]
        %v519 = vld [vmem:[%s3] sm:$0x1]
        %v520 = vmul.u32 %v508, 2
        %v521 = vmul.u32 %v509, 2
        %v522 = vadd.s32 %v520, 4294967295
        %v523 = vadd.s32 %v521, 4294967295
        %vm524 = vcmp.eq.s32.totalorder %v511, %v522
        %vm525 = vcmp.eq.s32.totalorder %v511, %v523
        %vm526 = vcmp.lt.s32.totalorder %v508, 8
        %vm527 = vcmp.lt.s32.totalorder %v509, 8
        %vm528 = vmand %vm524, %vm526
        %vm529 = vmand %vm525, %vm527
        %vm530 = vcmp.lt.s32.totalorder %v511, 16
        %vm531 = vmand %vm528, %vm530
        %vm532 = vmand %vm529, %vm530
        %v533 = vsel %vm531, 1.0, 0.0
        %v534 = vsel %vm532, 1.0, 0.0
        %v535 = vpack.c.bf16 %v534, %v533
        %v538 = vunpack.c.l.b16 %v517
        %v539 = vunpack.c.l.b16 %v518
        %v540 = vpack.c.b16 %v539, %v538
        %vm542 = vcmask 130048
        %v544 = vsel %vm542, %v535, 0
        %546 = vmatpush.bf16.msra.mxu0 0
        %547 = vmatpush.bf16.msra.mxu0 0
        %548 = vmatpush.bf16.msra.mxu0 0
        %549 = vmatpush.bf16.msra.mxu0 0
        %550 = vmatpush.bf16.msra.mxu0 0
        %551 = vmatpush.bf16.msra.mxu0 0
        %552 = vmatpush.bf16.msra.mxu0 0
        %553 = vmatpush.bf16.msra.mxu0 %v540
        %554 = vmatmul.bf16.gmra.mxu0 %v544
        %v555 = vpop.f32.mrf.mxu0
        %v556 = vadd.f32 0.0, %v555
        %v557 = vpop.f32.mrf.mxu0
        %v558 = vadd.f32 0.0, %v557
        %559 = vdwg.mxu0
        %v560 = vpack.c.bf16 %v558, %v556
        %v561 = vld [vmem:[%s2] sm:$0xf]
        %v562 = vld [vmem:[%s2 + $0x4] sm:$0xf]
        %v563 = vld [vmem:[%s2 + $0x8] sm:$0xf]
        %v564 = vld [vmem:[%s2 + $0xc] sm:$0xf]
        %v565 = vld [vmem:[%s2 + $0x10] sm:$0xf]
        %v566 = vld [vmem:[%s2 + $0x14] sm:$0xf]
        %v567 = vld [vmem:[%s2 + $0x18] sm:$0xf]
        %v568 = vld [vmem:[%s2 + $0x1c] sm:$0xf]
        %v569 = vld [vmem:[%s2 + $0x20] sm:$0xf]
        %v570 = vld [vmem:[%s2 + $0x24] sm:$0xf]
        %v571 = vld [vmem:[%s2 + $0x28] sm:$0xf]
        %v572 = vld [vmem:[%s2 + $0x2c] sm:$0xf]
        %v573 = vld [vmem:[%s2 + $0x30] sm:$0xf]
        %v574 = vld [vmem:[%s2 + $0x34] sm:$0xf]
        %v575 = vld [vmem:[%s2 + $0x38] sm:$0xf]
        %v576 = vld [vmem:[%s2 + $0x3c] sm:$0xf]
        %v593 = vunpack.c.l.b16 %v561
        %v594 = vunpack.c.l.b16 %v562
        %v595 = vunpack.c.l.b16 %v563
        %v596 = vunpack.c.l.b16 %v564
        %v597 = vunpack.c.l.b16 %v565
        %v598 = vunpack.c.l.b16 %v566
        %v599 = vunpack.c.l.b16 %v567
        %v600 = vunpack.c.l.b16 %v568
        %v601 = vunpack.c.l.b16 %v569
        %v602 = vunpack.c.l.b16 %v570
        %v603 = vunpack.c.l.b16 %v571
        %v604 = vunpack.c.l.b16 %v572
        %v605 = vunpack.c.l.b16 %v573
        %v606 = vunpack.c.l.b16 %v574
        %v607 = vunpack.c.l.b16 %v575
        %v608 = vunpack.c.l.b16 %v576
        %v609 = vpack.c.b16 %v594, %v593
        %v610 = vpack.c.b16 %v596, %v595
        %v611 = vpack.c.b16 %v598, %v597
        %v612 = vpack.c.b16 %v600, %v599
        %v613 = vpack.c.b16 %v602, %v601
        %v614 = vpack.c.b16 %v604, %v603
        %v615 = vpack.c.b16 %v606, %v605
        %v616 = vpack.c.b16 %v608, %v607
        %625 = vmatpush.bf16.msra.mxu0 %v616
        %626 = vmatpush.bf16.msra.mxu0 %v615
        %627 = vmatpush.bf16.msra.mxu0 %v614
        %628 = vmatpush.bf16.msra.mxu0 %v613
        %629 = vmatpush.bf16.msra.mxu0 %v612
        %630 = vmatpush.bf16.msra.mxu0 %v611
        %631 = vmatpush.bf16.msra.mxu0 %v610
        %632 = vmatpush.bf16.msra.mxu0 %v609
        %633 = vmatmul.bf16.gmra.mxu0 %v560
        %v634 = vpop.f32.mrf.mxu0
        %v635 = vadd.f32 0.0, %v634
        %v636 = vpop.f32.mrf.mxu0
        %v637 = vadd.f32 0.0, %v636
        %638 = vdwg.mxu0
        %v640 = vperm.slane %v519, 0
        %v642 = vadd.f32 %v640, %v635
        %v643 = vadd.f32 %v640, %v637
        %vm644 = vcmp.eq.s32.totalorder %v511, %v520
        %vm645 = vcmp.eq.s32.totalorder %v511, %v521
        %vm646 = vmand %vm644, %vm526
        %vm647 = vmand %vm645, %vm527
        %vm648 = vmand %vm646, %vm530
        %vm649 = vmand %vm647, %vm530
        %v650 = vsel %vm648, 1.0, 0.0
        %v651 = vsel %vm649, 1.0, 0.0
        %v652 = vpack.c.bf16 %v651, %v650
        %v654 = vsel %vm542, %v652, 0
        %656 = vmatpush.bf16.msra.mxu0 0
        %657 = vmatpush.bf16.msra.mxu0 0
        %658 = vmatpush.bf16.msra.mxu0 0
        %659 = vmatpush.bf16.msra.mxu0 0
        %660 = vmatpush.bf16.msra.mxu0 0
        %661 = vmatpush.bf16.msra.mxu0 0
        %662 = vmatpush.bf16.msra.mxu0 0
        %663 = vmatpush.bf16.msra.mxu0 %v540
        %664 = vmatmul.bf16.gmra.mxu0 %v654
        %v665 = vpop.f32.mrf.mxu0
        %v666 = vadd.f32 0.0, %v665
        %v667 = vpop.f32.mrf.mxu0
        %v668 = vadd.f32 0.0, %v667
        %669 = vdwg.mxu0
        %v670 = vpack.c.bf16 %v668, %v666
        %s671 = scalar_lea.vmem %s2, 64
        %v672 = vld [vmem:[%s671] sm:$0xf]
        %v673 = vld [vmem:[%s671 + $0x4] sm:$0xf]
        %v674 = vld [vmem:[%s671 + $0x8] sm:$0xf]
        %v675 = vld [vmem:[%s671 + $0xc] sm:$0xf]
        %v676 = vld [vmem:[%s671 + $0x10] sm:$0xf]
        %v677 = vld [vmem:[%s671 + $0x14] sm:$0xf]
        %v678 = vld [vmem:[%s671 + $0x18] sm:$0xf]
        %v679 = vld [vmem:[%s671 + $0x1c] sm:$0xf]
        %v680 = vld [vmem:[%s671 + $0x20] sm:$0xf]
        %v681 = vld [vmem:[%s671 + $0x24] sm:$0xf]
        %v682 = vld [vmem:[%s671 + $0x28] sm:$0xf]
        %v683 = vld [vmem:[%s671 + $0x2c] sm:$0xf]
        %v684 = vld [vmem:[%s671 + $0x30] sm:$0xf]
        %v685 = vld [vmem:[%s671 + $0x34] sm:$0xf]
        %v686 = vld [vmem:[%s671 + $0x38] sm:$0xf]
        %v687 = vld [vmem:[%s671 + $0x3c] sm:$0xf]
        %v704 = vunpack.c.l.b16 %v672
        %v705 = vunpack.c.l.b16 %v673
        %v706 = vunpack.c.l.b16 %v674
        %v707 = vunpack.c.l.b16 %v675
        %v708 = vunpack.c.l.b16 %v676
        %v709 = vunpack.c.l.b16 %v677
        %v710 = vunpack.c.l.b16 %v678
        %v711 = vunpack.c.l.b16 %v679
        %v712 = vunpack.c.l.b16 %v680
        %v713 = vunpack.c.l.b16 %v681
        %v714 = vunpack.c.l.b16 %v682
        %v715 = vunpack.c.l.b16 %v683
        %v716 = vunpack.c.l.b16 %v684
        %v717 = vunpack.c.l.b16 %v685
        %v718 = vunpack.c.l.b16 %v686
        %v719 = vunpack.c.l.b16 %v687
        %v720 = vpack.c.b16 %v705, %v704
        %v721 = vpack.c.b16 %v707, %v706
        %v722 = vpack.c.b16 %v709, %v708
        %v723 = vpack.c.b16 %v711, %v710
        %v724 = vpack.c.b16 %v713, %v712
        %v725 = vpack.c.b16 %v715, %v714
        %v726 = vpack.c.b16 %v717, %v716
        %v727 = vpack.c.b16 %v719, %v718
        %736 = vmatpush.bf16.msra.mxu0 %v727
        %737 = vmatpush.bf16.msra.mxu0 %v726
        %738 = vmatpush.bf16.msra.mxu0 %v725
        %739 = vmatpush.bf16.msra.mxu0 %v724
        %740 = vmatpush.bf16.msra.mxu0 %v723
        %741 = vmatpush.bf16.msra.mxu0 %v722
        %742 = vmatpush.bf16.msra.mxu0 %v721
        %743 = vmatpush.bf16.msra.mxu0 %v720
        %744 = vmatmul.bf16.gmra.mxu0 %v670
        %v745 = vpop.f32.mrf.mxu0
        %v746 = vadd.f32 0.0, %v745
        %v747 = vpop.f32.mrf.mxu0
        %v748 = vadd.f32 0.0, %v747
        %749 = vdwg.mxu0
        %v750 = vadd.f32 %v642, %v746
        %v751 = vadd.f32 %v643, %v748
        %v752 = vadd.s32 %v520, 1
        %v753 = vadd.s32 %v521, 1
        %vm754 = vcmp.eq.s32.totalorder %v511, %v752
        %vm755 = vcmp.eq.s32.totalorder %v511, %v753
        %vm756 = vmand %vm754, %vm526
        %vm757 = vmand %vm755, %vm527
        %vm758 = vmand %vm756, %vm530
        %vm759 = vmand %vm757, %vm530
        %v760 = vsel %vm758, 1.0, 0.0
        %v761 = vsel %vm759, 1.0, 0.0
        %v762 = vpack.c.bf16 %v761, %v760
        %v764 = vsel %vm542, %v762, 0
        %766 = vmatpush.bf16.msra.mxu0 0
        %767 = vmatpush.bf16.msra.mxu0 0
        %768 = vmatpush.bf16.msra.mxu0 0
        %769 = vmatpush.bf16.msra.mxu0 0
        %770 = vmatpush.bf16.msra.mxu0 0
        %771 = vmatpush.bf16.msra.mxu0 0
        %772 = vmatpush.bf16.msra.mxu0 0
        %773 = vmatpush.bf16.msra.mxu0 %v540
        %774 = vmatmul.bf16.gmra.mxu0 %v764
        %v775 = vpop.f32.mrf.mxu0
        %v776 = vadd.f32 0.0, %v775
        %v777 = vpop.f32.mrf.mxu0
        %v778 = vadd.f32 0.0, %v777
        %779 = vdwg.mxu0
        %v780 = vpack.c.bf16 %v778, %v776
        %s781 = scalar_lea.vmem %s2, 128
        %v782 = vld [vmem:[%s781] sm:$0xf]
        %v783 = vld [vmem:[%s781 + $0x4] sm:$0xf]
        %v784 = vld [vmem:[%s781 + $0x8] sm:$0xf]
        %v785 = vld [vmem:[%s781 + $0xc] sm:$0xf]
        %v786 = vld [vmem:[%s781 + $0x10] sm:$0xf]
        %v787 = vld [vmem:[%s781 + $0x14] sm:$0xf]
        %v788 = vld [vmem:[%s781 + $0x18] sm:$0xf]
        %v789 = vld [vmem:[%s781 + $0x1c] sm:$0xf]
        %v790 = vld [vmem:[%s781 + $0x20] sm:$0xf]
        %v791 = vld [vmem:[%s781 + $0x24] sm:$0xf]
        %v792 = vld [vmem:[%s781 + $0x28] sm:$0xf]
        %v793 = vld [vmem:[%s781 + $0x2c] sm:$0xf]
        %v794 = vld [vmem:[%s781 + $0x30] sm:$0xf]
        %v795 = vld [vmem:[%s781 + $0x34] sm:$0xf]
        %v796 = vld [vmem:[%s781 + $0x38] sm:$0xf]
        %v797 = vld [vmem:[%s781 + $0x3c] sm:$0xf]
        %v814 = vunpack.c.l.b16 %v782
        %v815 = vunpack.c.l.b16 %v783
        %v816 = vunpack.c.l.b16 %v784
        %v817 = vunpack.c.l.b16 %v785
        %v818 = vunpack.c.l.b16 %v786
        %v819 = vunpack.c.l.b16 %v787
        %v820 = vunpack.c.l.b16 %v788
        %v821 = vunpack.c.l.b16 %v789
        %v822 = vunpack.c.l.b16 %v790
        %v823 = vunpack.c.l.b16 %v791
        %v824 = vunpack.c.l.b16 %v792
        %v825 = vunpack.c.l.b16 %v793
        %v826 = vunpack.c.l.b16 %v794
        %v827 = vunpack.c.l.b16 %v795
        %v828 = vunpack.c.l.b16 %v796
        %v829 = vunpack.c.l.b16 %v797
        %v830 = vpack.c.b16 %v815, %v814
        %v831 = vpack.c.b16 %v817, %v816
        %v832 = vpack.c.b16 %v819, %v818
        %v833 = vpack.c.b16 %v821, %v820
        %v834 = vpack.c.b16 %v823, %v822
        %v835 = vpack.c.b16 %v825, %v824
        %v836 = vpack.c.b16 %v827, %v826
        %v837 = vpack.c.b16 %v829, %v828
        %846 = vmatpush.bf16.msra.mxu0 %v837
        %847 = vmatpush.bf16.msra.mxu0 %v836
        %848 = vmatpush.bf16.msra.mxu0 %v835
        %849 = vmatpush.bf16.msra.mxu0 %v834
        %850 = vmatpush.bf16.msra.mxu0 %v833
        %851 = vmatpush.bf16.msra.mxu0 %v832
        %852 = vmatpush.bf16.msra.mxu0 %v831
        %853 = vmatpush.bf16.msra.mxu0 %v830
        %854 = vmatmul.bf16.gmra.mxu0 %v780
        %v855 = vpop.f32.mrf.mxu0
        %v856 = vadd.f32 0.0, %v855
        %v857 = vpop.f32.mrf.mxu0
        %v858 = vadd.f32 0.0, %v857
        %859 = vdwg.mxu0
        %v860 = vadd.f32 %v750, %v856
        %v861 = vadd.f32 %v751, %v858
        %v862 = vmax.f32 %v860, 0.0
        %v863 = vmax.f32 %v861, 0.0
        %v864 = vpack.c.bf16 %v863, %v862
        %v865 = vshra.s32 %v508, 1
        %v866 = vshra.s32 %v509, 1
        %vm867 = vcmp.eq.s32.totalorder %v511, %v865
        %vm868 = vcmp.eq.s32.totalorder %v511, %v866
        %vm869 = vcmp.lt.s32.totalorder %v508, 16
        %vm870 = vcmp.lt.s32.totalorder %v509, 16
        %vm871 = vmand %vm867, %vm869
        %vm872 = vmand %vm868, %vm870
        %v873 = vsel %vm871, 1.0, 0.0
        %v874 = vsel %vm872, 1.0, 0.0
        %v875 = vpack.c.bf16 %v874, %v873
        %v876 = vld [vmem:[%s452] sm:$0xf]
        %v877 = vld [vmem:[%s452 + $0x4] sm:$0xf]
        %v878 = vunpack.c.l.bf16 %v876
        %v879 = vunpack.c.l.bf16 %v877
        %v881 = vsel %vm542, %v875, 0
        %883 = vmatpush.bf16.msra.mxu0 0
        %884 = vmatpush.bf16.msra.mxu0 0
        %885 = vmatpush.bf16.msra.mxu0 0
        %886 = vmatpush.bf16.msra.mxu0 0
        %887 = vmatpush.bf16.msra.mxu0 0
        %888 = vmatpush.bf16.msra.mxu0 0
        %889 = vmatpush.bf16.msra.mxu0 0
        %890 = vmatpush.bf16.msra.mxu0 %v864
        %891 = vmatmul.bf16.gmra.mxu0 %v881
        %v892 = vpop.f32.mrf.mxu0
        %v893 = vadd.f32 %v878, %v892
        %v894 = vpop.f32.mrf.mxu0
        %v895 = vadd.f32 %v879, %v894
        %896 = vdwg.mxu0
        %v897 = vpack.c.bf16 %v895, %v893
        %v898 = vld [vmem:[%s4] sm:$0xf]
        %v899 = vld [vmem:[%s4 + $0x4] sm:$0xf]
        %v900 = vld [vmem:[%s4 + $0x8] sm:$0xf]
        %v901 = vld [vmem:[%s4 + $0xc] sm:$0xf]
        %v902 = vld [vmem:[%s4 + $0x10] sm:$0xf]
        %v903 = vld [vmem:[%s4 + $0x14] sm:$0xf]
        %v904 = vld [vmem:[%s4 + $0x18] sm:$0xf]
        %v905 = vld [vmem:[%s4 + $0x1c] sm:$0xf]
        %v906 = vld [vmem:[%s4 + $0x20] sm:$0xf]
        %v907 = vld [vmem:[%s4 + $0x24] sm:$0xf]
        %v908 = vld [vmem:[%s4 + $0x28] sm:$0xf]
        %v909 = vld [vmem:[%s4 + $0x2c] sm:$0xf]
        %v910 = vld [vmem:[%s4 + $0x30] sm:$0xf]
        %v911 = vld [vmem:[%s4 + $0x34] sm:$0xf]
        %v912 = vld [vmem:[%s4 + $0x38] sm:$0xf]
        %v913 = vld [vmem:[%s4 + $0x3c] sm:$0xf]
        %v914 = vld [vmem:[%s5] sm:$0x1]
        %v916 = vperm.slane %v914, 0
        %v934 = vunpack.c.l.b16 %v898
        %v935 = vunpack.c.l.b16 %v899
        %v936 = vunpack.c.l.b16 %v900
        %v937 = vunpack.c.l.b16 %v901
        %v938 = vunpack.c.l.b16 %v902
        %v939 = vunpack.c.l.b16 %v903
        %v940 = vunpack.c.l.b16 %v904
        %v941 = vunpack.c.l.b16 %v905
        %v942 = vunpack.c.l.b16 %v906
        %v943 = vunpack.c.l.b16 %v907
        %v944 = vunpack.c.l.b16 %v908
        %v945 = vunpack.c.l.b16 %v909
        %v946 = vunpack.c.l.b16 %v910
        %v947 = vunpack.c.l.b16 %v911
        %v948 = vunpack.c.l.b16 %v912
        %v949 = vunpack.c.l.b16 %v913
        %v950 = vpack.c.b16 %v935, %v934
        %v951 = vpack.c.b16 %v937, %v936
        %v952 = vpack.c.b16 %v939, %v938
        %v953 = vpack.c.b16 %v941, %v940
        %v954 = vpack.c.b16 %v943, %v942
        %v955 = vpack.c.b16 %v945, %v944
        %v956 = vpack.c.b16 %v947, %v946
        %v957 = vpack.c.b16 %v949, %v948
        %966 = vmatpush.bf16.msra.mxu0 %v957
        %967 = vmatpush.bf16.msra.mxu0 %v956
        %968 = vmatpush.bf16.msra.mxu0 %v955
        %969 = vmatpush.bf16.msra.mxu0 %v954
        %970 = vmatpush.bf16.msra.mxu0 %v953
        %971 = vmatpush.bf16.msra.mxu0 %v952
        %972 = vmatpush.bf16.msra.mxu0 %v951
        %973 = vmatpush.bf16.msra.mxu0 %v950
        %974 = vmatmul.bf16.gmra.mxu0 %v897
        %v975 = vpop.f32.mrf.mxu0
        %v976 = vadd.f32 %v916, %v975
        %v977 = vpop.f32.mrf.mxu0
        %v978 = vadd.f32 %v916, %v977
        %979 = vdwg.mxu0
        %v980 = vmax.f32 %v976, 0.0
        %v981 = vmax.f32 %v978, 0.0
        %v982 = vpack.c.bf16 %v980, %v980
        %v983 = vpack.c.bf16 %v981, %v981
        %v984 = vunpack.c.l.bf16 %v982
        %v985 = vunpack.c.l.bf16 %v983
        %986 = vst [vmem:[#allocation2 + $0x1] sm:$0xff] %v984
        %987 = vst [vmem:[#allocation2 + $0x9] sm:$0xff] %v985
        %s988 = scalar_lea.vmem %s3, 1
        %v989 = vld [vmem:[%s988] sm:$0x1]
        %vm990 = vcmp.lt.s32.totalorder %v508, 4
        %vm991 = vcmp.lt.s32.totalorder %v509, 4
        %vm992 = vmand %vm524, %vm990
        %vm993 = vmand %vm525, %vm991
        %vm994 = vcmp.lt.s32.totalorder %v511, 8
        %vm995 = vmand %vm992, %vm994
        %vm996 = vmand %vm993, %vm994
        %v997 = vsel %vm995, 1.0, 0.0
        %v998 = vsel %vm996, 1.0, 0.0
        %v999 = vpack.c.bf16 %v998, %v997
        %v1001 = vsel %vm542, %v999, 0
        %1003 = vmatpush.bf16.msra.mxu0 0
        %1004 = vmatpush.bf16.msra.mxu0 0
        %1005 = vmatpush.bf16.msra.mxu0 0
        %1006 = vmatpush.bf16.msra.mxu0 0
        %1007 = vmatpush.bf16.msra.mxu0 0
        %1008 = vmatpush.bf16.msra.mxu0 0
        %1009 = vmatpush.bf16.msra.mxu0 0
        %1010 = vmatpush.bf16.msra.mxu0 %v864
        %1011 = vmatmul.bf16.gmra.mxu0 %v1001
        %v1012 = vpop.f32.mrf.mxu0
        %v1013 = vadd.f32 0.0, %v1012
        %v1014 = vpop.f32.mrf.mxu0
        %v1015 = vadd.f32 0.0, %v1014
        %1016 = vdwg.mxu0
        %v1017 = vpack.c.bf16 %v1015, %v1013
        %s1018 = scalar_lea.vmem %s2, 192
        %v1019 = vld [vmem:[%s1018] sm:$0xf]
        %v1020 = vld [vmem:[%s1018 + $0x4] sm:$0xf]
        %v1021 = vld [vmem:[%s1018 + $0x8] sm:$0xf]
        %v1022 = vld [vmem:[%s1018 + $0xc] sm:$0xf]
        %v1023 = vld [vmem:[%s1018 + $0x10] sm:$0xf]
        %v1024 = vld [vmem:[%s1018 + $0x14] sm:$0xf]
        %v1025 = vld [vmem:[%s1018 + $0x18] sm:$0xf]
        %v1026 = vld [vmem:[%s1018 + $0x1c] sm:$0xf]
        %v1027 = vld [vmem:[%s1018 + $0x20] sm:$0xf]
        %v1028 = vld [vmem:[%s1018 + $0x24] sm:$0xf]
        %v1029 = vld [vmem:[%s1018 + $0x28] sm:$0xf]
        %v1030 = vld [vmem:[%s1018 + $0x2c] sm:$0xf]
        %v1031 = vld [vmem:[%s1018 + $0x30] sm:$0xf]
        %v1032 = vld [vmem:[%s1018 + $0x34] sm:$0xf]
        %v1033 = vld [vmem:[%s1018 + $0x38] sm:$0xf]
        %v1034 = vld [vmem:[%s1018 + $0x3c] sm:$0xf]
        %v1051 = vunpack.c.l.b16 %v1019
        %v1052 = vunpack.c.l.b16 %v1020
        %v1053 = vunpack.c.l.b16 %v1021
        %v1054 = vunpack.c.l.b16 %v1022
        %v1055 = vunpack.c.l.b16 %v1023
        %v1056 = vunpack.c.l.b16 %v1024
        %v1057 = vunpack.c.l.b16 %v1025
        %v1058 = vunpack.c.l.b16 %v1026
        %v1059 = vunpack.c.l.b16 %v1027
        %v1060 = vunpack.c.l.b16 %v1028
        %v1061 = vunpack.c.l.b16 %v1029
        %v1062 = vunpack.c.l.b16 %v1030
        %v1063 = vunpack.c.l.b16 %v1031
        %v1064 = vunpack.c.l.b16 %v1032
        %v1065 = vunpack.c.l.b16 %v1033
        %v1066 = vunpack.c.l.b16 %v1034
        %v1067 = vpack.c.b16 %v1052, %v1051
        %v1068 = vpack.c.b16 %v1054, %v1053
        %v1069 = vpack.c.b16 %v1056, %v1055
        %v1070 = vpack.c.b16 %v1058, %v1057
        %v1071 = vpack.c.b16 %v1060, %v1059
        %v1072 = vpack.c.b16 %v1062, %v1061
        %v1073 = vpack.c.b16 %v1064, %v1063
        %v1074 = vpack.c.b16 %v1066, %v1065
        %1083 = vmatpush.bf16.msra.mxu0 %v1074
        %1084 = vmatpush.bf16.msra.mxu0 %v1073
        %1085 = vmatpush.bf16.msra.mxu0 %v1072
        %1086 = vmatpush.bf16.msra.mxu0 %v1071
        %1087 = vmatpush.bf16.msra.mxu0 %v1070
        %1088 = vmatpush.bf16.msra.mxu0 %v1069
        %1089 = vmatpush.bf16.msra.mxu0 %v1068
        %1090 = vmatpush.bf16.msra.mxu0 %v1067
        %1091 = vmatmul.bf16.gmra.mxu0 %v1017
        %v1092 = vpop.f32.mrf.mxu0
        %v1093 = vadd.f32 0.0, %v1092
        %v1094 = vpop.f32.mrf.mxu0
        %v1095 = vadd.f32 0.0, %v1094
        %1096 = vdwg.mxu0
        %v1098 = vperm.slane %v989, 0
        %v1100 = vadd.f32 %v1098, %v1093
        %v1101 = vadd.f32 %v1098, %v1095
        %vm1102 = vmand %vm644, %vm990
        %vm1103 = vmand %vm645, %vm991
        %vm1104 = vmand %vm1102, %vm994
        %vm1105 = vmand %vm1103, %vm994
        %v1106 = vsel %vm1104, 1.0, 0.0
        %v1107 = vsel %vm1105, 1.0, 0.0
        %v1108 = vpack.c.bf16 %v1107, %v1106
        %v1110 = vsel %vm542, %v1108, 0
        %1112 = vmatpush.bf16.msra.mxu0 0
        %1113 = vmatpush.bf16.msra.mxu0 0
        %1114 = vmatpush.bf16.msra.mxu0 0
        %1115 = vmatpush.bf16.msra.mxu0 0
        %1116 = vmatpush.bf16.msra.mxu0 0
        %1117 = vmatpush.bf16.msra.mxu0 0
        %1118 = vmatpush.bf16.msra.mxu0 0
        %1119 = vmatpush.bf16.msra.mxu0 %v864
        %1120 = vmatmul.bf16.gmra.mxu0 %v1110
        %v1121 = vpop.f32.mrf.mxu0
        %v1122 = vadd.f32 0.0, %v1121
        %v1123 = vpop.f32.mrf.mxu0
        %v1124 = vadd.f32 0.0, %v1123
        %1125 = vdwg.mxu0
        %v1126 = vpack.c.bf16 %v1124, %v1122
        %s1127 = scalar_lea.vmem %s2, 256
        %v1128 = vld [vmem:[%s1127] sm:$0xf]
        %v1129 = vld [vmem:[%s1127 + $0x4] sm:$0xf]
        %v1130 = vld [vmem:[%s1127 + $0x8] sm:$0xf]
        %v1131 = vld [vmem:[%s1127 + $0xc] sm:$0xf]
        %v1132 = vld [vmem:[%s1127 + $0x10] sm:$0xf]
        %v1133 = vld [vmem:[%s1127 + $0x14] sm:$0xf]
        %v1134 = vld [vmem:[%s1127 + $0x18] sm:$0xf]
        %v1135 = vld [vmem:[%s1127 + $0x1c] sm:$0xf]
        %v1136 = vld [vmem:[%s1127 + $0x20] sm:$0xf]
        %v1137 = vld [vmem:[%s1127 + $0x24] sm:$0xf]
        %v1138 = vld [vmem:[%s1127 + $0x28] sm:$0xf]
        %v1139 = vld [vmem:[%s1127 + $0x2c] sm:$0xf]
        %v1140 = vld [vmem:[%s1127 + $0x30] sm:$0xf]
        %v1141 = vld [vmem:[%s1127 + $0x34] sm:$0xf]
        %v1142 = vld [vmem:[%s1127 + $0x38] sm:$0xf]
        %v1143 = vld [vmem:[%s1127 + $0x3c] sm:$0xf]
        %v1160 = vunpack.c.l.b16 %v1128
        %v1161 = vunpack.c.l.b16 %v1129
        %v1162 = vunpack.c.l.b16 %v1130
        %v1163 = vunpack.c.l.b16 %v1131
        %v1164 = vunpack.c.l.b16 %v1132
        %v1165 = vunpack.c.l.b16 %v1133
        %v1166 = vunpack.c.l.b16 %v1134
        %v1167 = vunpack.c.l.b16 %v1135
        %v1168 = vunpack.c.l.b16 %v1136
        %v1169 = vunpack.c.l.b16 %v1137
        %v1170 = vunpack.c.l.b16 %v1138
        %v1171 = vunpack.c.l.b16 %v1139
        %v1172 = vunpack.c.l.b16 %v1140
        %v1173 = vunpack.c.l.b16 %v1141
        %v1174 = vunpack.c.l.b16 %v1142
        %v1175 = vunpack.c.l.b16 %v1143
        %v1176 = vpack.c.b16 %v1161, %v1160
        %v1177 = vpack.c.b16 %v1163, %v1162
        %v1178 = vpack.c.b16 %v1165, %v1164
        %v1179 = vpack.c.b16 %v1167, %v1166
        %v1180 = vpack.c.b16 %v1169, %v1168
        %v1181 = vpack.c.b16 %v1171, %v1170
        %v1182 = vpack.c.b16 %v1173, %v1172
        %v1183 = vpack.c.b16 %v1175, %v1174
        %1192 = vmatpush.bf16.msra.mxu0 %v1183
        %1193 = vmatpush.bf16.msra.mxu0 %v1182
        %1194 = vmatpush.bf16.msra.mxu0 %v1181
        %1195 = vmatpush.bf16.msra.mxu0 %v1180
        %1196 = vmatpush.bf16.msra.mxu0 %v1179
        %1197 = vmatpush.bf16.msra.mxu0 %v1178
        %1198 = vmatpush.bf16.msra.mxu0 %v1177
        %1199 = vmatpush.bf16.msra.mxu0 %v1176
        %1200 = vmatmul.bf16.gmra.mxu0 %v1126
        %v1201 = vpop.f32.mrf.mxu0
        %v1202 = vadd.f32 0.0, %v1201
        %v1203 = vpop.f32.mrf.mxu0
        %v1204 = vadd.f32 0.0, %v1203
        %1205 = vdwg.mxu0
        %v1206 = vadd.f32 %v1100, %v1202
        %v1207 = vadd.f32 %v1101, %v1204
        %vm1208 = vmand %vm754, %vm990
        %vm1209 = vmand %vm755, %vm991
        %vm1210 = vmand %vm1208, %vm994
        %vm1211 = vmand %vm1209, %vm994
        %v1212 = vsel %vm1210, 1.0, 0.0
        %v1213 = vsel %vm1211, 1.0, 0.0
        %v1214 = vpack.c.bf16 %v1213, %v1212
        %v1216 = vsel %vm542, %v1214, 0
        %1218 = vmatpush.bf16.msra.mxu0 0
        %1219 = vmatpush.bf16.msra.mxu0 0
        %1220 = vmatpush.bf16.msra.mxu0 0
        %1221 = vmatpush.bf16.msra.mxu0 0
        %1222 = vmatpush.bf16.msra.mxu0 0
        %1223 = vmatpush.bf16.msra.mxu0 0
        %1224 = vmatpush.bf16.msra.mxu0 0
        %1225 = vmatpush.bf16.msra.mxu0 %v864
        %1226 = vmatmul.bf16.gmra.mxu0 %v1216
        %v1227 = vpop.f32.mrf.mxu0
        %v1228 = vadd.f32 0.0, %v1227
        %v1229 = vpop.f32.mrf.mxu0
        %v1230 = vadd.f32 0.0, %v1229
        %1231 = vdwg.mxu0
        %v1232 = vpack.c.bf16 %v1230, %v1228
        %s1233 = scalar_lea.vmem %s2, 320
        %v1234 = vld [vmem:[%s1233] sm:$0xf]
        %v1235 = vld [vmem:[%s1233 + $0x4] sm:$0xf]
        %v1236 = vld [vmem:[%s1233 + $0x8] sm:$0xf]
        %v1237 = vld [vmem:[%s1233 + $0xc] sm:$0xf]
        %v1238 = vld [vmem:[%s1233 + $0x10] sm:$0xf]
        %v1239 = vld [vmem:[%s1233 + $0x14] sm:$0xf]
        %v1240 = vld [vmem:[%s1233 + $0x18] sm:$0xf]
        %v1241 = vld [vmem:[%s1233 + $0x1c] sm:$0xf]
        %v1242 = vld [vmem:[%s1233 + $0x20] sm:$0xf]
        %v1243 = vld [vmem:[%s1233 + $0x24] sm:$0xf]
        %v1244 = vld [vmem:[%s1233 + $0x28] sm:$0xf]
        %v1245 = vld [vmem:[%s1233 + $0x2c] sm:$0xf]
        %v1246 = vld [vmem:[%s1233 + $0x30] sm:$0xf]
        %v1247 = vld [vmem:[%s1233 + $0x34] sm:$0xf]
        %v1248 = vld [vmem:[%s1233 + $0x38] sm:$0xf]
        %v1249 = vld [vmem:[%s1233 + $0x3c] sm:$0xf]
        %v1266 = vunpack.c.l.b16 %v1234
        %v1267 = vunpack.c.l.b16 %v1235
        %v1268 = vunpack.c.l.b16 %v1236
        %v1269 = vunpack.c.l.b16 %v1237
        %v1270 = vunpack.c.l.b16 %v1238
        %v1271 = vunpack.c.l.b16 %v1239
        %v1272 = vunpack.c.l.b16 %v1240
        %v1273 = vunpack.c.l.b16 %v1241
        %v1274 = vunpack.c.l.b16 %v1242
        %v1275 = vunpack.c.l.b16 %v1243
        %v1276 = vunpack.c.l.b16 %v1244
        %v1277 = vunpack.c.l.b16 %v1245
        %v1278 = vunpack.c.l.b16 %v1246
        %v1279 = vunpack.c.l.b16 %v1247
        %v1280 = vunpack.c.l.b16 %v1248
        %v1281 = vunpack.c.l.b16 %v1249
        %v1282 = vpack.c.b16 %v1267, %v1266
        %v1283 = vpack.c.b16 %v1269, %v1268
        %v1284 = vpack.c.b16 %v1271, %v1270
        %v1285 = vpack.c.b16 %v1273, %v1272
        %v1286 = vpack.c.b16 %v1275, %v1274
        %v1287 = vpack.c.b16 %v1277, %v1276
        %v1288 = vpack.c.b16 %v1279, %v1278
        %v1289 = vpack.c.b16 %v1281, %v1280
        %1298 = vmatpush.bf16.msra.mxu0 %v1289
        %1299 = vmatpush.bf16.msra.mxu0 %v1288
        %1300 = vmatpush.bf16.msra.mxu0 %v1287
        %1301 = vmatpush.bf16.msra.mxu0 %v1286
        %1302 = vmatpush.bf16.msra.mxu0 %v1285
        %1303 = vmatpush.bf16.msra.mxu0 %v1284
        %1304 = vmatpush.bf16.msra.mxu0 %v1283
        %1305 = vmatpush.bf16.msra.mxu0 %v1282
        %1306 = vmatmul.bf16.gmra.mxu0 %v1232
        %v1307 = vpop.f32.mrf.mxu0
        %v1308 = vadd.f32 0.0, %v1307
        %v1309 = vpop.f32.mrf.mxu0
        %v1310 = vadd.f32 0.0, %v1309
        %1311 = vdwg.mxu0
        %v1312 = vadd.f32 %v1206, %v1308
        %v1313 = vadd.f32 %v1207, %v1310
        %v1314 = vmax.f32 %v1312, 0.0
        %v1315 = vmax.f32 %v1313, 0.0
        %v1316 = vpack.c.bf16 %v1315, %v1314
        %vm1317 = vmand %vm867, %vm526
        %vm1318 = vmand %vm868, %vm527
        %v1319 = vsel %vm1317, 1.0, 0.0
        %v1320 = vsel %vm1318, 1.0, 0.0
        %v1321 = vpack.c.bf16 %v1320, %v1319
        %s1322 = scalar_lea.vmem %s452, 8 [#allocation3]
        %v1323 = vld [vmem:[%s1322] sm:$0xf]
        %v1324 = vld [vmem:[%s1322 + $0x4] sm:$0xf]
        %v1325 = vunpack.c.l.bf16 %v1323
        %v1326 = vunpack.c.l.bf16 %v1324
        %v1328 = vsel %vm542, %v1321, 0
        %1330 = vmatpush.bf16.msra.mxu0 0
        %1331 = vmatpush.bf16.msra.mxu0 0
        %1332 = vmatpush.bf16.msra.mxu0 0
        %1333 = vmatpush.bf16.msra.mxu0 0
        %1334 = vmatpush.bf16.msra.mxu0 0
        %1335 = vmatpush.bf16.msra.mxu0 0
        %1336 = vmatpush.bf16.msra.mxu0 0
        %1337 = vmatpush.bf16.msra.mxu0 %v1316
        %1338 = vmatmul.bf16.gmra.mxu0 %v1328
        %v1339 = vpop.f32.mrf.mxu0
        %v1340 = vadd.f32 %v1325, %v1339
        %v1341 = vpop.f32.mrf.mxu0
        %v1342 = vadd.f32 %v1326, %v1341
        %1343 = vdwg.mxu0
        %v1344 = vpack.c.bf16 %v1342, %v1340
        %s1345 = scalar_lea.vmem %s4, 64
        %v1346 = vld [vmem:[%s1345] sm:$0xf]
        %v1347 = vld [vmem:[%s1345 + $0x4] sm:$0xf]
        %v1348 = vld [vmem:[%s1345 + $0x8] sm:$0xf]
        %v1349 = vld [vmem:[%s1345 + $0xc] sm:$0xf]
        %v1350 = vld [vmem:[%s1345 + $0x10] sm:$0xf]
        %v1351 = vld [vmem:[%s1345 + $0x14] sm:$0xf]
        %v1352 = vld [vmem:[%s1345 + $0x18] sm:$0xf]
        %v1353 = vld [vmem:[%s1345 + $0x1c] sm:$0xf]
        %v1354 = vld [vmem:[%s1345 + $0x20] sm:$0xf]
        %v1355 = vld [vmem:[%s1345 + $0x24] sm:$0xf]
        %v1356 = vld [vmem:[%s1345 + $0x28] sm:$0xf]
        %v1357 = vld [vmem:[%s1345 + $0x2c] sm:$0xf]
        %v1358 = vld [vmem:[%s1345 + $0x30] sm:$0xf]
        %v1359 = vld [vmem:[%s1345 + $0x34] sm:$0xf]
        %v1360 = vld [vmem:[%s1345 + $0x38] sm:$0xf]
        %v1361 = vld [vmem:[%s1345 + $0x3c] sm:$0xf]
        %s1362 = scalar_lea.vmem %s5, 1
        %v1363 = vld [vmem:[%s1362] sm:$0x1]
        %v1365 = vperm.slane %v1363, 0
        %v1383 = vunpack.c.l.b16 %v1346
        %v1384 = vunpack.c.l.b16 %v1347
        %v1385 = vunpack.c.l.b16 %v1348
        %v1386 = vunpack.c.l.b16 %v1349
        %v1387 = vunpack.c.l.b16 %v1350
        %v1388 = vunpack.c.l.b16 %v1351
        %v1389 = vunpack.c.l.b16 %v1352
        %v1390 = vunpack.c.l.b16 %v1353
        %v1391 = vunpack.c.l.b16 %v1354
        %v1392 = vunpack.c.l.b16 %v1355
        %v1393 = vunpack.c.l.b16 %v1356
        %v1394 = vunpack.c.l.b16 %v1357
        %v1395 = vunpack.c.l.b16 %v1358
        %v1396 = vunpack.c.l.b16 %v1359
        %v1397 = vunpack.c.l.b16 %v1360
        %v1398 = vunpack.c.l.b16 %v1361
        %v1399 = vpack.c.b16 %v1384, %v1383
        %v1400 = vpack.c.b16 %v1386, %v1385
        %v1401 = vpack.c.b16 %v1388, %v1387
        %v1402 = vpack.c.b16 %v1390, %v1389
        %v1403 = vpack.c.b16 %v1392, %v1391
        %v1404 = vpack.c.b16 %v1394, %v1393
        %v1405 = vpack.c.b16 %v1396, %v1395
        %v1406 = vpack.c.b16 %v1398, %v1397
        %1415 = vmatpush.bf16.msra.mxu0 %v1406
        %1416 = vmatpush.bf16.msra.mxu0 %v1405
        %1417 = vmatpush.bf16.msra.mxu0 %v1404
        %1418 = vmatpush.bf16.msra.mxu0 %v1403
        %1419 = vmatpush.bf16.msra.mxu0 %v1402
        %1420 = vmatpush.bf16.msra.mxu0 %v1401
        %1421 = vmatpush.bf16.msra.mxu0 %v1400
        %1422 = vmatpush.bf16.msra.mxu0 %v1399
        %1423 = vmatmul.bf16.gmra.mxu0 %v1344
        %v1424 = vpop.f32.mrf.mxu0
        %v1425 = vadd.f32 %v1365, %v1424
        %v1426 = vpop.f32.mrf.mxu0
        %1427 = vdwg.mxu0
        %v1428 = vmax.f32 %v1425, 0.0
        %v1429 = vpack.c.bf16 %v1428, %v1428
        %v1430 = vunpack.c.l.bf16 %v1429
        %1431 = vst [vmem:[#allocation2 + $0x12] sm:$0xff] %v1430
        %s1432 = scalar_lea.vmem %s3, 2
        %v1433 = vld [vmem:[%s1432] sm:$0x1]
        %vm1434 = vcmp.lt.s32.totalorder %v508, 2
        %vm1435 = vcmp.lt.s32.totalorder %v509, 2
        %vm1436 = vmand %vm524, %vm1434
        %vm1437 = vmand %vm525, %vm1435
        %vm1438 = vcmp.lt.s32.totalorder %v511, 4
        %vm1439 = vmand %vm1436, %vm1438
        %vm1440 = vmand %vm1437, %vm1438
        %v1441 = vsel %vm1439, 1.0, 0.0
        %v1442 = vsel %vm1440, 1.0, 0.0
        %v1443 = vpack.c.bf16 %v1442, %v1441
        %v1445 = vsel %vm542, %v1443, 0
        %1447 = vmatpush.bf16.msra.mxu0 0
        %1448 = vmatpush.bf16.msra.mxu0 0
        %1449 = vmatpush.bf16.msra.mxu0 0
        %1450 = vmatpush.bf16.msra.mxu0 0
        %1451 = vmatpush.bf16.msra.mxu0 0
        %1452 = vmatpush.bf16.msra.mxu0 0
        %1453 = vmatpush.bf16.msra.mxu0 0
        %1454 = vmatpush.bf16.msra.mxu0 %v1316
        %1455 = vmatmul.bf16.gmra.mxu0 %v1445
        %v1456 = vpop.f32.mrf.mxu0
        %v1457 = vadd.f32 0.0, %v1456
        %v1458 = vpop.f32.mrf.mxu0
        %v1459 = vadd.f32 0.0, %v1458
        %1460 = vdwg.mxu0
        %v1461 = vpack.c.bf16 %v1459, %v1457
        %s1462 = scalar_lea.vmem %s2, 384
        %v1463 = vld [vmem:[%s1462] sm:$0xf]
        %v1464 = vld [vmem:[%s1462 + $0x4] sm:$0xf]
        %v1465 = vld [vmem:[%s1462 + $0x8] sm:$0xf]
        %v1466 = vld [vmem:[%s1462 + $0xc] sm:$0xf]
        %v1467 = vld [vmem:[%s1462 + $0x10] sm:$0xf]
        %v1468 = vld [vmem:[%s1462 + $0x14] sm:$0xf]
        %v1469 = vld [vmem:[%s1462 + $0x18] sm:$0xf]
        %v1470 = vld [vmem:[%s1462 + $0x1c] sm:$0xf]
        %v1471 = vld [vmem:[%s1462 + $0x20] sm:$0xf]
        %v1472 = vld [vmem:[%s1462 + $0x24] sm:$0xf]
        %v1473 = vld [vmem:[%s1462 + $0x28] sm:$0xf]
        %v1474 = vld [vmem:[%s1462 + $0x2c] sm:$0xf]
        %v1475 = vld [vmem:[%s1462 + $0x30] sm:$0xf]
        %v1476 = vld [vmem:[%s1462 + $0x34] sm:$0xf]
        %v1477 = vld [vmem:[%s1462 + $0x38] sm:$0xf]
        %v1478 = vld [vmem:[%s1462 + $0x3c] sm:$0xf]
        %v1495 = vunpack.c.l.b16 %v1463
        %v1496 = vunpack.c.l.b16 %v1464
        %v1497 = vunpack.c.l.b16 %v1465
        %v1498 = vunpack.c.l.b16 %v1466
        %v1499 = vunpack.c.l.b16 %v1467
        %v1500 = vunpack.c.l.b16 %v1468
        %v1501 = vunpack.c.l.b16 %v1469
        %v1502 = vunpack.c.l.b16 %v1470
        %v1503 = vunpack.c.l.b16 %v1471
        %v1504 = vunpack.c.l.b16 %v1472
        %v1505 = vunpack.c.l.b16 %v1473
        %v1506 = vunpack.c.l.b16 %v1474
        %v1507 = vunpack.c.l.b16 %v1475
        %v1508 = vunpack.c.l.b16 %v1476
        %v1509 = vunpack.c.l.b16 %v1477
        %v1510 = vunpack.c.l.b16 %v1478
        %v1511 = vpack.c.b16 %v1496, %v1495
        %v1512 = vpack.c.b16 %v1498, %v1497
        %v1513 = vpack.c.b16 %v1500, %v1499
        %v1514 = vpack.c.b16 %v1502, %v1501
        %v1515 = vpack.c.b16 %v1504, %v1503
        %v1516 = vpack.c.b16 %v1506, %v1505
        %v1517 = vpack.c.b16 %v1508, %v1507
        %v1518 = vpack.c.b16 %v1510, %v1509
        %1527 = vmatpush.bf16.msra.mxu0 %v1518
        %1528 = vmatpush.bf16.msra.mxu0 %v1517
        %1529 = vmatpush.bf16.msra.mxu0 %v1516
        %1530 = vmatpush.bf16.msra.mxu0 %v1515
        %1531 = vmatpush.bf16.msra.mxu0 %v1514
        %1532 = vmatpush.bf16.msra.mxu0 %v1513
        %1533 = vmatpush.bf16.msra.mxu0 %v1512
        %1534 = vmatpush.bf16.msra.mxu0 %v1511
        %1535 = vmatmul.bf16.gmra.mxu0 %v1461
        %v1536 = vpop.f32.mrf.mxu0
        %v1537 = vadd.f32 0.0, %v1536
        %v1538 = vpop.f32.mrf.mxu0
        %v1539 = vadd.f32 0.0, %v1538
        %1540 = vdwg.mxu0
        %v1542 = vperm.slane %v1433, 0
        %v1544 = vadd.f32 %v1542, %v1537
        %v1545 = vadd.f32 %v1542, %v1539
        %vm1546 = vmand %vm644, %vm1434
        %vm1547 = vmand %vm645, %vm1435
        %vm1548 = vmand %vm1546, %vm1438
        %vm1549 = vmand %vm1547, %vm1438
        %v1550 = vsel %vm1548, 1.0, 0.0
        %v1551 = vsel %vm1549, 1.0, 0.0
        %v1552 = vpack.c.bf16 %v1551, %v1550
        %v1554 = vsel %vm542, %v1552, 0
        %1556 = vmatpush.bf16.msra.mxu0 0
        %1557 = vmatpush.bf16.msra.mxu0 0
        %1558 = vmatpush.bf16.msra.mxu0 0
        %1559 = vmatpush.bf16.msra.mxu0 0
        %1560 = vmatpush.bf16.msra.mxu0 0
        %1561 = vmatpush.bf16.msra.mxu0 0
        %1562 = vmatpush.bf16.msra.mxu0 0
        %1563 = vmatpush.bf16.msra.mxu0 %v1316
        %1564 = vmatmul.bf16.gmra.mxu0 %v1554
        %v1565 = vpop.f32.mrf.mxu0
        %v1566 = vadd.f32 0.0, %v1565
        %v1567 = vpop.f32.mrf.mxu0
        %v1568 = vadd.f32 0.0, %v1567
        %1569 = vdwg.mxu0
        %v1570 = vpack.c.bf16 %v1568, %v1566
        %s1571 = scalar_lea.vmem %s2, 448
        %v1572 = vld [vmem:[%s1571] sm:$0xf]
        %v1573 = vld [vmem:[%s1571 + $0x4] sm:$0xf]
        %v1574 = vld [vmem:[%s1571 + $0x8] sm:$0xf]
        %v1575 = vld [vmem:[%s1571 + $0xc] sm:$0xf]
        %v1576 = vld [vmem:[%s1571 + $0x10] sm:$0xf]
        %v1577 = vld [vmem:[%s1571 + $0x14] sm:$0xf]
        %v1578 = vld [vmem:[%s1571 + $0x18] sm:$0xf]
        %v1579 = vld [vmem:[%s1571 + $0x1c] sm:$0xf]
        %v1580 = vld [vmem:[%s1571 + $0x20] sm:$0xf]
        %v1581 = vld [vmem:[%s1571 + $0x24] sm:$0xf]
        %v1582 = vld [vmem:[%s1571 + $0x28] sm:$0xf]
        %v1583 = vld [vmem:[%s1571 + $0x2c] sm:$0xf]
        %v1584 = vld [vmem:[%s1571 + $0x30] sm:$0xf]
        %v1585 = vld [vmem:[%s1571 + $0x34] sm:$0xf]
        %v1586 = vld [vmem:[%s1571 + $0x38] sm:$0xf]
        %v1587 = vld [vmem:[%s1571 + $0x3c] sm:$0xf]
        %v1604 = vunpack.c.l.b16 %v1572
        %v1605 = vunpack.c.l.b16 %v1573
        %v1606 = vunpack.c.l.b16 %v1574
        %v1607 = vunpack.c.l.b16 %v1575
        %v1608 = vunpack.c.l.b16 %v1576
        %v1609 = vunpack.c.l.b16 %v1577
        %v1610 = vunpack.c.l.b16 %v1578
        %v1611 = vunpack.c.l.b16 %v1579
        %v1612 = vunpack.c.l.b16 %v1580
        %v1613 = vunpack.c.l.b16 %v1581
        %v1614 = vunpack.c.l.b16 %v1582
        %v1615 = vunpack.c.l.b16 %v1583
        %v1616 = vunpack.c.l.b16 %v1584
        %v1617 = vunpack.c.l.b16 %v1585
        %v1618 = vunpack.c.l.b16 %v1586
        %v1619 = vunpack.c.l.b16 %v1587
        %v1620 = vpack.c.b16 %v1605, %v1604
        %v1621 = vpack.c.b16 %v1607, %v1606
        %v1622 = vpack.c.b16 %v1609, %v1608
        %v1623 = vpack.c.b16 %v1611, %v1610
        %v1624 = vpack.c.b16 %v1613, %v1612
        %v1625 = vpack.c.b16 %v1615, %v1614
        %v1626 = vpack.c.b16 %v1617, %v1616
        %v1627 = vpack.c.b16 %v1619, %v1618
        %1636 = vmatpush.bf16.msra.mxu0 %v1627
        %1637 = vmatpush.bf16.msra.mxu0 %v1626
        %1638 = vmatpush.bf16.msra.mxu0 %v1625
        %1639 = vmatpush.bf16.msra.mxu0 %v1624
        %1640 = vmatpush.bf16.msra.mxu0 %v1623
        %1641 = vmatpush.bf16.msra.mxu0 %v1622
        %1642 = vmatpush.bf16.msra.mxu0 %v1621
        %1643 = vmatpush.bf16.msra.mxu0 %v1620
        %1644 = vmatmul.bf16.gmra.mxu0 %v1570
        %v1645 = vpop.f32.mrf.mxu0
        %v1646 = vadd.f32 0.0, %v1645
        %v1647 = vpop.f32.mrf.mxu0
        %v1648 = vadd.f32 0.0, %v1647
        %1649 = vdwg.mxu0
        %v1650 = vadd.f32 %v1544, %v1646
        %v1651 = vadd.f32 %v1545, %v1648
        %vm1652 = vmand %vm754, %vm1434
        %vm1653 = vmand %vm755, %vm1435
        %vm1654 = vmand %vm1652, %vm1438
        %vm1655 = vmand %vm1653, %vm1438
        %v1656 = vsel %vm1654, 1.0, 0.0
        %v1657 = vsel %vm1655, 1.0, 0.0
        %v1658 = vpack.c.bf16 %v1657, %v1656
        %v1660 = vsel %vm542, %v1658, 0
        %1662 = vmatpush.bf16.msra.mxu0 0
        %1663 = vmatpush.bf16.msra.mxu0 0
        %1664 = vmatpush.bf16.msra.mxu0 0
        %1665 = vmatpush.bf16.msra.mxu0 0
        %1666 = vmatpush.bf16.msra.mxu0 0
        %1667 = vmatpush.bf16.msra.mxu0 0
        %1668 = vmatpush.bf16.msra.mxu0 0
        %1669 = vmatpush.bf16.msra.mxu0 %v1316
        %1670 = vmatmul.bf16.gmra.mxu0 %v1660
        %v1671 = vpop.f32.mrf.mxu0
        %v1672 = vadd.f32 0.0, %v1671
        %v1673 = vpop.f32.mrf.mxu0
        %v1674 = vadd.f32 0.0, %v1673
        %1675 = vdwg.mxu0
        %v1676 = vpack.c.bf16 %v1674, %v1672
        %s1677 = scalar_lea.vmem %s2, 512
        %v1678 = vld [vmem:[%s1677] sm:$0xf]
        %v1679 = vld [vmem:[%s1677 + $0x4] sm:$0xf]
        %v1680 = vld [vmem:[%s1677 + $0x8] sm:$0xf]
        %v1681 = vld [vmem:[%s1677 + $0xc] sm:$0xf]
        %v1682 = vld [vmem:[%s1677 + $0x10] sm:$0xf]
        %v1683 = vld [vmem:[%s1677 + $0x14] sm:$0xf]
        %v1684 = vld [vmem:[%s1677 + $0x18] sm:$0xf]
        %v1685 = vld [vmem:[%s1677 + $0x1c] sm:$0xf]
        %v1686 = vld [vmem:[%s1677 + $0x20] sm:$0xf]
        %v1687 = vld [vmem:[%s1677 + $0x24] sm:$0xf]
        %v1688 = vld [vmem:[%s1677 + $0x28] sm:$0xf]
        %v1689 = vld [vmem:[%s1677 + $0x2c] sm:$0xf]
        %v1690 = vld [vmem:[%s1677 + $0x30] sm:$0xf]
        %v1691 = vld [vmem:[%s1677 + $0x34] sm:$0xf]
        %v1692 = vld [vmem:[%s1677 + $0x38] sm:$0xf]
        %v1693 = vld [vmem:[%s1677 + $0x3c] sm:$0xf]
        %v1710 = vunpack.c.l.b16 %v1678
        %v1711 = vunpack.c.l.b16 %v1679
        %v1712 = vunpack.c.l.b16 %v1680
        %v1713 = vunpack.c.l.b16 %v1681
        %v1714 = vunpack.c.l.b16 %v1682
        %v1715 = vunpack.c.l.b16 %v1683
        %v1716 = vunpack.c.l.b16 %v1684
        %v1717 = vunpack.c.l.b16 %v1685
        %v1718 = vunpack.c.l.b16 %v1686
        %v1719 = vunpack.c.l.b16 %v1687
        %v1720 = vunpack.c.l.b16 %v1688
        %v1721 = vunpack.c.l.b16 %v1689
        %v1722 = vunpack.c.l.b16 %v1690
        %v1723 = vunpack.c.l.b16 %v1691
        %v1724 = vunpack.c.l.b16 %v1692
        %v1725 = vunpack.c.l.b16 %v1693
        %v1726 = vpack.c.b16 %v1711, %v1710
        %v1727 = vpack.c.b16 %v1713, %v1712
        %v1728 = vpack.c.b16 %v1715, %v1714
        %v1729 = vpack.c.b16 %v1717, %v1716
        %v1730 = vpack.c.b16 %v1719, %v1718
        %v1731 = vpack.c.b16 %v1721, %v1720
        %v1732 = vpack.c.b16 %v1723, %v1722
        %v1733 = vpack.c.b16 %v1725, %v1724
        %1742 = vmatpush.bf16.msra.mxu0 %v1733
        %1743 = vmatpush.bf16.msra.mxu0 %v1732
        %1744 = vmatpush.bf16.msra.mxu0 %v1731
        %1745 = vmatpush.bf16.msra.mxu0 %v1730
        %1746 = vmatpush.bf16.msra.mxu0 %v1729
        %1747 = vmatpush.bf16.msra.mxu0 %v1728
        %1748 = vmatpush.bf16.msra.mxu0 %v1727
        %1749 = vmatpush.bf16.msra.mxu0 %v1726
        %1750 = vmatmul.bf16.gmra.mxu0 %v1676
        %v1751 = vpop.f32.mrf.mxu0
        %v1752 = vadd.f32 0.0, %v1751
        %v1753 = vpop.f32.mrf.mxu0
        %v1754 = vadd.f32 0.0, %v1753
        %1755 = vdwg.mxu0
        %v1756 = vadd.f32 %v1650, %v1752
        %v1757 = vadd.f32 %v1651, %v1754
        %v1758 = vmax.f32 %v1756, 0.0
        %v1759 = vmax.f32 %v1757, 0.0
        %v1760 = vpack.c.bf16 %v1759, %v1758
        %vm1761 = vmand %vm867, %vm990
        %vm1762 = vmand %vm868, %vm991
        %v1763 = vsel %vm1761, 1.0, 0.0
        %v1764 = vsel %vm1762, 1.0, 0.0
        %v1765 = vpack.c.bf16 %v1764, %v1763
        %s1766 = scalar_lea.vmem %s452, 16 [#allocation3]
        %v1767 = vld [vmem:[%s1766] sm:$0xf]
        %v1768 = vld [vmem:[%s1766 + $0x4] sm:$0xf]
        %v1769 = vunpack.c.l.bf16 %v1767
        %v1770 = vunpack.c.l.bf16 %v1768
        %v1772 = vsel %vm542, %v1765, 0
        %1774 = vmatpush.bf16.msra.mxu0 0
        %1775 = vmatpush.bf16.msra.mxu0 0
        %1776 = vmatpush.bf16.msra.mxu0 0
        %1777 = vmatpush.bf16.msra.mxu0 0
        %1778 = vmatpush.bf16.msra.mxu0 0
        %1779 = vmatpush.bf16.msra.mxu0 0
        %1780 = vmatpush.bf16.msra.mxu0 0
        %1781 = vmatpush.bf16.msra.mxu0 %v1760
        %1782 = vmatmul.bf16.gmra.mxu0 %v1772
        %v1783 = vpop.f32.mrf.mxu0
        %v1784 = vadd.f32 %v1769, %v1783
        %v1785 = vpop.f32.mrf.mxu0
        %v1786 = vadd.f32 %v1770, %v1785
        %1787 = vdwg.mxu0
        %v1788 = vpack.c.bf16 %v1786, %v1784
        %s1789 = scalar_lea.vmem %s4, 128
        %v1790 = vld [vmem:[%s1789] sm:$0xf]
        %v1791 = vld [vmem:[%s1789 + $0x4] sm:$0xf]
        %v1792 = vld [vmem:[%s1789 + $0x8] sm:$0xf]
        %v1793 = vld [vmem:[%s1789 + $0xc] sm:$0xf]
        %v1794 = vld [vmem:[%s1789 + $0x10] sm:$0xf]
        %v1795 = vld [vmem:[%s1789 + $0x14] sm:$0xf]
        %v1796 = vld [vmem:[%s1789 + $0x18] sm:$0xf]
        %v1797 = vld [vmem:[%s1789 + $0x1c] sm:$0xf]
        %v1798 = vld [vmem:[%s1789 + $0x20] sm:$0xf]
        %v1799 = vld [vmem:[%s1789 + $0x24] sm:$0xf]
        %v1800 = vld [vmem:[%s1789 + $0x28] sm:$0xf]
        %v1801 = vld [vmem:[%s1789 + $0x2c] sm:$0xf]
        %v1802 = vld [vmem:[%s1789 + $0x30] sm:$0xf]
        %v1803 = vld [vmem:[%s1789 + $0x34] sm:$0xf]
        %v1804 = vld [vmem:[%s1789 + $0x38] sm:$0xf]
        %v1805 = vld [vmem:[%s1789 + $0x3c] sm:$0xf]
        %s1806 = scalar_lea.vmem %s5, 2
        %v1807 = vld [vmem:[%s1806] sm:$0x1]
        %v1809 = vperm.slane %v1807, 0
        %v1827 = vunpack.c.l.b16 %v1790
        %v1828 = vunpack.c.l.b16 %v1791
        %v1829 = vunpack.c.l.b16 %v1792
        %v1830 = vunpack.c.l.b16 %v1793
        %v1831 = vunpack.c.l.b16 %v1794
        %v1832 = vunpack.c.l.b16 %v1795
        %v1833 = vunpack.c.l.b16 %v1796
        %v1834 = vunpack.c.l.b16 %v1797
        %v1835 = vunpack.c.l.b16 %v1798
        %v1836 = vunpack.c.l.b16 %v1799
        %v1837 = vunpack.c.l.b16 %v1800
        %v1838 = vunpack.c.l.b16 %v1801
        %v1839 = vunpack.c.l.b16 %v1802
        %v1840 = vunpack.c.l.b16 %v1803
        %v1841 = vunpack.c.l.b16 %v1804
        %v1842 = vunpack.c.l.b16 %v1805
        %v1843 = vpack.c.b16 %v1828, %v1827
        %v1844 = vpack.c.b16 %v1830, %v1829
        %v1845 = vpack.c.b16 %v1832, %v1831
        %v1846 = vpack.c.b16 %v1834, %v1833
        %v1847 = vpack.c.b16 %v1836, %v1835
        %v1848 = vpack.c.b16 %v1838, %v1837
        %v1849 = vpack.c.b16 %v1840, %v1839
        %v1850 = vpack.c.b16 %v1842, %v1841
        %1859 = vmatpush.bf16.msra.mxu0 %v1850
        %1860 = vmatpush.bf16.msra.mxu0 %v1849
        %1861 = vmatpush.bf16.msra.mxu0 %v1848
        %1862 = vmatpush.bf16.msra.mxu0 %v1847
        %1863 = vmatpush.bf16.msra.mxu0 %v1846
        %1864 = vmatpush.bf16.msra.mxu0 %v1845
        %1865 = vmatpush.bf16.msra.mxu0 %v1844
        %1866 = vmatpush.bf16.msra.mxu0 %v1843
        %1867 = vmatmul.bf16.gmra.mxu0 %v1788
        %v1868 = vpop.f32.mrf.mxu0
        %v1869 = vadd.f32 %v1809, %v1868
        %v1870 = vpop.f32.mrf.mxu0
        %1871 = vdwg.mxu0
        %v1872 = vmax.f32 %v1869, 0.0
        %v1873 = vpack.c.bf16 %v1872, %v1872
        %v1874 = vunpack.c.l.bf16 %v1873
        %1875 = vst [vmem:[#allocation2 + $0x1b] sm:$0xf] %v1874
        %s1876 = scalar_lea.vmem %s3, 3
        %v1877 = vld [vmem:[%s1876] sm:$0x1]
        %vm1878 = vcmp.lt.s32.totalorder %v508, 1
        %vm1879 = vcmp.lt.s32.totalorder %v509, 1
        %vm1880 = vmand %vm524, %vm1878
        %vm1881 = vmand %vm525, %vm1879
        %vm1882 = vcmp.lt.s32.totalorder %v511, 2
        %vm1883 = vmand %vm1880, %vm1882
        %vm1884 = vmand %vm1881, %vm1882
        %v1885 = vsel %vm1883, 1.0, 0.0
        %v1886 = vsel %vm1884, 1.0, 0.0
        %v1887 = vpack.c.bf16 %v1886, %v1885
        %v1889 = vsel %vm542, %v1887, 0
        %1891 = vmatpush.bf16.msra.mxu0 0
        %1892 = vmatpush.bf16.msra.mxu0 0
        %1893 = vmatpush.bf16.msra.mxu0 0
        %1894 = vmatpush.bf16.msra.mxu0 0
        %1895 = vmatpush.bf16.msra.mxu0 0
        %1896 = vmatpush.bf16.msra.mxu0 0
        %1897 = vmatpush.bf16.msra.mxu0 0
        %1898 = vmatpush.bf16.msra.mxu0 %v1760
        %1899 = vmatmul.bf16.gmra.mxu0 %v1889
        %v1900 = vpop.f32.mrf.mxu0
        %v1901 = vadd.f32 0.0, %v1900
        %v1902 = vpop.f32.mrf.mxu0
        %v1903 = vadd.f32 0.0, %v1902
        %1904 = vdwg.mxu0
        %v1905 = vpack.c.bf16 %v1903, %v1901
        %s1906 = scalar_lea.vmem %s2, 576
        %v1907 = vld [vmem:[%s1906] sm:$0xf]
        %v1908 = vld [vmem:[%s1906 + $0x4] sm:$0xf]
        %v1909 = vld [vmem:[%s1906 + $0x8] sm:$0xf]
        %v1910 = vld [vmem:[%s1906 + $0xc] sm:$0xf]
        %v1911 = vld [vmem:[%s1906 + $0x10] sm:$0xf]
        %v1912 = vld [vmem:[%s1906 + $0x14] sm:$0xf]
        %v1913 = vld [vmem:[%s1906 + $0x18] sm:$0xf]
        %v1914 = vld [vmem:[%s1906 + $0x1c] sm:$0xf]
        %v1915 = vld [vmem:[%s1906 + $0x20] sm:$0xf]
        %v1916 = vld [vmem:[%s1906 + $0x24] sm:$0xf]
        %v1917 = vld [vmem:[%s1906 + $0x28] sm:$0xf]
        %v1918 = vld [vmem:[%s1906 + $0x2c] sm:$0xf]
        %v1919 = vld [vmem:[%s1906 + $0x30] sm:$0xf]
        %v1920 = vld [vmem:[%s1906 + $0x34] sm:$0xf]
        %v1921 = vld [vmem:[%s1906 + $0x38] sm:$0xf]
        %v1922 = vld [vmem:[%s1906 + $0x3c] sm:$0xf]
        %v1939 = vunpack.c.l.b16 %v1907
        %v1940 = vunpack.c.l.b16 %v1908
        %v1941 = vunpack.c.l.b16 %v1909
        %v1942 = vunpack.c.l.b16 %v1910
        %v1943 = vunpack.c.l.b16 %v1911
        %v1944 = vunpack.c.l.b16 %v1912
        %v1945 = vunpack.c.l.b16 %v1913
        %v1946 = vunpack.c.l.b16 %v1914
        %v1947 = vunpack.c.l.b16 %v1915
        %v1948 = vunpack.c.l.b16 %v1916
        %v1949 = vunpack.c.l.b16 %v1917
        %v1950 = vunpack.c.l.b16 %v1918
        %v1951 = vunpack.c.l.b16 %v1919
        %v1952 = vunpack.c.l.b16 %v1920
        %v1953 = vunpack.c.l.b16 %v1921
        %v1954 = vunpack.c.l.b16 %v1922
        %v1955 = vpack.c.b16 %v1940, %v1939
        %v1956 = vpack.c.b16 %v1942, %v1941
        %v1957 = vpack.c.b16 %v1944, %v1943
        %v1958 = vpack.c.b16 %v1946, %v1945
        %v1959 = vpack.c.b16 %v1948, %v1947
        %v1960 = vpack.c.b16 %v1950, %v1949
        %v1961 = vpack.c.b16 %v1952, %v1951
        %v1962 = vpack.c.b16 %v1954, %v1953
        %1971 = vmatpush.bf16.msra.mxu0 %v1962
        %1972 = vmatpush.bf16.msra.mxu0 %v1961
        %1973 = vmatpush.bf16.msra.mxu0 %v1960
        %1974 = vmatpush.bf16.msra.mxu0 %v1959
        %1975 = vmatpush.bf16.msra.mxu0 %v1958
        %1976 = vmatpush.bf16.msra.mxu0 %v1957
        %1977 = vmatpush.bf16.msra.mxu0 %v1956
        %1978 = vmatpush.bf16.msra.mxu0 %v1955
        %1979 = vmatmul.bf16.gmra.mxu0 %v1905
        %v1980 = vpop.f32.mrf.mxu0
        %v1981 = vadd.f32 0.0, %v1980
        %v1982 = vpop.f32.mrf.mxu0
        %v1983 = vadd.f32 0.0, %v1982
        %1984 = vdwg.mxu0
        %v1986 = vperm.slane %v1877, 0
        %v1988 = vadd.f32 %v1986, %v1981
        %v1989 = vadd.f32 %v1986, %v1983
        %vm1990 = vmand %vm644, %vm1878
        %vm1991 = vmand %vm645, %vm1879
        %vm1992 = vmand %vm1990, %vm1882
        %vm1993 = vmand %vm1991, %vm1882
        %v1994 = vsel %vm1992, 1.0, 0.0
        %v1995 = vsel %vm1993, 1.0, 0.0
        %v1996 = vpack.c.bf16 %v1995, %v1994
        %v1998 = vsel %vm542, %v1996, 0
        %2000 = vmatpush.bf16.msra.mxu0 0
        %2001 = vmatpush.bf16.msra.mxu0 0
        %2002 = vmatpush.bf16.msra.mxu0 0
        %2003 = vmatpush.bf16.msra.mxu0 0
        %2004 = vmatpush.bf16.msra.mxu0 0
        %2005 = vmatpush.bf16.msra.mxu0 0
        %2006 = vmatpush.bf16.msra.mxu0 0
        %2007 = vmatpush.bf16.msra.mxu0 %v1760
        %2008 = vmatmul.bf16.gmra.mxu0 %v1998
        %v2009 = vpop.f32.mrf.mxu0
        %v2010 = vadd.f32 0.0, %v2009
        %v2011 = vpop.f32.mrf.mxu0
        %v2012 = vadd.f32 0.0, %v2011
        %2013 = vdwg.mxu0
        %v2014 = vpack.c.bf16 %v2012, %v2010
        %s2015 = scalar_lea.vmem %s2, 640
        %v2016 = vld [vmem:[%s2015] sm:$0xf]
        %v2017 = vld [vmem:[%s2015 + $0x4] sm:$0xf]
        %v2018 = vld [vmem:[%s2015 + $0x8] sm:$0xf]
        %v2019 = vld [vmem:[%s2015 + $0xc] sm:$0xf]
        %v2020 = vld [vmem:[%s2015 + $0x10] sm:$0xf]
        %v2021 = vld [vmem:[%s2015 + $0x14] sm:$0xf]
        %v2022 = vld [vmem:[%s2015 + $0x18] sm:$0xf]
        %v2023 = vld [vmem:[%s2015 + $0x1c] sm:$0xf]
        %v2024 = vld [vmem:[%s2015 + $0x20] sm:$0xf]
        %v2025 = vld [vmem:[%s2015 + $0x24] sm:$0xf]
        %v2026 = vld [vmem:[%s2015 + $0x28] sm:$0xf]
        %v2027 = vld [vmem:[%s2015 + $0x2c] sm:$0xf]
        %v2028 = vld [vmem:[%s2015 + $0x30] sm:$0xf]
        %v2029 = vld [vmem:[%s2015 + $0x34] sm:$0xf]
        %v2030 = vld [vmem:[%s2015 + $0x38] sm:$0xf]
        %v2031 = vld [vmem:[%s2015 + $0x3c] sm:$0xf]
        %v2048 = vunpack.c.l.b16 %v2016
        %v2049 = vunpack.c.l.b16 %v2017
        %v2050 = vunpack.c.l.b16 %v2018
        %v2051 = vunpack.c.l.b16 %v2019
        %v2052 = vunpack.c.l.b16 %v2020
        %v2053 = vunpack.c.l.b16 %v2021
        %v2054 = vunpack.c.l.b16 %v2022
        %v2055 = vunpack.c.l.b16 %v2023
        %v2056 = vunpack.c.l.b16 %v2024
        %v2057 = vunpack.c.l.b16 %v2025
        %v2058 = vunpack.c.l.b16 %v2026
        %v2059 = vunpack.c.l.b16 %v2027
        %v2060 = vunpack.c.l.b16 %v2028
        %v2061 = vunpack.c.l.b16 %v2029
        %v2062 = vunpack.c.l.b16 %v2030
        %v2063 = vunpack.c.l.b16 %v2031
        %v2064 = vpack.c.b16 %v2049, %v2048
        %v2065 = vpack.c.b16 %v2051, %v2050
        %v2066 = vpack.c.b16 %v2053, %v2052
        %v2067 = vpack.c.b16 %v2055, %v2054
        %v2068 = vpack.c.b16 %v2057, %v2056
        %v2069 = vpack.c.b16 %v2059, %v2058
        %v2070 = vpack.c.b16 %v2061, %v2060
        %v2071 = vpack.c.b16 %v2063, %v2062
        %2080 = vmatpush.bf16.msra.mxu0 %v2071
        %2081 = vmatpush.bf16.msra.mxu0 %v2070
        %2082 = vmatpush.bf16.msra.mxu0 %v2069
        %2083 = vmatpush.bf16.msra.mxu0 %v2068
        %2084 = vmatpush.bf16.msra.mxu0 %v2067
        %2085 = vmatpush.bf16.msra.mxu0 %v2066
        %2086 = vmatpush.bf16.msra.mxu0 %v2065
        %2087 = vmatpush.bf16.msra.mxu0 %v2064
        %2088 = vmatmul.bf16.gmra.mxu0 %v2014
        %v2089 = vpop.f32.mrf.mxu0
        %v2090 = vadd.f32 0.0, %v2089
        %v2091 = vpop.f32.mrf.mxu0
        %v2092 = vadd.f32 0.0, %v2091
        %2093 = vdwg.mxu0
        %v2094 = vadd.f32 %v1988, %v2090
        %v2095 = vadd.f32 %v1989, %v2092
        %vm2096 = vmand %vm754, %vm1878
        %vm2097 = vmand %vm755, %vm1879
        %vm2098 = vmand %vm2096, %vm1882
        %vm2099 = vmand %vm2097, %vm1882
        %v2100 = vsel %vm2098, 1.0, 0.0
        %v2101 = vsel %vm2099, 1.0, 0.0
        %v2102 = vpack.c.bf16 %v2101, %v2100
        %v2104 = vsel %vm542, %v2102, 0
        %2106 = vmatpush.bf16.msra.mxu0 0
        %2107 = vmatpush.bf16.msra.mxu0 0
        %2108 = vmatpush.bf16.msra.mxu0 0
        %2109 = vmatpush.bf16.msra.mxu0 0
        %2110 = vmatpush.bf16.msra.mxu0 0
        %2111 = vmatpush.bf16.msra.mxu0 0
        %2112 = vmatpush.bf16.msra.mxu0 0
        %2113 = vmatpush.bf16.msra.mxu0 %v1760
        %2114 = vmatmul.bf16.gmra.mxu0 %v2104
        %v2115 = vpop.f32.mrf.mxu0
        %v2116 = vadd.f32 0.0, %v2115
        %v2117 = vpop.f32.mrf.mxu0
        %v2118 = vadd.f32 0.0, %v2117
        %2119 = vdwg.mxu0
        %v2120 = vpack.c.bf16 %v2118, %v2116
        %s2121 = scalar_lea.vmem %s2, 704
        %v2122 = vld [vmem:[%s2121] sm:$0xf]
        %v2123 = vld [vmem:[%s2121 + $0x4] sm:$0xf]
        %v2124 = vld [vmem:[%s2121 + $0x8] sm:$0xf]
        %v2125 = vld [vmem:[%s2121 + $0xc] sm:$0xf]
        %v2126 = vld [vmem:[%s2121 + $0x10] sm:$0xf]
        %v2127 = vld [vmem:[%s2121 + $0x14] sm:$0xf]
        %v2128 = vld [vmem:[%s2121 + $0x18] sm:$0xf]
        %v2129 = vld [vmem:[%s2121 + $0x1c] sm:$0xf]
        %v2130 = vld [vmem:[%s2121 + $0x20] sm:$0xf]
        %v2131 = vld [vmem:[%s2121 + $0x24] sm:$0xf]
        %v2132 = vld [vmem:[%s2121 + $0x28] sm:$0xf]
        %v2133 = vld [vmem:[%s2121 + $0x2c] sm:$0xf]
        %v2134 = vld [vmem:[%s2121 + $0x30] sm:$0xf]
        %v2135 = vld [vmem:[%s2121 + $0x34] sm:$0xf]
        %v2136 = vld [vmem:[%s2121 + $0x38] sm:$0xf]
        %v2137 = vld [vmem:[%s2121 + $0x3c] sm:$0xf]
        %v2154 = vunpack.c.l.b16 %v2122
        %v2155 = vunpack.c.l.b16 %v2123
        %v2156 = vunpack.c.l.b16 %v2124
        %v2157 = vunpack.c.l.b16 %v2125
        %v2158 = vunpack.c.l.b16 %v2126
        %v2159 = vunpack.c.l.b16 %v2127
        %v2160 = vunpack.c.l.b16 %v2128
        %v2161 = vunpack.c.l.b16 %v2129
        %v2162 = vunpack.c.l.b16 %v2130
        %v2163 = vunpack.c.l.b16 %v2131
        %v2164 = vunpack.c.l.b16 %v2132
        %v2165 = vunpack.c.l.b16 %v2133
        %v2166 = vunpack.c.l.b16 %v2134
        %v2167 = vunpack.c.l.b16 %v2135
        %v2168 = vunpack.c.l.b16 %v2136
        %v2169 = vunpack.c.l.b16 %v2137
        %v2170 = vpack.c.b16 %v2155, %v2154
        %v2171 = vpack.c.b16 %v2157, %v2156
        %v2172 = vpack.c.b16 %v2159, %v2158
        %v2173 = vpack.c.b16 %v2161, %v2160
        %v2174 = vpack.c.b16 %v2163, %v2162
        %v2175 = vpack.c.b16 %v2165, %v2164
        %v2176 = vpack.c.b16 %v2167, %v2166
        %v2177 = vpack.c.b16 %v2169, %v2168
        %2186 = vmatpush.bf16.msra.mxu0 %v2177
        %2187 = vmatpush.bf16.msra.mxu0 %v2176
        %2188 = vmatpush.bf16.msra.mxu0 %v2175
        %2189 = vmatpush.bf16.msra.mxu0 %v2174
        %2190 = vmatpush.bf16.msra.mxu0 %v2173
        %2191 = vmatpush.bf16.msra.mxu0 %v2172
        %2192 = vmatpush.bf16.msra.mxu0 %v2171
        %2193 = vmatpush.bf16.msra.mxu0 %v2170
        %2194 = vmatmul.bf16.gmra.mxu0 %v2120
        %v2195 = vpop.f32.mrf.mxu0
        %v2196 = vadd.f32 0.0, %v2195
        %v2197 = vpop.f32.mrf.mxu0
        %v2198 = vadd.f32 0.0, %v2197
        %2199 = vdwg.mxu0
        %v2200 = vadd.f32 %v2094, %v2196
        %v2201 = vadd.f32 %v2095, %v2198
        %v2202 = vmax.f32 %v2200, 0.0
        %v2203 = vmax.f32 %v2201, 0.0
        %v2204 = vpack.c.bf16 %v2203, %v2202
        %vm2205 = vmand %vm867, %vm1434
        %vm2206 = vmand %vm868, %vm1435
        %v2207 = vsel %vm2205, 1.0, 0.0
        %v2208 = vsel %vm2206, 1.0, 0.0
        %v2209 = vpack.c.bf16 %v2208, %v2207
        %s2210 = scalar_lea.vmem %s452, 24 [#allocation3]
        %v2211 = vld [vmem:[%s2210] sm:$0xf]
        %v2212 = vld [vmem:[%s2210 + $0x4] sm:$0xf]
        %v2213 = vunpack.c.l.bf16 %v2211
        %v2214 = vunpack.c.l.bf16 %v2212
        %v2216 = vsel %vm542, %v2209, 0
        %2218 = vmatpush.bf16.msra.mxu0 0
        %2219 = vmatpush.bf16.msra.mxu0 0
        %2220 = vmatpush.bf16.msra.mxu0 0
        %2221 = vmatpush.bf16.msra.mxu0 0
        %2222 = vmatpush.bf16.msra.mxu0 0
        %2223 = vmatpush.bf16.msra.mxu0 0
        %2224 = vmatpush.bf16.msra.mxu0 0
        %2225 = vmatpush.bf16.msra.mxu0 %v2204
        %2226 = vmatmul.bf16.gmra.mxu0 %v2216
        %v2227 = vpop.f32.mrf.mxu0
        %v2228 = vadd.f32 %v2213, %v2227
        %v2229 = vpop.f32.mrf.mxu0
        %v2230 = vadd.f32 %v2214, %v2229
        %2231 = vdwg.mxu0
        %v2232 = vpack.c.bf16 %v2230, %v2228
        %s2233 = scalar_lea.vmem %s4, 192
        %v2234 = vld [vmem:[%s2233] sm:$0xf]
        %v2235 = vld [vmem:[%s2233 + $0x4] sm:$0xf]
        %v2236 = vld [vmem:[%s2233 + $0x8] sm:$0xf]
        %v2237 = vld [vmem:[%s2233 + $0xc] sm:$0xf]
        %v2238 = vld [vmem:[%s2233 + $0x10] sm:$0xf]
        %v2239 = vld [vmem:[%s2233 + $0x14] sm:$0xf]
        %v2240 = vld [vmem:[%s2233 + $0x18] sm:$0xf]
        %v2241 = vld [vmem:[%s2233 + $0x1c] sm:$0xf]
        %v2242 = vld [vmem:[%s2233 + $0x20] sm:$0xf]
        %v2243 = vld [vmem:[%s2233 + $0x24] sm:$0xf]
        %v2244 = vld [vmem:[%s2233 + $0x28] sm:$0xf]
        %v2245 = vld [vmem:[%s2233 + $0x2c] sm:$0xf]
        %v2246 = vld [vmem:[%s2233 + $0x30] sm:$0xf]
        %v2247 = vld [vmem:[%s2233 + $0x34] sm:$0xf]
        %v2248 = vld [vmem:[%s2233 + $0x38] sm:$0xf]
        %v2249 = vld [vmem:[%s2233 + $0x3c] sm:$0xf]
        %s2250 = scalar_lea.vmem %s5, 3
        %v2251 = vld [vmem:[%s2250] sm:$0x1]
        %v2253 = vperm.slane %v2251, 0
        %v2271 = vunpack.c.l.b16 %v2234
        %v2272 = vunpack.c.l.b16 %v2235
        %v2273 = vunpack.c.l.b16 %v2236
        %v2274 = vunpack.c.l.b16 %v2237
        %v2275 = vunpack.c.l.b16 %v2238
        %v2276 = vunpack.c.l.b16 %v2239
        %v2277 = vunpack.c.l.b16 %v2240
        %v2278 = vunpack.c.l.b16 %v2241
        %v2279 = vunpack.c.l.b16 %v2242
        %v2280 = vunpack.c.l.b16 %v2243
        %v2281 = vunpack.c.l.b16 %v2244
        %v2282 = vunpack.c.l.b16 %v2245
        %v2283 = vunpack.c.l.b16 %v2246
        %v2284 = vunpack.c.l.b16 %v2247
        %v2285 = vunpack.c.l.b16 %v2248
        %v2286 = vunpack.c.l.b16 %v2249
        %v2287 = vpack.c.b16 %v2272, %v2271
        %v2288 = vpack.c.b16 %v2274, %v2273
        %v2289 = vpack.c.b16 %v2276, %v2275
        %v2290 = vpack.c.b16 %v2278, %v2277
        %v2291 = vpack.c.b16 %v2280, %v2279
        %v2292 = vpack.c.b16 %v2282, %v2281
        %v2293 = vpack.c.b16 %v2284, %v2283
        %v2294 = vpack.c.b16 %v2286, %v2285
        %2303 = vmatpush.bf16.msra.mxu0 %v2294
        %2304 = vmatpush.bf16.msra.mxu0 %v2293
        %2305 = vmatpush.bf16.msra.mxu0 %v2292
        %2306 = vmatpush.bf16.msra.mxu0 %v2291
        %2307 = vmatpush.bf16.msra.mxu0 %v2290
        %2308 = vmatpush.bf16.msra.mxu0 %v2289
        %2309 = vmatpush.bf16.msra.mxu0 %v2288
        %2310 = vmatpush.bf16.msra.mxu0 %v2287
        %2311 = vmatmul.bf16.gmra.mxu0 %v2232
        %v2312 = vpop.f32.mrf.mxu0
        %v2313 = vadd.f32 %v2253, %v2312
        %v2314 = vpop.f32.mrf.mxu0
        %2315 = vdwg.mxu0
        %v2316 = vmax.f32 %v2313, 0.0
        %v2317 = vpack.c.bf16 %v2316, %v2316
        %v2318 = vunpack.c.l.bf16 %v2317
        %2319 = vst [vmem:[#allocation2 + $0x20] sm:$0x3] %v2318
        %v2320 = vld [vmem:[#allocation2] sm:$0xff]
        %v2321 = vld [vmem:[#allocation2 + $0x8] sm:$0xff]
        %v2322 = vld [vmem:[#allocation2 + $0x10] sm:$0xff]
        %v2323 = vld [vmem:[#allocation2 + $0x18] sm:$0xff]
        %v2324 = vld [vmem:[#allocation2 + $0x20] sm:$0xff]
        %v2325 = vpack.c.bf16 %v2321, %v2320
        %v2326 = vpack.c.bf16 %v2323, %v2322
        %v2327 = vpack.c.bf16 %v2324, %v2324
        %v2328 = vrot.slane %v2320, 7
        %v2329 = vrot.slane %v2321, 7
        %v2330 = vrot.slane %v2322, 7
        %v2331 = vrot.slane %v2323, 7
        %v2332 = vrot.slane %v2324, 7
        %v2333 = vsel %vm1878, %v2331, %v2332
        %v2334 = vsel %vm1878, %v2330, %v2331
        %v2335 = vsel %vm1878, %v2329, %v2330
        %v2336 = vsel %vm1878, %v2328, %v2329
        %v2337 = vsel %vm1878, %v2332, %v2328
        %v2338 = vpack.c.bf16 %v2336, %v2337
        %v2339 = vpack.c.bf16 %v2334, %v2335
        %v2340 = vpack.c.bf16 %v2333, %v2333
        %v2341 = vrot.slane %v2320, 1
        %v2342 = vrot.slane %v2321, 1
        %v2343 = vrot.slane %v2322, 1
        %v2344 = vrot.slane %v2323, 1
        %v2345 = vrot.slane %v2324, 1
        %vm2346 = vcmp.lt.s32.totalorder %v508, 7
        %v2347 = vsel %vm2346, %v2344, %v2345
        %v2348 = vsel %vm2346, %v2343, %v2344
        %v2349 = vsel %vm2346, %v2342, %v2343
        %v2350 = vsel %vm2346, %v2341, %v2342
        %v2351 = vsel %vm2346, %v2345, %v2341
        %v2352 = vpack.c.bf16 %v2349, %v2350
        %v2353 = vpack.c.bf16 %v2347, %v2348
        %v2354 = vpack.c.bf16 %v2351, %v2351
        %v2355 = vld [vmem:[%s6] sm:$0xf]
        %v2356 = vld [vmem:[%s6 + $0x4] sm:$0xf]
        %v2357 = vld [vmem:[%s6 + $0x8] sm:$0xf]
        %v2358 = vld [vmem:[%s6 + $0xc] sm:$0xf]
        %v2359 = vld [vmem:[%s6 + $0x10] sm:$0xf]
        %v2360 = vld [vmem:[%s6 + $0x14] sm:$0xf]
        %v2361 = vld [vmem:[%s6 + $0x18] sm:$0xf]
        %v2362 = vld [vmem:[%s6 + $0x1c] sm:$0xf]
        %v2363 = vld [vmem:[%s6 + $0x20] sm:$0xf]
        %v2364 = vld [vmem:[%s6 + $0x24] sm:$0xf]
        %v2365 = vld [vmem:[%s6 + $0x28] sm:$0xf]
        %v2366 = vld [vmem:[%s6 + $0x2c] sm:$0xf]
        %v2367 = vld [vmem:[%s6 + $0x30] sm:$0xf]
        %v2368 = vld [vmem:[%s6 + $0x34] sm:$0xf]
        %v2369 = vld [vmem:[%s6 + $0x38] sm:$0xf]
        %v2370 = vld [vmem:[%s6 + $0x3c] sm:$0xf]
        %s2371 = scalar_lea.vmem %s6, 64
        %v2372 = vld [vmem:[%s2371] sm:$0xf]
        %v2373 = vld [vmem:[%s2371 + $0x4] sm:$0xf]
        %v2374 = vld [vmem:[%s2371 + $0x8] sm:$0xf]
        %v2375 = vld [vmem:[%s2371 + $0xc] sm:$0xf]
        %v2376 = vld [vmem:[%s2371 + $0x10] sm:$0xf]
        %v2377 = vld [vmem:[%s2371 + $0x14] sm:$0xf]
        %v2378 = vld [vmem:[%s2371 + $0x18] sm:$0xf]
        %v2379 = vld [vmem:[%s2371 + $0x1c] sm:$0xf]
        %v2380 = vld [vmem:[%s2371 + $0x20] sm:$0xf]
        %v2381 = vld [vmem:[%s2371 + $0x24] sm:$0xf]
        %v2382 = vld [vmem:[%s2371 + $0x28] sm:$0xf]
        %v2383 = vld [vmem:[%s2371 + $0x2c] sm:$0xf]
        %v2384 = vld [vmem:[%s2371 + $0x30] sm:$0xf]
        %v2385 = vld [vmem:[%s2371 + $0x34] sm:$0xf]
        %v2386 = vld [vmem:[%s2371 + $0x38] sm:$0xf]
        %v2387 = vld [vmem:[%s2371 + $0x3c] sm:$0xf]
        %v2404 = vunpack.c.l.b16 %v2372
        %v2405 = vunpack.c.l.b16 %v2373
        %v2406 = vunpack.c.l.b16 %v2374
        %v2407 = vunpack.c.l.b16 %v2375
        %v2408 = vunpack.c.l.b16 %v2376
        %v2409 = vunpack.c.l.b16 %v2377
        %v2410 = vunpack.c.l.b16 %v2378
        %v2411 = vunpack.c.l.b16 %v2379
        %v2412 = vunpack.c.l.b16 %v2380
        %v2413 = vunpack.c.l.b16 %v2381
        %v2414 = vunpack.c.l.b16 %v2382
        %v2415 = vunpack.c.l.b16 %v2383
        %v2416 = vunpack.c.l.b16 %v2384
        %v2417 = vunpack.c.l.b16 %v2385
        %v2418 = vunpack.c.l.b16 %v2386
        %v2419 = vunpack.c.l.b16 %v2387
        %v2420 = vpack.c.b16 %v2405, %v2404
        %v2421 = vpack.c.b16 %v2407, %v2406
        %v2422 = vpack.c.b16 %v2409, %v2408
        %v2423 = vpack.c.b16 %v2411, %v2410
        %v2424 = vpack.c.b16 %v2413, %v2412
        %v2425 = vpack.c.b16 %v2415, %v2414
        %v2426 = vpack.c.b16 %v2417, %v2416
        %v2427 = vpack.c.b16 %v2419, %v2418
        %2436 = vmatpush.bf16.msra.mxu0 %v2427
        %2437 = vmatpush.bf16.msra.mxu0 %v2426
        %2438 = vmatpush.bf16.msra.mxu0 %v2425
        %2439 = vmatpush.bf16.msra.mxu0 %v2424
        %2440 = vmatpush.bf16.msra.mxu0 %v2423
        %2441 = vmatpush.bf16.msra.mxu0 %v2422
        %2442 = vmatpush.bf16.msra.mxu0 %v2421
        %2443 = vmatpush.bf16.msra.mxu0 %v2420
        %2444 = vmatmul.bf16.gmra.mxu0 %v2325
        %v2445 = vpop.f32.mrf.mxu0
        %v2446 = vadd.f32 0.0, %v2445
        %v2447 = vpop.f32.mrf.mxu0
        %v2448 = vadd.f32 0.0, %v2447
        %2449 = vmatmul.bf16.gmra.mxu0 %v2326
        %v2450 = vpop.f32.mrf.mxu0
        %v2451 = vadd.f32 0.0, %v2450
        %v2452 = vpop.f32.mrf.mxu0
        %v2453 = vadd.f32 0.0, %v2452
        %2454 = vmatmul.bf16.gmra.mxu0 %v2327
        %v2455 = vpop.f32.mrf.mxu0
        %v2456 = vadd.f32 0.0, %v2455
        %v2457 = vpop.f32.mrf.mxu0
        %2458 = vdwg.mxu0
        %v2475 = vunpack.c.l.b16 %v2355
        %v2476 = vunpack.c.l.b16 %v2356
        %v2477 = vunpack.c.l.b16 %v2357
        %v2478 = vunpack.c.l.b16 %v2358
        %v2479 = vunpack.c.l.b16 %v2359
        %v2480 = vunpack.c.l.b16 %v2360
        %v2481 = vunpack.c.l.b16 %v2361
        %v2482 = vunpack.c.l.b16 %v2362
        %v2483 = vunpack.c.l.b16 %v2363
        %v2484 = vunpack.c.l.b16 %v2364
        %v2485 = vunpack.c.l.b16 %v2365
        %v2486 = vunpack.c.l.b16 %v2366
        %v2487 = vunpack.c.l.b16 %v2367
        %v2488 = vunpack.c.l.b16 %v2368
        %v2489 = vunpack.c.l.b16 %v2369
        %v2490 = vunpack.c.l.b16 %v2370
        %v2491 = vpack.c.b16 %v2476, %v2475
        %v2492 = vpack.c.b16 %v2478, %v2477
        %v2493 = vpack.c.b16 %v2480, %v2479
        %v2494 = vpack.c.b16 %v2482, %v2481
        %v2495 = vpack.c.b16 %v2484, %v2483
        %v2496 = vpack.c.b16 %v2486, %v2485
        %v2497 = vpack.c.b16 %v2488, %v2487
        %v2498 = vpack.c.b16 %v2490, %v2489
        %2507 = vmatpush.bf16.msra.mxu0 %v2498
        %2508 = vmatpush.bf16.msra.mxu0 %v2497
        %2509 = vmatpush.bf16.msra.mxu0 %v2496
        %2510 = vmatpush.bf16.msra.mxu0 %v2495
        %2511 = vmatpush.bf16.msra.mxu0 %v2494
        %2512 = vmatpush.bf16.msra.mxu0 %v2493
        %2513 = vmatpush.bf16.msra.mxu0 %v2492
        %2514 = vmatpush.bf16.msra.mxu0 %v2491
        %2515 = vmatmul.bf16.gmra.mxu0 %v2338
        %v2516 = vpop.f32.mrf.mxu0
        %v2517 = vadd.f32 %v2446, %v2516
        %v2518 = vpop.f32.mrf.mxu0
        %v2519 = vadd.f32 %v2448, %v2518
        %2520 = vmatmul.bf16.gmra.mxu0 %v2339
        %v2521 = vpop.f32.mrf.mxu0
        %v2522 = vadd.f32 %v2451, %v2521
        %v2523 = vpop.f32.mrf.mxu0
        %v2524 = vadd.f32 %v2453, %v2523
        %2525 = vmatmul.bf16.gmra.mxu0 %v2340
        %v2526 = vpop.f32.mrf.mxu0
        %v2527 = vadd.f32 %v2456, %v2526
        %v2528 = vpop.f32.mrf.mxu0
        %2529 = vdwg.mxu0
        %s2530 = scalar_lea.vmem %s6, 128
        %v2531 = vld [vmem:[%s2530] sm:$0xf]
        %v2532 = vld [vmem:[%s2530 + $0x4] sm:$0xf]
        %v2533 = vld [vmem:[%s2530 + $0x8] sm:$0xf]
        %v2534 = vld [vmem:[%s2530 + $0xc] sm:$0xf]
        %v2535 = vld [vmem:[%s2530 + $0x10] sm:$0xf]
        %v2536 = vld [vmem:[%s2530 + $0x14] sm:$0xf]
        %v2537 = vld [vmem:[%s2530 + $0x18] sm:$0xf]
        %v2538 = vld [vmem:[%s2530 + $0x1c] sm:$0xf]
        %v2539 = vld [vmem:[%s2530 + $0x20] sm:$0xf]
        %v2540 = vld [vmem:[%s2530 + $0x24] sm:$0xf]
        %v2541 = vld [vmem:[%s2530 + $0x28] sm:$0xf]
        %v2542 = vld [vmem:[%s2530 + $0x2c] sm:$0xf]
        %v2543 = vld [vmem:[%s2530 + $0x30] sm:$0xf]
        %v2544 = vld [vmem:[%s2530 + $0x34] sm:$0xf]
        %v2545 = vld [vmem:[%s2530 + $0x38] sm:$0xf]
        %v2546 = vld [vmem:[%s2530 + $0x3c] sm:$0xf]
        %v2563 = vunpack.c.l.b16 %v2531
        %v2564 = vunpack.c.l.b16 %v2532
        %v2565 = vunpack.c.l.b16 %v2533
        %v2566 = vunpack.c.l.b16 %v2534
        %v2567 = vunpack.c.l.b16 %v2535
        %v2568 = vunpack.c.l.b16 %v2536
        %v2569 = vunpack.c.l.b16 %v2537
        %v2570 = vunpack.c.l.b16 %v2538
        %v2571 = vunpack.c.l.b16 %v2539
        %v2572 = vunpack.c.l.b16 %v2540
        %v2573 = vunpack.c.l.b16 %v2541
        %v2574 = vunpack.c.l.b16 %v2542
        %v2575 = vunpack.c.l.b16 %v2543
        %v2576 = vunpack.c.l.b16 %v2544
        %v2577 = vunpack.c.l.b16 %v2545
        %v2578 = vunpack.c.l.b16 %v2546
        %v2579 = vpack.c.b16 %v2564, %v2563
        %v2580 = vpack.c.b16 %v2566, %v2565
        %v2581 = vpack.c.b16 %v2568, %v2567
        %v2582 = vpack.c.b16 %v2570, %v2569
        %v2583 = vpack.c.b16 %v2572, %v2571
        %v2584 = vpack.c.b16 %v2574, %v2573
        %v2585 = vpack.c.b16 %v2576, %v2575
        %v2586 = vpack.c.b16 %v2578, %v2577
        %2595 = vmatpush.bf16.msra.mxu0 %v2586
        %2596 = vmatpush.bf16.msra.mxu0 %v2585
        %2597 = vmatpush.bf16.msra.mxu0 %v2584
        %2598 = vmatpush.bf16.msra.mxu0 %v2583
        %2599 = vmatpush.bf16.msra.mxu0 %v2582
        %2600 = vmatpush.bf16.msra.mxu0 %v2581
        %2601 = vmatpush.bf16.msra.mxu0 %v2580
        %2602 = vmatpush.bf16.msra.mxu0 %v2579
        %2603 = vmatmul.bf16.gmra.mxu0 %v2352
        %v2604 = vpop.f32.mrf.mxu0
        %v2605 = vadd.f32 0.0, %v2604
        %v2606 = vpop.f32.mrf.mxu0
        %v2607 = vadd.f32 0.0, %v2606
        %2608 = vmatmul.bf16.gmra.mxu0 %v2353
        %v2609 = vpop.f32.mrf.mxu0
        %v2610 = vadd.f32 0.0, %v2609
        %v2611 = vpop.f32.mrf.mxu0
        %v2612 = vadd.f32 0.0, %v2611
        %2613 = vmatmul.bf16.gmra.mxu0 %v2354
        %v2614 = vpop.f32.mrf.mxu0
        %v2615 = vadd.f32 0.0, %v2614
        %v2616 = vpop.f32.mrf.mxu0
        %2617 = vdwg.mxu0
        %v2618 = vadd.f32 %v2517, %v2605
        %v2619 = vadd.f32 %v2519, %v2607
        %v2620 = vadd.f32 %v2522, %v2610
        %v2621 = vadd.f32 %v2524, %v2612
        %v2622 = vadd.f32 %v2527, %v2615
        %v2623 = vld [vmem:[%s7] sm:$0x1]
        %v2625 = vperm.slane %v2623, 0
        %v2627 = vadd.f32 %v2618, %v2625
        %v2628 = vadd.f32 %v2619, %v2625
        %v2629 = vadd.f32 %v2620, %v2625
        %v2630 = vadd.f32 %v2621, %v2625
        %v2631 = vadd.f32 %v2622, %v2625
        %v2632 = vmax.f32 %v2627, 0.0
        %v2633 = vmax.f32 %v2628, 0.0
        %v2634 = vmax.f32 %v2629, 0.0
        %v2635 = vmax.f32 %v2630, 0.0
        %v2636 = vmax.f32 %v2631, 0.0
        %v2637 = vld [vmem:[%s10] sm:$0xff]
        %v2638 = vld [vmem:[%s10 + $0x8] sm:$0xff]
        %v2639 = vld [vmem:[%s10 + $0x10] sm:$0xff]
        %v2640 = vld [vmem:[%s10 + $0x18] sm:$0xff]
        %v2641 = vld [vmem:[%s10 + $0x20] sm:$0xff]
        %2643 = vset.pattern.permute.xlu0 0
        %2644 = vperm.xlu0 %2643, %v2637
        %v2645 = vpop.permute.xlu0 %2644
        %2648 = vset.pattern.permute.xlu0 0
        %2649 = vperm.xlu0 %2648, %v2638
        %v2650 = vpop.permute.xlu0 %2649
        %2653 = vset.pattern.permute.xlu0 0
        %2654 = vperm.xlu0 %2653, %v2639
        %v2655 = vpop.permute.xlu0 %2654
        %2658 = vset.pattern.permute.xlu0 0
        %2659 = vperm.xlu0 %2658, %v2640
        %v2660 = vpop.permute.xlu0 %2659
        %2663 = vset.pattern.permute.xlu0 0
        %2664 = vperm.xlu0 %2663, %v2641
        %v2665 = vpop.permute.xlu0 %2664
        %v2667 = vmul.f32 %v2632, %v2645
        %v2668 = vmul.f32 %v2633, %v2650
        %v2669 = vmul.f32 %v2634, %v2655
        %v2670 = vmul.f32 %v2635, %v2660
        %v2671 = vmul.f32 %v2636, %v2665
        %v2672 = vpack.c.bf16 %v2668, %v2667
        %v2673 = vpack.c.bf16 %v2670, %v2669
        %v2674 = vpack.c.bf16 %v2671, %v2671
        %v2675 = vrot.slane %v2667, 7
        %v2676 = vrot.slane %v2668, 7
        %v2677 = vrot.slane %v2669, 7
        %v2678 = vrot.slane %v2670, 7
        %v2679 = vrot.slane %v2671, 7
        %v2680 = vsel %vm1878, %v2678, %v2679
        %v2681 = vsel %vm1878, %v2677, %v2678
        %v2682 = vsel %vm1878, %v2676, %v2677
        %v2683 = vsel %vm1878, %v2675, %v2676
        %v2684 = vsel %vm1878, %v2679, %v2675
        %v2685 = vpack.c.bf16 %v2683, %v2684
        %v2686 = vpack.c.bf16 %v2681, %v2682
        %v2687 = vpack.c.bf16 %v2680, %v2680
        %v2688 = vrot.slane %v2667, 1
        %v2689 = vrot.slane %v2668, 1
        %v2690 = vrot.slane %v2669, 1
        %v2691 = vrot.slane %v2670, 1
        %v2692 = vrot.slane %v2671, 1
        %v2693 = vsel %vm2346, %v2691, %v2692
        %v2694 = vsel %vm2346, %v2690, %v2691
        %v2695 = vsel %vm2346, %v2689, %v2690
        %v2696 = vsel %vm2346, %v2688, %v2689
        %v2697 = vsel %vm2346, %v2692, %v2688
        %v2698 = vpack.c.bf16 %v2695, %v2696
        %v2699 = vpack.c.bf16 %v2693, %v2694
        %v2700 = vpack.c.bf16 %v2697, %v2697
        %v2701 = vld [vmem:[%s8] sm:$0xf]
        %v2702 = vld [vmem:[%s8 + $0x4] sm:$0xf]
        %v2703 = vld [vmem:[%s8 + $0x8] sm:$0xf]
        %v2704 = vld [vmem:[%s8 + $0xc] sm:$0xf]
        %v2705 = vld [vmem:[%s8 + $0x10] sm:$0xf]
        %v2706 = vld [vmem:[%s8 + $0x14] sm:$0xf]
        %v2707 = vld [vmem:[%s8 + $0x18] sm:$0xf]
        %v2708 = vld [vmem:[%s8 + $0x1c] sm:$0xf]
        %v2709 = vld [vmem:[%s8 + $0x20] sm:$0xf]
        %v2710 = vld [vmem:[%s8 + $0x24] sm:$0xf]
        %v2711 = vld [vmem:[%s8 + $0x28] sm:$0xf]
        %v2712 = vld [vmem:[%s8 + $0x2c] sm:$0xf]
        %v2713 = vld [vmem:[%s8 + $0x30] sm:$0xf]
        %v2714 = vld [vmem:[%s8 + $0x34] sm:$0xf]
        %v2715 = vld [vmem:[%s8 + $0x38] sm:$0xf]
        %v2716 = vld [vmem:[%s8 + $0x3c] sm:$0xf]
        %s2717 = scalar_lea.vmem %s8, 64
        %v2718 = vld [vmem:[%s2717] sm:$0xf]
        %v2719 = vld [vmem:[%s2717 + $0x4] sm:$0xf]
        %v2720 = vld [vmem:[%s2717 + $0x8] sm:$0xf]
        %v2721 = vld [vmem:[%s2717 + $0xc] sm:$0xf]
        %v2722 = vld [vmem:[%s2717 + $0x10] sm:$0xf]
        %v2723 = vld [vmem:[%s2717 + $0x14] sm:$0xf]
        %v2724 = vld [vmem:[%s2717 + $0x18] sm:$0xf]
        %v2725 = vld [vmem:[%s2717 + $0x1c] sm:$0xf]
        %v2726 = vld [vmem:[%s2717 + $0x20] sm:$0xf]
        %v2727 = vld [vmem:[%s2717 + $0x24] sm:$0xf]
        %v2728 = vld [vmem:[%s2717 + $0x28] sm:$0xf]
        %v2729 = vld [vmem:[%s2717 + $0x2c] sm:$0xf]
        %v2730 = vld [vmem:[%s2717 + $0x30] sm:$0xf]
        %v2731 = vld [vmem:[%s2717 + $0x34] sm:$0xf]
        %v2732 = vld [vmem:[%s2717 + $0x38] sm:$0xf]
        %v2733 = vld [vmem:[%s2717 + $0x3c] sm:$0xf]
        %v2750 = vunpack.c.l.b16 %v2718
        %v2751 = vunpack.c.l.b16 %v2719
        %v2752 = vunpack.c.l.b16 %v2720
        %v2753 = vunpack.c.l.b16 %v2721
        %v2754 = vunpack.c.l.b16 %v2722
        %v2755 = vunpack.c.l.b16 %v2723
        %v2756 = vunpack.c.l.b16 %v2724
        %v2757 = vunpack.c.l.b16 %v2725
        %v2758 = vunpack.c.l.b16 %v2726
        %v2759 = vunpack.c.l.b16 %v2727
        %v2760 = vunpack.c.l.b16 %v2728
        %v2761 = vunpack.c.l.b16 %v2729
        %v2762 = vunpack.c.l.b16 %v2730
        %v2763 = vunpack.c.l.b16 %v2731
        %v2764 = vunpack.c.l.b16 %v2732
        %v2765 = vunpack.c.l.b16 %v2733
        %v2766 = vpack.c.b16 %v2751, %v2750
        %v2767 = vpack.c.b16 %v2753, %v2752
        %v2768 = vpack.c.b16 %v2755, %v2754
        %v2769 = vpack.c.b16 %v2757, %v2756
        %v2770 = vpack.c.b16 %v2759, %v2758
        %v2771 = vpack.c.b16 %v2761, %v2760
        %v2772 = vpack.c.b16 %v2763, %v2762
        %v2773 = vpack.c.b16 %v2765, %v2764
        %2782 = vmatpush.bf16.msra.mxu0 %v2773
        %2783 = vmatpush.bf16.msra.mxu0 %v2772
        %2784 = vmatpush.bf16.msra.mxu0 %v2771
        %2785 = vmatpush.bf16.msra.mxu0 %v2770
        %2786 = vmatpush.bf16.msra.mxu0 %v2769
        %2787 = vmatpush.bf16.msra.mxu0 %v2768
        %2788 = vmatpush.bf16.msra.mxu0 %v2767
        %2789 = vmatpush.bf16.msra.mxu0 %v2766
        %2790 = vmatmul.bf16.gmra.mxu0 %v2672
        %v2791 = vpop.f32.mrf.mxu0
        %v2792 = vadd.f32 0.0, %v2791
        %v2793 = vpop.f32.mrf.mxu0
        %v2794 = vadd.f32 0.0, %v2793
        %2795 = vmatmul.bf16.gmra.mxu0 %v2673
        %v2796 = vpop.f32.mrf.mxu0
        %v2797 = vadd.f32 0.0, %v2796
        %v2798 = vpop.f32.mrf.mxu0
        %v2799 = vadd.f32 0.0, %v2798
        %2800 = vmatmul.bf16.gmra.mxu0 %v2674
        %v2801 = vpop.f32.mrf.mxu0
        %v2802 = vadd.f32 0.0, %v2801
        %v2803 = vpop.f32.mrf.mxu0
        %2804 = vdwg.mxu0
        %v2821 = vunpack.c.l.b16 %v2701
        %v2822 = vunpack.c.l.b16 %v2702
        %v2823 = vunpack.c.l.b16 %v2703
        %v2824 = vunpack.c.l.b16 %v2704
        %v2825 = vunpack.c.l.b16 %v2705
        %v2826 = vunpack.c.l.b16 %v2706
        %v2827 = vunpack.c.l.b16 %v2707
        %v2828 = vunpack.c.l.b16 %v2708
        %v2829 = vunpack.c.l.b16 %v2709
        %v2830 = vunpack.c.l.b16 %v2710
        %v2831 = vunpack.c.l.b16 %v2711
        %v2832 = vunpack.c.l.b16 %v2712
        %v2833 = vunpack.c.l.b16 %v2713
        %v2834 = vunpack.c.l.b16 %v2714
        %v2835 = vunpack.c.l.b16 %v2715
        %v2836 = vunpack.c.l.b16 %v2716
        %v2837 = vpack.c.b16 %v2822, %v2821
        %v2838 = vpack.c.b16 %v2824, %v2823
        %v2839 = vpack.c.b16 %v2826, %v2825
        %v2840 = vpack.c.b16 %v2828, %v2827
        %v2841 = vpack.c.b16 %v2830, %v2829
        %v2842 = vpack.c.b16 %v2832, %v2831
        %v2843 = vpack.c.b16 %v2834, %v2833
        %v2844 = vpack.c.b16 %v2836, %v2835
        %2853 = vmatpush.bf16.msra.mxu0 %v2844
        %2854 = vmatpush.bf16.msra.mxu0 %v2843
        %2855 = vmatpush.bf16.msra.mxu0 %v2842
        %2856 = vmatpush.bf16.msra.mxu0 %v2841
        %2857 = vmatpush.bf16.msra.mxu0 %v2840
        %2858 = vmatpush.bf16.msra.mxu0 %v2839
        %2859 = vmatpush.bf16.msra.mxu0 %v2838
        %2860 = vmatpush.bf16.msra.mxu0 %v2837
        %2861 = vmatmul.bf16.gmra.mxu0 %v2685
        %v2862 = vpop.f32.mrf.mxu0
        %v2863 = vadd.f32 %v2792, %v2862
        %v2864 = vpop.f32.mrf.mxu0
        %v2865 = vadd.f32 %v2794, %v2864
        %2866 = vmatmul.bf16.gmra.mxu0 %v2686
        %v2867 = vpop.f32.mrf.mxu0
        %v2868 = vadd.f32 %v2797, %v2867
        %v2869 = vpop.f32.mrf.mxu0
        %v2870 = vadd.f32 %v2799, %v2869
        %2871 = vmatmul.bf16.gmra.mxu0 %v2687
        %v2872 = vpop.f32.mrf.mxu0
        %v2873 = vadd.f32 %v2802, %v2872
        %v2874 = vpop.f32.mrf.mxu0
        %2875 = vdwg.mxu0
        %s2876 = scalar_lea.vmem %s8, 128
        %v2877 = vld [vmem:[%s2876] sm:$0xf]
        %v2878 = vld [vmem:[%s2876 + $0x4] sm:$0xf]
        %v2879 = vld [vmem:[%s2876 + $0x8] sm:$0xf]
        %v2880 = vld [vmem:[%s2876 + $0xc] sm:$0xf]
        %v2881 = vld [vmem:[%s2876 + $0x10] sm:$0xf]
        %v2882 = vld [vmem:[%s2876 + $0x14] sm:$0xf]
        %v2883 = vld [vmem:[%s2876 + $0x18] sm:$0xf]
        %v2884 = vld [vmem:[%s2876 + $0x1c] sm:$0xf]
        %v2885 = vld [vmem:[%s2876 + $0x20] sm:$0xf]
        %v2886 = vld [vmem:[%s2876 + $0x24] sm:$0xf]
        %v2887 = vld [vmem:[%s2876 + $0x28] sm:$0xf]
        %v2888 = vld [vmem:[%s2876 + $0x2c] sm:$0xf]
        %v2889 = vld [vmem:[%s2876 + $0x30] sm:$0xf]
        %v2890 = vld [vmem:[%s2876 + $0x34] sm:$0xf]
        %v2891 = vld [vmem:[%s2876 + $0x38] sm:$0xf]
        %v2892 = vld [vmem:[%s2876 + $0x3c] sm:$0xf]
        %v2909 = vunpack.c.l.b16 %v2877
        %v2910 = vunpack.c.l.b16 %v2878
        %v2911 = vunpack.c.l.b16 %v2879
        %v2912 = vunpack.c.l.b16 %v2880
        %v2913 = vunpack.c.l.b16 %v2881
        %v2914 = vunpack.c.l.b16 %v2882
        %v2915 = vunpack.c.l.b16 %v2883
        %v2916 = vunpack.c.l.b16 %v2884
        %v2917 = vunpack.c.l.b16 %v2885
        %v2918 = vunpack.c.l.b16 %v2886
        %v2919 = vunpack.c.l.b16 %v2887
        %v2920 = vunpack.c.l.b16 %v2888
        %v2921 = vunpack.c.l.b16 %v2889
        %v2922 = vunpack.c.l.b16 %v2890
        %v2923 = vunpack.c.l.b16 %v2891
        %v2924 = vunpack.c.l.b16 %v2892
        %v2925 = vpack.c.b16 %v2910, %v2909
        %v2926 = vpack.c.b16 %v2912, %v2911
        %v2927 = vpack.c.b16 %v2914, %v2913
        %v2928 = vpack.c.b16 %v2916, %v2915
        %v2929 = vpack.c.b16 %v2918, %v2917
        %v2930 = vpack.c.b16 %v2920, %v2919
        %v2931 = vpack.c.b16 %v2922, %v2921
        %v2932 = vpack.c.b16 %v2924, %v2923
        %2941 = vmatpush.bf16.msra.mxu0 %v2932
        %2942 = vmatpush.bf16.msra.mxu0 %v2931
        %2943 = vmatpush.bf16.msra.mxu0 %v2930
        %2944 = vmatpush.bf16.msra.mxu0 %v2929
        %2945 = vmatpush.bf16.msra.mxu0 %v2928
        %2946 = vmatpush.bf16.msra.mxu0 %v2927
        %2947 = vmatpush.bf16.msra.mxu0 %v2926
        %2948 = vmatpush.bf16.msra.mxu0 %v2925
        %2949 = vmatmul.bf16.gmra.mxu0 %v2698
        %v2950 = vpop.f32.mrf.mxu0
        %v2951 = vadd.f32 0.0, %v2950
        %v2952 = vpop.f32.mrf.mxu0
        %v2953 = vadd.f32 0.0, %v2952
        %2954 = vmatmul.bf16.gmra.mxu0 %v2699
        %v2955 = vpop.f32.mrf.mxu0
        %v2956 = vadd.f32 0.0, %v2955
        %v2957 = vpop.f32.mrf.mxu0
        %v2958 = vadd.f32 0.0, %v2957
        %2959 = vmatmul.bf16.gmra.mxu0 %v2700
        %v2960 = vpop.f32.mrf.mxu0
        %v2961 = vadd.f32 0.0, %v2960
        %v2962 = vpop.f32.mrf.mxu0
        %2963 = vdwg.mxu0
        %v2964 = vadd.f32 %v2863, %v2951
        %v2965 = vadd.f32 %v2865, %v2953
        %v2966 = vadd.f32 %v2868, %v2956
        %v2967 = vadd.f32 %v2870, %v2958
        %v2968 = vadd.f32 %v2873, %v2961
        %v2969 = vld [vmem:[%s9] sm:$0x1]
        %v2971 = vperm.slane %v2969, 0
        %v2973 = vadd.f32 %v2964, %v2971
        %v2974 = vadd.f32 %v2965, %v2971
        %v2975 = vadd.f32 %v2966, %v2971
        %v2976 = vadd.f32 %v2967, %v2971
        %v2977 = vadd.f32 %v2968, %v2971
        %v2978 = vld [vmem:[%s11] sm:$0xff]
        %v2979 = vld [vmem:[%s11 + $0x8] sm:$0xff]
        %v2980 = vld [vmem:[%s11 + $0x10] sm:$0xff]
        %v2981 = vld [vmem:[%s11 + $0x18] sm:$0xff]
        %v2982 = vld [vmem:[%s11 + $0x20] sm:$0xff]
        %2984 = vset.pattern.permute.xlu0 0
        %2985 = vperm.xlu0 %2984, %v2978
        %v2986 = vpop.permute.xlu0 %2985
        %2989 = vset.pattern.permute.xlu0 0
        %2990 = vperm.xlu0 %2989, %v2979
        %v2991 = vpop.permute.xlu0 %2990
        %2994 = vset.pattern.permute.xlu0 0
        %2995 = vperm.xlu0 %2994, %v2980
        %v2996 = vpop.permute.xlu0 %2995
        %2999 = vset.pattern.permute.xlu0 0
        %3000 = vperm.xlu0 %2999, %v2981
        %v3001 = vpop.permute.xlu0 %3000
        %3004 = vset.pattern.permute.xlu0 0
        %3005 = vperm.xlu0 %3004, %v2982
        %v3006 = vpop.permute.xlu0 %3005
        %v3008 = vmul.f32 %v2973, %v2986
        %v3009 = vmul.f32 %v2974, %v2991
        %v3010 = vmul.f32 %v2975, %v2996
        %v3011 = vmul.f32 %v2976, %v3001
        %v3012 = vmul.f32 %v2977, %v3006
        %v3013 = vmul.f32 %v3008, 1.442695
        %v3014 = vpow.pop %v3013
        %v3015 = vmul.f32 %v3009, 1.442695
        %v3016 = vpow.pop %v3015
        %v3017 = vmul.f32 %v3010, 1.442695
        %v3018 = vpow.pop %v3017
        %v3019 = vmul.f32 %v3011, 1.442695
        %v3020 = vpow.pop %v3019
        %v3021 = vmul.f32 %v3012, 1.442695
        %v3022 = vpow.pop %v3021
        %v3023 = vsel %vm1882, %v3014, %v2973
        %v3024 = vsel %vm1882, %v3016, %v2974
        %v3025 = vsel %vm1882, %v3018, %v2975
        %v3026 = vsel %vm1882, %v3020, %v2976
        %v3027 = vsel %vm1882, %v3022, %v2977
        %3028 = vst [vmem:[%s505] sm:$0xff] %v3023
        %3029 = vst [vmem:[%s505 + $0x8] sm:$0xff] %v3024
        %3030 = vst [vmem:[%s505 + $0x10] sm:$0xff] %v3025
        %3031 = vst [vmem:[%s505 + $0x18] sm:$0xff] %v3026
        %3032 = vst [vmem:[%s505 + $0x20] sm:$0xff] %v3027
        %p3033 = scmp.lt.s32.totalorder %s23, 1
        %s3034 = scalar_select %p3033, %s23, 1
        %s3035 = smul.addr %s3034, 5
        %s3036 = smul.addr %s3035, 8
        %s3037 = scalar_lea.vmem %s12, %s3036
        // Predicated region
        $region110: #{pyramid_detection_forward.9} parent=104 // pred_check
          %p3038 = pneg %p303
        $region111: #{pyramid_detection_forward.9} parent=104 // pred_check_branch
          %3040 = sbr.rel (%p3038) target = $region113
        $region112: #{pyramid_detection_forward.9} parent=104 // pred_region
          _
        $region113: #{pyramid_detection_forward.9} parent=104 // pred_fallthru
          _
      $region105: #{pyramid_detection_forward.9} parent=5 // pred_fallthru
        _
      %p3041 = scmp.le.s32.totalorder 2, %s18
      // Predicated region
      $region114: #{pyramid_detection_forward.9} parent=5 // pred_check
        %p3042 = pneg %p3041
      $region115: #{pyramid_detection_forward.9} parent=5 // pred_check_branch
        %3044 = sbr.rel (%p3042) target = $region117
      $region116: #{pyramid_detection_forward.9} parent=5 // pred_region
        %s3045 = ssub.s32 %s18, 2
        // Predicated region
        $region118: #{pyramid_detection_forward.9} parent=116 // pred_check
          %p3046 = pneg %p309
        $region119: #{pyramid_detection_forward.9} parent=116 // pred_check_branch
          %3048 = sbr.rel (%p3046) target = $region121
        $region120: #{pyramid_detection_forward.9} parent=116 // pred_region
          %p3049 = scmp.lt.s32.totalorder %s24, 1
          %s3050 = scalar_select %p3049, %s24, 1
          %s3051 = smul.addr %s3050, 5
          %s3052 = smul.addr %s3051, 8
          %s3053 = scalar_lea.vmem %s12, %s3052
        $region121: #{pyramid_detection_forward.9} parent=116 // pred_fallthru
          _
      $region117: #{pyramid_detection_forward.9} parent=5 // pred_fallthru
        _
    $region6: #{pyramid_detection_forward.9} parent=1 // loop_footer
      %s22 = sadd.s32 1, %s18
    $region7: #{pyramid_detection_forward.9} parent=1 // loop_footer_branch
      %17 = sbr.rel target = $region3
    $region8: #{pyramid_detection_forward.9} parent=1 // loop_exit
      _

</llo_original>
